<compile_context>
chip_gen: v7x
topology: tpu7x:2x2x1
jax: 0.10.0
libtpu: 0.0.40
codegen_flags: <defaults>
</compile_context>

<pallas_src>
import math
from functools import partial

import jax
import jax.numpy as jnp
from jax.experimental import pallas as pl
from jax.experimental.pallas import tpu as pltpu

GROUPS = 32
GROUPS_PAD = 128          # group axis zero-padded to a full 128-lane vreg
EPS = 1e-5
INV_SQRT2 = 2.0 ** -0.5


def _round_up(x, m):
    return ((x + m - 1) // m) * m


def _silu(x):
    return x * jax.nn.sigmoid(x)


def fcnet_kernel(num_layer_blocks, layers_per_block, compute_dtype,
                 x_ref, wmap_ref, bmap_ref, ga_ref, gb_ref,
                 w1_ref, b1_ref, w2_ref, b2_ref, w3_ref, b3_ref,
                 o_ref, h_acc):
    lb = pl.program_id(1)

    # First layer block: h = self.map(x), kept in the per-row-tile f32 accumulator.
    @pl.when(lb == 0)
    def _():
        xm = x_ref[...].astype(compute_dtype)
        h0 = jnp.dot(xm, wmap_ref[...], preferred_element_type=jnp.float32)
        h_acc[...] = h0 + bmap_ref[...]

    h = h_acc[...]
    ga = ga_ref[...]          # (H, 128): group-average matrix, zero cols past GROUPS
    gb = gb_ref[...]          # (128, H): group-broadcast matrix, zero rows past GROUPS

    # Static unroll over the layers held in this block: 1 (streaming) or L (resident).
    for j in range(layers_per_block):
        # GroupNorm(32, H) in f32 via low-rank group mean + centered variance
        # (matches torch's biased variance; no catastrophic cancellation).
        mu = jnp.dot(jnp.dot(h, ga, preferred_element_type=jnp.float32), gb,
                     preferred_element_type=jnp.float32)
        d = h - mu
        var = jnp.dot(jnp.dot(d * d, ga, preferred_element_type=jnp.float32), gb,
                      preferred_element_type=jnp.float32)
        g = d * jax.lax.rsqrt(jnp.maximum(var, 0.0) + EPS)
        # GroupNorm's gamma/beta are folded into w1/b1 at prep time.

        # res_block: (Linear -> SiLU) x 3; matmuls in compute_dtype, f32 accumulation.
        t = _silu(jnp.dot(g.astype(compute_dtype), w1_ref[j],
                          preferred_element_type=jnp.float32) + b1_ref[j])
        t = _silu(jnp.dot(t.astype(compute_dtype), w2_ref[j],
                          preferred_element_type=jnp.float32) + b2_ref[j])
        t = _silu(jnp.dot(t.astype(compute_dtype), w3_ref[j],
                          preferred_element_type=jnp.float32) + b3_ref[j])

        # h = (h + res_block(norm(h))) / sqrt(2)
        h = (h + t) * INV_SQRT2

    h_acc[...] = h

    @pl.when(lb == num_layer_blocks - 1)
    def _():
        o_ref[...] = h_acc[...].astype(o_ref.dtype)


def _tpu_generation_defaults():
    """(target_block_rows, mxu_row_tile, want_two_row_tiles, vmem_limit_bytes)."""
    kind = ""
    try:
        kind = jax.devices()[0].device_kind.lower()
    except Exception:
        pass
    if "v5" in kind:                       # v5e/v5p: break-even ~240 rows, 128-row MXU
        target_bm, mxu_rows, phys_vmem, two_tile = 256, 128, 128 * 2**20, False
    elif "v6" in kind:                     # v6e: break-even ~650 rows, 256-row MXU
        target_bm, mxu_rows, phys_vmem, two_tile = 768, 256, 128 * 2**20, False
    elif "v7" in kind or "tpu7" in kind:   # v7x: ~311 rows, 2 TCs, 64 MiB VMEM/TC
        target_bm, mxu_rows, phys_vmem, two_tile = 512, 256, 64 * 2**20, True
    else:                                  # unknown: conservative
        target_bm, mxu_rows, phys_vmem, two_tile = 512, 128, 64 * 2**20, False
    try:
        phys_vmem = int(pltpu.get_tpu_info().vmem_capacity_bytes)
    except Exception:
        pass
    vmem_limit = min(int(phys_vmem * 0.78), 100 * 2**20)
    return target_bm, mxu_rows, two_tile, vmem_limit


def _vmem_bytes(bm, lpb, dd_pad, h_dim, w_itemsize):
    """Conservative VMEM footprint estimate for one grid step (double-buffered blocks)."""
    f32 = 4
    weights = 2 * lpb * 3 * h_dim * h_dim * w_itemsize      # w1/w2/w3 blocks
    biases = 2 * lpb * 3 * h_dim * f32
    consts = 2 * (dd_pad * h_dim * w_itemsize + h_dim * f32
                  + 2 * GROUPS_PAD * h_dim * f32)           # wmap, bmap, ga, gb
    io = 2 * bm * (dd_pad + h_dim) * f32                    # x tile + out tile
    scratch = bm * h_dim * f32                              # h accumulator
    temps = 8 * bm * h_dim * f32                            # f32 intermediates headroom
    return weights + biases + consts + io + scratch + temps


def fcnet_forward(x, prepped, *, block_rows=None, layers_per_block=None,
                  vmem_limit_bytes=None, out_dtype=None):
    """block_rows/layers_per_block default to generation-aware auto-tuning."""
    n, data_dim = x.shape
    dd_pad, h_dim = prepped["wmap"].shape
    L = prepped["w1"].shape[0]
    assert L >= 1
    w_itemsize = jnp.dtype(prepped["compute_dtype"]).itemsize

    target_bm, mxu_rows, two_tile, auto_vmem = _tpu_generation_defaults()
    if vmem_limit_bytes is None:
        vmem_limit_bytes = auto_vmem
    budget = vmem_limit_bytes - 4 * 2**20   # leave room for Mosaic internal scratch

    if block_rows is None:
        bm = target_bm
        if two_tile:
            # v7x: keep >= 2 row tiles so both TensorCores get work.
            bm = min(bm, max(mxu_rows, _round_up(-(-n // 2), mxu_rows)))
    else:
        bm = block_rows
    bm = _round_up(max(8, min(bm, _round_up(n, 8))), 8)

    if layers_per_block is None:
        # Weight-resident mode: all layers' weights in one constant-index block
        # (fetched from HBM exactly once) whenever they fit next to a reasonable
        # row tile; otherwise stream one layer per grid step.
        lpb = L if _vmem_bytes(min(bm, 128), L, dd_pad, h_dim, w_itemsize) <= budget else 1
    else:
        lpb = layers_per_block
    assert L % lpb == 0

    # Shrink the row tile rather than blowing the per-generation VMEM budget (v7x!).
    while bm > 8 and _vmem_bytes(bm, lpb, dd_pad, h_dim, w_itemsize) > budget:
        bm = max(8, _round_up(bm // 2, 8))

    padded_n = _round_up(n, bm)
    if padded_n != n or dd_pad != data_dim:
        x = jnp.pad(x, ((0, padded_n - n), (0, dd_pad - data_dim)))

    num_layer_blocks = L // lpb
    row_map = lambda i, l: (i, 0)
    const2 = lambda i, l: (0, 0)
    layer3 = lambda i, l: (l, 0, 0)

    grid_spec = pltpu.PrefetchScalarGridSpec(
        num_scalar_prefetch=0,
        grid=(padded_n // bm, num_layer_blocks),
        in_specs=[
            pl.BlockSpec((bm, dd_pad), row_map),                 # x tile (K zero-padded)
            pl.BlockSpec((dd_pad, h_dim), const2),               # wmap (compute dtype)
            pl.BlockSpec((1, h_dim), const2),                    # bmap (f32)
            pl.BlockSpec((h_dim, GROUPS_PAD), const2),           # ga: group-average (f32)
            pl.BlockSpec((GROUPS_PAD, h_dim), const2),           # gb: group-broadcast (f32)
            pl.BlockSpec((lpb, h_dim, h_dim), layer3),           # w1 (per-layer-block slice)
            pl.BlockSpec((lpb, 1, h_dim), layer3),               # b1
            pl.BlockSpec((lpb, h_dim, h_dim), layer3),           # w2
            pl.BlockSpec((lpb, 1, h_dim), layer3),               # b2
            pl.BlockSpec((lpb, h_dim, h_dim), layer3),           # w3
            pl.BlockSpec((lpb, 1, h_dim), layer3),               # b3
        ],
        out_specs=pl.BlockSpec((bm, h_dim), row_map),
        scratch_shapes=[pltpu.VMEM((bm, h_dim), jnp.float32)],   # running h
    )

    out = pl.pallas_call(
        partial(fcnet_kernel, num_layer_blocks, lpb, prepped["compute_dtype"]),
        out_shape=jax.ShapeDtypeStruct(
            (padded_n, h_dim), out_dtype if out_dtype is not None else x.dtype),
        grid_spec=grid_spec,
        compiler_params=pltpu.CompilerParams(
            dimension_semantics=("parallel", "arbitrary"),  # row tiles across TCs
            vmem_limit_bytes=vmem_limit_bytes),
    )(x, prepped["wmap"], prepped["bmap"], prepped["ga"], prepped["gb"],
      prepped["w1"], prepped["b1"], prepped["w2"], prepped["b2"],
      prepped["w3"], prepped["b3"])
    return out[:n]


def prepare_params(params, compute_dtype=jnp.bfloat16):
    """One-time prep: fold GroupNorm affine into w1/b1, build lane-padded low-rank
    group-stat matrices, zero-pad the map matmul K dim to 128, cast matmul weights."""
    data_dim, h_dim = params["wmap"].shape
    assert h_dim % GROUPS == 0
    gsize = h_dim // GROUPS

    gamma = params["gamma"].astype(jnp.float32)   # (L, 1, H)
    beta = params["beta"].astype(jnp.float32)     # (L, 1, H)
    w1 = params["w1"].astype(jnp.float32)         # (L, H, H)
    b1 = params["b1"].astype(jnp.float32)         # (L, 1, H)

    # (g*gamma + beta) @ W1 + b1 == g @ (gamma[:,None]*W1) + (b1 + beta@W1)
    w1_fold = jnp.swapaxes(gamma, 1, 2) * w1
    b1_fold = b1 + jnp.einsum("lc,lco->lo", beta[:, 0, :], w1)[:, None, :]

    # Low-rank group-mean matrices, zero-padded along the group axis to 128 lanes
    # so the (rows, GROUPS) intermediate is a fully dense vreg (exact: pads are 0).
    gid = jnp.arange(h_dim) // gsize
    ga = jnp.zeros((h_dim, GROUPS_PAD), jnp.float32).at[
        jnp.arange(h_dim), gid].set(1.0 / gsize)
    gb = jnp.zeros((GROUPS_PAD, h_dim), jnp.float32).at[
        gid, jnp.arange(h_dim)].set(1.0)

    # Zero-pad the map matmul K dim (data_dim) to a multiple of 128 lanes.
    dd_pad = _round_up(data_dim, 128)
    wmap = jnp.zeros((dd_pad, h_dim), jnp.float32).at[:data_dim].set(
        params["wmap"].astype(jnp.float32))

    return {
        "compute_dtype": jnp.dtype(compute_dtype),
        "wmap": wmap.astype(compute_dtype),
        "bmap": params["bmap"].astype(jnp.float32),
        "ga": ga,
        "gb": gb,
        "w1": w1_fold.astype(compute_dtype),
        "b1": b1_fold,
        "w2": params["w2"].astype(compute_dtype),
        "b2": params["b2"].astype(jnp.float32),
        "w3": params["w3"].astype(compute_dtype),
        "b3": params["b3"].astype(jnp.float32),
    }


def init_params(key, data_dim, hidden_dim, num_res_blocks, dtype=jnp.float32):
    assert hidden_dim % GROUPS == 0
    ks = jax.random.split(key, 10)
    L = num_res_blocks
    scale = 0.05
    return {
        "wmap": scale * jax.random.normal(ks[0], (data_dim, hidden_dim), dtype),
        "bmap": scale * jax.random.normal(ks[1], (1, hidden_dim), dtype),
        "gamma": 1.0 + scale * jax.random.normal(ks[2], (L, 1, hidden_dim), dtype),
        "beta": scale * jax.random.normal(ks[3], (L, 1, hidden_dim), dtype),
        "w1": scale * jax.random.normal(ks[4], (L, hidden_dim, hidden_dim), dtype),
        "b1": scale * jax.random.normal(ks[5], (L, 1, hidden_dim), dtype),
        "w2": scale * jax.random.normal(ks[6], (L, hidden_dim, hidden_dim), dtype),
        "b2": scale * jax.random.normal(ks[7], (L, 1, hidden_dim), dtype),
        "w3": scale * jax.random.normal(ks[8], (L, hidden_dim, hidden_dim), dtype),
        "b3": scale * jax.random.normal(ks[9], (L, 1, hidden_dim), dtype),
    }


def fcnet_reference(x, params):
    """Pure-JAX f32 reference mirroring the PyTorch module exactly."""
    h = x @ params["wmap"] + params["bmap"][0]
    L = params["gamma"].shape[0]
    n, c = h.shape
    for l in range(L):
        hg = h.reshape(n, GROUPS, c // GROUPS)
        mu = hg.mean(axis=-1, keepdims=True)
        var = ((hg - mu) ** 2).mean(axis=-1, keepdims=True)
        g = ((hg - mu) / jnp.sqrt(var + EPS)).reshape(n, c)
        g = g * params["gamma"][l, 0] + params["beta"][l, 0]
        t = _silu(g @ params["w1"][l] + params["b1"][l, 0])
        t = _silu(t @ params["w2"][l] + params["b2"][l, 0])
        t = _silu(t @ params["w3"][l] + params["b3"][l, 0])
        h = (h + t) / math.sqrt(2.0)
    return h


if __name__ == "__main__":
    data_dim = 16
    hidden_dim = 128        # must be divisible by 32 (GroupNorm groups)
    num_res_blocks = 2
    batch = 300             # not a multiple of the row tile -> exercises padding path

    key = jax.random.PRNGKey(0)
    kx, kp = jax.random.split(key)
    x = jax.random.normal(kx, (batch, data_dim), jnp.float32)
    params = init_params(kp, data_dim, hidden_dim, num_res_blocks)
    ref = fcnet_reference(x, params)

    pp_f32 = prepare_params(params, jnp.float32)
    pp_bf16 = prepare_params(params, jnp.bfloat16)

    # 1) f32 compute path, auto config (weight-resident mode at these shapes).
    out = jax.block_until_ready(fcnet_forward(x, pp_f32))
    assert out.shape == (batch, hidden_dim)
    assert jnp.allclose(out, ref, rtol=1e-4, atol=1e-4), \
        float(jnp.max(jnp.abs(out - ref)))

    # 2) f32, forced per-layer weight streaming + multiple row tiles (large-model path).
    out = jax.block_until_ready(
        fcnet_forward(x, pp_f32, block_rows=128, layers_per_block=1))
    assert jnp.allclose(out, ref, rtol=1e-4, atol=1e-4), \
        float(jnp.max(jnp.abs(out - ref)))

    # 3) bf16 matmul operands (performance default), auto config; f32 accumulation
    #    and f32 norms keep the error within bf16 operand rounding.
    out = jax.block_until_ready(fcnet_forward(x, pp_bf16))
    assert out.shape == (batch, hidden_dim)
    assert jnp.allclose(out, ref, rtol=5e-2, atol=5e-2), \
        float(jnp.max(jnp.abs(out - ref)))

    print("KERNEL_OK")
</pallas_src>

<mosaic_0001>
module attributes {stable_mosaic.version = 11 : i64} {
  func.func @fcnet_kernel(%arg0: i32, %arg1: i32, %arg2: memref<304x128xf32, #tpu.memory_space<vmem>>, %arg3: memref<128x128xf32, #tpu.memory_space<vmem>>, %arg4: memref<1x128xf32, #tpu.memory_space<vmem>>, %arg5: memref<128x128xf32, #tpu.memory_space<vmem>>, %arg6: memref<128x128xf32, #tpu.memory_space<vmem>>, %arg7: memref<2x128x128xf32, #tpu.memory_space<vmem>>, %arg8: memref<2x1x128xf32, #tpu.memory_space<vmem>>, %arg9: memref<2x128x128xf32, #tpu.memory_space<vmem>>, %arg10: memref<2x1x128xf32, #tpu.memory_space<vmem>>, %arg11: memref<2x128x128xf32, #tpu.memory_space<vmem>>, %arg12: memref<2x1x128xf32, #tpu.memory_space<vmem>>, %arg13: memref<304x128xf32, #tpu.memory_space<vmem>>, %arg14: memref<304x128xf32, #tpu.memory_space<vmem>>) attributes {dimension_semantics = [#tpu.dimension_semantics<parallel>, #tpu.dimension_semantics<arbitrary>], iteration_bounds = array<i64: 1, 1>, scalar_prefetch = 0 : i64, scratch_operands = 1 : i64, tpu.core_type = #tpu.core_type<tc>, window_params = [{transform_indices = @transform_0, window_bounds = array<i64: 304, 128>}, {pipeline_mode = #tpu.pipeline_mode<synchronous>, transform_indices = @transform_1, window_bounds = array<i64: 128, 128>}, {pipeline_mode = #tpu.pipeline_mode<synchronous>, transform_indices = @transform_2, window_bounds = array<i64: 1, 128>}, {pipeline_mode = #tpu.pipeline_mode<synchronous>, transform_indices = @transform_3, window_bounds = array<i64: 128, 128>}, {pipeline_mode = #tpu.pipeline_mode<synchronous>, transform_indices = @transform_4, window_bounds = array<i64: 128, 128>}, {transform_indices = @transform_5, window_bounds = array<i64: 2, 128, 128>}, {transform_indices = @transform_6, window_bounds = array<i64: 2, 1, 128>}, {transform_indices = @transform_7, window_bounds = array<i64: 2, 128, 128>}, {transform_indices = @transform_8, window_bounds = array<i64: 2, 1, 128>}, {transform_indices = @transform_9, window_bounds = array<i64: 2, 128, 128>}, {transform_indices = @transform_10, window_bounds = array<i64: 2, 1, 128>}, {transform_indices = @transform_11, window_bounds = array<i64: 304, 128>}]} {
    %c0_i32 = arith.constant 0 : i32
    %0 = arith.cmpi eq, %arg1, %c0_i32 : i32
    %1 = arith.extui %0 : i1 to i32
    %c0_i32_0 = arith.constant 0 : i32
    %2 = arith.cmpi ne, %1, %c0_i32_0 : i32
    scf.if %2 {
      %c0_70 = arith.constant 0 : index
      %c0_71 = arith.constant 0 : index
      %118 = vector.load %arg2[%c0_70, %c0_71] : memref<304x128xf32, #tpu.memory_space<vmem>>, vector<304x128xf32>
      %c0_72 = arith.constant 0 : index
      %c0_73 = arith.constant 0 : index
      %119 = vector.load %arg3[%c0_72, %c0_73] : memref<128x128xf32, #tpu.memory_space<vmem>>, vector<128x128xf32>
      %cst_74 = arith.constant dense<0.000000e+00> : vector<304x128xf32>
      %120 = tpu.matmul %118, %119, %cst_74 {dimension_numbers = #tpu.dot_dimension_numbers<[1], [0], [0], [1], [0, 0, 1, 1], [], []>} : vector<304x128xf32>, vector<128x128xf32>, vector<304x128xf32> -> vector<304x128xf32>
      %c0_75 = arith.constant 0 : index
      %c0_76 = arith.constant 0 : index
      %121 = vector.load %arg4[%c0_75, %c0_76] : memref<1x128xf32, #tpu.memory_space<vmem>>, vector<1x128xf32>
      %122 = vector.broadcast %121 : vector<1x128xf32> to vector<304x128xf32>
      %123 = arith.addf %120, %122 : vector<304x128xf32>
      %c0_77 = arith.constant 0 : index
      %c0_78 = arith.constant 0 : index
      %124 = vector.load %arg14[%c0_77, %c0_78] : memref<304x128xf32, #tpu.memory_space<vmem>>, vector<304x128xf32>
      tpu.vector_store %arg14[%c0_77, %c0_78], %123 {strides = array<i32>} : memref<304x128xf32, #tpu.memory_space<vmem>>, vector<304x128xf32>,
    } else {
    }
    %c0 = arith.constant 0 : index
    %c0_1 = arith.constant 0 : index
    %3 = vector.load %arg14[%c0, %c0_1] : memref<304x128xf32, #tpu.memory_space<vmem>>, vector<304x128xf32>
    %c0_2 = arith.constant 0 : index
    %c0_3 = arith.constant 0 : index
    %4 = vector.load %arg5[%c0_2, %c0_3] : memref<128x128xf32, #tpu.memory_space<vmem>>, vector<128x128xf32>
    %c0_4 = arith.constant 0 : index
    %c0_5 = arith.constant 0 : index
    %5 = vector.load %arg6[%c0_4, %c0_5] : memref<128x128xf32, #tpu.memory_space<vmem>>, vector<128x128xf32>
    %cst = arith.constant dense<0.000000e+00> : vector<304x128xf32>
    %6 = tpu.matmul %3, %4, %cst {dimension_numbers = #tpu.dot_dimension_numbers<[1], [0], [0], [1], [0, 0, 1, 1], [], []>} : vector<304x128xf32>, vector<128x128xf32>, vector<304x128xf32> -> vector<304x128xf32>
    %cst_6 = arith.constant dense<0.000000e+00> : vector<304x128xf32>
    %7 = tpu.matmul %6, %5, %cst_6 {dimension_numbers = #tpu.dot_dimension_numbers<[1], [0], [0], [1], [0, 0, 1, 1], [], []>} : vector<304x128xf32>, vector<128x128xf32>, vector<304x128xf32> -> vector<304x128xf32>
    %8 = arith.subf %3, %7 : vector<304x128xf32>
    %9 = arith.mulf %8, %8 : vector<304x128xf32>
    %cst_7 = arith.constant dense<0.000000e+00> : vector<304x128xf32>
    %10 = tpu.matmul %9, %4, %cst_7 {dimension_numbers = #tpu.dot_dimension_numbers<[1], [0], [0], [1], [0, 0, 1, 1], [], []>} : vector<304x128xf32>, vector<128x128xf32>, vector<304x128xf32> -> vector<304x128xf32>
    %cst_8 = arith.constant dense<0.000000e+00> : vector<304x128xf32>
    %11 = tpu.matmul %10, %5, %cst_8 {dimension_numbers = #tpu.dot_dimension_numbers<[1], [0], [0], [1], [0, 0, 1, 1], [], []>} : vector<304x128xf32>, vector<128x128xf32>, vector<304x128xf32> -> vector<304x128xf32>
    %cst_9 = arith.constant 0.000000e+00 : f32
    %12 = vector.broadcast %cst_9 : f32 to vector<304x128xf32>
    %13 = arith.maximumf %11, %12 : vector<304x128xf32>
    %cst_10 = arith.constant 9.99999974E-6 : f32
    %14 = vector.broadcast %cst_10 : f32 to vector<304x128xf32>
    %15 = arith.addf %13, %14 : vector<304x128xf32>
    %16 = math.rsqrt %15 : vector<304x128xf32>
    %17 = arith.mulf %8, %16 : vector<304x128xf32>
    %c0_11 = arith.constant 0 : index
    %c0_12 = arith.constant 0 : index
    %c0_13 = arith.constant 0 : index
    %18 = vector.load %arg7[%c0_11, %c0_12, %c0_13] : memref<2x128x128xf32, #tpu.memory_space<vmem>>, vector<1x128x128xf32>
    %19 = vector.shape_cast %18 : vector<1x128x128xf32> to vector<128x128xf32>
    %cst_14 = arith.constant dense<0.000000e+00> : vector<304x128xf32>
    %20 = tpu.matmul %17, %19, %cst_14 {dimension_numbers = #tpu.dot_dimension_numbers<[1], [0], [0], [1], [0, 0, 1, 1], [], []>} : vector<304x128xf32>, vector<128x128xf32>, vector<304x128xf32> -> vector<304x128xf32>
    %c0_15 = arith.constant 0 : index
    %c0_16 = arith.constant 0 : index
    %c0_17 = arith.constant 0 : index
    %21 = vector.load %arg8[%c0_15, %c0_16, %c0_17] : memref<2x1x128xf32, #tpu.memory_space<vmem>>, vector<1x1x128xf32>
    %22 = vector.shape_cast %21 : vector<1x1x128xf32> to vector<1x128xf32>
    %23 = vector.broadcast %22 : vector<1x128xf32> to vector<304x128xf32>
    %24 = arith.addf %20, %23 : vector<304x128xf32>
    %25 = arith.negf %24 : vector<304x128xf32>
    %26 = math.exp %25 : vector<304x128xf32>
    %cst_18 = arith.constant 1.000000e+00 : f32
    %27 = vector.broadcast %cst_18 : f32 to vector<304x128xf32>
    %28 = arith.addf %27, %26 : vector<304x128xf32>
    %29 = arith.divf %27, %28 : vector<304x128xf32>
    %30 = arith.mulf %24, %29 : vector<304x128xf32>
    %c0_19 = arith.constant 0 : index
    %c0_20 = arith.constant 0 : index
    %c0_21 = arith.constant 0 : index
    %31 = vector.load %arg9[%c0_19, %c0_20, %c0_21] : memref<2x128x128xf32, #tpu.memory_space<vmem>>, vector<1x128x128xf32>
    %32 = vector.shape_cast %31 : vector<1x128x128xf32> to vector<128x128xf32>
    %cst_22 = arith.constant dense<0.000000e+00> : vector<304x128xf32>
    %33 = tpu.matmul %30, %32, %cst_22 {dimension_numbers = #tpu.dot_dimension_numbers<[1], [0], [0], [1], [0, 0, 1, 1], [], []>} : vector<304x128xf32>, vector<128x128xf32>, vector<304x128xf32> -> vector<304x128xf32>
    %c0_23 = arith.constant 0 : index
    %c0_24 = arith.constant 0 : index
    %c0_25 = arith.constant 0 : index
    %34 = vector.load %arg10[%c0_23, %c0_24, %c0_25] : memref<2x1x128xf32, #tpu.memory_space<vmem>>, vector<1x1x128xf32>
    %35 = vector.shape_cast %34 : vector<1x1x128xf32> to vector<1x128xf32>
    %36 = vector.broadcast %35 : vector<1x128xf32> to vector<304x128xf32>
    %37 = arith.addf %33, %36 : vector<304x128xf32>
    %38 = arith.negf %37 : vector<304x128xf32>
    %39 = math.exp %38 : vector<304x128xf32>
    %cst_26 = arith.constant 1.000000e+00 : f32
    %40 = vector.broadcast %cst_26 : f32 to vector<304x128xf32>
    %41 = arith.addf %40, %39 : vector<304x128xf32>
    %42 = arith.divf %40, %41 : vector<304x128xf32>
    %43 = arith.mulf %37, %42 : vector<304x128xf32>
    %c0_27 = arith.constant 0 : index
    %c0_28 = arith.constant 0 : index
    %c0_29 = arith.constant 0 : index
    %44 = vector.load %arg11[%c0_27, %c0_28, %c0_29] : memref<2x128x128xf32, #tpu.memory_space<vmem>>, vector<1x128x128xf32>
    %45 = vector.shape_cast %44 : vector<1x128x128xf32> to vector<128x128xf32>
    %cst_30 = arith.constant dense<0.000000e+00> : vector<304x128xf32>
    %46 = tpu.matmul %43, %45, %cst_30 {dimension_numbers = #tpu.dot_dimension_numbers<[1], [0], [0], [1], [0, 0, 1, 1], [], []>} : vector<304x128xf32>, vector<128x128xf32>, vector<304x128xf32> -> vector<304x128xf32>
    %c0_31 = arith.constant 0 : index
    %c0_32 = arith.constant 0 : index
    %c0_33 = arith.constant 0 : index
    %47 = vector.load %arg12[%c0_31, %c0_32, %c0_33] : memref<2x1x128xf32, #tpu.memory_space<vmem>>, vector<1x1x128xf32>
    %48 = vector.shape_cast %47 : vector<1x1x128xf32> to vector<1x128xf32>
    %49 = vector.broadcast %48 : vector<1x128xf32> to vector<304x128xf32>
    %50 = arith.addf %46, %49 : vector<304x128xf32>
    %51 = arith.negf %50 : vector<304x128xf32>
    %52 = math.exp %51 : vector<304x128xf32>
    %cst_34 = arith.constant 1.000000e+00 : f32
    %53 = vector.broadcast %cst_34 : f32 to vector<304x128xf32>
    %54 = arith.addf %53, %52 : vector<304x128xf32>
    %55 = arith.divf %53, %54 : vector<304x128xf32>
    %56 = arith.mulf %50, %55 : vector<304x128xf32>
    %57 = arith.addf %3, %56 : vector<304x128xf32>
    %cst_35 = arith.constant 0.707106769 : f32
    %58 = vector.broadcast %cst_35 : f32 to vector<304x128xf32>
    %59 = arith.mulf %57, %58 : vector<304x128xf32>
    %cst_36 = arith.constant dense<0.000000e+00> : vector<304x128xf32>
    %60 = tpu.matmul %59, %4, %cst_36 {dimension_numbers = #tpu.dot_dimension_numbers<[1], [0], [0], [1], [0, 0, 1, 1], [], []>} : vector<304x128xf32>, vector<128x128xf32>, vector<304x128xf32> -> vector<304x128xf32>
    %cst_37 = arith.constant dense<0.000000e+00> : vector<304x128xf32>
    %61 = tpu.matmul %60, %5, %cst_37 {dimension_numbers = #tpu.dot_dimension_numbers<[1], [0], [0], [1], [0, 0, 1, 1], [], []>} : vector<304x128xf32>, vector<128x128xf32>, vector<304x128xf32> -> vector<304x128xf32>
    %62 = arith.subf %59, %61 : vector<304x128xf32>
    %63 = arith.mulf %62, %62 : vector<304x128xf32>
    %cst_38 = arith.constant dense<0.000000e+00> : vector<304x128xf32>
    %64 = tpu.matmul %63, %4, %cst_38 {dimension_numbers = #tpu.dot_dimension_numbers<[1], [0], [0], [1], [0, 0, 1, 1], [], []>} : vector<304x128xf32>, vector<128x128xf32>, vector<304x128xf32> -> vector<304x128xf32>
    %cst_39 = arith.constant dense<0.000000e+00> : vector<304x128xf32>
    %65 = tpu.matmul %64, %5, %cst_39 {dimension_numbers = #tpu.dot_dimension_numbers<[1], [0], [0], [1], [0, 0, 1, 1], [], []>} : vector<304x128xf32>, vector<128x128xf32>, vector<304x128xf32> -> vector<304x128xf32>
    %cst_40 = arith.constant 0.000000e+00 : f32
    %66 = vector.broadcast %cst_40 : f32 to vector<304x128xf32>
    %67 = arith.maximumf %65, %66 : vector<304x128xf32>
    %cst_41 = arith.constant 9.99999974E-6 : f32
    %68 = vector.broadcast %cst_41 : f32 to vector<304x128xf32>
    %69 = arith.addf %67, %68 : vector<304x128xf32>
    %70 = math.rsqrt %69 : vector<304x128xf32>
    %71 = arith.mulf %62, %70 : vector<304x128xf32>
    %c1 = arith.constant 1 : index
    %c0_42 = arith.constant 0 : index
    %c0_43 = arith.constant 0 : index
    %72 = vector.load %arg7[%c1, %c0_42, %c0_43] : memref<2x128x128xf32, #tpu.memory_space<vmem>>, vector<1x128x128xf32>
    %73 = vector.shape_cast %72 : vector<1x128x128xf32> to vector<128x128xf32>
    %cst_44 = arith.constant dense<0.000000e+00> : vector<304x128xf32>
    %74 = tpu.matmul %71, %73, %cst_44 {dimension_numbers = #tpu.dot_dimension_numbers<[1], [0], [0], [1], [0, 0, 1, 1], [], []>} : vector<304x128xf32>, vector<128x128xf32>, vector<304x128xf32> -> vector<304x128xf32>
    %c1_45 = arith.constant 1 : index
    %c0_46 = arith.constant 0 : index
    %c0_47 = arith.constant 0 : index
    %75 = vector.load %arg8[%c1_45, %c0_46, %c0_47] : memref<2x1x128xf32, #tpu.memory_space<vmem>>, vector<1x1x128xf32>
    %76 = vector.shape_cast %75 : vector<1x1x128xf32> to vector<1x128xf32>
    %77 = vector.broadcast %76 : vector<1x128xf32> to vector<304x128xf32>
    %78 = arith.addf %74, %77 : vector<304x128xf32>
    %79 = arith.negf %78 : vector<304x128xf32>
    %80 = math.exp %79 : vector<304x128xf32>
    %cst_48 = arith.constant 1.000000e+00 : f32
    %81 = vector.broadcast %cst_48 : f32 to vector<304x128xf32>
    %82 = arith.addf %81, %80 : vector<304x128xf32>
    %83 = arith.divf %81, %82 : vector<304x128xf32>
    %84 = arith.mulf %78, %83 : vector<304x128xf32>
    %c1_49 = arith.constant 1 : index
    %c0_50 = arith.constant 0 : index
    %c0_51 = arith.constant 0 : index
    %85 = vector.load %arg9[%c1_49, %c0_50, %c0_51] : memref<2x128x128xf32, #tpu.memory_space<vmem>>, vector<1x128x128xf32>
    %86 = vector.shape_cast %85 : vector<1x128x128xf32> to vector<128x128xf32>
    %cst_52 = arith.constant dense<0.000000e+00> : vector<304x128xf32>
    %87 = tpu.matmul %84, %86, %cst_52 {dimension_numbers = #tpu.dot_dimension_numbers<[1], [0], [0], [1], [0, 0, 1, 1], [], []>} : vector<304x128xf32>, vector<128x128xf32>, vector<304x128xf32> -> vector<304x128xf32>
    %c1_53 = arith.constant 1 : index
    %c0_54 = arith.constant 0 : index
    %c0_55 = arith.constant 0 : index
    %88 = vector.load %arg10[%c1_53, %c0_54, %c0_55] : memref<2x1x128xf32, #tpu.memory_space<vmem>>, vector<1x1x128xf32>
    %89 = vector.shape_cast %88 : vector<1x1x128xf32> to vector<1x128xf32>
    %90 = vector.broadcast %89 : vector<1x128xf32> to vector<304x128xf32>
    %91 = arith.addf %87, %90 : vector<304x128xf32>
    %92 = arith.negf %91 : vector<304x128xf32>
    %93 = math.exp %92 : vector<304x128xf32>
    %cst_56 = arith.constant 1.000000e+00 : f32
    %94 = vector.broadcast %cst_56 : f32 to vector<304x128xf32>
    %95 = arith.addf %94, %93 : vector<304x128xf32>
    %96 = arith.divf %94, %95 : vector<304x128xf32>
    %97 = arith.mulf %91, %96 : vector<304x128xf32>
    %c1_57 = arith.constant 1 : index
    %c0_58 = arith.constant 0 : index
    %c0_59 = arith.constant 0 : index
    %98 = vector.load %arg11[%c1_57, %c0_58, %c0_59] : memref<2x128x128xf32, #tpu.memory_space<vmem>>, vector<1x128x128xf32>
    %99 = vector.shape_cast %98 : vector<1x128x128xf32> to vector<128x128xf32>
    %cst_60 = arith.constant dense<0.000000e+00> : vector<304x128xf32>
    %100 = tpu.matmul %97, %99, %cst_60 {dimension_numbers = #tpu.dot_dimension_numbers<[1], [0], [0], [1], [0, 0, 1, 1], [], []>} : vector<304x128xf32>, vector<128x128xf32>, vector<304x128xf32> -> vector<304x128xf32>
    %c1_61 = arith.constant 1 : index
    %c0_62 = arith.constant 0 : index
    %c0_63 = arith.constant 0 : index
    %101 = vector.load %arg12[%c1_61, %c0_62, %c0_63] : memref<2x1x128xf32, #tpu.memory_space<vmem>>, vector<1x1x128xf32>
    %102 = vector.shape_cast %101 : vector<1x1x128xf32> to vector<1x128xf32>
    %103 = vector.broadcast %102 : vector<1x128xf32> to vector<304x128xf32>
    %104 = arith.addf %100, %103 : vector<304x128xf32>
    %105 = arith.negf %104 : vector<304x128xf32>
    %106 = math.exp %105 : vector<304x128xf32>
    %cst_64 = arith.constant 1.000000e+00 : f32
    %107 = vector.broadcast %cst_64 : f32 to vector<304x128xf32>
    %108 = arith.addf %107, %106 : vector<304x128xf32>
    %109 = arith.divf %107, %108 : vector<304x128xf32>
    %110 = arith.mulf %104, %109 : vector<304x128xf32>
    %111 = arith.addf %59, %110 : vector<304x128xf32>
    %cst_65 = arith.constant 0.707106769 : f32
    %112 = vector.broadcast %cst_65 : f32 to vector<304x128xf32>
    %113 = arith.mulf %111, %112 : vector<304x128xf32>
    %c0_66 = arith.constant 0 : index
    %c0_67 = arith.constant 0 : index
    %114 = vector.load %arg14[%c0_66, %c0_67] : memref<304x128xf32, #tpu.memory_space<vmem>>, vector<304x128xf32>
    tpu.vector_store %arg14[%c0_66, %c0_67], %113 {strides = array<i32>} : memref<304x128xf32, #tpu.memory_space<vmem>>, vector<304x128xf32>,
    %c0_i32_68 = arith.constant 0 : i32
    %115 = arith.cmpi eq, %arg1, %c0_i32_68 : i32
    %116 = arith.extui %115 : i1 to i32
    %c0_i32_69 = arith.constant 0 : i32
    %117 = arith.cmpi ne, %116, %c0_i32_69 : i32
    scf.if %117 {
      %c0_70 = arith.constant 0 : index
      %c0_71 = arith.constant 0 : index
      %118 = vector.load %arg14[%c0_70, %c0_71] : memref<304x128xf32, #tpu.memory_space<vmem>>, vector<304x128xf32>
      %c0_72 = arith.constant 0 : index
      %c0_73 = arith.constant 0 : index
      %119 = vector.load %arg13[%c0_72, %c0_73] : memref<304x128xf32, #tpu.memory_space<vmem>>, vector<304x128xf32>
      tpu.vector_store %arg13[%c0_72, %c0_73], %118 {strides = array<i32>} : memref<304x128xf32, #tpu.memory_space<vmem>>, vector<304x128xf32>,
    } else {
    }
    return
  }
  func.func @transform_0(%arg0: i32, %arg1: i32) -> (i32, i32) {
    %c0_i32 = arith.constant 0 : i32
    %c0_i32_0 = arith.constant 0 : i32
    return %arg0, %c0_i32 : i32, i32
  }
  func.func @transform_1(%arg0: i32, %arg1: i32) -> (i32, i32) {
    %c0_i32 = arith.constant 0 : i32
    %c0_i32_0 = arith.constant 0 : i32
    %c0_i32_1 = arith.constant 0 : i32
    return %c0_i32, %c0_i32_0 : i32, i32
  }
  func.func @transform_2(%arg0: i32, %arg1: i32) -> (i32, i32) {
    %c0_i32 = arith.constant 0 : i32
    %c0_i32_0 = arith.constant 0 : i32
    %c0_i32_1 = arith.constant 0 : i32
    return %c0_i32, %c0_i32_0 : i32, i32
  }
  func.func @transform_3(%arg0: i32, %arg1: i32) -> (i32, i32) {
    %c0_i32 = arith.constant 0 : i32
    %c0_i32_0 = arith.constant 0 : i32
    %c0_i32_1 = arith.constant 0 : i32
    return %c0_i32, %c0_i32_0 : i32, i32
  }
  func.func @transform_4(%arg0: i32, %arg1: i32) -> (i32, i32) {
    %c0_i32 = arith.constant 0 : i32
    %c0_i32_0 = arith.constant 0 : i32
    %c0_i32_1 = arith.constant 0 : i32
    return %c0_i32, %c0_i32_0 : i32, i32
  }
  func.func @transform_5(%arg0: i32, %arg1: i32) -> (i32, i32, i32) {
    %c0_i32 = arith.constant 0 : i32
    %c0_i32_0 = arith.constant 0 : i32
    %c0_i32_1 = arith.constant 0 : i32
    return %arg1, %c0_i32, %c0_i32_0 : i32, i32, i32
  }
  func.func @transform_6(%arg0: i32, %arg1: i32) -> (i32, i32, i32) {
    %c0_i32 = arith.constant 0 : i32
    %c0_i32_0 = arith.constant 0 : i32
    %c0_i32_1 = arith.constant 0 : i32
    return %arg1, %c0_i32, %c0_i32_0 : i32, i32, i32
  }
  func.func @transform_7(%arg0: i32, %arg1: i32) -> (i32, i32, i32) {
    %c0_i32 = arith.constant 0 : i32
    %c0_i32_0 = arith.constant 0 : i32
    %c0_i32_1 = arith.constant 0 : i32
    return %arg1, %c0_i32, %c0_i32_0 : i32, i32, i32
  }
  func.func @transform_8(%arg0: i32, %arg1: i32) -> (i32, i32, i32) {
    %c0_i32 = arith.constant 0 : i32
    %c0_i32_0 = arith.constant 0 : i32
    %c0_i32_1 = arith.constant 0 : i32
    return %arg1, %c0_i32, %c0_i32_0 : i32, i32, i32
  }
  func.func @transform_9(%arg0: i32, %arg1: i32) -> (i32, i32, i32) {
    %c0_i32 = arith.constant 0 : i32
    %c0_i32_0 = arith.constant 0 : i32
    %c0_i32_1 = arith.constant 0 : i32
    return %arg1, %c0_i32, %c0_i32_0 : i32, i32, i32
  }
  func.func @transform_10(%arg0: i32, %arg1: i32) -> (i32, i32, i32) {
    %c0_i32 = arith.constant 0 : i32
    %c0_i32_0 = arith.constant 0 : i32
    %c0_i32_1 = arith.constant 0 : i32
    return %arg1, %c0_i32, %c0_i32_0 : i32, i32, i32
  }
  func.func @transform_11(%arg0: i32, %arg1: i32) -> (i32, i32) {
    %c0_i32 = arith.constant 0 : i32
    %c0_i32_0 = arith.constant 0 : i32
    return %arg0, %c0_i32 : i32, i32
  }
}

</mosaic_0001>

<llo_original>
// kernel: tpu_custom_call.1
$region0: #{tpu_custom_call.1}
  #allocation0 [shape = 'u32[]', space=smem, size = 0x4, offset = 0x4, fixed_abs, tag = 'smem constant byte address 0x4 - core index']
  #allocation1 [shape = 'u32[144,128]{1,0:T(1,128)}', space=vmem, size = 0x12000, scoped, tag = 'internal scratch']
  #allocation2 [shape = 'f32[304,128]{1,0:T(8,128)}', space=vmem, size = 0x26000, scoped, tag = 'scratch operand']
  %s0 = inlined_call_operand.hbm [shape: f32[304,128], index: 0, kind: input, shape index: {}]
  %s1 = inlined_call_operand.hbm [shape: f32[128,128], index: 1, kind: input, shape index: {}]
  %s2 = inlined_call_operand.vmem [shape: f32[1,128], index: 2, kind: input, shape index: {}]
  %s3 = inlined_call_operand.hbm [shape: f32[128,128], index: 3, kind: input, shape index: {}]
  %s4 = inlined_call_operand.hbm [shape: f32[128,128], index: 4, kind: input, shape index: {}]
  %s5 = inlined_call_operand.hbm [shape: f32[2,128,128], index: 5, kind: input, shape index: {}]
  %s6 = inlined_call_operand.vmem [shape: f32[2,1,128], index: 6, kind: input, shape index: {}]
  %s7 = inlined_call_operand.hbm [shape: f32[2,128,128], index: 7, kind: input, shape index: {}]
  %s8 = inlined_call_operand.vmem [shape: f32[2,1,128], index: 8, kind: input, shape index: {}]
  %s9 = inlined_call_operand.hbm [shape: f32[2,128,128], index: 9, kind: input, shape index: {}]
  %s10 = inlined_call_operand.vmem [shape: f32[2,1,128], index: 10, kind: input, shape index: {}]
  %s11 = inlined_call_operand.hbm [shape: f32[304,128], index: 11, kind: output, shape index: {}]
  %s12 = sld [smem:[#allocation0]]
  $region90: #{tpu_custom_call.1} parent=0
    _
  %s14 = ssub.s32 1, %s12
  %s15 = scalar_select 0, %s14, %s12
  $region1: #{tpu_custom_call.1} parent=0
    #allocation3 [shape = 'u8[155648]{0}', space=vmem, size = 0x26000, scoped, tag = 'input window, operand 0, single buffered']
    #allocation4 [shape = 's32[1]{0}', space=sflag, size = 0x4, scoped, tag = 'scoped memory for tpu_custom_call.1']
    #allocation5 [shape = 's32[1]{0}', space=sflag, size = 0x4, scoped, tag = 'scoped memory for tpu_custom_call.1']
    #allocation6 [shape = 'u8[65536]{0}', space=vmem, size = 0x10000, scoped, tag = 'input window, operand 1, single buffered']
    #allocation7 [shape = 's32[1]{0}', space=sflag, size = 0x4, scoped, tag = 'scoped memory for tpu_custom_call.1']
    #allocation8 [shape = 'u8[65536]{0}', space=vmem, size = 0x10000, scoped, tag = 'input window, operand 3, single buffered']
    #allocation9 [shape = 'u8[65536]{0}', space=vmem, size = 0x10000, scoped, tag = 'input window, operand 4, single buffered']
    #allocation10 [shape = 's32[1]{0}', space=sflag, size = 0x4, scoped, tag = 'scoped memory for tpu_custom_call.1']
    #allocation11 [shape = 'u8[131072]{0}', space=vmem, size = 0x20000, scoped, tag = 'input window, operand 5, single buffered']
    #allocation12 [shape = 'u8[131072]{0}', space=vmem, size = 0x20000, scoped, tag = 'input window, operand 7, single buffered']
    #allocation13 [shape = 's32[1]{0}', space=sflag, size = 0x4, scoped, tag = 'scoped memory for tpu_custom_call.1']
    #allocation14 [shape = 'u8[131072]{0}', space=vmem, size = 0x20000, scoped, tag = 'input window, operand 9, single buffered']
    #allocation15 [shape = 'u8[155648]{0}', space=vmem, size = 0x26000, scoped, tag = 'output window, operand 0, single buffered']
    %16 = vsyncpa [#allocation4], 0
    %17 = vsyncpa [#allocation7], 0
    %18 = vsyncpa [#allocation10], 0
    %19 = vsyncpa [#allocation13], 0
    %20 = vsyncpa [#allocation5], 0
    // Predicated region
    $region2: #{tpu_custom_call.1} parent=1 // pred_check
      _
    $region3: #{tpu_custom_call.1} parent=1 // pred_check_branch
      %22 = sbr.rel (0) target = $region5
    $region4: #{tpu_custom_call.1} parent=1 // pred_region
      %s24 = ssub.s32 4864, 4864
      %25 = vsyncadd [#allocation4], %s24
      %s26 = sshll.u32 [#allocation3], 4
      %s27 = int_to_ptr.vmem [resolvable:$true] %s26
      %32 = dma.hbm_to_vmem [thread:$0]  %s0, 4864, %s27, [#allocation4], 128, 128, 8
    $region5: #{tpu_custom_call.1} parent=1 // pred_fallthru
      _
    // Predicated region
    $region6: #{tpu_custom_call.1} parent=1 // pred_check
      _
    $region7: #{tpu_custom_call.1} parent=1 // pred_check_branch
      %34 = sbr.rel (0) target = $region9
    $region8: #{tpu_custom_call.1} parent=1 // pred_region
      %s36 = ssub.s32 2048, 2048
      %37 = vsyncadd [#allocation7], %s36
      %s38 = sshll.u32 [#allocation6], 4
      %s39 = int_to_ptr.vmem [resolvable:$true] %s38
      %44 = dma.hbm_to_vmem [thread:$0]  %s1, 2048, %s39, [#allocation7], 128, 128, 8
    $region9: #{tpu_custom_call.1} parent=1 // pred_fallthru
      _
    // Predicated region
    $region10: #{tpu_custom_call.1} parent=1 // pred_check
      _
    $region11: #{tpu_custom_call.1} parent=1 // pred_check_branch
      %46 = sbr.rel (0) target = $region13
    $region12: #{tpu_custom_call.1} parent=1 // pred_region
      _
    $region13: #{tpu_custom_call.1} parent=1 // pred_fallthru
      _
    // Predicated region
    $region14: #{tpu_custom_call.1} parent=1 // pred_check
      _
    $region15: #{tpu_custom_call.1} parent=1 // pred_check_branch
      %48 = sbr.rel (0) target = $region17
    $region16: #{tpu_custom_call.1} parent=1 // pred_region
      %s50 = ssub.s32 2048, 2048
      %51 = vsyncadd [#allocation7], %s50
      %s52 = sshll.u32 [#allocation8], 4
      %s53 = int_to_ptr.vmem [resolvable:$true] %s52
      %58 = dma.hbm_to_vmem [thread:$0]  %s3, 2048, %s53, [#allocation7], 128, 128, 8
    $region17: #{tpu_custom_call.1} parent=1 // pred_fallthru
      _
    // Predicated region
    $region18: #{tpu_custom_call.1} parent=1 // pred_check
      _
    $region19: #{tpu_custom_call.1} parent=1 // pred_check_branch
      %60 = sbr.rel (0) target = $region21
    $region20: #{tpu_custom_call.1} parent=1 // pred_region
      %s62 = ssub.s32 2048, 2048
      %63 = vsyncadd [#allocation10], %s62
      %s64 = sshll.u32 [#allocation9], 4
      %s65 = int_to_ptr.vmem [resolvable:$true] %s64
      %70 = dma.hbm_to_vmem [thread:$0]  %s4, 2048, %s65, [#allocation10], 128, 128, 8
    $region21: #{tpu_custom_call.1} parent=1 // pred_fallthru
      _
    // Predicated region
    $region22: #{tpu_custom_call.1} parent=1 // pred_check
      _
    $region23: #{tpu_custom_call.1} parent=1 // pred_check_branch
      %72 = sbr.rel (0) target = $region25
    $region24: #{tpu_custom_call.1} parent=1 // pred_region
      %s74 = ssub.s32 4096, 4096
      %75 = vsyncadd [#allocation10], %s74
      %s76 = sshll.u32 [#allocation11], 4
      %s77 = int_to_ptr.vmem [resolvable:$true] %s76
      %82 = dma.hbm_to_vmem [thread:$0]  %s5, 4096, %s77, [#allocation10], 128, 128, 8
    $region25: #{tpu_custom_call.1} parent=1 // pred_fallthru
      _
    // Predicated region
    $region26: #{tpu_custom_call.1} parent=1 // pred_check
      _
    $region27: #{tpu_custom_call.1} parent=1 // pred_check_branch
      %84 = sbr.rel (0) target = $region29
    $region28: #{tpu_custom_call.1} parent=1 // pred_region
      _
    $region29: #{tpu_custom_call.1} parent=1 // pred_fallthru
      _
    // Predicated region
    $region30: #{tpu_custom_call.1} parent=1 // pred_check
      _
    $region31: #{tpu_custom_call.1} parent=1 // pred_check_branch
      %86 = sbr.rel (0) target = $region33
    $region32: #{tpu_custom_call.1} parent=1 // pred_region
      %s88 = ssub.s32 4096, 4096
      %89 = vsyncadd [#allocation13], %s88
      %s90 = sshll.u32 [#allocation12], 4
      %s91 = int_to_ptr.vmem [resolvable:$true] %s90
      %96 = dma.hbm_to_vmem [thread:$0]  %s7, 4096, %s91, [#allocation13], 128, 128, 8
    $region33: #{tpu_custom_call.1} parent=1 // pred_fallthru
      _
    // Predicated region
    $region34: #{tpu_custom_call.1} parent=1 // pred_check
      _
    $region35: #{tpu_custom_call.1} parent=1 // pred_check_branch
      %98 = sbr.rel (0) target = $region37
    $region36: #{tpu_custom_call.1} parent=1 // pred_region
      _
    $region37: #{tpu_custom_call.1} parent=1 // pred_fallthru
      _
    // Predicated region
    $region38: #{tpu_custom_call.1} parent=1 // pred_check
      _
    $region39: #{tpu_custom_call.1} parent=1 // pred_check_branch
      %100 = sbr.rel (0) target = $region41
    $region40: #{tpu_custom_call.1} parent=1 // pred_region
      %s102 = ssub.s32 4096, 4096
      %103 = vsyncadd [#allocation13], %s102
      %s104 = sshll.u32 [#allocation14], 4
      %s105 = int_to_ptr.vmem [resolvable:$true] %s104
      %110 = dma.hbm_to_vmem [thread:$0]  %s9, 4096, %s105, [#allocation13], 128, 128, 8
    $region41: #{tpu_custom_call.1} parent=1 // pred_fallthru
      _
    // Predicated region
    $region42: #{tpu_custom_call.1} parent=1 // pred_check
      _
    $region43: #{tpu_custom_call.1} parent=1 // pred_check_branch
      %112 = sbr.rel (0) target = $region45
    $region44: #{tpu_custom_call.1} parent=1 // pred_region
      _
    $region45: #{tpu_custom_call.1} parent=1 // pred_fallthru
      _
    // Predicated region
    $region46: #{tpu_custom_call.1} parent=1 // pred_check
      _
    $region47: #{tpu_custom_call.1} parent=1 // pred_check_branch
      %114 = sbr.rel (0) target = $region49
    $region48: #{tpu_custom_call.1} parent=1 // pred_region
      %115 = dma.done [#allocation4], 4864
    $region49: #{tpu_custom_call.1} parent=1 // pred_fallthru
      _
    // Predicated region
    $region50: #{tpu_custom_call.1} parent=1 // pred_check
      _
    $region51: #{tpu_custom_call.1} parent=1 // pred_check_branch
      %117 = sbr.rel (0) target = $region53
    $region52: #{tpu_custom_call.1} parent=1 // pred_region
      %118 = dma.done [#allocation7], 2048
    $region53: #{tpu_custom_call.1} parent=1 // pred_fallthru
      _
    // Predicated region
    $region54: #{tpu_custom_call.1} parent=1 // pred_check
      _
    $region55: #{tpu_custom_call.1} parent=1 // pred_check_branch
      %120 = sbr.rel (0) target = $region57
    $region56: #{tpu_custom_call.1} parent=1 // pred_region
      %121 = dma.done [#allocation7], 2048
    $region57: #{tpu_custom_call.1} parent=1 // pred_fallthru
      _
    // Predicated region
    $region58: #{tpu_custom_call.1} parent=1 // pred_check
      _
    $region59: #{tpu_custom_call.1} parent=1 // pred_check_branch
      %123 = sbr.rel (0) target = $region61
    $region60: #{tpu_custom_call.1} parent=1 // pred_region
      %124 = dma.done [#allocation10], 2048
    $region61: #{tpu_custom_call.1} parent=1 // pred_fallthru
      _
    // Predicated region
    $region62: #{tpu_custom_call.1} parent=1 // pred_check
      _
    $region63: #{tpu_custom_call.1} parent=1 // pred_check_branch
      %126 = sbr.rel (0) target = $region65
    $region64: #{tpu_custom_call.1} parent=1 // pred_region
      %127 = dma.done [#allocation10], 4096
    $region65: #{tpu_custom_call.1} parent=1 // pred_fallthru
      _
    // Predicated region
    $region66: #{tpu_custom_call.1} parent=1 // pred_check
      _
    $region67: #{tpu_custom_call.1} parent=1 // pred_check_branch
      %129 = sbr.rel (0) target = $region69
    $region68: #{tpu_custom_call.1} parent=1 // pred_region
      %130 = dma.done [#allocation13], 4096
    $region69: #{tpu_custom_call.1} parent=1 // pred_fallthru
      _
    // Predicated region
    $region70: #{tpu_custom_call.1} parent=1 // pred_check
      _
    $region71: #{tpu_custom_call.1} parent=1 // pred_check_branch
      %132 = sbr.rel (0) target = $region73
    $region72: #{tpu_custom_call.1} parent=1 // pred_region
      %133 = dma.done [#allocation13], 4096
    $region73: #{tpu_custom_call.1} parent=1 // pred_fallthru
      _
    %p134 = scmp.eq.s32.totalorder 0, 0
    // Predicated region
    $region74: #{tpu_custom_call.1} parent=1 // pred_check
      %p135 = pneg %p134
    $region75: #{tpu_custom_call.1} parent=1 // pred_check_branch
      %137 = sbr.rel (%p135) target = $region77
    $region76: #{tpu_custom_call.1} parent=1 // pred_region
      %v138 = vld [vmem:[#allocation3] sm:$0xff]
      %v139 = vld [vmem:[#allocation3 + $0x8] sm:$0xff]
      %v140 = vld [vmem:[#allocation3 + $0x10] sm:$0xff]
      %v141 = vld [vmem:[#allocation3 + $0x18] sm:$0xff]
      %v142 = vld [vmem:[#allocation3 + $0x20] sm:$0xff]
      %v143 = vld [vmem:[#allocation3 + $0x28] sm:$0xff]
      %v144 = vld [vmem:[#allocation3 + $0x30] sm:$0xff]
      %v145 = vld [vmem:[#allocation3 + $0x38] sm:$0xff]
      %v146 = vld [vmem:[#allocation3 + $0x40] sm:$0xff]
      %v147 = vld [vmem:[#allocation3 + $0x48] sm:$0xff]
      %v148 = vld [vmem:[#allocation3 + $0x50] sm:$0xff]
      %v149 = vld [vmem:[#allocation3 + $0x58] sm:$0xff]
      %v150 = vld [vmem:[#allocation3 + $0x60] sm:$0xff]
      %v151 = vld [vmem:[#allocation3 + $0x68] sm:$0xff]
      %v152 = vld [vmem:[#allocation3 + $0x70] sm:$0xff]
      %v153 = vld [vmem:[#allocation3 + $0x78] sm:$0xff]
      %v154 = vld [vmem:[#allocation3 + $0x80] sm:$0xff]
      %v155 = vld [vmem:[#allocation3 + $0x88] sm:$0xff]
      %v156 = vld [vmem:[#allocation3 + $0x90] sm:$0xff]
      %v157 = vld [vmem:[#allocation3 + $0x98] sm:$0xff]
      %v158 = vld [vmem:[#allocation3 + $0xa0] sm:$0xff]
      %v159 = vld [vmem:[#allocation3 + $0xa8] sm:$0xff]
      %v160 = vld [vmem:[#allocation3 + $0xb0] sm:$0xff]
      %v161 = vld [vmem:[#allocation3 + $0xb8] sm:$0xff]
      %v162 = vld [vmem:[#allocation3 + $0xc0] sm:$0xff]
      %v163 = vld [vmem:[#allocation3 + $0xc8] sm:$0xff]
      %v164 = vld [vmem:[#allocation3 + $0xd0] sm:$0xff]
      %v165 = vld [vmem:[#allocation3 + $0xd8] sm:$0xff]
      %v166 = vld [vmem:[#allocation3 + $0xe0] sm:$0xff]
      %v167 = vld [vmem:[#allocation3 + $0xe8] sm:$0xff]
      %v168 = vld [vmem:[#allocation3 + $0xf0] sm:$0xff]
      %v169 = vld [vmem:[#allocation3 + $0xf8] sm:$0xff]
      %v170 = vld [vmem:[#allocation3 + $0x100] sm:$0xff]
      %v171 = vld [vmem:[#allocation3 + $0x108] sm:$0xff]
      %v172 = vld [vmem:[#allocation3 + $0x110] sm:$0xff]
      %v173 = vld [vmem:[#allocation3 + $0x118] sm:$0xff]
      %v174 = vld [vmem:[#allocation3 + $0x120] sm:$0xff]
      %v175 = vld [vmem:[#allocation3 + $0x128] sm:$0xff]
      %v176 = vld [vmem:[#allocation6] sm:$0xff]
      %v177 = vld [vmem:[#allocation6 + $0x8] sm:$0xff]
      %v178 = vld [vmem:[#allocation6 + $0x10] sm:$0xff]
      %v179 = vld [vmem:[#allocation6 + $0x18] sm:$0xff]
      %v180 = vld [vmem:[#allocation6 + $0x20] sm:$0xff]
      %v181 = vld [vmem:[#allocation6 + $0x28] sm:$0xff]
      %v182 = vld [vmem:[#allocation6 + $0x30] sm:$0xff]
      %v183 = vld [vmem:[#allocation6 + $0x38] sm:$0xff]
      %v184 = vld [vmem:[#allocation6 + $0x40] sm:$0xff]
      %v185 = vld [vmem:[#allocation6 + $0x48] sm:$0xff]
      %v186 = vld [vmem:[#allocation6 + $0x50] sm:$0xff]
      %v187 = vld [vmem:[#allocation6 + $0x58] sm:$0xff]
      %v188 = vld [vmem:[#allocation6 + $0x60] sm:$0xff]
      %v189 = vld [vmem:[#allocation6 + $0x68] sm:$0xff]
      %v190 = vld [vmem:[#allocation6 + $0x70] sm:$0xff]
      %v191 = vld [vmem:[#allocation6 + $0x78] sm:$0xff]
      %v192 = vld [vmem:[%s2] sm:$0x1]
      %v194 = vlaneseq
      %v195 = vshrl.u32 %v194, 7
      %v196 = vsub.s32 0, %v195
      %v197 = vrot.slane %v192, %v196
      %199 = vmatprep.subr.mxu0 0.0
      %200 = vmatpush1.msra.mxu0 %v176
      %201 = vmatprep.subr.mxu0 0.0
      %202 = vmatpush1.msra.mxu0 %v177
      %203 = vmatprep.subr.mxu0 0.0
      %204 = vmatpush1.msra.mxu0 %v178
      %205 = vmatprep.subr.mxu0 0.0
      %206 = vmatpush1.msra.mxu0 %v179
      %207 = vmatprep.subr.mxu0 0.0
      %208 = vmatpush1.msra.mxu0 %v180
      %209 = vmatprep.subr.mxu0 0.0
      %210 = vmatpush1.msra.mxu0 %v181
      %211 = vmatprep.subr.mxu0 0.0
      %212 = vmatpush1.msra.mxu0 %v182
      %213 = vmatprep.subr.mxu0 0.0
      %214 = vmatpush1.msra.mxu0 %v183
      %215 = vmatprep.subr.mxu0 0.0
      %216 = vmatpush1.msra.mxu0 %v184
      %217 = vmatprep.subr.mxu0 0.0
      %218 = vmatpush1.msra.mxu0 %v185
      %219 = vmatprep.subr.mxu0 0.0
      %220 = vmatpush1.msra.mxu0 %v186
      %221 = vmatprep.subr.mxu0 0.0
      %222 = vmatpush1.msra.mxu0 %v187
      %223 = vmatprep.subr.mxu0 0.0
      %224 = vmatpush1.msra.mxu0 %v188
      %225 = vmatprep.subr.mxu0 0.0
      %226 = vmatpush1.msra.mxu0 %v189
      %227 = vmatprep.subr.mxu0 0.0
      %228 = vmatpush1.msra.mxu0 %v190
      %229 = vmatprep.subr.mxu0 0.0
      %230 = vmatpush1.msra.mxu0 %v191
      %231 = vmatprep.subr.mxu0 0.0
      %232 = vmatpush1.msra.mxu0 0.0
      %233 = vmatprep.subr.mxu0 0.0
      %234 = vmatpush1.msra.mxu0 0.0
      %235 = vmatprep.subr.mxu0 0.0
      %236 = vmatpush1.msra.mxu0 0.0
      %237 = vmatprep.subr.mxu0 0.0
      %238 = vmatpush1.msra.mxu0 0.0
      %239 = vmatprep.subr.mxu0 0.0
      %240 = vmatpush1.msra.mxu0 0.0
      %241 = vmatprep.subr.mxu0 0.0
      %242 = vmatpush1.msra.mxu0 0.0
      %243 = vmatprep.subr.mxu0 0.0
      %244 = vmatpush1.msra.mxu0 0.0
      %245 = vmatprep.subr.mxu0 0.0
      %246 = vmatpush1.msra.mxu0 0.0
      %247 = vmatprep.subr.mxu0 0.0
      %248 = vmatpush1.msra.mxu0 0.0
      %249 = vmatprep.subr.mxu0 0.0
      %250 = vmatpush1.msra.mxu0 0.0
      %251 = vmatprep.subr.mxu0 0.0
      %252 = vmatpush1.msra.mxu0 0.0
      %253 = vmatprep.subr.mxu0 0.0
      %254 = vmatpush1.msra.mxu0 0.0
      %255 = vmatprep.subr.mxu0 0.0
      %256 = vmatpush1.msra.mxu0 0.0
      %257 = vmatprep.subr.mxu0 0.0
      %258 = vmatpush1.msra.mxu0 0.0
      %259 = vmatprep.subr.mxu0 0.0
      %260 = vmatpush1.msra.mxu0 0.0
      %261 = vmatprep.subr.mxu0 0.0
      %262 = vmatpush1.msra.mxu0 0.0
      %263 = vmatprep.mubr.f32.mxu0 0.0
      %264 = vmatmul.mubr.f32.gmra.mrb[0].mxu0 %v138
      %v265 = vpop.f32.mrb[0].mxu0
      %v266 = vadd.f32 %v197, %v265
      %v267 = vpop.f32.mrb[0].mxu0
      %268 = vmatprep.mubr.f32.mxu0 0.0
      %269 = vmatmul.mubr.f32.gmra.mrb[0].mxu0 %v139
      %v270 = vpop.f32.mrb[0].mxu0
      %v271 = vadd.f32 %v197, %v270
      %v272 = vpop.f32.mrb[0].mxu0
      %273 = vmatprep.mubr.f32.mxu0 0.0
      %274 = vmatmul.mubr.f32.gmra.mrb[0].mxu0 %v140
      %v275 = vpop.f32.mrb[0].mxu0
      %v276 = vadd.f32 %v197, %v275
      %v277 = vpop.f32.mrb[0].mxu0
      %278 = vmatprep.mubr.f32.mxu0 0.0
      %279 = vmatmul.mubr.f32.gmra.mrb[0].mxu0 %v141
      %v280 = vpop.f32.mrb[0].mxu0
      %v281 = vadd.f32 %v197, %v280
      %v282 = vpop.f32.mrb[0].mxu0
      %283 = vmatprep.mubr.f32.mxu0 0.0
      %284 = vmatmul.mubr.f32.gmra.mrb[0].mxu0 %v142
      %v285 = vpop.f32.mrb[0].mxu0
      %v286 = vadd.f32 %v197, %v285
      %v287 = vpop.f32.mrb[0].mxu0
      %288 = vmatprep.mubr.f32.mxu0 0.0
      %289 = vmatmul.mubr.f32.gmra.mrb[0].mxu0 %v143
      %v290 = vpop.f32.mrb[0].mxu0
      %v291 = vadd.f32 %v197, %v290
      %v292 = vpop.f32.mrb[0].mxu0
      %293 = vmatprep.mubr.f32.mxu0 0.0
      %294 = vmatmul.mubr.f32.gmra.mrb[0].mxu0 %v144
      %v295 = vpop.f32.mrb[0].mxu0
      %v296 = vadd.f32 %v197, %v295
      %v297 = vpop.f32.mrb[0].mxu0
      %298 = vmatprep.mubr.f32.mxu0 0.0
      %299 = vmatmul.mubr.f32.gmra.mrb[0].mxu0 %v145
      %v300 = vpop.f32.mrb[0].mxu0
      %v301 = vadd.f32 %v197, %v300
      %v302 = vpop.f32.mrb[0].mxu0
      %303 = vmatprep.mubr.f32.mxu0 0.0
      %304 = vmatmul.mubr.f32.gmra.mrb[0].mxu0 %v146
      %v305 = vpop.f32.mrb[0].mxu0
      %v306 = vadd.f32 %v197, %v305
      %v307 = vpop.f32.mrb[0].mxu0
      %308 = vmatprep.mubr.f32.mxu0 0.0
      %309 = vmatmul.mubr.f32.gmra.mrb[0].mxu0 %v147
      %v310 = vpop.f32.mrb[0].mxu0
      %v311 = vadd.f32 %v197, %v310
      %v312 = vpop.f32.mrb[0].mxu0
      %313 = vmatprep.mubr.f32.mxu0 0.0
      %314 = vmatmul.mubr.f32.gmra.mrb[0].mxu0 %v148
      %v315 = vpop.f32.mrb[0].mxu0
      %v316 = vadd.f32 %v197, %v315
      %v317 = vpop.f32.mrb[0].mxu0
      %318 = vmatprep.mubr.f32.mxu0 0.0
      %319 = vmatmul.mubr.f32.gmra.mrb[0].mxu0 %v149
      %v320 = vpop.f32.mrb[0].mxu0
      %v321 = vadd.f32 %v197, %v320
      %v322 = vpop.f32.mrb[0].mxu0
      %323 = vmatprep.mubr.f32.mxu0 0.0
      %324 = vmatmul.mubr.f32.gmra.mrb[0].mxu0 %v150
      %v325 = vpop.f32.mrb[0].mxu0
      %v326 = vadd.f32 %v197, %v325
      %v327 = vpop.f32.mrb[0].mxu0
      %328 = vmatprep.mubr.f32.mxu0 0.0
      %329 = vmatmul.mubr.f32.gmra.mrb[0].mxu0 %v151
      %v330 = vpop.f32.mrb[0].mxu0
      %v331 = vadd.f32 %v197, %v330
      %v332 = vpop.f32.mrb[0].mxu0
      %333 = vmatprep.mubr.f32.mxu0 0.0
      %334 = vmatmul.mubr.f32.gmra.mrb[0].mxu0 %v152
      %v335 = vpop.f32.mrb[0].mxu0
      %v336 = vadd.f32 %v197, %v335
      %v337 = vpop.f32.mrb[0].mxu0
      %338 = vmatprep.mubr.f32.mxu0 0.0
      %339 = vmatmul.mubr.f32.gmra.mrb[0].mxu0 %v153
      %v340 = vpop.f32.mrb[0].mxu0
      %v341 = vadd.f32 %v197, %v340
      %v342 = vpop.f32.mrb[0].mxu0
      %343 = vmatprep.mubr.f32.mxu0 0.0
      %344 = vmatmul.mubr.f32.gmra.mrb[0].mxu0 %v154
      %v345 = vpop.f32.mrb[0].mxu0
      %v346 = vadd.f32 %v197, %v345
      %v347 = vpop.f32.mrb[0].mxu0
      %348 = vmatprep.mubr.f32.mxu0 0.0
      %349 = vmatmul.mubr.f32.gmra.mrb[0].mxu0 %v155
      %v350 = vpop.f32.mrb[0].mxu0
      %v351 = vadd.f32 %v197, %v350
      %v352 = vpop.f32.mrb[0].mxu0
      %353 = vmatprep.mubr.f32.mxu0 0.0
      %354 = vmatmul.mubr.f32.gmra.mrb[0].mxu0 %v156
      %v355 = vpop.f32.mrb[0].mxu0
      %v356 = vadd.f32 %v197, %v355
      %v357 = vpop.f32.mrb[0].mxu0
      %358 = vmatprep.mubr.f32.mxu0 0.0
      %359 = vmatmul.mubr.f32.gmra.mrb[0].mxu0 %v157
      %v360 = vpop.f32.mrb[0].mxu0
      %v361 = vadd.f32 %v197, %v360
      %v362 = vpop.f32.mrb[0].mxu0
      %363 = vmatprep.mubr.f32.mxu0 0.0
      %364 = vmatmul.mubr.f32.gmra.mrb[0].mxu0 %v158
      %v365 = vpop.f32.mrb[0].mxu0
      %v366 = vadd.f32 %v197, %v365
      %v367 = vpop.f32.mrb[0].mxu0
      %368 = vmatprep.mubr.f32.mxu0 0.0
      %369 = vmatmul.mubr.f32.gmra.mrb[0].mxu0 %v159
      %v370 = vpop.f32.mrb[0].mxu0
      %v371 = vadd.f32 %v197, %v370
      %v372 = vpop.f32.mrb[0].mxu0
      %373 = vmatprep.mubr.f32.mxu0 0.0
      %374 = vmatmul.mubr.f32.gmra.mrb[0].mxu0 %v160
      %v375 = vpop.f32.mrb[0].mxu0
      %v376 = vadd.f32 %v197, %v375
      %v377 = vpop.f32.mrb[0].mxu0
      %378 = vmatprep.mubr.f32.mxu0 0.0
      %379 = vmatmul.mubr.f32.gmra.mrb[0].mxu0 %v161
      %v380 = vpop.f32.mrb[0].mxu0
      %v381 = vadd.f32 %v197, %v380
      %v382 = vpop.f32.mrb[0].mxu0
      %383 = vmatprep.mubr.f32.mxu0 0.0
      %384 = vmatmul.mubr.f32.gmra.mrb[0].mxu0 %v162
      %v385 = vpop.f32.mrb[0].mxu0
      %v386 = vadd.f32 %v197, %v385
      %v387 = vpop.f32.mrb[0].mxu0
      %388 = vmatprep.mubr.f32.mxu0 0.0
      %389 = vmatmul.mubr.f32.gmra.mrb[0].mxu0 %v163
      %v390 = vpop.f32.mrb[0].mxu0
      %v391 = vadd.f32 %v197, %v390
      %v392 = vpop.f32.mrb[0].mxu0
      %393 = vmatprep.mubr.f32.mxu0 0.0
      %394 = vmatmul.mubr.f32.gmra.mrb[0].mxu0 %v164
      %v395 = vpop.f32.mrb[0].mxu0
      %v396 = vadd.f32 %v197, %v395
      %v397 = vpop.f32.mrb[0].mxu0
      %398 = vmatprep.mubr.f32.mxu0 0.0
      %399 = vmatmul.mubr.f32.gmra.mrb[0].mxu0 %v165
      %v400 = vpop.f32.mrb[0].mxu0
      %v401 = vadd.f32 %v197, %v400
      %v402 = vpop.f32.mrb[0].mxu0
      %403 = vmatprep.mubr.f32.mxu0 0.0
      %404 = vmatmul.mubr.f32.gmra.mrb[0].mxu0 %v166
      %v405 = vpop.f32.mrb[0].mxu0
      %v406 = vadd.f32 %v197, %v405
      %v407 = vpop.f32.mrb[0].mxu0
      %408 = vmatprep.mubr.f32.mxu0 0.0
      %409 = vmatmul.mubr.f32.gmra.mrb[0].mxu0 %v167
      %v410 = vpop.f32.mrb[0].mxu0
      %v411 = vadd.f32 %v197, %v410
      %v412 = vpop.f32.mrb[0].mxu0
      %413 = vmatprep.mubr.f32.mxu0 0.0
      %414 = vmatmul.mubr.f32.gmra.mrb[0].mxu0 %v168
      %v415 = vpop.f32.mrb[0].mxu0
      %v416 = vadd.f32 %v197, %v415
      %v417 = vpop.f32.mrb[0].mxu0
      %418 = vmatprep.mubr.f32.mxu0 0.0
      %419 = vmatmul.mubr.f32.gmra.mrb[0].mxu0 %v169
      %v420 = vpop.f32.mrb[0].mxu0
      %v421 = vadd.f32 %v197, %v420
      %v422 = vpop.f32.mrb[0].mxu0
      %423 = vmatprep.mubr.f32.mxu0 0.0
      %424 = vmatmul.mubr.f32.gmra.mrb[0].mxu0 %v170
      %v425 = vpop.f32.mrb[0].mxu0
      %v426 = vadd.f32 %v197, %v425
      %v427 = vpop.f32.mrb[0].mxu0
      %428 = vmatprep.mubr.f32.mxu0 0.0
      %429 = vmatmul.mubr.f32.gmra.mrb[0].mxu0 %v171
      %v430 = vpop.f32.mrb[0].mxu0
      %v431 = vadd.f32 %v197, %v430
      %v432 = vpop.f32.mrb[0].mxu0
      %433 = vmatprep.mubr.f32.mxu0 0.0
      %434 = vmatmul.mubr.f32.gmra.mrb[0].mxu0 %v172
      %v435 = vpop.f32.mrb[0].mxu0
      %v436 = vadd.f32 %v197, %v435
      %v437 = vpop.f32.mrb[0].mxu0
      %438 = vmatprep.mubr.f32.mxu0 0.0
      %439 = vmatmul.mubr.f32.gmra.mrb[0].mxu0 %v173
      %v440 = vpop.f32.mrb[0].mxu0
      %v441 = vadd.f32 %v197, %v440
      %v442 = vpop.f32.mrb[0].mxu0
      %443 = vmatprep.mubr.f32.mxu0 0.0
      %444 = vmatmul.mubr.f32.gmra.mrb[0].mxu0 %v174
      %v445 = vpop.f32.mrb[0].mxu0
      %v446 = vadd.f32 %v197, %v445
      %v447 = vpop.f32.mrb[0].mxu0
      %448 = vmatprep.mubr.f32.mxu0 0.0
      %449 = vmatmul.mubr.f32.gmra.mrb[0].mxu0 %v175
      %v450 = vpop.f32.mrb[0].mxu0
      %v451 = vadd.f32 %v197, %v450
      %v452 = vpop.f32.mrb[0].mxu0
      %453 = vdwg.mxu0
      %454 = vst [vmem:[#allocation2] sm:$0xff] %v266
      %455 = vst [vmem:[#allocation2 + $0x8] sm:$0xff] %v271
      %456 = vst [vmem:[#allocation2 + $0x10] sm:$0xff] %v276
      %457 = vst [vmem:[#allocation2 + $0x18] sm:$0xff] %v281
      %458 = vst [vmem:[#allocation2 + $0x20] sm:$0xff] %v286
      %459 = vst [vmem:[#allocation2 + $0x28] sm:$0xff] %v291
      %460 = vst [vmem:[#allocation2 + $0x30] sm:$0xff] %v296
      %461 = vst [vmem:[#allocation2 + $0x38] sm:$0xff] %v301
      %462 = vst [vmem:[#allocation2 + $0x40] sm:$0xff] %v306
      %463 = vst [vmem:[#allocation2 + $0x48] sm:$0xff] %v311
      %464 = vst [vmem:[#allocation2 + $0x50] sm:$0xff] %v316
      %465 = vst [vmem:[#allocation2 + $0x58] sm:$0xff] %v321
      %466 = vst [vmem:[#allocation2 + $0x60] sm:$0xff] %v326
      %467 = vst [vmem:[#allocation2 + $0x68] sm:$0xff] %v331
      %468 = vst [vmem:[#allocation2 + $0x70] sm:$0xff] %v336
      %469 = vst [vmem:[#allocation2 + $0x78] sm:$0xff] %v341
      %470 = vst [vmem:[#allocation2 + $0x80] sm:$0xff] %v346
      %471 = vst [vmem:[#allocation2 + $0x88] sm:$0xff] %v351
      %472 = vst [vmem:[#allocation2 + $0x90] sm:$0xff] %v356
      %473 = vst [vmem:[#allocation2 + $0x98] sm:$0xff] %v361
      %474 = vst [vmem:[#allocation2 + $0xa0] sm:$0xff] %v366
      %475 = vst [vmem:[#allocation2 + $0xa8] sm:$0xff] %v371
      %476 = vst [vmem:[#allocation2 + $0xb0] sm:$0xff] %v376
      %477 = vst [vmem:[#allocation2 + $0xb8] sm:$0xff] %v381
      %478 = vst [vmem:[#allocation2 + $0xc0] sm:$0xff] %v386
      %479 = vst [vmem:[#allocation2 + $0xc8] sm:$0xff] %v391
      %480 = vst [vmem:[#allocation2 + $0xd0] sm:$0xff] %v396
      %481 = vst [vmem:[#allocation2 + $0xd8] sm:$0xff] %v401
      %482 = vst [vmem:[#allocation2 + $0xe0] sm:$0xff] %v406
      %483 = vst [vmem:[#allocation2 + $0xe8] sm:$0xff] %v411
      %484 = vst [vmem:[#allocation2 + $0xf0] sm:$0xff] %v416
      %485 = vst [vmem:[#allocation2 + $0xf8] sm:$0xff] %v421
      %486 = vst [vmem:[#allocation2 + $0x100] sm:$0xff] %v426
      %487 = vst [vmem:[#allocation2 + $0x108] sm:$0xff] %v431
      %488 = vst [vmem:[#allocation2 + $0x110] sm:$0xff] %v436
      %489 = vst [vmem:[#allocation2 + $0x118] sm:$0xff] %v441
      %490 = vst [vmem:[#allocation2 + $0x120] sm:$0xff] %v446
      %491 = vst [vmem:[#allocation2 + $0x128] sm:$0xff] %v451
    $region77: #{tpu_custom_call.1} parent=1 // pred_fallthru
      _
    %v492 = vld [vmem:[#allocation2] sm:$0xff]
    %v493 = vld [vmem:[#allocation2 + $0x8] sm:$0xff]
    %v494 = vld [vmem:[#allocation2 + $0x10] sm:$0xff]
    %v495 = vld [vmem:[#allocation2 + $0x18] sm:$0xff]
    %v496 = vld [vmem:[#allocation2 + $0x20] sm:$0xff]
    %v497 = vld [vmem:[#allocation2 + $0x28] sm:$0xff]
    %v498 = vld [vmem:[#allocation2 + $0x30] sm:$0xff]
    %v499 = vld [vmem:[#allocation2 + $0x38] sm:$0xff]
    %v500 = vld [vmem:[#allocation2 + $0x40] sm:$0xff]
    %v501 = vld [vmem:[#allocation2 + $0x48] sm:$0xff]
    %v502 = vld [vmem:[#allocation2 + $0x50] sm:$0xff]
    %v503 = vld [vmem:[#allocation2 + $0x58] sm:$0xff]
    %v504 = vld [vmem:[#allocation2 + $0x60] sm:$0xff]
    %v505 = vld [vmem:[#allocation2 + $0x68] sm:$0xff]
    %v506 = vld [vmem:[#allocation2 + $0x70] sm:$0xff]
    %v507 = vld [vmem:[#allocation2 + $0x78] sm:$0xff]
    %v508 = vld [vmem:[#allocation2 + $0x80] sm:$0xff]
    %v509 = vld [vmem:[#allocation2 + $0x88] sm:$0xff]
    %v510 = vld [vmem:[#allocation2 + $0x90] sm:$0xff]
    %v511 = vld [vmem:[#allocation2 + $0x98] sm:$0xff]
    %v512 = vld [vmem:[#allocation2 + $0xa0] sm:$0xff]
    %v513 = vld [vmem:[#allocation2 + $0xa8] sm:$0xff]
    %v514 = vld [vmem:[#allocation2 + $0xb0] sm:$0xff]
    %v515 = vld [vmem:[#allocation2 + $0xb8] sm:$0xff]
    %v516 = vld [vmem:[#allocation2 + $0xc0] sm:$0xff]
    %v517 = vld [vmem:[#allocation2 + $0xc8] sm:$0xff]
    %v518 = vld [vmem:[#allocation2 + $0xd0] sm:$0xff]
    %v519 = vld [vmem:[#allocation2 + $0xd8] sm:$0xff]
    %v520 = vld [vmem:[#allocation2 + $0xe0] sm:$0xff]
    %v521 = vld [vmem:[#allocation2 + $0xe8] sm:$0xff]
    %v522 = vld [vmem:[#allocation2 + $0xf0] sm:$0xff]
    %v523 = vld [vmem:[#allocation2 + $0xf8] sm:$0xff]
    %v524 = vld [vmem:[#allocation2 + $0x100] sm:$0xff]
    %v525 = vld [vmem:[#allocation2 + $0x108] sm:$0xff]
    %v526 = vld [vmem:[#allocation2 + $0x110] sm:$0xff]
    %v527 = vld [vmem:[#allocation2 + $0x118] sm:$0xff]
    %v528 = vld [vmem:[#allocation2 + $0x120] sm:$0xff]
    %v529 = vld [vmem:[#allocation2 + $0x128] sm:$0xff]
    %v530 = vld [vmem:[#allocation8] sm:$0xff]
    %v531 = vld [vmem:[#allocation8 + $0x8] sm:$0xff]
    %v532 = vld [vmem:[#allocation8 + $0x10] sm:$0xff]
    %v533 = vld [vmem:[#allocation8 + $0x18] sm:$0xff]
    %v534 = vld [vmem:[#allocation8 + $0x20] sm:$0xff]
    %v535 = vld [vmem:[#allocation8 + $0x28] sm:$0xff]
    %v536 = vld [vmem:[#allocation8 + $0x30] sm:$0xff]
    %v537 = vld [vmem:[#allocation8 + $0x38] sm:$0xff]
    %v538 = vld [vmem:[#allocation8 + $0x40] sm:$0xff]
    %v539 = vld [vmem:[#allocation8 + $0x48] sm:$0xff]
    %v540 = vld [vmem:[#allocation8 + $0x50] sm:$0xff]
    %v541 = vld [vmem:[#allocation8 + $0x58] sm:$0xff]
    %v542 = vld [vmem:[#allocation8 + $0x60] sm:$0xff]
    %v543 = vld [vmem:[#allocation8 + $0x68] sm:$0xff]
    %v544 = vld [vmem:[#allocation8 + $0x70] sm:$0xff]
    %v545 = vld [vmem:[#allocation8 + $0x78] sm:$0xff]
    %v546 = vld [vmem:[#allocation9] sm:$0xff]
    %v547 = vld [vmem:[#allocation9 + $0x8] sm:$0xff]
    %v548 = vld [vmem:[#allocation9 + $0x10] sm:$0xff]
    %v549 = vld [vmem:[#allocation9 + $0x18] sm:$0xff]
    %v550 = vld [vmem:[#allocation9 + $0x20] sm:$0xff]
    %v551 = vld [vmem:[#allocation9 + $0x28] sm:$0xff]
    %v552 = vld [vmem:[#allocation9 + $0x30] sm:$0xff]
    %v553 = vld [vmem:[#allocation9 + $0x38] sm:$0xff]
    %v554 = vld [vmem:[#allocation9 + $0x40] sm:$0xff]
    %v555 = vld [vmem:[#allocation9 + $0x48] sm:$0xff]
    %v556 = vld [vmem:[#allocation9 + $0x50] sm:$0xff]
    %v557 = vld [vmem:[#allocation9 + $0x58] sm:$0xff]
    %v558 = vld [vmem:[#allocation9 + $0x60] sm:$0xff]
    %v559 = vld [vmem:[#allocation9 + $0x68] sm:$0xff]
    %v560 = vld [vmem:[#allocation9 + $0x70] sm:$0xff]
    %v561 = vld [vmem:[#allocation9 + $0x78] sm:$0xff]
    %562 = vmatprep.subr.mxu0 0.0
    %563 = vmatpush1.msra.mxu0 %v530
    %564 = vmatprep.subr.mxu0 0.0
    %565 = vmatpush1.msra.mxu0 %v531
    %566 = vmatprep.subr.mxu0 0.0
    %567 = vmatpush1.msra.mxu0 %v532
    %568 = vmatprep.subr.mxu0 0.0
    %569 = vmatpush1.msra.mxu0 %v533
    %570 = vmatprep.subr.mxu0 0.0
    %571 = vmatpush1.msra.mxu0 %v534
    %572 = vmatprep.subr.mxu0 0.0
    %573 = vmatpush1.msra.mxu0 %v535
    %574 = vmatprep.subr.mxu0 0.0
    %575 = vmatpush1.msra.mxu0 %v536
    %576 = vmatprep.subr.mxu0 0.0
    %577 = vmatpush1.msra.mxu0 %v537
    %578 = vmatprep.subr.mxu0 0.0
    %579 = vmatpush1.msra.mxu0 %v538
    %580 = vmatprep.subr.mxu0 0.0
    %581 = vmatpush1.msra.mxu0 %v539
    %582 = vmatprep.subr.mxu0 0.0
    %583 = vmatpush1.msra.mxu0 %v540
    %584 = vmatprep.subr.mxu0 0.0
    %585 = vmatpush1.msra.mxu0 %v541
    %586 = vmatprep.subr.mxu0 0.0
    %587 = vmatpush1.msra.mxu0 %v542
    %588 = vmatprep.subr.mxu0 0.0
    %589 = vmatpush1.msra.mxu0 %v543
    %590 = vmatprep.subr.mxu0 0.0
    %591 = vmatpush1.msra.mxu0 %v544
    %592 = vmatprep.subr.mxu0 0.0
    %593 = vmatpush1.msra.mxu0 %v545
    %594 = vmatprep.subr.mxu0 0.0
    %595 = vmatpush1.msra.mxu0 0.0
    %596 = vmatprep.subr.mxu0 0.0
    %597 = vmatpush1.msra.mxu0 0.0
    %598 = vmatprep.subr.mxu0 0.0
    %599 = vmatpush1.msra.mxu0 0.0
    %600 = vmatprep.subr.mxu0 0.0
    %601 = vmatpush1.msra.mxu0 0.0
    %602 = vmatprep.subr.mxu0 0.0
    %603 = vmatpush1.msra.mxu0 0.0
    %604 = vmatprep.subr.mxu0 0.0
    %605 = vmatpush1.msra.mxu0 0.0
    %606 = vmatprep.subr.mxu0 0.0
    %607 = vmatpush1.msra.mxu0 0.0
    %608 = vmatprep.subr.mxu0 0.0
    %609 = vmatpush1.msra.mxu0 0.0
    %610 = vmatprep.subr.mxu0 0.0
    %611 = vmatpush1.msra.mxu0 0.0
    %612 = vmatprep.subr.mxu0 0.0
    %613 = vmatpush1.msra.mxu0 0.0
    %614 = vmatprep.subr.mxu0 0.0
    %615 = vmatpush1.msra.mxu0 0.0
    %616 = vmatprep.subr.mxu0 0.0
    %617 = vmatpush1.msra.mxu0 0.0
    %618 = vmatprep.subr.mxu0 0.0
    %619 = vmatpush1.msra.mxu0 0.0
    %620 = vmatprep.subr.mxu0 0.0
    %621 = vmatpush1.msra.mxu0 0.0
    %622 = vmatprep.subr.mxu0 0.0
    %623 = vmatpush1.msra.mxu0 0.0
    %624 = vmatprep.subr.mxu0 0.0
    %625 = vmatpush1.msra.mxu0 0.0
    %626 = vmatprep.mubr.f32.mxu0 0.0
    %627 = vmatmul.mubr.f32.gmra.mrb[0].mxu0 %v492
    %v628 = vpop.f32.mrb[0].mxu0
    %v629 = vadd.f32 0.0, %v628
    %v630 = vpop.f32.mrb[0].mxu0
    %631 = vmatprep.mubr.f32.mxu0 0.0
    %632 = vmatmul.mubr.f32.gmra.mrb[0].mxu0 %v493
    %v633 = vpop.f32.mrb[0].mxu0
    %v634 = vadd.f32 0.0, %v633
    %v635 = vpop.f32.mrb[0].mxu0
    %636 = vmatprep.mubr.f32.mxu0 0.0
    %637 = vmatmul.mubr.f32.gmra.mrb[0].mxu0 %v494
    %v638 = vpop.f32.mrb[0].mxu0
    %v639 = vadd.f32 0.0, %v638
    %v640 = vpop.f32.mrb[0].mxu0
    %641 = vmatprep.mubr.f32.mxu0 0.0
    %642 = vmatmul.mubr.f32.gmra.mrb[0].mxu0 %v495
    %v643 = vpop.f32.mrb[0].mxu0
    %v644 = vadd.f32 0.0, %v643
    %v645 = vpop.f32.mrb[0].mxu0
    %646 = vmatprep.mubr.f32.mxu0 0.0
    %647 = vmatmul.mubr.f32.gmra.mrb[0].mxu0 %v496
    %v648 = vpop.f32.mrb[0].mxu0
    %v649 = vadd.f32 0.0, %v648
    %v650 = vpop.f32.mrb[0].mxu0
    %651 = vmatprep.mubr.f32.mxu0 0.0
    %652 = vmatmul.mubr.f32.gmra.mrb[0].mxu0 %v497
    %v653 = vpop.f32.mrb[0].mxu0
    %v654 = vadd.f32 0.0, %v653
    %v655 = vpop.f32.mrb[0].mxu0
    %656 = vmatprep.mubr.f32.mxu0 0.0
    %657 = vmatmul.mubr.f32.gmra.mrb[0].mxu0 %v498
    %v658 = vpop.f32.mrb[0].mxu0
    %v659 = vadd.f32 0.0, %v658
    %v660 = vpop.f32.mrb[0].mxu0
    %661 = vmatprep.mubr.f32.mxu0 0.0
    %662 = vmatmul.mubr.f32.gmra.mrb[0].mxu0 %v499
    %v663 = vpop.f32.mrb[0].mxu0
    %v664 = vadd.f32 0.0, %v663
    %v665 = vpop.f32.mrb[0].mxu0
    %666 = vmatprep.mubr.f32.mxu0 0.0
    %667 = vmatmul.mubr.f32.gmra.mrb[0].mxu0 %v500
    %v668 = vpop.f32.mrb[0].mxu0
    %v669 = vadd.f32 0.0, %v668
    %v670 = vpop.f32.mrb[0].mxu0
    %671 = vmatprep.mubr.f32.mxu0 0.0
    %672 = vmatmul.mubr.f32.gmra.mrb[0].mxu0 %v501
    %v673 = vpop.f32.mrb[0].mxu0
    %v674 = vadd.f32 0.0, %v673
    %v675 = vpop.f32.mrb[0].mxu0
    %676 = vmatprep.mubr.f32.mxu0 0.0
    %677 = vmatmul.mubr.f32.gmra.mrb[0].mxu0 %v502
    %v678 = vpop.f32.mrb[0].mxu0
    %v679 = vadd.f32 0.0, %v678
    %v680 = vpop.f32.mrb[0].mxu0
    %681 = vmatprep.mubr.f32.mxu0 0.0
    %682 = vmatmul.mubr.f32.gmra.mrb[0].mxu0 %v503
    %v683 = vpop.f32.mrb[0].mxu0
    %v684 = vadd.f32 0.0, %v683
    %v685 = vpop.f32.mrb[0].mxu0
    %686 = vmatprep.mubr.f32.mxu0 0.0
    %687 = vmatmul.mubr.f32.gmra.mrb[0].mxu0 %v504
    %v688 = vpop.f32.mrb[0].mxu0
    %v689 = vadd.f32 0.0, %v688
    %v690 = vpop.f32.mrb[0].mxu0
    %691 = vmatprep.mubr.f32.mxu0 0.0
    %692 = vmatmul.mubr.f32.gmra.mrb[0].mxu0 %v505
    %v693 = vpop.f32.mrb[0].mxu0
    %v694 = vadd.f32 0.0, %v693
    %v695 = vpop.f32.mrb[0].mxu0
    %696 = vmatprep.mubr.f32.mxu0 0.0
    %697 = vmatmul.mubr.f32.gmra.mrb[0].mxu0 %v506
    %v698 = vpop.f32.mrb[0].mxu0
    %v699 = vadd.f32 0.0, %v698
    %v700 = vpop.f32.mrb[0].mxu0
    %701 = vmatprep.mubr.f32.mxu0 0.0
    %702 = vmatmul.mubr.f32.gmra.mrb[0].mxu0 %v507
    %v703 = vpop.f32.mrb[0].mxu0
    %v704 = vadd.f32 0.0, %v703
    %v705 = vpop.f32.mrb[0].mxu0
    %706 = vmatprep.mubr.f32.mxu0 0.0
    %707 = vmatmul.mubr.f32.gmra.mrb[0].mxu0 %v508
    %v708 = vpop.f32.mrb[0].mxu0
    %v709 = vadd.f32 0.0, %v708
    %v710 = vpop.f32.mrb[0].mxu0
    %711 = vmatprep.mubr.f32.mxu0 0.0
    %712 = vmatmul.mubr.f32.gmra.mrb[0].mxu0 %v509
    %v713 = vpop.f32.mrb[0].mxu0
    %v714 = vadd.f32 0.0, %v713
    %v715 = vpop.f32.mrb[0].mxu0
    %716 = vmatprep.mubr.f32.mxu0 0.0
    %717 = vmatmul.mubr.f32.gmra.mrb[0].mxu0 %v510
    %v718 = vpop.f32.mrb[0].mxu0
    %v719 = vadd.f32 0.0, %v718
    %v720 = vpop.f32.mrb[0].mxu0
    %721 = vmatprep.mubr.f32.mxu0 0.0
    %722 = vmatmul.mubr.f32.gmra.mrb[0].mxu0 %v511
    %v723 = vpop.f32.mrb[0].mxu0
    %v724 = vadd.f32 0.0, %v723
    %v725 = vpop.f32.mrb[0].mxu0
    %726 = vmatprep.mubr.f32.mxu0 0.0
    %727 = vmatmul.mubr.f32.gmra.mrb[0].mxu0 %v512
    %v728 = vpop.f32.mrb[0].mxu0
    %v729 = vadd.f32 0.0, %v728
    %v730 = vpop.f32.mrb[0].mxu0
    %731 = vmatprep.mubr.f32.mxu0 0.0
    %732 = vmatmul.mubr.f32.gmra.mrb[0].mxu0 %v513
    %v733 = vpop.f32.mrb[0].mxu0
    %v734 = vadd.f32 0.0, %v733
    %v735 = vpop.f32.mrb[0].mxu0
    %736 = vmatprep.mubr.f32.mxu0 0.0
    %737 = vmatmul.mubr.f32.gmra.mrb[0].mxu0 %v514
    %v738 = vpop.f32.mrb[0].mxu0
    %v739 = vadd.f32 0.0, %v738
    %v740 = vpop.f32.mrb[0].mxu0
    %741 = vmatprep.mubr.f32.mxu0 0.0
    %742 = vmatmul.mubr.f32.gmra.mrb[0].mxu0 %v515
    %v743 = vpop.f32.mrb[0].mxu0
    %v744 = vadd.f32 0.0, %v743
    %v745 = vpop.f32.mrb[0].mxu0
    %746 = vmatprep.mubr.f32.mxu0 0.0
    %747 = vmatmul.mubr.f32.gmra.mrb[0].mxu0 %v516
    %v748 = vpop.f32.mrb[0].mxu0
    %v749 = vadd.f32 0.0, %v748
    %v750 = vpop.f32.mrb[0].mxu0
    %751 = vmatprep.mubr.f32.mxu0 0.0
    %752 = vmatmul.mubr.f32.gmra.mrb[0].mxu0 %v517
    %v753 = vpop.f32.mrb[0].mxu0
    %v754 = vadd.f32 0.0, %v753
    %v755 = vpop.f32.mrb[0].mxu0
    %756 = vmatprep.mubr.f32.mxu0 0.0
    %757 = vmatmul.mubr.f32.gmra.mrb[0].mxu0 %v518
    %v758 = vpop.f32.mrb[0].mxu0
    %v759 = vadd.f32 0.0, %v758
    %v760 = vpop.f32.mrb[0].mxu0
    %761 = vmatprep.mubr.f32.mxu0 0.0
    %762 = vmatmul.mubr.f32.gmra.mrb[0].mxu0 %v519
    %v763 = vpop.f32.mrb[0].mxu0
    %v764 = vadd.f32 0.0, %v763
    %v765 = vpop.f32.mrb[0].mxu0
    %766 = vmatprep.mubr.f32.mxu0 0.0
    %767 = vmatmul.mubr.f32.gmra.mrb[0].mxu0 %v520
    %v768 = vpop.f32.mrb[0].mxu0
    %v769 = vadd.f32 0.0, %v768
    %v770 = vpop.f32.mrb[0].mxu0
    %771 = vmatprep.mubr.f32.mxu0 0.0
    %772 = vmatmul.mubr.f32.gmra.mrb[0].mxu0 %v521
    %v773 = vpop.f32.mrb[0].mxu0
    %v774 = vadd.f32 0.0, %v773
    %v775 = vpop.f32.mrb[0].mxu0
    %776 = vmatprep.mubr.f32.mxu0 0.0
    %777 = vmatmul.mubr.f32.gmra.mrb[0].mxu0 %v522
    %v778 = vpop.f32.mrb[0].mxu0
    %v779 = vadd.f32 0.0, %v778
    %v780 = vpop.f32.mrb[0].mxu0
    %781 = vmatprep.mubr.f32.mxu0 0.0
    %782 = vmatmul.mubr.f32.gmra.mrb[0].mxu0 %v523
    %v783 = vpop.f32.mrb[0].mxu0
    %v784 = vadd.f32 0.0, %v783
    %v785 = vpop.f32.mrb[0].mxu0
    %786 = vmatprep.mubr.f32.mxu0 0.0
    %787 = vmatmul.mubr.f32.gmra.mrb[0].mxu0 %v524
    %v788 = vpop.f32.mrb[0].mxu0
    %v789 = vadd.f32 0.0, %v788
    %v790 = vpop.f32.mrb[0].mxu0
    %791 = vmatprep.mubr.f32.mxu0 0.0
    %792 = vmatmul.mubr.f32.gmra.mrb[0].mxu0 %v525
    %v793 = vpop.f32.mrb[0].mxu0
    %v794 = vadd.f32 0.0, %v793
    %v795 = vpop.f32.mrb[0].mxu0
    %796 = vmatprep.mubr.f32.mxu0 0.0
    %797 = vmatmul.mubr.f32.gmra.mrb[0].mxu0 %v526
    %v798 = vpop.f32.mrb[0].mxu0
    %v799 = vadd.f32 0.0, %v798
    %v800 = vpop.f32.mrb[0].mxu0
    %801 = vmatprep.mubr.f32.mxu0 0.0
    %802 = vmatmul.mubr.f32.gmra.mrb[0].mxu0 %v527
    %v803 = vpop.f32.mrb[0].mxu0
    %v804 = vadd.f32 0.0, %v803
    %v805 = vpop.f32.mrb[0].mxu0
    %806 = vmatprep.mubr.f32.mxu0 0.0
    %807 = vmatmul.mubr.f32.gmra.mrb[0].mxu0 %v528
    %v808 = vpop.f32.mrb[0].mxu0
    %v809 = vadd.f32 0.0, %v808
    %v810 = vpop.f32.mrb[0].mxu0
    %811 = vmatprep.mubr.f32.mxu0 0.0
    %812 = vmatmul.mubr.f32.gmra.mrb[0].mxu0 %v529
    %v813 = vpop.f32.mrb[0].mxu0
    %v814 = vadd.f32 0.0, %v813
    %v815 = vpop.f32.mrb[0].mxu0
    %816 = vdwg.mxu0
    %817 = vmatprep.subr.mxu0 0.0
    %818 = vmatpush1.msra.mxu0 %v546
    %819 = vmatprep.subr.mxu0 0.0
    %820 = vmatpush1.msra.mxu0 %v547
    %821 = vmatprep.subr.mxu0 0.0
    %822 = vmatpush1.msra.mxu0 %v548
    %823 = vmatprep.subr.mxu0 0.0
    %824 = vmatpush1.msra.mxu0 %v549
    %825 = vmatprep.subr.mxu0 0.0
    %826 = vmatpush1.msra.mxu0 %v550
    %827 = vmatprep.subr.mxu0 0.0
    %828 = vmatpush1.msra.mxu0 %v551
    %829 = vmatprep.subr.mxu0 0.0
    %830 = vmatpush1.msra.mxu0 %v552
    %831 = vmatprep.subr.mxu0 0.0
    %832 = vmatpush1.msra.mxu0 %v553
    %833 = vmatprep.subr.mxu0 0.0
    %834 = vmatpush1.msra.mxu0 %v554
    %835 = vmatprep.subr.mxu0 0.0
    %836 = vmatpush1.msra.mxu0 %v555
    %837 = vmatprep.subr.mxu0 0.0
    %838 = vmatpush1.msra.mxu0 %v556
    %839 = vmatprep.subr.mxu0 0.0
    %840 = vmatpush1.msra.mxu0 %v557
    %841 = vmatprep.subr.mxu0 0.0
    %842 = vmatpush1.msra.mxu0 %v558
    %843 = vmatprep.subr.mxu0 0.0
    %844 = vmatpush1.msra.mxu0 %v559
    %845 = vmatprep.subr.mxu0 0.0
    %846 = vmatpush1.msra.mxu0 %v560
    %847 = vmatprep.subr.mxu0 0.0
    %848 = vmatpush1.msra.mxu0 %v561
    %849 = vmatprep.subr.mxu0 0.0
    %850 = vmatpush1.msra.mxu0 0.0
    %851 = vmatprep.subr.mxu0 0.0
    %852 = vmatpush1.msra.mxu0 0.0
    %853 = vmatprep.subr.mxu0 0.0
    %854 = vmatpush1.msra.mxu0 0.0
    %855 = vmatprep.subr.mxu0 0.0
    %856 = vmatpush1.msra.mxu0 0.0
    %857 = vmatprep.subr.mxu0 0.0
    %858 = vmatpush1.msra.mxu0 0.0
    %859 = vmatprep.subr.mxu0 0.0
    %860 = vmatpush1.msra.mxu0 0.0
    %861 = vmatprep.subr.mxu0 0.0
    %862 = vmatpush1.msra.mxu0 0.0
    %863 = vmatprep.subr.mxu0 0.0
    %864 = vmatpush1.msra.mxu0 0.0
    %865 = vmatprep.subr.mxu0 0.0
    %866 = vmatpush1.msra.mxu0 0.0
    %867 = vmatprep.subr.mxu0 0.0
    %868 = vmatpush1.msra.mxu0 0.0
    %869 = vmatprep.subr.mxu0 0.0
    %870 = vmatpush1.msra.mxu0 0.0
    %871 = vmatprep.subr.mxu0 0.0
    %872 = vmatpush1.msra.mxu0 0.0
    %873 = vmatprep.subr.mxu0 0.0
    %874 = vmatpush1.msra.mxu0 0.0
    %875 = vmatprep.subr.mxu0 0.0
    %876 = vmatpush1.msra.mxu0 0.0
    %877 = vmatprep.subr.mxu0 0.0
    %878 = vmatpush1.msra.mxu0 0.0
    %879 = vmatprep.subr.mxu0 0.0
    %880 = vmatpush1.msra.mxu0 0.0
    %881 = vmatprep.mubr.f32.mxu0 0.0
    %882 = vmatmul.mubr.f32.gmra.mrb[0].mxu0 %v629
    %v883 = vpop.f32.mrb[0].mxu0
    %v884 = vadd.f32 0.0, %v883
    %v885 = vpop.f32.mrb[0].mxu0
    %886 = vmatprep.mubr.f32.mxu0 0.0
    %887 = vmatmul.mubr.f32.gmra.mrb[0].mxu0 %v634
    %v888 = vpop.f32.mrb[0].mxu0
    %v889 = vadd.f32 0.0, %v888
    %v890 = vpop.f32.mrb[0].mxu0
    %891 = vmatprep.mubr.f32.mxu0 0.0
    %892 = vmatmul.mubr.f32.gmra.mrb[0].mxu0 %v639
    %v893 = vpop.f32.mrb[0].mxu0
    %v894 = vadd.f32 0.0, %v893
    %v895 = vpop.f32.mrb[0].mxu0
    %896 = vmatprep.mubr.f32.mxu0 0.0
    %897 = vmatmul.mubr.f32.gmra.mrb[0].mxu0 %v644
    %v898 = vpop.f32.mrb[0].mxu0
    %v899 = vadd.f32 0.0, %v898
    %v900 = vpop.f32.mrb[0].mxu0
    %901 = vmatprep.mubr.f32.mxu0 0.0
    %902 = vmatmul.mubr.f32.gmra.mrb[0].mxu0 %v649
    %v903 = vpop.f32.mrb[0].mxu0
    %v904 = vadd.f32 0.0, %v903
    %v905 = vpop.f32.mrb[0].mxu0
    %906 = vmatprep.mubr.f32.mxu0 0.0
    %907 = vmatmul.mubr.f32.gmra.mrb[0].mxu0 %v654
    %v908 = vpop.f32.mrb[0].mxu0
    %v909 = vadd.f32 0.0, %v908
    %v910 = vpop.f32.mrb[0].mxu0
    %911 = vmatprep.mubr.f32.mxu0 0.0
    %912 = vmatmul.mubr.f32.gmra.mrb[0].mxu0 %v659
    %v913 = vpop.f32.mrb[0].mxu0
    %v914 = vadd.f32 0.0, %v913
    %v915 = vpop.f32.mrb[0].mxu0
    %916 = vmatprep.mubr.f32.mxu0 0.0
    %917 = vmatmul.mubr.f32.gmra.mrb[0].mxu0 %v664
    %v918 = vpop.f32.mrb[0].mxu0
    %v919 = vadd.f32 0.0, %v918
    %v920 = vpop.f32.mrb[0].mxu0
    %921 = vmatprep.mubr.f32.mxu0 0.0
    %922 = vmatmul.mubr.f32.gmra.mrb[0].mxu0 %v669
    %v923 = vpop.f32.mrb[0].mxu0
    %v924 = vadd.f32 0.0, %v923
    %v925 = vpop.f32.mrb[0].mxu0
    %926 = vmatprep.mubr.f32.mxu0 0.0
    %927 = vmatmul.mubr.f32.gmra.mrb[0].mxu0 %v674
    %v928 = vpop.f32.mrb[0].mxu0
    %v929 = vadd.f32 0.0, %v928
    %v930 = vpop.f32.mrb[0].mxu0
    %931 = vmatprep.mubr.f32.mxu0 0.0
    %932 = vmatmul.mubr.f32.gmra.mrb[0].mxu0 %v679
    %v933 = vpop.f32.mrb[0].mxu0
    %v934 = vadd.f32 0.0, %v933
    %v935 = vpop.f32.mrb[0].mxu0
    %936 = vmatprep.mubr.f32.mxu0 0.0
    %937 = vmatmul.mubr.f32.gmra.mrb[0].mxu0 %v684
    %v938 = vpop.f32.mrb[0].mxu0
    %v939 = vadd.f32 0.0, %v938
    %v940 = vpop.f32.mrb[0].mxu0
    %941 = vmatprep.mubr.f32.mxu0 0.0
    %942 = vmatmul.mubr.f32.gmra.mrb[0].mxu0 %v689
    %v943 = vpop.f32.mrb[0].mxu0
    %v944 = vadd.f32 0.0, %v943
    %v945 = vpop.f32.mrb[0].mxu0
    %946 = vmatprep.mubr.f32.mxu0 0.0
    %947 = vmatmul.mubr.f32.gmra.mrb[0].mxu0 %v694
    %v948 = vpop.f32.mrb[0].mxu0
    %v949 = vadd.f32 0.0, %v948
    %v950 = vpop.f32.mrb[0].mxu0
    %951 = vmatprep.mubr.f32.mxu0 0.0
    %952 = vmatmul.mubr.f32.gmra.mrb[0].mxu0 %v699
    %v953 = vpop.f32.mrb[0].mxu0
    %v954 = vadd.f32 0.0, %v953
    %v955 = vpop.f32.mrb[0].mxu0
    %956 = vmatprep.mubr.f32.mxu0 0.0
    %957 = vmatmul.mubr.f32.gmra.mrb[0].mxu0 %v704
    %v958 = vpop.f32.mrb[0].mxu0
    %v959 = vadd.f32 0.0, %v958
    %v960 = vpop.f32.mrb[0].mxu0
    %961 = vmatprep.mubr.f32.mxu0 0.0
    %962 = vmatmul.mubr.f32.gmra.mrb[0].mxu0 %v709
    %v963 = vpop.f32.mrb[0].mxu0
    %v964 = vadd.f32 0.0, %v963
    %v965 = vpop.f32.mrb[0].mxu0
    %966 = vmatprep.mubr.f32.mxu0 0.0
    %967 = vmatmul.mubr.f32.gmra.mrb[0].mxu0 %v714
    %v968 = vpop.f32.mrb[0].mxu0
    %v969 = vadd.f32 0.0, %v968
    %v970 = vpop.f32.mrb[0].mxu0
    %971 = vmatprep.mubr.f32.mxu0 0.0
    %972 = vmatmul.mubr.f32.gmra.mrb[0].mxu0 %v719
    %v973 = vpop.f32.mrb[0].mxu0
    %v974 = vadd.f32 0.0, %v973
    %v975 = vpop.f32.mrb[0].mxu0
    %976 = vmatprep.mubr.f32.mxu0 0.0
    %977 = vmatmul.mubr.f32.gmra.mrb[0].mxu0 %v724
    %v978 = vpop.f32.mrb[0].mxu0
    %v979 = vadd.f32 0.0, %v978
    %v980 = vpop.f32.mrb[0].mxu0
    %981 = vmatprep.mubr.f32.mxu0 0.0
    %982 = vmatmul.mubr.f32.gmra.mrb[0].mxu0 %v729
    %v983 = vpop.f32.mrb[0].mxu0
    %v984 = vadd.f32 0.0, %v983
    %v985 = vpop.f32.mrb[0].mxu0
    %986 = vmatprep.mubr.f32.mxu0 0.0
    %987 = vmatmul.mubr.f32.gmra.mrb[0].mxu0 %v734
    %v988 = vpop.f32.mrb[0].mxu0
    %v989 = vadd.f32 0.0, %v988
    %v990 = vpop.f32.mrb[0].mxu0
    %991 = vmatprep.mubr.f32.mxu0 0.0
    %992 = vmatmul.mubr.f32.gmra.mrb[0].mxu0 %v739
    %v993 = vpop.f32.mrb[0].mxu0
    %v994 = vadd.f32 0.0, %v993
    %v995 = vpop.f32.mrb[0].mxu0
    %996 = vmatprep.mubr.f32.mxu0 0.0
    %997 = vmatmul.mubr.f32.gmra.mrb[0].mxu0 %v744
    %v998 = vpop.f32.mrb[0].mxu0
    %v999 = vadd.f32 0.0, %v998
    %v1000 = vpop.f32.mrb[0].mxu0
    %1001 = vmatprep.mubr.f32.mxu0 0.0
    %1002 = vmatmul.mubr.f32.gmra.mrb[0].mxu0 %v749
    %v1003 = vpop.f32.mrb[0].mxu0
    %v1004 = vadd.f32 0.0, %v1003
    %v1005 = vpop.f32.mrb[0].mxu0
    %1006 = vmatprep.mubr.f32.mxu0 0.0
    %1007 = vmatmul.mubr.f32.gmra.mrb[0].mxu0 %v754
    %v1008 = vpop.f32.mrb[0].mxu0
    %v1009 = vadd.f32 0.0, %v1008
    %v1010 = vpop.f32.mrb[0].mxu0
    %1011 = vmatprep.mubr.f32.mxu0 0.0
    %1012 = vmatmul.mubr.f32.gmra.mrb[0].mxu0 %v759
    %v1013 = vpop.f32.mrb[0].mxu0
    %v1014 = vadd.f32 0.0, %v1013
    %v1015 = vpop.f32.mrb[0].mxu0
    %1016 = vmatprep.mubr.f32.mxu0 0.0
    %1017 = vmatmul.mubr.f32.gmra.mrb[0].mxu0 %v764
    %v1018 = vpop.f32.mrb[0].mxu0
    %v1019 = vadd.f32 0.0, %v1018
    %v1020 = vpop.f32.mrb[0].mxu0
    %1021 = vmatprep.mubr.f32.mxu0 0.0
    %1022 = vmatmul.mubr.f32.gmra.mrb[0].mxu0 %v769
    %v1023 = vpop.f32.mrb[0].mxu0
    %v1024 = vadd.f32 0.0, %v1023
    %v1025 = vpop.f32.mrb[0].mxu0
    %1026 = vmatprep.mubr.f32.mxu0 0.0
    %1027 = vmatmul.mubr.f32.gmra.mrb[0].mxu0 %v774
    %v1028 = vpop.f32.mrb[0].mxu0
    %v1029 = vadd.f32 0.0, %v1028
    %v1030 = vpop.f32.mrb[0].mxu0
    %1031 = vmatprep.mubr.f32.mxu0 0.0
    %1032 = vmatmul.mubr.f32.gmra.mrb[0].mxu0 %v779
    %v1033 = vpop.f32.mrb[0].mxu0
    %v1034 = vadd.f32 0.0, %v1033
    %v1035 = vpop.f32.mrb[0].mxu0
    %1036 = vmatprep.mubr.f32.mxu0 0.0
    %1037 = vmatmul.mubr.f32.gmra.mrb[0].mxu0 %v784
    %v1038 = vpop.f32.mrb[0].mxu0
    %v1039 = vadd.f32 0.0, %v1038
    %v1040 = vpop.f32.mrb[0].mxu0
    %1041 = vmatprep.mubr.f32.mxu0 0.0
    %1042 = vmatmul.mubr.f32.gmra.mrb[0].mxu0 %v789
    %v1043 = vpop.f32.mrb[0].mxu0
    %v1044 = vadd.f32 0.0, %v1043
    %v1045 = vpop.f32.mrb[0].mxu0
    %1046 = vmatprep.mubr.f32.mxu0 0.0
    %1047 = vmatmul.mubr.f32.gmra.mrb[0].mxu0 %v794
    %v1048 = vpop.f32.mrb[0].mxu0
    %v1049 = vadd.f32 0.0, %v1048
    %v1050 = vpop.f32.mrb[0].mxu0
    %1051 = vmatprep.mubr.f32.mxu0 0.0
    %1052 = vmatmul.mubr.f32.gmra.mrb[0].mxu0 %v799
    %v1053 = vpop.f32.mrb[0].mxu0
    %v1054 = vadd.f32 0.0, %v1053
    %v1055 = vpop.f32.mrb[0].mxu0
    %1056 = vmatprep.mubr.f32.mxu0 0.0
    %1057 = vmatmul.mubr.f32.gmra.mrb[0].mxu0 %v804
    %v1058 = vpop.f32.mrb[0].mxu0
    %v1059 = vadd.f32 0.0, %v1058
    %v1060 = vpop.f32.mrb[0].mxu0
    %1061 = vmatprep.mubr.f32.mxu0 0.0
    %1062 = vmatmul.mubr.f32.gmra.mrb[0].mxu0 %v809
    %v1063 = vpop.f32.mrb[0].mxu0
    %v1064 = vadd.f32 0.0, %v1063
    %v1065 = vpop.f32.mrb[0].mxu0
    %1066 = vmatprep.mubr.f32.mxu0 0.0
    %1067 = vmatmul.mubr.f32.gmra.mrb[0].mxu0 %v814
    %v1068 = vpop.f32.mrb[0].mxu0
    %v1069 = vadd.f32 0.0, %v1068
    %v1070 = vpop.f32.mrb[0].mxu0
    %1071 = vdwg.mxu0
    %v1072 = vsub.f32 %v492, %v884
    %v1073 = vsub.f32 %v493, %v889
    %v1074 = vsub.f32 %v494, %v894
    %v1075 = vsub.f32 %v495, %v899
    %v1076 = vsub.f32 %v496, %v904
    %v1077 = vsub.f32 %v497, %v909
    %v1078 = vsub.f32 %v498, %v914
    %v1079 = vsub.f32 %v499, %v919
    %v1080 = vsub.f32 %v500, %v924
    %v1081 = vsub.f32 %v501, %v929
    %v1082 = vsub.f32 %v502, %v934
    %v1083 = vsub.f32 %v503, %v939
    %v1084 = vsub.f32 %v504, %v944
    %v1085 = vsub.f32 %v505, %v949
    %v1086 = vsub.f32 %v506, %v954
    %v1087 = vsub.f32 %v507, %v959
    %v1088 = vsub.f32 %v508, %v964
    %v1089 = vsub.f32 %v509, %v969
    %v1090 = vsub.f32 %v510, %v974
    %v1091 = vsub.f32 %v511, %v979
    %v1092 = vsub.f32 %v512, %v984
    %v1093 = vsub.f32 %v513, %v989
    %v1094 = vsub.f32 %v514, %v994
    %v1095 = vsub.f32 %v515, %v999
    %v1096 = vsub.f32 %v516, %v1004
    %v1097 = vsub.f32 %v517, %v1009
    %v1098 = vsub.f32 %v518, %v1014
    %v1099 = vsub.f32 %v519, %v1019
    %v1100 = vsub.f32 %v520, %v1024
    %v1101 = vsub.f32 %v521, %v1029
    %v1102 = vsub.f32 %v522, %v1034
    %v1103 = vsub.f32 %v523, %v1039
    %v1104 = vsub.f32 %v524, %v1044
    %v1105 = vsub.f32 %v525, %v1049
    %v1106 = vsub.f32 %v526, %v1054
    %v1107 = vsub.f32 %v527, %v1059
    %v1108 = vsub.f32 %v528, %v1064
    %v1109 = vsub.f32 %v529, %v1069
    %v1110 = vmul.f32 %v1072, %v1072
    %v1111 = vmul.f32 %v1073, %v1073
    %v1112 = vmul.f32 %v1074, %v1074
    %v1113 = vmul.f32 %v1075, %v1075
    %v1114 = vmul.f32 %v1076, %v1076
    %v1115 = vmul.f32 %v1077, %v1077
    %v1116 = vmul.f32 %v1078, %v1078
    %v1117 = vmul.f32 %v1079, %v1079
    %v1118 = vmul.f32 %v1080, %v1080
    %v1119 = vmul.f32 %v1081, %v1081
    %v1120 = vmul.f32 %v1082, %v1082
    %v1121 = vmul.f32 %v1083, %v1083
    %v1122 = vmul.f32 %v1084, %v1084
    %v1123 = vmul.f32 %v1085, %v1085
    %v1124 = vmul.f32 %v1086, %v1086
    %v1125 = vmul.f32 %v1087, %v1087
    %v1126 = vmul.f32 %v1088, %v1088
    %v1127 = vmul.f32 %v1089, %v1089
    %v1128 = vmul.f32 %v1090, %v1090
    %v1129 = vmul.f32 %v1091, %v1091
    %v1130 = vmul.f32 %v1092, %v1092
    %v1131 = vmul.f32 %v1093, %v1093
    %v1132 = vmul.f32 %v1094, %v1094
    %v1133 = vmul.f32 %v1095, %v1095
    %v1134 = vmul.f32 %v1096, %v1096
    %v1135 = vmul.f32 %v1097, %v1097
    %v1136 = vmul.f32 %v1098, %v1098
    %v1137 = vmul.f32 %v1099, %v1099
    %v1138 = vmul.f32 %v1100, %v1100
    %v1139 = vmul.f32 %v1101, %v1101
    %v1140 = vmul.f32 %v1102, %v1102
    %v1141 = vmul.f32 %v1103, %v1103
    %v1142 = vmul.f32 %v1104, %v1104
    %v1143 = vmul.f32 %v1105, %v1105
    %v1144 = vmul.f32 %v1106, %v1106
    %v1145 = vmul.f32 %v1107, %v1107
    %v1146 = vmul.f32 %v1108, %v1108
    %v1147 = vmul.f32 %v1109, %v1109
    %1148 = vmatprep.subr.mxu0 0.0
    %1149 = vmatpush1.msra.mxu0 %v530
    %1150 = vmatprep.subr.mxu0 0.0
    %1151 = vmatpush1.msra.mxu0 %v531
    %1152 = vmatprep.subr.mxu0 0.0
    %1153 = vmatpush1.msra.mxu0 %v532
    %1154 = vmatprep.subr.mxu0 0.0
    %1155 = vmatpush1.msra.mxu0 %v533
    %1156 = vmatprep.subr.mxu0 0.0
    %1157 = vmatpush1.msra.mxu0 %v534
    %1158 = vmatprep.subr.mxu0 0.0
    %1159 = vmatpush1.msra.mxu0 %v535
    %1160 = vmatprep.subr.mxu0 0.0
    %1161 = vmatpush1.msra.mxu0 %v536
    %1162 = vmatprep.subr.mxu0 0.0
    %1163 = vmatpush1.msra.mxu0 %v537
    %1164 = vmatprep.subr.mxu0 0.0
    %1165 = vmatpush1.msra.mxu0 %v538
    %1166 = vmatprep.subr.mxu0 0.0
    %1167 = vmatpush1.msra.mxu0 %v539
    %1168 = vmatprep.subr.mxu0 0.0
    %1169 = vmatpush1.msra.mxu0 %v540
    %1170 = vmatprep.subr.mxu0 0.0
    %1171 = vmatpush1.msra.mxu0 %v541
    %1172 = vmatprep.subr.mxu0 0.0
    %1173 = vmatpush1.msra.mxu0 %v542
    %1174 = vmatprep.subr.mxu0 0.0
    %1175 = vmatpush1.msra.mxu0 %v543
    %1176 = vmatprep.subr.mxu0 0.0
    %1177 = vmatpush1.msra.mxu0 %v544
    %1178 = vmatprep.subr.mxu0 0.0
    %1179 = vmatpush1.msra.mxu0 %v545
    %1180 = vmatprep.subr.mxu0 0.0
    %1181 = vmatpush1.msra.mxu0 0.0
    %1182 = vmatprep.subr.mxu0 0.0
    %1183 = vmatpush1.msra.mxu0 0.0
    %1184 = vmatprep.subr.mxu0 0.0
    %1185 = vmatpush1.msra.mxu0 0.0
    %1186 = vmatprep.subr.mxu0 0.0
    %1187 = vmatpush1.msra.mxu0 0.0
    %1188 = vmatprep.subr.mxu0 0.0
    %1189 = vmatpush1.msra.mxu0 0.0
    %1190 = vmatprep.subr.mxu0 0.0
    %1191 = vmatpush1.msra.mxu0 0.0
    %1192 = vmatprep.subr.mxu0 0.0
    %1193 = vmatpush1.msra.mxu0 0.0
    %1194 = vmatprep.subr.mxu0 0.0
    %1195 = vmatpush1.msra.mxu0 0.0
    %1196 = vmatprep.subr.mxu0 0.0
    %1197 = vmatpush1.msra.mxu0 0.0
    %1198 = vmatprep.subr.mxu0 0.0
    %1199 = vmatpush1.msra.mxu0 0.0
    %1200 = vmatprep.subr.mxu0 0.0
    %1201 = vmatpush1.msra.mxu0 0.0
    %1202 = vmatprep.subr.mxu0 0.0
    %1203 = vmatpush1.msra.mxu0 0.0
    %1204 = vmatprep.subr.mxu0 0.0
    %1205 = vmatpush1.msra.mxu0 0.0
    %1206 = vmatprep.subr.mxu0 0.0
    %1207 = vmatpush1.msra.mxu0 0.0
    %1208 = vmatprep.subr.mxu0 0.0
    %1209 = vmatpush1.msra.mxu0 0.0
    %1210 = vmatprep.subr.mxu0 0.0
    %1211 = vmatpush1.msra.mxu0 0.0
    %1212 = vmatprep.mubr.f32.mxu0 0.0
    %1213 = vmatmul.mubr.f32.gmra.mrb[0].mxu0 %v1110
    %v1214 = vpop.f32.mrb[0].mxu0
    %v1215 = vadd.f32 0.0, %v1214
    %v1216 = vpop.f32.mrb[0].mxu0
    %1217 = vmatprep.mubr.f32.mxu0 0.0
    %1218 = vmatmul.mubr.f32.gmra.mrb[0].mxu0 %v1111
    %v1219 = vpop.f32.mrb[0].mxu0
    %v1220 = vadd.f32 0.0, %v1219
    %v1221 = vpop.f32.mrb[0].mxu0
    %1222 = vmatprep.mubr.f32.mxu0 0.0
    %1223 = vmatmul.mubr.f32.gmra.mrb[0].mxu0 %v1112
    %v1224 = vpop.f32.mrb[0].mxu0
    %v1225 = vadd.f32 0.0, %v1224
    %v1226 = vpop.f32.mrb[0].mxu0
    %1227 = vmatprep.mubr.f32.mxu0 0.0
    %1228 = vmatmul.mubr.f32.gmra.mrb[0].mxu0 %v1113
    %v1229 = vpop.f32.mrb[0].mxu0
    %v1230 = vadd.f32 0.0, %v1229
    %v1231 = vpop.f32.mrb[0].mxu0
    %1232 = vmatprep.mubr.f32.mxu0 0.0
    %1233 = vmatmul.mubr.f32.gmra.mrb[0].mxu0 %v1114
    %v1234 = vpop.f32.mrb[0].mxu0
    %v1235 = vadd.f32 0.0, %v1234
    %v1236 = vpop.f32.mrb[0].mxu0
    %1237 = vmatprep.mubr.f32.mxu0 0.0
    %1238 = vmatmul.mubr.f32.gmra.mrb[0].mxu0 %v1115
    %v1239 = vpop.f32.mrb[0].mxu0
    %v1240 = vadd.f32 0.0, %v1239
    %v1241 = vpop.f32.mrb[0].mxu0
    %1242 = vmatprep.mubr.f32.mxu0 0.0
    %1243 = vmatmul.mubr.f32.gmra.mrb[0].mxu0 %v1116
    %v1244 = vpop.f32.mrb[0].mxu0
    %v1245 = vadd.f32 0.0, %v1244
    %v1246 = vpop.f32.mrb[0].mxu0
    %1247 = vmatprep.mubr.f32.mxu0 0.0
    %1248 = vmatmul.mubr.f32.gmra.mrb[0].mxu0 %v1117
    %v1249 = vpop.f32.mrb[0].mxu0
    %v1250 = vadd.f32 0.0, %v1249
    %v1251 = vpop.f32.mrb[0].mxu0
    %1252 = vmatprep.mubr.f32.mxu0 0.0
    %1253 = vmatmul.mubr.f32.gmra.mrb[0].mxu0 %v1118
    %v1254 = vpop.f32.mrb[0].mxu0
    %v1255 = vadd.f32 0.0, %v1254
    %v1256 = vpop.f32.mrb[0].mxu0
    %1257 = vmatprep.mubr.f32.mxu0 0.0
    %1258 = vmatmul.mubr.f32.gmra.mrb[0].mxu0 %v1119
    %v1259 = vpop.f32.mrb[0].mxu0
    %v1260 = vadd.f32 0.0, %v1259
    %v1261 = vpop.f32.mrb[0].mxu0
    %1262 = vmatprep.mubr.f32.mxu0 0.0
    %1263 = vmatmul.mubr.f32.gmra.mrb[0].mxu0 %v1120
    %v1264 = vpop.f32.mrb[0].mxu0
    %v1265 = vadd.f32 0.0, %v1264
    %v1266 = vpop.f32.mrb[0].mxu0
    %1267 = vmatprep.mubr.f32.mxu0 0.0
    %1268 = vmatmul.mubr.f32.gmra.mrb[0].mxu0 %v1121
    %v1269 = vpop.f32.mrb[0].mxu0
    %v1270 = vadd.f32 0.0, %v1269
    %v1271 = vpop.f32.mrb[0].mxu0
    %1272 = vmatprep.mubr.f32.mxu0 0.0
    %1273 = vmatmul.mubr.f32.gmra.mrb[0].mxu0 %v1122
    %v1274 = vpop.f32.mrb[0].mxu0
    %v1275 = vadd.f32 0.0, %v1274
    %v1276 = vpop.f32.mrb[0].mxu0
    %1277 = vmatprep.mubr.f32.mxu0 0.0
    %1278 = vmatmul.mubr.f32.gmra.mrb[0].mxu0 %v1123
    %v1279 = vpop.f32.mrb[0].mxu0
    %v1280 = vadd.f32 0.0, %v1279
    %v1281 = vpop.f32.mrb[0].mxu0
    %1282 = vmatprep.mubr.f32.mxu0 0.0
    %1283 = vmatmul.mubr.f32.gmra.mrb[0].mxu0 %v1124
    %v1284 = vpop.f32.mrb[0].mxu0
    %v1285 = vadd.f32 0.0, %v1284
    %v1286 = vpop.f32.mrb[0].mxu0
    %1287 = vmatprep.mubr.f32.mxu0 0.0
    %1288 = vmatmul.mubr.f32.gmra.mrb[0].mxu0 %v1125
    %v1289 = vpop.f32.mrb[0].mxu0
    %v1290 = vadd.f32 0.0, %v1289
    %v1291 = vpop.f32.mrb[0].mxu0
    %1292 = vmatprep.mubr.f32.mxu0 0.0
    %1293 = vmatmul.mubr.f32.gmra.mrb[0].mxu0 %v1126
    %v1294 = vpop.f32.mrb[0].mxu0
    %v1295 = vadd.f32 0.0, %v1294
    %v1296 = vpop.f32.mrb[0].mxu0
    %1297 = vmatprep.mubr.f32.mxu0 0.0
    %1298 = vmatmul.mubr.f32.gmra.mrb[0].mxu0 %v1127
    %v1299 = vpop.f32.mrb[0].mxu0
    %v1300 = vadd.f32 0.0, %v1299
    %v1301 = vpop.f32.mrb[0].mxu0
    %1302 = vmatprep.mubr.f32.mxu0 0.0
    %1303 = vmatmul.mubr.f32.gmra.mrb[0].mxu0 %v1128
    %v1304 = vpop.f32.mrb[0].mxu0
    %v1305 = vadd.f32 0.0, %v1304
    %v1306 = vpop.f32.mrb[0].mxu0
    %1307 = vmatprep.mubr.f32.mxu0 0.0
    %1308 = vmatmul.mubr.f32.gmra.mrb[0].mxu0 %v1129
    %v1309 = vpop.f32.mrb[0].mxu0
    %v1310 = vadd.f32 0.0, %v1309
    %v1311 = vpop.f32.mrb[0].mxu0
    %1312 = vmatprep.mubr.f32.mxu0 0.0
    %1313 = vmatmul.mubr.f32.gmra.mrb[0].mxu0 %v1130
    %v1314 = vpop.f32.mrb[0].mxu0
    %v1315 = vadd.f32 0.0, %v1314
    %v1316 = vpop.f32.mrb[0].mxu0
    %1317 = vmatprep.mubr.f32.mxu0 0.0
    %1318 = vmatmul.mubr.f32.gmra.mrb[0].mxu0 %v1131
    %v1319 = vpop.f32.mrb[0].mxu0
    %v1320 = vadd.f32 0.0, %v1319
    %v1321 = vpop.f32.mrb[0].mxu0
    %1322 = vmatprep.mubr.f32.mxu0 0.0
    %1323 = vmatmul.mubr.f32.gmra.mrb[0].mxu0 %v1132
    %v1324 = vpop.f32.mrb[0].mxu0
    %v1325 = vadd.f32 0.0, %v1324
    %v1326 = vpop.f32.mrb[0].mxu0
    %1327 = vmatprep.mubr.f32.mxu0 0.0
    %1328 = vmatmul.mubr.f32.gmra.mrb[0].mxu0 %v1133
    %v1329 = vpop.f32.mrb[0].mxu0
    %v1330 = vadd.f32 0.0, %v1329
    %v1331 = vpop.f32.mrb[0].mxu0
    %1332 = vmatprep.mubr.f32.mxu0 0.0
    %1333 = vmatmul.mubr.f32.gmra.mrb[0].mxu0 %v1134
    %v1334 = vpop.f32.mrb[0].mxu0
    %v1335 = vadd.f32 0.0, %v1334
    %v1336 = vpop.f32.mrb[0].mxu0
    %1337 = vmatprep.mubr.f32.mxu0 0.0
    %1338 = vmatmul.mubr.f32.gmra.mrb[0].mxu0 %v1135
    %v1339 = vpop.f32.mrb[0].mxu0
    %v1340 = vadd.f32 0.0, %v1339
    %v1341 = vpop.f32.mrb[0].mxu0
    %1342 = vmatprep.mubr.f32.mxu0 0.0
    %1343 = vmatmul.mubr.f32.gmra.mrb[0].mxu0 %v1136
    %v1344 = vpop.f32.mrb[0].mxu0
    %v1345 = vadd.f32 0.0, %v1344
    %v1346 = vpop.f32.mrb[0].mxu0
    %1347 = vmatprep.mubr.f32.mxu0 0.0
    %1348 = vmatmul.mubr.f32.gmra.mrb[0].mxu0 %v1137
    %v1349 = vpop.f32.mrb[0].mxu0
    %v1350 = vadd.f32 0.0, %v1349
    %v1351 = vpop.f32.mrb[0].mxu0
    %1352 = vmatprep.mubr.f32.mxu0 0.0
    %1353 = vmatmul.mubr.f32.gmra.mrb[0].mxu0 %v1138
    %v1354 = vpop.f32.mrb[0].mxu0
    %v1355 = vadd.f32 0.0, %v1354
    %v1356 = vpop.f32.mrb[0].mxu0
    %1357 = vmatprep.mubr.f32.mxu0 0.0
    %1358 = vmatmul.mubr.f32.gmra.mrb[0].mxu0 %v1139
    %v1359 = vpop.f32.mrb[0].mxu0
    %v1360 = vadd.f32 0.0, %v1359
    %v1361 = vpop.f32.mrb[0].mxu0
    %1362 = vmatprep.mubr.f32.mxu0 0.0
    %1363 = vmatmul.mubr.f32.gmra.mrb[0].mxu0 %v1140
    %v1364 = vpop.f32.mrb[0].mxu0
    %v1365 = vadd.f32 0.0, %v1364
    %v1366 = vpop.f32.mrb[0].mxu0
    %1367 = vmatprep.mubr.f32.mxu0 0.0
    %1368 = vmatmul.mubr.f32.gmra.mrb[0].mxu0 %v1141
    %v1369 = vpop.f32.mrb[0].mxu0
    %v1370 = vadd.f32 0.0, %v1369
    %v1371 = vpop.f32.mrb[0].mxu0
    %1372 = vmatprep.mubr.f32.mxu0 0.0
    %1373 = vmatmul.mubr.f32.gmra.mrb[0].mxu0 %v1142
    %v1374 = vpop.f32.mrb[0].mxu0
    %v1375 = vadd.f32 0.0, %v1374
    %v1376 = vpop.f32.mrb[0].mxu0
    %1377 = vmatprep.mubr.f32.mxu0 0.0
    %1378 = vmatmul.mubr.f32.gmra.mrb[0].mxu0 %v1143
    %v1379 = vpop.f32.mrb[0].mxu0
    %v1380 = vadd.f32 0.0, %v1379
    %v1381 = vpop.f32.mrb[0].mxu0
    %1382 = vmatprep.mubr.f32.mxu0 0.0
    %1383 = vmatmul.mubr.f32.gmra.mrb[0].mxu0 %v1144
    %v1384 = vpop.f32.mrb[0].mxu0
    %v1385 = vadd.f32 0.0, %v1384
    %v1386 = vpop.f32.mrb[0].mxu0
    %1387 = vmatprep.mubr.f32.mxu0 0.0
    %1388 = vmatmul.mubr.f32.gmra.mrb[0].mxu0 %v1145
    %v1389 = vpop.f32.mrb[0].mxu0
    %v1390 = vadd.f32 0.0, %v1389
    %v1391 = vpop.f32.mrb[0].mxu0
    %1392 = vmatprep.mubr.f32.mxu0 0.0
    %1393 = vmatmul.mubr.f32.gmra.mrb[0].mxu0 %v1146
    %v1394 = vpop.f32.mrb[0].mxu0
    %v1395 = vadd.f32 0.0, %v1394
    %v1396 = vpop.f32.mrb[0].mxu0
    %1397 = vmatprep.mubr.f32.mxu0 0.0
    %1398 = vmatmul.mubr.f32.gmra.mrb[0].mxu0 %v1147
    %v1399 = vpop.f32.mrb[0].mxu0
    %v1400 = vadd.f32 0.0, %v1399
    %v1401 = vpop.f32.mrb[0].mxu0
    %1402 = vdwg.mxu0
    %1403 = vmatprep.subr.mxu0 0.0
    %1404 = vmatpush1.msra.mxu0 %v546
    %1405 = vmatprep.subr.mxu0 0.0
    %1406 = vmatpush1.msra.mxu0 %v547
    %1407 = vmatprep.subr.mxu0 0.0
    %1408 = vmatpush1.msra.mxu0 %v548
    %1409 = vmatprep.subr.mxu0 0.0
    %1410 = vmatpush1.msra.mxu0 %v549
    %1411 = vmatprep.subr.mxu0 0.0
    %1412 = vmatpush1.msra.mxu0 %v550
    %1413 = vmatprep.subr.mxu0 0.0
    %1414 = vmatpush1.msra.mxu0 %v551
    %1415 = vmatprep.subr.mxu0 0.0
    %1416 = vmatpush1.msra.mxu0 %v552
    %1417 = vmatprep.subr.mxu0 0.0
    %1418 = vmatpush1.msra.mxu0 %v553
    %1419 = vmatprep.subr.mxu0 0.0
    %1420 = vmatpush1.msra.mxu0 %v554
    %1421 = vmatprep.subr.mxu0 0.0
    %1422 = vmatpush1.msra.mxu0 %v555
    %1423 = vmatprep.subr.mxu0 0.0
    %1424 = vmatpush1.msra.mxu0 %v556
    %1425 = vmatprep.subr.mxu0 0.0
    %1426 = vmatpush1.msra.mxu0 %v557
    %1427 = vmatprep.subr.mxu0 0.0
    %1428 = vmatpush1.msra.mxu0 %v558
    %1429 = vmatprep.subr.mxu0 0.0
    %1430 = vmatpush1.msra.mxu0 %v559
    %1431 = vmatprep.subr.mxu0 0.0
    %1432 = vmatpush1.msra.mxu0 %v560
    %1433 = vmatprep.subr.mxu0 0.0
    %1434 = vmatpush1.msra.mxu0 %v561
    %1435 = vmatprep.subr.mxu0 0.0
    %1436 = vmatpush1.msra.mxu0 0.0
    %1437 = vmatprep.subr.mxu0 0.0
    %1438 = vmatpush1.msra.mxu0 0.0
    %1439 = vmatprep.subr.mxu0 0.0
    %1440 = vmatpush1.msra.mxu0 0.0
    %1441 = vmatprep.subr.mxu0 0.0
    %1442 = vmatpush1.msra.mxu0 0.0
    %1443 = vmatprep.subr.mxu0 0.0
    %1444 = vmatpush1.msra.mxu0 0.0
    %1445 = vmatprep.subr.mxu0 0.0
    %1446 = vmatpush1.msra.mxu0 0.0
    %1447 = vmatprep.subr.mxu0 0.0
    %1448 = vmatpush1.msra.mxu0 0.0
    %1449 = vmatprep.subr.mxu0 0.0
    %1450 = vmatpush1.msra.mxu0 0.0
    %1451 = vmatprep.subr.mxu0 0.0
    %1452 = vmatpush1.msra.mxu0 0.0
    %1453 = vmatprep.subr.mxu0 0.0
    %1454 = vmatpush1.msra.mxu0 0.0
    %1455 = vmatprep.subr.mxu0 0.0
    %1456 = vmatpush1.msra.mxu0 0.0
    %1457 = vmatprep.subr.mxu0 0.0
    %1458 = vmatpush1.msra.mxu0 0.0
    %1459 = vmatprep.subr.mxu0 0.0
    %1460 = vmatpush1.msra.mxu0 0.0
    %1461 = vmatprep.subr.mxu0 0.0
    %1462 = vmatpush1.msra.mxu0 0.0
    %1463 = vmatprep.subr.mxu0 0.0
    %1464 = vmatpush1.msra.mxu0 0.0
    %1465 = vmatprep.subr.mxu0 0.0
    %1466 = vmatpush1.msra.mxu0 0.0
    %1467 = vmatprep.mubr.f32.mxu0 0.0
    %1468 = vmatmul.mubr.f32.gmra.mrb[0].mxu0 %v1215
    %v1469 = vpop.f32.mrb[0].mxu0
    %v1470 = vadd.f32 0.0, %v1469
    %v1471 = vpop.f32.mrb[0].mxu0
    %1472 = vmatprep.mubr.f32.mxu0 0.0
    %1473 = vmatmul.mubr.f32.gmra.mrb[0].mxu0 %v1220
    %v1474 = vpop.f32.mrb[0].mxu0
    %v1475 = vadd.f32 0.0, %v1474
    %v1476 = vpop.f32.mrb[0].mxu0
    %1477 = vmatprep.mubr.f32.mxu0 0.0
    %1478 = vmatmul.mubr.f32.gmra.mrb[0].mxu0 %v1225
    %v1479 = vpop.f32.mrb[0].mxu0
    %v1480 = vadd.f32 0.0, %v1479
    %v1481 = vpop.f32.mrb[0].mxu0
    %1482 = vmatprep.mubr.f32.mxu0 0.0
    %1483 = vmatmul.mubr.f32.gmra.mrb[0].mxu0 %v1230
    %v1484 = vpop.f32.mrb[0].mxu0
    %v1485 = vadd.f32 0.0, %v1484
    %v1486 = vpop.f32.mrb[0].mxu0
    %1487 = vmatprep.mubr.f32.mxu0 0.0
    %1488 = vmatmul.mubr.f32.gmra.mrb[0].mxu0 %v1235
    %v1489 = vpop.f32.mrb[0].mxu0
    %v1490 = vadd.f32 0.0, %v1489
    %v1491 = vpop.f32.mrb[0].mxu0
    %1492 = vmatprep.mubr.f32.mxu0 0.0
    %1493 = vmatmul.mubr.f32.gmra.mrb[0].mxu0 %v1240
    %v1494 = vpop.f32.mrb[0].mxu0
    %v1495 = vadd.f32 0.0, %v1494
    %v1496 = vpop.f32.mrb[0].mxu0
    %1497 = vmatprep.mubr.f32.mxu0 0.0
    %1498 = vmatmul.mubr.f32.gmra.mrb[0].mxu0 %v1245
    %v1499 = vpop.f32.mrb[0].mxu0
    %v1500 = vadd.f32 0.0, %v1499
    %v1501 = vpop.f32.mrb[0].mxu0
    %1502 = vmatprep.mubr.f32.mxu0 0.0
    %1503 = vmatmul.mubr.f32.gmra.mrb[0].mxu0 %v1250
    %v1504 = vpop.f32.mrb[0].mxu0
    %v1505 = vadd.f32 0.0, %v1504
    %v1506 = vpop.f32.mrb[0].mxu0
    %1507 = vmatprep.mubr.f32.mxu0 0.0
    %1508 = vmatmul.mubr.f32.gmra.mrb[0].mxu0 %v1255
    %v1509 = vpop.f32.mrb[0].mxu0
    %v1510 = vadd.f32 0.0, %v1509
    %v1511 = vpop.f32.mrb[0].mxu0
    %1512 = vmatprep.mubr.f32.mxu0 0.0
    %1513 = vmatmul.mubr.f32.gmra.mrb[0].mxu0 %v1260
    %v1514 = vpop.f32.mrb[0].mxu0
    %v1515 = vadd.f32 0.0, %v1514
    %v1516 = vpop.f32.mrb[0].mxu0
    %1517 = vmatprep.mubr.f32.mxu0 0.0
    %1518 = vmatmul.mubr.f32.gmra.mrb[0].mxu0 %v1265
    %v1519 = vpop.f32.mrb[0].mxu0
    %v1520 = vadd.f32 0.0, %v1519
    %v1521 = vpop.f32.mrb[0].mxu0
    %1522 = vmatprep.mubr.f32.mxu0 0.0
    %1523 = vmatmul.mubr.f32.gmra.mrb[0].mxu0 %v1270
    %v1524 = vpop.f32.mrb[0].mxu0
    %v1525 = vadd.f32 0.0, %v1524
    %v1526 = vpop.f32.mrb[0].mxu0
    %1527 = vmatprep.mubr.f32.mxu0 0.0
    %1528 = vmatmul.mubr.f32.gmra.mrb[0].mxu0 %v1275
    %v1529 = vpop.f32.mrb[0].mxu0
    %v1530 = vadd.f32 0.0, %v1529
    %v1531 = vpop.f32.mrb[0].mxu0
    %1532 = vmatprep.mubr.f32.mxu0 0.0
    %1533 = vmatmul.mubr.f32.gmra.mrb[0].mxu0 %v1280
    %v1534 = vpop.f32.mrb[0].mxu0
    %v1535 = vadd.f32 0.0, %v1534
    %v1536 = vpop.f32.mrb[0].mxu0
    %1537 = vmatprep.mubr.f32.mxu0 0.0
    %1538 = vmatmul.mubr.f32.gmra.mrb[0].mxu0 %v1285
    %v1539 = vpop.f32.mrb[0].mxu0
    %v1540 = vadd.f32 0.0, %v1539
    %v1541 = vpop.f32.mrb[0].mxu0
    %1542 = vmatprep.mubr.f32.mxu0 0.0
    %1543 = vmatmul.mubr.f32.gmra.mrb[0].mxu0 %v1290
    %v1544 = vpop.f32.mrb[0].mxu0
    %v1545 = vadd.f32 0.0, %v1544
    %v1546 = vpop.f32.mrb[0].mxu0
    %1547 = vmatprep.mubr.f32.mxu0 0.0
    %1548 = vmatmul.mubr.f32.gmra.mrb[0].mxu0 %v1295
    %v1549 = vpop.f32.mrb[0].mxu0
    %v1550 = vadd.f32 0.0, %v1549
    %v1551 = vpop.f32.mrb[0].mxu0
    %1552 = vmatprep.mubr.f32.mxu0 0.0
    %1553 = vmatmul.mubr.f32.gmra.mrb[0].mxu0 %v1300
    %v1554 = vpop.f32.mrb[0].mxu0
    %v1555 = vadd.f32 0.0, %v1554
    %v1556 = vpop.f32.mrb[0].mxu0
    %1557 = vmatprep.mubr.f32.mxu0 0.0
    %1558 = vmatmul.mubr.f32.gmra.mrb[0].mxu0 %v1305
    %v1559 = vpop.f32.mrb[0].mxu0
    %v1560 = vadd.f32 0.0, %v1559
    %v1561 = vpop.f32.mrb[0].mxu0
    %1562 = vmatprep.mubr.f32.mxu0 0.0
    %1563 = vmatmul.mubr.f32.gmra.mrb[0].mxu0 %v1310
    %v1564 = vpop.f32.mrb[0].mxu0
    %v1565 = vadd.f32 0.0, %v1564
    %v1566 = vpop.f32.mrb[0].mxu0
    %1567 = vmatprep.mubr.f32.mxu0 0.0
    %1568 = vmatmul.mubr.f32.gmra.mrb[0].mxu0 %v1315
    %v1569 = vpop.f32.mrb[0].mxu0
    %v1570 = vadd.f32 0.0, %v1569
    %v1571 = vpop.f32.mrb[0].mxu0
    %1572 = vmatprep.mubr.f32.mxu0 0.0
    %1573 = vmatmul.mubr.f32.gmra.mrb[0].mxu0 %v1320
    %v1574 = vpop.f32.mrb[0].mxu0
    %v1575 = vadd.f32 0.0, %v1574
    %v1576 = vpop.f32.mrb[0].mxu0
    %1577 = vmatprep.mubr.f32.mxu0 0.0
    %1578 = vmatmul.mubr.f32.gmra.mrb[0].mxu0 %v1325
    %v1579 = vpop.f32.mrb[0].mxu0
    %v1580 = vadd.f32 0.0, %v1579
    %v1581 = vpop.f32.mrb[0].mxu0
    %1582 = vmatprep.mubr.f32.mxu0 0.0
    %1583 = vmatmul.mubr.f32.gmra.mrb[0].mxu0 %v1330
    %v1584 = vpop.f32.mrb[0].mxu0
    %v1585 = vadd.f32 0.0, %v1584
    %v1586 = vpop.f32.mrb[0].mxu0
    %1587 = vmatprep.mubr.f32.mxu0 0.0
    %1588 = vmatmul.mubr.f32.gmra.mrb[0].mxu0 %v1335
    %v1589 = vpop.f32.mrb[0].mxu0
    %v1590 = vadd.f32 0.0, %v1589
    %v1591 = vpop.f32.mrb[0].mxu0
    %1592 = vmatprep.mubr.f32.mxu0 0.0
    %1593 = vmatmul.mubr.f32.gmra.mrb[0].mxu0 %v1340
    %v1594 = vpop.f32.mrb[0].mxu0
    %v1595 = vadd.f32 0.0, %v1594
    %v1596 = vpop.f32.mrb[0].mxu0
    %1597 = vmatprep.mubr.f32.mxu0 0.0
    %1598 = vmatmul.mubr.f32.gmra.mrb[0].mxu0 %v1345
    %v1599 = vpop.f32.mrb[0].mxu0
    %v1600 = vadd.f32 0.0, %v1599
    %v1601 = vpop.f32.mrb[0].mxu0
    %1602 = vmatprep.mubr.f32.mxu0 0.0
    %1603 = vmatmul.mubr.f32.gmra.mrb[0].mxu0 %v1350
    %v1604 = vpop.f32.mrb[0].mxu0
    %v1605 = vadd.f32 0.0, %v1604
    %v1606 = vpop.f32.mrb[0].mxu0
    %1607 = vmatprep.mubr.f32.mxu0 0.0
    %1608 = vmatmul.mubr.f32.gmra.mrb[0].mxu0 %v1355
    %v1609 = vpop.f32.mrb[0].mxu0
    %v1610 = vadd.f32 0.0, %v1609
    %v1611 = vpop.f32.mrb[0].mxu0
    %1612 = vmatprep.mubr.f32.mxu0 0.0
    %1613 = vmatmul.mubr.f32.gmra.mrb[0].mxu0 %v1360
    %v1614 = vpop.f32.mrb[0].mxu0
    %v1615 = vadd.f32 0.0, %v1614
    %v1616 = vpop.f32.mrb[0].mxu0
    %1617 = vmatprep.mubr.f32.mxu0 0.0
    %1618 = vmatmul.mubr.f32.gmra.mrb[0].mxu0 %v1365
    %v1619 = vpop.f32.mrb[0].mxu0
    %v1620 = vadd.f32 0.0, %v1619
    %v1621 = vpop.f32.mrb[0].mxu0
    %1622 = vmatprep.mubr.f32.mxu0 0.0
    %1623 = vmatmul.mubr.f32.gmra.mrb[0].mxu0 %v1370
    %v1624 = vpop.f32.mrb[0].mxu0
    %v1625 = vadd.f32 0.0, %v1624
    %v1626 = vpop.f32.mrb[0].mxu0
    %1627 = vmatprep.mubr.f32.mxu0 0.0
    %1628 = vmatmul.mubr.f32.gmra.mrb[0].mxu0 %v1375
    %v1629 = vpop.f32.mrb[0].mxu0
    %v1630 = vadd.f32 0.0, %v1629
    %v1631 = vpop.f32.mrb[0].mxu0
    %1632 = vmatprep.mubr.f32.mxu0 0.0
    %1633 = vmatmul.mubr.f32.gmra.mrb[0].mxu0 %v1380
    %v1634 = vpop.f32.mrb[0].mxu0
    %v1635 = vadd.f32 0.0, %v1634
    %v1636 = vpop.f32.mrb[0].mxu0
    %1637 = vmatprep.mubr.f32.mxu0 0.0
    %1638 = vmatmul.mubr.f32.gmra.mrb[0].mxu0 %v1385
    %v1639 = vpop.f32.mrb[0].mxu0
    %v1640 = vadd.f32 0.0, %v1639
    %v1641 = vpop.f32.mrb[0].mxu0
    %1642 = vmatprep.mubr.f32.mxu0 0.0
    %1643 = vmatmul.mubr.f32.gmra.mrb[0].mxu0 %v1390
    %v1644 = vpop.f32.mrb[0].mxu0
    %v1645 = vadd.f32 0.0, %v1644
    %v1646 = vpop.f32.mrb[0].mxu0
    %1647 = vmatprep.mubr.f32.mxu0 0.0
    %1648 = vmatmul.mubr.f32.gmra.mrb[0].mxu0 %v1395
    %v1649 = vpop.f32.mrb[0].mxu0
    %v1650 = vadd.f32 0.0, %v1649
    %v1651 = vpop.f32.mrb[0].mxu0
    %1652 = vmatprep.mubr.f32.mxu0 0.0
    %1653 = vmatmul.mubr.f32.gmra.mrb[0].mxu0 %v1400
    %v1654 = vpop.f32.mrb[0].mxu0
    %v1655 = vadd.f32 0.0, %v1654
    %v1656 = vpop.f32.mrb[0].mxu0
    %1657 = vdwg.mxu0
    %v1658 = vmax.f32 %v1470, 0.0
    %v1659 = vmax.f32 %v1475, 0.0
    %v1660 = vmax.f32 %v1480, 0.0
    %v1661 = vmax.f32 %v1485, 0.0
    %v1662 = vmax.f32 %v1490, 0.0
    %v1663 = vmax.f32 %v1495, 0.0
    %v1664 = vmax.f32 %v1500, 0.0
    %v1665 = vmax.f32 %v1505, 0.0
    %v1666 = vmax.f32 %v1510, 0.0
    %v1667 = vmax.f32 %v1515, 0.0
    %v1668 = vmax.f32 %v1520, 0.0
    %v1669 = vmax.f32 %v1525, 0.0
    %v1670 = vmax.f32 %v1530, 0.0
    %v1671 = vmax.f32 %v1535, 0.0
    %v1672 = vmax.f32 %v1540, 0.0
    %v1673 = vmax.f32 %v1545, 0.0
    %v1674 = vmax.f32 %v1550, 0.0
    %v1675 = vmax.f32 %v1555, 0.0
    %v1676 = vmax.f32 %v1560, 0.0
    %v1677 = vmax.f32 %v1565, 0.0
    %v1678 = vmax.f32 %v1570, 0.0
    %v1679 = vmax.f32 %v1575, 0.0
    %v1680 = vmax.f32 %v1580, 0.0
    %v1681 = vmax.f32 %v1585, 0.0
    %v1682 = vmax.f32 %v1590, 0.0
    %v1683 = vmax.f32 %v1595, 0.0
    %v1684 = vmax.f32 %v1600, 0.0
    %v1685 = vmax.f32 %v1605, 0.0
    %v1686 = vmax.f32 %v1610, 0.0
    %v1687 = vmax.f32 %v1615, 0.0
    %v1688 = vmax.f32 %v1620, 0.0
    %v1689 = vmax.f32 %v1625, 0.0
    %v1690 = vmax.f32 %v1630, 0.0
    %v1691 = vmax.f32 %v1635, 0.0
    %v1692 = vmax.f32 %v1640, 0.0
    %v1693 = vmax.f32 %v1645, 0.0
    %v1694 = vmax.f32 %v1650, 0.0
    %v1695 = vmax.f32 %v1655, 0.0
    %v1696 = vadd.f32 %v1658, 1e-05
    %v1697 = vadd.f32 %v1659, 1e-05
    %v1698 = vadd.f32 %v1660, 1e-05
    %v1699 = vadd.f32 %v1661, 1e-05
    %v1700 = vadd.f32 %v1662, 1e-05
    %v1701 = vadd.f32 %v1663, 1e-05
    %v1702 = vadd.f32 %v1664, 1e-05
    %v1703 = vadd.f32 %v1665, 1e-05
    %v1704 = vadd.f32 %v1666, 1e-05
    %v1705 = vadd.f32 %v1667, 1e-05
    %v1706 = vadd.f32 %v1668, 1e-05
    %v1707 = vadd.f32 %v1669, 1e-05
    %v1708 = vadd.f32 %v1670, 1e-05
    %v1709 = vadd.f32 %v1671, 1e-05
    %v1710 = vadd.f32 %v1672, 1e-05
    %v1711 = vadd.f32 %v1673, 1e-05
    %v1712 = vadd.f32 %v1674, 1e-05
    %v1713 = vadd.f32 %v1675, 1e-05
    %v1714 = vadd.f32 %v1676, 1e-05
    %v1715 = vadd.f32 %v1677, 1e-05
    %v1716 = vadd.f32 %v1678, 1e-05
    %v1717 = vadd.f32 %v1679, 1e-05
    %v1718 = vadd.f32 %v1680, 1e-05
    %v1719 = vadd.f32 %v1681, 1e-05
    %v1720 = vadd.f32 %v1682, 1e-05
    %v1721 = vadd.f32 %v1683, 1e-05
    %v1722 = vadd.f32 %v1684, 1e-05
    %v1723 = vadd.f32 %v1685, 1e-05
    %v1724 = vadd.f32 %v1686, 1e-05
    %v1725 = vadd.f32 %v1687, 1e-05
    %v1726 = vadd.f32 %v1688, 1e-05
    %v1727 = vadd.f32 %v1689, 1e-05
    %v1728 = vadd.f32 %v1690, 1e-05
    %v1729 = vadd.f32 %v1691, 1e-05
    %v1730 = vadd.f32 %v1692, 1e-05
    %v1731 = vadd.f32 %v1693, 1e-05
    %v1732 = vadd.f32 %v1694, 1e-05
    %v1733 = vadd.f32 %v1695, 1e-05
    %v1734 = vrsqrt.pop %v1696
    %v1735 = vrsqrt.pop %v1697
    %v1736 = vrsqrt.pop %v1698
    %v1737 = vrsqrt.pop %v1699
    %v1738 = vrsqrt.pop %v1700
    %v1739 = vrsqrt.pop %v1701
    %v1740 = vrsqrt.pop %v1702
    %v1741 = vrsqrt.pop %v1703
    %v1742 = vrsqrt.pop %v1704
    %v1743 = vrsqrt.pop %v1705
    %v1744 = vrsqrt.pop %v1706
    %v1745 = vrsqrt.pop %v1707
    %v1746 = vrsqrt.pop %v1708
    %v1747 = vrsqrt.pop %v1709
    %v1748 = vrsqrt.pop %v1710
    %v1749 = vrsqrt.pop %v1711
    %v1750 = vrsqrt.pop %v1712
    %v1751 = vrsqrt.pop %v1713
    %v1752 = vrsqrt.pop %v1714
    %v1753 = vrsqrt.pop %v1715
    %v1754 = vrsqrt.pop %v1716
    %v1755 = vrsqrt.pop %v1717
    %v1756 = vrsqrt.pop %v1718
    %v1757 = vrsqrt.pop %v1719
    %v1758 = vrsqrt.pop %v1720
    %v1759 = vrsqrt.pop %v1721
    %v1760 = vrsqrt.pop %v1722
    %v1761 = vrsqrt.pop %v1723
    %v1762 = vrsqrt.pop %v1724
    %v1763 = vrsqrt.pop %v1725
    %v1764 = vrsqrt.pop %v1726
    %v1765 = vrsqrt.pop %v1727
    %v1766 = vrsqrt.pop %v1728
    %v1767 = vrsqrt.pop %v1729
    %v1768 = vrsqrt.pop %v1730
    %v1769 = vrsqrt.pop %v1731
    %v1770 = vrsqrt.pop %v1732
    %v1771 = vrsqrt.pop %v1733
    %v1772 = vmul.f32 %v1072, %v1734
    %v1773 = vmul.f32 %v1073, %v1735
    %v1774 = vmul.f32 %v1074, %v1736
    %v1775 = vmul.f32 %v1075, %v1737
    %v1776 = vmul.f32 %v1076, %v1738
    %v1777 = vmul.f32 %v1077, %v1739
    %v1778 = vmul.f32 %v1078, %v1740
    %v1779 = vmul.f32 %v1079, %v1741
    %v1780 = vmul.f32 %v1080, %v1742
    %v1781 = vmul.f32 %v1081, %v1743
    %v1782 = vmul.f32 %v1082, %v1744
    %v1783 = vmul.f32 %v1083, %v1745
    %v1784 = vmul.f32 %v1084, %v1746
    %v1785 = vmul.f32 %v1085, %v1747
    %v1786 = vmul.f32 %v1086, %v1748
    %v1787 = vmul.f32 %v1087, %v1749
    %v1788 = vmul.f32 %v1088, %v1750
    %v1789 = vmul.f32 %v1089, %v1751
    %v1790 = vmul.f32 %v1090, %v1752
    %v1791 = vmul.f32 %v1091, %v1753
    %v1792 = vmul.f32 %v1092, %v1754
    %v1793 = vmul.f32 %v1093, %v1755
    %v1794 = vmul.f32 %v1094, %v1756
    %v1795 = vmul.f32 %v1095, %v1757
    %v1796 = vmul.f32 %v1096, %v1758
    %v1797 = vmul.f32 %v1097, %v1759
    %v1798 = vmul.f32 %v1098, %v1760
    %v1799 = vmul.f32 %v1099, %v1761
    %v1800 = vmul.f32 %v1100, %v1762
    %v1801 = vmul.f32 %v1101, %v1763
    %v1802 = vmul.f32 %v1102, %v1764
    %v1803 = vmul.f32 %v1103, %v1765
    %v1804 = vmul.f32 %v1104, %v1766
    %v1805 = vmul.f32 %v1105, %v1767
    %v1806 = vmul.f32 %v1106, %v1768
    %v1807 = vmul.f32 %v1107, %v1769
    %v1808 = vmul.f32 %v1108, %v1770
    %v1809 = vmul.f32 %v1109, %v1771
    %v1810 = vld [vmem:[#allocation11] sm:$0xff]
    %v1811 = vld [vmem:[#allocation11 + $0x8] sm:$0xff]
    %v1812 = vld [vmem:[#allocation11 + $0x10] sm:$0xff]
    %v1813 = vld [vmem:[#allocation11 + $0x18] sm:$0xff]
    %v1814 = vld [vmem:[#allocation11 + $0x20] sm:$0xff]
    %v1815 = vld [vmem:[#allocation11 + $0x28] sm:$0xff]
    %v1816 = vld [vmem:[#allocation11 + $0x30] sm:$0xff]
    %v1817 = vld [vmem:[#allocation11 + $0x38] sm:$0xff]
    %v1818 = vld [vmem:[#allocation11 + $0x40] sm:$0xff]
    %v1819 = vld [vmem:[#allocation11 + $0x48] sm:$0xff]
    %v1820 = vld [vmem:[#allocation11 + $0x50] sm:$0xff]
    %v1821 = vld [vmem:[#allocation11 + $0x58] sm:$0xff]
    %v1822 = vld [vmem:[#allocation11 + $0x60] sm:$0xff]
    %v1823 = vld [vmem:[#allocation11 + $0x68] sm:$0xff]
    %v1824 = vld [vmem:[#allocation11 + $0x70] sm:$0xff]
    %v1825 = vld [vmem:[#allocation11 + $0x78] sm:$0xff]
    %v1826 = vld [vmem:[%s6] sm:$0x1]
    %v1828 = vlaneseq
    %v1829 = vshrl.u32 %v1828, 7
    %v1830 = vsub.s32 0, %v1829
    %v1831 = vrot.slane %v1826, %v1830
    %1833 = vmatprep.subr.mxu0 0.0
    %1834 = vmatpush1.msra.mxu0 %v1810
    %1835 = vmatprep.subr.mxu0 0.0
    %1836 = vmatpush1.msra.mxu0 %v1811
    %1837 = vmatprep.subr.mxu0 0.0
    %1838 = vmatpush1.msra.mxu0 %v1812
    %1839 = vmatprep.subr.mxu0 0.0
    %1840 = vmatpush1.msra.mxu0 %v1813
    %1841 = vmatprep.subr.mxu0 0.0
    %1842 = vmatpush1.msra.mxu0 %v1814
    %1843 = vmatprep.subr.mxu0 0.0
    %1844 = vmatpush1.msra.mxu0 %v1815
    %1845 = vmatprep.subr.mxu0 0.0
    %1846 = vmatpush1.msra.mxu0 %v1816
    %1847 = vmatprep.subr.mxu0 0.0
    %1848 = vmatpush1.msra.mxu0 %v1817
    %1849 = vmatprep.subr.mxu0 0.0
    %1850 = vmatpush1.msra.mxu0 %v1818
    %1851 = vmatprep.subr.mxu0 0.0
    %1852 = vmatpush1.msra.mxu0 %v1819
    %1853 = vmatprep.subr.mxu0 0.0
    %1854 = vmatpush1.msra.mxu0 %v1820
    %1855 = vmatprep.subr.mxu0 0.0
    %1856 = vmatpush1.msra.mxu0 %v1821
    %1857 = vmatprep.subr.mxu0 0.0
    %1858 = vmatpush1.msra.mxu0 %v1822
    %1859 = vmatprep.subr.mxu0 0.0
    %1860 = vmatpush1.msra.mxu0 %v1823
    %1861 = vmatprep.subr.mxu0 0.0
    %1862 = vmatpush1.msra.mxu0 %v1824
    %1863 = vmatprep.subr.mxu0 0.0
    %1864 = vmatpush1.msra.mxu0 %v1825
    %1865 = vmatprep.subr.mxu0 0.0
    %1866 = vmatpush1.msra.mxu0 0.0
    %1867 = vmatprep.subr.mxu0 0.0
    %1868 = vmatpush1.msra.mxu0 0.0
    %1869 = vmatprep.subr.mxu0 0.0
    %1870 = vmatpush1.msra.mxu0 0.0
    %1871 = vmatprep.subr.mxu0 0.0
    %1872 = vmatpush1.msra.mxu0 0.0
    %1873 = vmatprep.subr.mxu0 0.0
    %1874 = vmatpush1.msra.mxu0 0.0
    %1875 = vmatprep.subr.mxu0 0.0
    %1876 = vmatpush1.msra.mxu0 0.0
    %1877 = vmatprep.subr.mxu0 0.0
    %1878 = vmatpush1.msra.mxu0 0.0
    %1879 = vmatprep.subr.mxu0 0.0
    %1880 = vmatpush1.msra.mxu0 0.0
    %1881 = vmatprep.subr.mxu0 0.0
    %1882 = vmatpush1.msra.mxu0 0.0
    %1883 = vmatprep.subr.mxu0 0.0
    %1884 = vmatpush1.msra.mxu0 0.0
    %1885 = vmatprep.subr.mxu0 0.0
    %1886 = vmatpush1.msra.mxu0 0.0
    %1887 = vmatprep.subr.mxu0 0.0
    %1888 = vmatpush1.msra.mxu0 0.0
    %1889 = vmatprep.subr.mxu0 0.0
    %1890 = vmatpush1.msra.mxu0 0.0
    %1891 = vmatprep.subr.mxu0 0.0
    %1892 = vmatpush1.msra.mxu0 0.0
    %1893 = vmatprep.subr.mxu0 0.0
    %1894 = vmatpush1.msra.mxu0 0.0
    %1895 = vmatprep.subr.mxu0 0.0
    %1896 = vmatpush1.msra.mxu0 0.0
    %1897 = vmatprep.mubr.f32.mxu0 0.0
    %1898 = vmatmul.mubr.f32.gmra.mrb[0].mxu0 %v1772
    %v1899 = vpop.f32.mrb[0].mxu0
    %v1900 = vadd.f32 %v1831, %v1899
    %v1901 = vpop.f32.mrb[0].mxu0
    %1902 = vmatprep.mubr.f32.mxu0 0.0
    %1903 = vmatmul.mubr.f32.gmra.mrb[0].mxu0 %v1773
    %v1904 = vpop.f32.mrb[0].mxu0
    %v1905 = vadd.f32 %v1831, %v1904
    %v1906 = vpop.f32.mrb[0].mxu0
    %1907 = vmatprep.mubr.f32.mxu0 0.0
    %1908 = vmatmul.mubr.f32.gmra.mrb[0].mxu0 %v1774
    %v1909 = vpop.f32.mrb[0].mxu0
    %v1910 = vadd.f32 %v1831, %v1909
    %v1911 = vpop.f32.mrb[0].mxu0
    %1912 = vmatprep.mubr.f32.mxu0 0.0
    %1913 = vmatmul.mubr.f32.gmra.mrb[0].mxu0 %v1775
    %v1914 = vpop.f32.mrb[0].mxu0
    %v1915 = vadd.f32 %v1831, %v1914
    %v1916 = vpop.f32.mrb[0].mxu0
    %1917 = vmatprep.mubr.f32.mxu0 0.0
    %1918 = vmatmul.mubr.f32.gmra.mrb[0].mxu0 %v1776
    %v1919 = vpop.f32.mrb[0].mxu0
    %v1920 = vadd.f32 %v1831, %v1919
    %v1921 = vpop.f32.mrb[0].mxu0
    %1922 = vmatprep.mubr.f32.mxu0 0.0
    %1923 = vmatmul.mubr.f32.gmra.mrb[0].mxu0 %v1777
    %v1924 = vpop.f32.mrb[0].mxu0
    %v1925 = vadd.f32 %v1831, %v1924
    %v1926 = vpop.f32.mrb[0].mxu0
    %1927 = vmatprep.mubr.f32.mxu0 0.0
    %1928 = vmatmul.mubr.f32.gmra.mrb[0].mxu0 %v1778
    %v1929 = vpop.f32.mrb[0].mxu0
    %v1930 = vadd.f32 %v1831, %v1929
    %v1931 = vpop.f32.mrb[0].mxu0
    %1932 = vmatprep.mubr.f32.mxu0 0.0
    %1933 = vmatmul.mubr.f32.gmra.mrb[0].mxu0 %v1779
    %v1934 = vpop.f32.mrb[0].mxu0
    %v1935 = vadd.f32 %v1831, %v1934
    %v1936 = vpop.f32.mrb[0].mxu0
    %1937 = vmatprep.mubr.f32.mxu0 0.0
    %1938 = vmatmul.mubr.f32.gmra.mrb[0].mxu0 %v1780
    %v1939 = vpop.f32.mrb[0].mxu0
    %v1940 = vadd.f32 %v1831, %v1939
    %v1941 = vpop.f32.mrb[0].mxu0
    %1942 = vmatprep.mubr.f32.mxu0 0.0
    %1943 = vmatmul.mubr.f32.gmra.mrb[0].mxu0 %v1781
    %v1944 = vpop.f32.mrb[0].mxu0
    %v1945 = vadd.f32 %v1831, %v1944
    %v1946 = vpop.f32.mrb[0].mxu0
    %1947 = vmatprep.mubr.f32.mxu0 0.0
    %1948 = vmatmul.mubr.f32.gmra.mrb[0].mxu0 %v1782
    %v1949 = vpop.f32.mrb[0].mxu0
    %v1950 = vadd.f32 %v1831, %v1949
    %v1951 = vpop.f32.mrb[0].mxu0
    %1952 = vmatprep.mubr.f32.mxu0 0.0
    %1953 = vmatmul.mubr.f32.gmra.mrb[0].mxu0 %v1783
    %v1954 = vpop.f32.mrb[0].mxu0
    %v1955 = vadd.f32 %v1831, %v1954
    %v1956 = vpop.f32.mrb[0].mxu0
    %1957 = vmatprep.mubr.f32.mxu0 0.0
    %1958 = vmatmul.mubr.f32.gmra.mrb[0].mxu0 %v1784
    %v1959 = vpop.f32.mrb[0].mxu0
    %v1960 = vadd.f32 %v1831, %v1959
    %v1961 = vpop.f32.mrb[0].mxu0
    %1962 = vmatprep.mubr.f32.mxu0 0.0
    %1963 = vmatmul.mubr.f32.gmra.mrb[0].mxu0 %v1785
    %v1964 = vpop.f32.mrb[0].mxu0
    %v1965 = vadd.f32 %v1831, %v1964
    %v1966 = vpop.f32.mrb[0].mxu0
    %1967 = vmatprep.mubr.f32.mxu0 0.0
    %1968 = vmatmul.mubr.f32.gmra.mrb[0].mxu0 %v1786
    %v1969 = vpop.f32.mrb[0].mxu0
    %v1970 = vadd.f32 %v1831, %v1969
    %v1971 = vpop.f32.mrb[0].mxu0
    %1972 = vmatprep.mubr.f32.mxu0 0.0
    %1973 = vmatmul.mubr.f32.gmra.mrb[0].mxu0 %v1787
    %v1974 = vpop.f32.mrb[0].mxu0
    %v1975 = vadd.f32 %v1831, %v1974
    %v1976 = vpop.f32.mrb[0].mxu0
    %1977 = vmatprep.mubr.f32.mxu0 0.0
    %1978 = vmatmul.mubr.f32.gmra.mrb[0].mxu0 %v1788
    %v1979 = vpop.f32.mrb[0].mxu0
    %v1980 = vadd.f32 %v1831, %v1979
    %v1981 = vpop.f32.mrb[0].mxu0
    %1982 = vmatprep.mubr.f32.mxu0 0.0
    %1983 = vmatmul.mubr.f32.gmra.mrb[0].mxu0 %v1789
    %v1984 = vpop.f32.mrb[0].mxu0
    %v1985 = vadd.f32 %v1831, %v1984
    %v1986 = vpop.f32.mrb[0].mxu0
    %1987 = vmatprep.mubr.f32.mxu0 0.0
    %1988 = vmatmul.mubr.f32.gmra.mrb[0].mxu0 %v1790
    %v1989 = vpop.f32.mrb[0].mxu0
    %v1990 = vadd.f32 %v1831, %v1989
    %v1991 = vpop.f32.mrb[0].mxu0
    %1992 = vmatprep.mubr.f32.mxu0 0.0
    %1993 = vmatmul.mubr.f32.gmra.mrb[0].mxu0 %v1791
    %v1994 = vpop.f32.mrb[0].mxu0
    %v1995 = vadd.f32 %v1831, %v1994
    %v1996 = vpop.f32.mrb[0].mxu0
    %1997 = vmatprep.mubr.f32.mxu0 0.0
    %1998 = vmatmul.mubr.f32.gmra.mrb[0].mxu0 %v1792
    %v1999 = vpop.f32.mrb[0].mxu0
    %v2000 = vadd.f32 %v1831, %v1999
    %v2001 = vpop.f32.mrb[0].mxu0
    %2002 = vmatprep.mubr.f32.mxu0 0.0
    %2003 = vmatmul.mubr.f32.gmra.mrb[0].mxu0 %v1793
    %v2004 = vpop.f32.mrb[0].mxu0
    %v2005 = vadd.f32 %v1831, %v2004
    %v2006 = vpop.f32.mrb[0].mxu0
    %2007 = vmatprep.mubr.f32.mxu0 0.0
    %2008 = vmatmul.mubr.f32.gmra.mrb[0].mxu0 %v1794
    %v2009 = vpop.f32.mrb[0].mxu0
    %v2010 = vadd.f32 %v1831, %v2009
    %v2011 = vpop.f32.mrb[0].mxu0
    %2012 = vmatprep.mubr.f32.mxu0 0.0
    %2013 = vmatmul.mubr.f32.gmra.mrb[0].mxu0 %v1795
    %v2014 = vpop.f32.mrb[0].mxu0
    %v2015 = vadd.f32 %v1831, %v2014
    %v2016 = vpop.f32.mrb[0].mxu0
    %2017 = vmatprep.mubr.f32.mxu0 0.0
    %2018 = vmatmul.mubr.f32.gmra.mrb[0].mxu0 %v1796
    %v2019 = vpop.f32.mrb[0].mxu0
    %v2020 = vadd.f32 %v1831, %v2019
    %v2021 = vpop.f32.mrb[0].mxu0
    %2022 = vmatprep.mubr.f32.mxu0 0.0
    %2023 = vmatmul.mubr.f32.gmra.mrb[0].mxu0 %v1797
    %v2024 = vpop.f32.mrb[0].mxu0
    %v2025 = vadd.f32 %v1831, %v2024
    %v2026 = vpop.f32.mrb[0].mxu0
    %2027 = vmatprep.mubr.f32.mxu0 0.0
    %2028 = vmatmul.mubr.f32.gmra.mrb[0].mxu0 %v1798
    %v2029 = vpop.f32.mrb[0].mxu0
    %v2030 = vadd.f32 %v1831, %v2029
    %v2031 = vpop.f32.mrb[0].mxu0
    %2032 = vmatprep.mubr.f32.mxu0 0.0
    %2033 = vmatmul.mubr.f32.gmra.mrb[0].mxu0 %v1799
    %v2034 = vpop.f32.mrb[0].mxu0
    %v2035 = vadd.f32 %v1831, %v2034
    %v2036 = vpop.f32.mrb[0].mxu0
    %2037 = vmatprep.mubr.f32.mxu0 0.0
    %2038 = vmatmul.mubr.f32.gmra.mrb[0].mxu0 %v1800
    %v2039 = vpop.f32.mrb[0].mxu0
    %v2040 = vadd.f32 %v1831, %v2039
    %v2041 = vpop.f32.mrb[0].mxu0
    %2042 = vmatprep.mubr.f32.mxu0 0.0
    %2043 = vmatmul.mubr.f32.gmra.mrb[0].mxu0 %v1801
    %v2044 = vpop.f32.mrb[0].mxu0
    %v2045 = vadd.f32 %v1831, %v2044
    %v2046 = vpop.f32.mrb[0].mxu0
    %2047 = vmatprep.mubr.f32.mxu0 0.0
    %2048 = vmatmul.mubr.f32.gmra.mrb[0].mxu0 %v1802
    %v2049 = vpop.f32.mrb[0].mxu0
    %v2050 = vadd.f32 %v1831, %v2049
    %v2051 = vpop.f32.mrb[0].mxu0
    %2052 = vmatprep.mubr.f32.mxu0 0.0
    %2053 = vmatmul.mubr.f32.gmra.mrb[0].mxu0 %v1803
    %v2054 = vpop.f32.mrb[0].mxu0
    %v2055 = vadd.f32 %v1831, %v2054
    %v2056 = vpop.f32.mrb[0].mxu0
    %2057 = vmatprep.mubr.f32.mxu0 0.0
    %2058 = vmatmul.mubr.f32.gmra.mrb[0].mxu0 %v1804
    %v2059 = vpop.f32.mrb[0].mxu0
    %v2060 = vadd.f32 %v1831, %v2059
    %v2061 = vpop.f32.mrb[0].mxu0
    %2062 = vmatprep.mubr.f32.mxu0 0.0
    %2063 = vmatmul.mubr.f32.gmra.mrb[0].mxu0 %v1805
    %v2064 = vpop.f32.mrb[0].mxu0
    %v2065 = vadd.f32 %v1831, %v2064
    %v2066 = vpop.f32.mrb[0].mxu0
    %2067 = vmatprep.mubr.f32.mxu0 0.0
    %2068 = vmatmul.mubr.f32.gmra.mrb[0].mxu0 %v1806
    %v2069 = vpop.f32.mrb[0].mxu0
    %v2070 = vadd.f32 %v1831, %v2069
    %v2071 = vpop.f32.mrb[0].mxu0
    %2072 = vmatprep.mubr.f32.mxu0 0.0
    %2073 = vmatmul.mubr.f32.gmra.mrb[0].mxu0 %v1807
    %v2074 = vpop.f32.mrb[0].mxu0
    %v2075 = vadd.f32 %v1831, %v2074
    %v2076 = vpop.f32.mrb[0].mxu0
    %2077 = vmatprep.mubr.f32.mxu0 0.0
    %2078 = vmatmul.mubr.f32.gmra.mrb[0].mxu0 %v1808
    %v2079 = vpop.f32.mrb[0].mxu0
    %v2080 = vadd.f32 %v1831, %v2079
    %v2081 = vpop.f32.mrb[0].mxu0
    %2082 = vmatprep.mubr.f32.mxu0 0.0
    %2083 = vmatmul.mubr.f32.gmra.mrb[0].mxu0 %v1809
    %v2084 = vpop.f32.mrb[0].mxu0
    %v2085 = vadd.f32 %v1831, %v2084
    %v2086 = vpop.f32.mrb[0].mxu0
    %2087 = vdwg.mxu0
    %v2088 = vxor.u32 %v1900, 2147483648
    %v2089 = vxor.u32 %v1905, 2147483648
    %v2090 = vxor.u32 %v1910, 2147483648
    %v2091 = vxor.u32 %v1915, 2147483648
    %v2092 = vxor.u32 %v1920, 2147483648
    %v2093 = vxor.u32 %v1925, 2147483648
    %v2094 = vxor.u32 %v1930, 2147483648
    %v2095 = vxor.u32 %v1935, 2147483648
    %v2096 = vxor.u32 %v1940, 2147483648
    %v2097 = vxor.u32 %v1945, 2147483648
    %v2098 = vxor.u32 %v1950, 2147483648
    %v2099 = vxor.u32 %v1955, 2147483648
    %v2100 = vxor.u32 %v1960, 2147483648
    %v2101 = vxor.u32 %v1965, 2147483648
    %v2102 = vxor.u32 %v1970, 2147483648
    %v2103 = vxor.u32 %v1975, 2147483648
    %v2104 = vxor.u32 %v1980, 2147483648
    %v2105 = vxor.u32 %v1985, 2147483648
    %v2106 = vxor.u32 %v1990, 2147483648
    %v2107 = vxor.u32 %v1995, 2147483648
    %v2108 = vxor.u32 %v2000, 2147483648
    %v2109 = vxor.u32 %v2005, 2147483648
    %v2110 = vxor.u32 %v2010, 2147483648
    %v2111 = vxor.u32 %v2015, 2147483648
    %v2112 = vxor.u32 %v2020, 2147483648
    %v2113 = vxor.u32 %v2025, 2147483648
    %v2114 = vxor.u32 %v2030, 2147483648
    %v2115 = vxor.u32 %v2035, 2147483648
    %v2116 = vxor.u32 %v2040, 2147483648
    %v2117 = vxor.u32 %v2045, 2147483648
    %v2118 = vxor.u32 %v2050, 2147483648
    %v2119 = vxor.u32 %v2055, 2147483648
    %v2120 = vxor.u32 %v2060, 2147483648
    %v2121 = vxor.u32 %v2065, 2147483648
    %v2122 = vxor.u32 %v2070, 2147483648
    %v2123 = vxor.u32 %v2075, 2147483648
    %v2124 = vxor.u32 %v2080, 2147483648
    %v2125 = vxor.u32 %v2085, 2147483648
    %v2126 = vmul.f32 %v2088, 1.442695
    %v2127 = vpow.pop %v2126
    %v2128 = vmul.f32 %v2089, 1.442695
    %v2129 = vpow.pop %v2128
    %v2130 = vmul.f32 %v2090, 1.442695
    %v2131 = vpow.pop %v2130
    %v2132 = vmul.f32 %v2091, 1.442695
    %v2133 = vpow.pop %v2132
    %v2134 = vmul.f32 %v2092, 1.442695
    %v2135 = vpow.pop %v2134
    %v2136 = vmul.f32 %v2093, 1.442695
    %v2137 = vpow.pop %v2136
    %v2138 = vmul.f32 %v2094, 1.442695
    %v2139 = vpow.pop %v2138
    %v2140 = vmul.f32 %v2095, 1.442695
    %v2141 = vpow.pop %v2140
    %v2142 = vmul.f32 %v2096, 1.442695
    %v2143 = vpow.pop %v2142
    %v2144 = vmul.f32 %v2097, 1.442695
    %v2145 = vpow.pop %v2144
    %v2146 = vmul.f32 %v2098, 1.442695
    %v2147 = vpow.pop %v2146
    %v2148 = vmul.f32 %v2099, 1.442695
    %v2149 = vpow.pop %v2148
    %v2150 = vmul.f32 %v2100, 1.442695
    %v2151 = vpow.pop %v2150
    %v2152 = vmul.f32 %v2101, 1.442695
    %v2153 = vpow.pop %v2152
    %v2154 = vmul.f32 %v2102, 1.442695
    %v2155 = vpow.pop %v2154
    %v2156 = vmul.f32 %v2103, 1.442695
    %v2157 = vpow.pop %v2156
    %v2158 = vmul.f32 %v2104, 1.442695
    %v2159 = vpow.pop %v2158
    %v2160 = vmul.f32 %v2105, 1.442695
    %v2161 = vpow.pop %v2160
    %v2162 = vmul.f32 %v2106, 1.442695
    %v2163 = vpow.pop %v2162
    %v2164 = vmul.f32 %v2107, 1.442695
    %v2165 = vpow.pop %v2164
    %v2166 = vmul.f32 %v2108, 1.442695
    %v2167 = vpow.pop %v2166
    %v2168 = vmul.f32 %v2109, 1.442695
    %v2169 = vpow.pop %v2168
    %v2170 = vmul.f32 %v2110, 1.442695
    %v2171 = vpow.pop %v2170
    %v2172 = vmul.f32 %v2111, 1.442695
    %v2173 = vpow.pop %v2172
    %v2174 = vmul.f32 %v2112, 1.442695
    %v2175 = vpow.pop %v2174
    %v2176 = vmul.f32 %v2113, 1.442695
    %v2177 = vpow.pop %v2176
    %v2178 = vmul.f32 %v2114, 1.442695
    %v2179 = vpow.pop %v2178
    %v2180 = vmul.f32 %v2115, 1.442695
    %v2181 = vpow.pop %v2180
    %v2182 = vmul.f32 %v2116, 1.442695
    %v2183 = vpow.pop %v2182
    %v2184 = vmul.f32 %v2117, 1.442695
    %v2185 = vpow.pop %v2184
    %v2186 = vmul.f32 %v2118, 1.442695
    %v2187 = vpow.pop %v2186
    %v2188 = vmul.f32 %v2119, 1.442695
    %v2189 = vpow.pop %v2188
    %v2190 = vmul.f32 %v2120, 1.442695
    %v2191 = vpow.pop %v2190
    %v2192 = vmul.f32 %v2121, 1.442695
    %v2193 = vpow.pop %v2192
    %v2194 = vmul.f32 %v2122, 1.442695
    %v2195 = vpow.pop %v2194
    %v2196 = vmul.f32 %v2123, 1.442695
    %v2197 = vpow.pop %v2196
    %v2198 = vmul.f32 %v2124, 1.442695
    %v2199 = vpow.pop %v2198
    %v2200 = vmul.f32 %v2125, 1.442695
    %v2201 = vpow.pop %v2200
    %v2202 = vadd.f32 %v2127, 1.0
    %v2203 = vadd.f32 %v2129, 1.0
    %v2204 = vadd.f32 %v2131, 1.0
    %v2205 = vadd.f32 %v2133, 1.0
    %v2206 = vadd.f32 %v2135, 1.0
    %v2207 = vadd.f32 %v2137, 1.0
    %v2208 = vadd.f32 %v2139, 1.0
    %v2209 = vadd.f32 %v2141, 1.0
    %v2210 = vadd.f32 %v2143, 1.0
    %v2211 = vadd.f32 %v2145, 1.0
    %v2212 = vadd.f32 %v2147, 1.0
    %v2213 = vadd.f32 %v2149, 1.0
    %v2214 = vadd.f32 %v2151, 1.0
    %v2215 = vadd.f32 %v2153, 1.0
    %v2216 = vadd.f32 %v2155, 1.0
    %v2217 = vadd.f32 %v2157, 1.0
    %v2218 = vadd.f32 %v2159, 1.0
    %v2219 = vadd.f32 %v2161, 1.0
    %v2220 = vadd.f32 %v2163, 1.0
    %v2221 = vadd.f32 %v2165, 1.0
    %v2222 = vadd.f32 %v2167, 1.0
    %v2223 = vadd.f32 %v2169, 1.0
    %v2224 = vadd.f32 %v2171, 1.0
    %v2225 = vadd.f32 %v2173, 1.0
    %v2226 = vadd.f32 %v2175, 1.0
    %v2227 = vadd.f32 %v2177, 1.0
    %v2228 = vadd.f32 %v2179, 1.0
    %v2229 = vadd.f32 %v2181, 1.0
    %v2230 = vadd.f32 %v2183, 1.0
    %v2231 = vadd.f32 %v2185, 1.0
    %v2232 = vadd.f32 %v2187, 1.0
    %v2233 = vadd.f32 %v2189, 1.0
    %v2234 = vadd.f32 %v2191, 1.0
    %v2235 = vadd.f32 %v2193, 1.0
    %v2236 = vadd.f32 %v2195, 1.0
    %v2237 = vadd.f32 %v2197, 1.0
    %v2238 = vadd.f32 %v2199, 1.0
    %v2239 = vadd.f32 %v2201, 1.0
    %v2240 = vrcp.pop %v2202
    %v2241 = vmul.f32 1.0, %v2240
    %v2242 = vrcp.pop %v2203
    %v2243 = vmul.f32 1.0, %v2242
    %v2244 = vrcp.pop %v2204
    %v2245 = vmul.f32 1.0, %v2244
    %v2246 = vrcp.pop %v2205
    %v2247 = vmul.f32 1.0, %v2246
    %v2248 = vrcp.pop %v2206
    %v2249 = vmul.f32 1.0, %v2248
    %v2250 = vrcp.pop %v2207
    %v2251 = vmul.f32 1.0, %v2250
    %v2252 = vrcp.pop %v2208
    %v2253 = vmul.f32 1.0, %v2252
    %v2254 = vrcp.pop %v2209
    %v2255 = vmul.f32 1.0, %v2254
    %v2256 = vrcp.pop %v2210
    %v2257 = vmul.f32 1.0, %v2256
    %v2258 = vrcp.pop %v2211
    %v2259 = vmul.f32 1.0, %v2258
    %v2260 = vrcp.pop %v2212
    %v2261 = vmul.f32 1.0, %v2260
    %v2262 = vrcp.pop %v2213
    %v2263 = vmul.f32 1.0, %v2262
    %v2264 = vrcp.pop %v2214
    %v2265 = vmul.f32 1.0, %v2264
    %v2266 = vrcp.pop %v2215
    %v2267 = vmul.f32 1.0, %v2266
    %v2268 = vrcp.pop %v2216
    %v2269 = vmul.f32 1.0, %v2268
    %v2270 = vrcp.pop %v2217
    %v2271 = vmul.f32 1.0, %v2270
    %v2272 = vrcp.pop %v2218
    %v2273 = vmul.f32 1.0, %v2272
    %v2274 = vrcp.pop %v2219
    %v2275 = vmul.f32 1.0, %v2274
    %v2276 = vrcp.pop %v2220
    %v2277 = vmul.f32 1.0, %v2276
    %v2278 = vrcp.pop %v2221
    %v2279 = vmul.f32 1.0, %v2278
    %v2280 = vrcp.pop %v2222
    %v2281 = vmul.f32 1.0, %v2280
    %v2282 = vrcp.pop %v2223
    %v2283 = vmul.f32 1.0, %v2282
    %v2284 = vrcp.pop %v2224
    %v2285 = vmul.f32 1.0, %v2284
    %v2286 = vrcp.pop %v2225
    %v2287 = vmul.f32 1.0, %v2286
    %v2288 = vrcp.pop %v2226
    %v2289 = vmul.f32 1.0, %v2288
    %v2290 = vrcp.pop %v2227
    %v2291 = vmul.f32 1.0, %v2290
    %v2292 = vrcp.pop %v2228
    %v2293 = vmul.f32 1.0, %v2292
    %v2294 = vrcp.pop %v2229
    %v2295 = vmul.f32 1.0, %v2294
    %v2296 = vrcp.pop %v2230
    %v2297 = vmul.f32 1.0, %v2296
    %v2298 = vrcp.pop %v2231
    %v2299 = vmul.f32 1.0, %v2298
    %v2300 = vrcp.pop %v2232
    %v2301 = vmul.f32 1.0, %v2300
    %v2302 = vrcp.pop %v2233
    %v2303 = vmul.f32 1.0, %v2302
    %v2304 = vrcp.pop %v2234
    %v2305 = vmul.f32 1.0, %v2304
    %v2306 = vrcp.pop %v2235
    %v2307 = vmul.f32 1.0, %v2306
    %v2308 = vrcp.pop %v2236
    %v2309 = vmul.f32 1.0, %v2308
    %v2310 = vrcp.pop %v2237
    %v2311 = vmul.f32 1.0, %v2310
    %v2312 = vrcp.pop %v2238
    %v2313 = vmul.f32 1.0, %v2312
    %v2314 = vrcp.pop %v2239
    %v2315 = vmul.f32 1.0, %v2314
    %v2316 = vmul.f32 %v1900, %v2241
    %v2317 = vmul.f32 %v1905, %v2243
    %v2318 = vmul.f32 %v1910, %v2245
    %v2319 = vmul.f32 %v1915, %v2247
    %v2320 = vmul.f32 %v1920, %v2249
    %v2321 = vmul.f32 %v1925, %v2251
    %v2322 = vmul.f32 %v1930, %v2253
    %v2323 = vmul.f32 %v1935, %v2255
    %v2324 = vmul.f32 %v1940, %v2257
    %v2325 = vmul.f32 %v1945, %v2259
    %v2326 = vmul.f32 %v1950, %v2261
    %v2327 = vmul.f32 %v1955, %v2263
    %v2328 = vmul.f32 %v1960, %v2265
    %v2329 = vmul.f32 %v1965, %v2267
    %v2330 = vmul.f32 %v1970, %v2269
    %v2331 = vmul.f32 %v1975, %v2271
    %v2332 = vmul.f32 %v1980, %v2273
    %v2333 = vmul.f32 %v1985, %v2275
    %v2334 = vmul.f32 %v1990, %v2277
    %v2335 = vmul.f32 %v1995, %v2279
    %v2336 = vmul.f32 %v2000, %v2281
    %v2337 = vmul.f32 %v2005, %v2283
    %v2338 = vmul.f32 %v2010, %v2285
    %v2339 = vmul.f32 %v2015, %v2287
    %v2340 = vmul.f32 %v2020, %v2289
    %v2341 = vmul.f32 %v2025, %v2291
    %v2342 = vmul.f32 %v2030, %v2293
    %v2343 = vmul.f32 %v2035, %v2295
    %v2344 = vmul.f32 %v2040, %v2297
    %v2345 = vmul.f32 %v2045, %v2299
    %v2346 = vmul.f32 %v2050, %v2301
    %v2347 = vmul.f32 %v2055, %v2303
    %v2348 = vmul.f32 %v2060, %v2305
    %v2349 = vmul.f32 %v2065, %v2307
    %v2350 = vmul.f32 %v2070, %v2309
    %v2351 = vmul.f32 %v2075, %v2311
    %v2352 = vmul.f32 %v2080, %v2313
    %v2353 = vmul.f32 %v2085, %v2315
    %v2354 = vld [vmem:[#allocation12] sm:$0xff]
    %v2355 = vld [vmem:[#allocation12 + $0x8] sm:$0xff]
    %v2356 = vld [vmem:[#allocation12 + $0x10] sm:$0xff]
    %v2357 = vld [vmem:[#allocation12 + $0x18] sm:$0xff]
    %v2358 = vld [vmem:[#allocation12 + $0x20] sm:$0xff]
    %v2359 = vld [vmem:[#allocation12 + $0x28] sm:$0xff]
    %v2360 = vld [vmem:[#allocation12 + $0x30] sm:$0xff]
    %v2361 = vld [vmem:[#allocation12 + $0x38] sm:$0xff]
    %v2362 = vld [vmem:[#allocation12 + $0x40] sm:$0xff]
    %v2363 = vld [vmem:[#allocation12 + $0x48] sm:$0xff]
    %v2364 = vld [vmem:[#allocation12 + $0x50] sm:$0xff]
    %v2365 = vld [vmem:[#allocation12 + $0x58] sm:$0xff]
    %v2366 = vld [vmem:[#allocation12 + $0x60] sm:$0xff]
    %v2367 = vld [vmem:[#allocation12 + $0x68] sm:$0xff]
    %v2368 = vld [vmem:[#allocation12 + $0x70] sm:$0xff]
    %v2369 = vld [vmem:[#allocation12 + $0x78] sm:$0xff]
    %v2370 = vld [vmem:[%s8] sm:$0x1]
    %v2372 = vlaneseq
    %v2373 = vshrl.u32 %v2372, 7
    %v2374 = vsub.s32 0, %v2373
    %v2375 = vrot.slane %v2370, %v2374
    %2377 = vmatprep.subr.mxu0 0.0
    %2378 = vmatpush1.msra.mxu0 %v2354
    %2379 = vmatprep.subr.mxu0 0.0
    %2380 = vmatpush1.msra.mxu0 %v2355
    %2381 = vmatprep.subr.mxu0 0.0
    %2382 = vmatpush1.msra.mxu0 %v2356
    %2383 = vmatprep.subr.mxu0 0.0
    %2384 = vmatpush1.msra.mxu0 %v2357
    %2385 = vmatprep.subr.mxu0 0.0
    %2386 = vmatpush1.msra.mxu0 %v2358
    %2387 = vmatprep.subr.mxu0 0.0
    %2388 = vmatpush1.msra.mxu0 %v2359
    %2389 = vmatprep.subr.mxu0 0.0
    %2390 = vmatpush1.msra.mxu0 %v2360
    %2391 = vmatprep.subr.mxu0 0.0
    %2392 = vmatpush1.msra.mxu0 %v2361
    %2393 = vmatprep.subr.mxu0 0.0
    %2394 = vmatpush1.msra.mxu0 %v2362
    %2395 = vmatprep.subr.mxu0 0.0
    %2396 = vmatpush1.msra.mxu0 %v2363
    %2397 = vmatprep.subr.mxu0 0.0
    %2398 = vmatpush1.msra.mxu0 %v2364
    %2399 = vmatprep.subr.mxu0 0.0
    %2400 = vmatpush1.msra.mxu0 %v2365
    %2401 = vmatprep.subr.mxu0 0.0
    %2402 = vmatpush1.msra.mxu0 %v2366
    %2403 = vmatprep.subr.mxu0 0.0
    %2404 = vmatpush1.msra.mxu0 %v2367
    %2405 = vmatprep.subr.mxu0 0.0
    %2406 = vmatpush1.msra.mxu0 %v2368
    %2407 = vmatprep.subr.mxu0 0.0
    %2408 = vmatpush1.msra.mxu0 %v2369
    %2409 = vmatprep.subr.mxu0 0.0
    %2410 = vmatpush1.msra.mxu0 0.0
    %2411 = vmatprep.subr.mxu0 0.0
    %2412 = vmatpush1.msra.mxu0 0.0
    %2413 = vmatprep.subr.mxu0 0.0
    %2414 = vmatpush1.msra.mxu0 0.0
    %2415 = vmatprep.subr.mxu0 0.0
    %2416 = vmatpush1.msra.mxu0 0.0
    %2417 = vmatprep.subr.mxu0 0.0
    %2418 = vmatpush1.msra.mxu0 0.0
    %2419 = vmatprep.subr.mxu0 0.0
    %2420 = vmatpush1.msra.mxu0 0.0
    %2421 = vmatprep.subr.mxu0 0.0
    %2422 = vmatpush1.msra.mxu0 0.0
    %2423 = vmatprep.subr.mxu0 0.0
    %2424 = vmatpush1.msra.mxu0 0.0
    %2425 = vmatprep.subr.mxu0 0.0
    %2426 = vmatpush1.msra.mxu0 0.0
    %2427 = vmatprep.subr.mxu0 0.0
    %2428 = vmatpush1.msra.mxu0 0.0
    %2429 = vmatprep.subr.mxu0 0.0
    %2430 = vmatpush1.msra.mxu0 0.0
    %2431 = vmatprep.subr.mxu0 0.0
    %2432 = vmatpush1.msra.mxu0 0.0
    %2433 = vmatprep.subr.mxu0 0.0
    %2434 = vmatpush1.msra.mxu0 0.0
    %2435 = vmatprep.subr.mxu0 0.0
    %2436 = vmatpush1.msra.mxu0 0.0
    %2437 = vmatprep.subr.mxu0 0.0
    %2438 = vmatpush1.msra.mxu0 0.0
    %2439 = vmatprep.subr.mxu0 0.0
    %2440 = vmatpush1.msra.mxu0 0.0
    %2441 = vmatprep.mubr.f32.mxu0 0.0
    %2442 = vmatmul.mubr.f32.gmra.mrb[0].mxu0 %v2316
    %v2443 = vpop.f32.mrb[0].mxu0
    %v2444 = vadd.f32 %v2375, %v2443
    %v2445 = vpop.f32.mrb[0].mxu0
    %2446 = vmatprep.mubr.f32.mxu0 0.0
    %2447 = vmatmul.mubr.f32.gmra.mrb[0].mxu0 %v2317
    %v2448 = vpop.f32.mrb[0].mxu0
    %v2449 = vadd.f32 %v2375, %v2448
    %v2450 = vpop.f32.mrb[0].mxu0
    %2451 = vmatprep.mubr.f32.mxu0 0.0
    %2452 = vmatmul.mubr.f32.gmra.mrb[0].mxu0 %v2318
    %v2453 = vpop.f32.mrb[0].mxu0
    %v2454 = vadd.f32 %v2375, %v2453
    %v2455 = vpop.f32.mrb[0].mxu0
    %2456 = vmatprep.mubr.f32.mxu0 0.0
    %2457 = vmatmul.mubr.f32.gmra.mrb[0].mxu0 %v2319
    %v2458 = vpop.f32.mrb[0].mxu0
    %v2459 = vadd.f32 %v2375, %v2458
    %v2460 = vpop.f32.mrb[0].mxu0
    %2461 = vmatprep.mubr.f32.mxu0 0.0
    %2462 = vmatmul.mubr.f32.gmra.mrb[0].mxu0 %v2320
    %v2463 = vpop.f32.mrb[0].mxu0
    %v2464 = vadd.f32 %v2375, %v2463
    %v2465 = vpop.f32.mrb[0].mxu0
    %2466 = vmatprep.mubr.f32.mxu0 0.0
    %2467 = vmatmul.mubr.f32.gmra.mrb[0].mxu0 %v2321
    %v2468 = vpop.f32.mrb[0].mxu0
    %v2469 = vadd.f32 %v2375, %v2468
    %v2470 = vpop.f32.mrb[0].mxu0
    %2471 = vmatprep.mubr.f32.mxu0 0.0
    %2472 = vmatmul.mubr.f32.gmra.mrb[0].mxu0 %v2322
    %v2473 = vpop.f32.mrb[0].mxu0
    %v2474 = vadd.f32 %v2375, %v2473
    %v2475 = vpop.f32.mrb[0].mxu0
    %2476 = vmatprep.mubr.f32.mxu0 0.0
    %2477 = vmatmul.mubr.f32.gmra.mrb[0].mxu0 %v2323
    %v2478 = vpop.f32.mrb[0].mxu0
    %v2479 = vadd.f32 %v2375, %v2478
    %v2480 = vpop.f32.mrb[0].mxu0
    %2481 = vmatprep.mubr.f32.mxu0 0.0
    %2482 = vmatmul.mubr.f32.gmra.mrb[0].mxu0 %v2324
    %v2483 = vpop.f32.mrb[0].mxu0
    %v2484 = vadd.f32 %v2375, %v2483
    %v2485 = vpop.f32.mrb[0].mxu0
    %2486 = vmatprep.mubr.f32.mxu0 0.0
    %2487 = vmatmul.mubr.f32.gmra.mrb[0].mxu0 %v2325
    %v2488 = vpop.f32.mrb[0].mxu0
    %v2489 = vadd.f32 %v2375, %v2488
    %v2490 = vpop.f32.mrb[0].mxu0
    %2491 = vmatprep.mubr.f32.mxu0 0.0
    %2492 = vmatmul.mubr.f32.gmra.mrb[0].mxu0 %v2326
    %v2493 = vpop.f32.mrb[0].mxu0
    %v2494 = vadd.f32 %v2375, %v2493
    %v2495 = vpop.f32.mrb[0].mxu0
    %2496 = vmatprep.mubr.f32.mxu0 0.0
    %2497 = vmatmul.mubr.f32.gmra.mrb[0].mxu0 %v2327
    %v2498 = vpop.f32.mrb[0].mxu0
    %v2499 = vadd.f32 %v2375, %v2498
    %v2500 = vpop.f32.mrb[0].mxu0
    %2501 = vmatprep.mubr.f32.mxu0 0.0
    %2502 = vmatmul.mubr.f32.gmra.mrb[0].mxu0 %v2328
    %v2503 = vpop.f32.mrb[0].mxu0
    %v2504 = vadd.f32 %v2375, %v2503
    %v2505 = vpop.f32.mrb[0].mxu0
    %2506 = vmatprep.mubr.f32.mxu0 0.0
    %2507 = vmatmul.mubr.f32.gmra.mrb[0].mxu0 %v2329
    %v2508 = vpop.f32.mrb[0].mxu0
    %v2509 = vadd.f32 %v2375, %v2508
    %v2510 = vpop.f32.mrb[0].mxu0
    %2511 = vmatprep.mubr.f32.mxu0 0.0
    %2512 = vmatmul.mubr.f32.gmra.mrb[0].mxu0 %v2330
    %v2513 = vpop.f32.mrb[0].mxu0
    %v2514 = vadd.f32 %v2375, %v2513
    %v2515 = vpop.f32.mrb[0].mxu0
    %2516 = vmatprep.mubr.f32.mxu0 0.0
    %2517 = vmatmul.mubr.f32.gmra.mrb[0].mxu0 %v2331
    %v2518 = vpop.f32.mrb[0].mxu0
    %v2519 = vadd.f32 %v2375, %v2518
    %v2520 = vpop.f32.mrb[0].mxu0
    %2521 = vmatprep.mubr.f32.mxu0 0.0
    %2522 = vmatmul.mubr.f32.gmra.mrb[0].mxu0 %v2332
    %v2523 = vpop.f32.mrb[0].mxu0
    %v2524 = vadd.f32 %v2375, %v2523
    %v2525 = vpop.f32.mrb[0].mxu0
    %2526 = vmatprep.mubr.f32.mxu0 0.0
    %2527 = vmatmul.mubr.f32.gmra.mrb[0].mxu0 %v2333
    %v2528 = vpop.f32.mrb[0].mxu0
    %v2529 = vadd.f32 %v2375, %v2528
    %v2530 = vpop.f32.mrb[0].mxu0
    %2531 = vmatprep.mubr.f32.mxu0 0.0
    %2532 = vmatmul.mubr.f32.gmra.mrb[0].mxu0 %v2334
    %v2533 = vpop.f32.mrb[0].mxu0
    %v2534 = vadd.f32 %v2375, %v2533
    %v2535 = vpop.f32.mrb[0].mxu0
    %2536 = vmatprep.mubr.f32.mxu0 0.0
    %2537 = vmatmul.mubr.f32.gmra.mrb[0].mxu0 %v2335
    %v2538 = vpop.f32.mrb[0].mxu0
    %v2539 = vadd.f32 %v2375, %v2538
    %v2540 = vpop.f32.mrb[0].mxu0
    %2541 = vmatprep.mubr.f32.mxu0 0.0
    %2542 = vmatmul.mubr.f32.gmra.mrb[0].mxu0 %v2336
    %v2543 = vpop.f32.mrb[0].mxu0
    %v2544 = vadd.f32 %v2375, %v2543
    %v2545 = vpop.f32.mrb[0].mxu0
    %2546 = vmatprep.mubr.f32.mxu0 0.0
    %2547 = vmatmul.mubr.f32.gmra.mrb[0].mxu0 %v2337
    %v2548 = vpop.f32.mrb[0].mxu0
    %v2549 = vadd.f32 %v2375, %v2548
    %v2550 = vpop.f32.mrb[0].mxu0
    %2551 = vmatprep.mubr.f32.mxu0 0.0
    %2552 = vmatmul.mubr.f32.gmra.mrb[0].mxu0 %v2338
    %v2553 = vpop.f32.mrb[0].mxu0
    %v2554 = vadd.f32 %v2375, %v2553
    %v2555 = vpop.f32.mrb[0].mxu0
    %2556 = vmatprep.mubr.f32.mxu0 0.0
    %2557 = vmatmul.mubr.f32.gmra.mrb[0].mxu0 %v2339
    %v2558 = vpop.f32.mrb[0].mxu0
    %v2559 = vadd.f32 %v2375, %v2558
    %v2560 = vpop.f32.mrb[0].mxu0
    %2561 = vmatprep.mubr.f32.mxu0 0.0
    %2562 = vmatmul.mubr.f32.gmra.mrb[0].mxu0 %v2340
    %v2563 = vpop.f32.mrb[0].mxu0
    %v2564 = vadd.f32 %v2375, %v2563
    %v2565 = vpop.f32.mrb[0].mxu0
    %2566 = vmatprep.mubr.f32.mxu0 0.0
    %2567 = vmatmul.mubr.f32.gmra.mrb[0].mxu0 %v2341
    %v2568 = vpop.f32.mrb[0].mxu0
    %v2569 = vadd.f32 %v2375, %v2568
    %v2570 = vpop.f32.mrb[0].mxu0
    %2571 = vmatprep.mubr.f32.mxu0 0.0
    %2572 = vmatmul.mubr.f32.gmra.mrb[0].mxu0 %v2342
    %v2573 = vpop.f32.mrb[0].mxu0
    %v2574 = vadd.f32 %v2375, %v2573
    %v2575 = vpop.f32.mrb[0].mxu0
    %2576 = vmatprep.mubr.f32.mxu0 0.0
    %2577 = vmatmul.mubr.f32.gmra.mrb[0].mxu0 %v2343
    %v2578 = vpop.f32.mrb[0].mxu0
    %v2579 = vadd.f32 %v2375, %v2578
    %v2580 = vpop.f32.mrb[0].mxu0
    %2581 = vmatprep.mubr.f32.mxu0 0.0
    %2582 = vmatmul.mubr.f32.gmra.mrb[0].mxu0 %v2344
    %v2583 = vpop.f32.mrb[0].mxu0
    %v2584 = vadd.f32 %v2375, %v2583
    %v2585 = vpop.f32.mrb[0].mxu0
    %2586 = vmatprep.mubr.f32.mxu0 0.0
    %2587 = vmatmul.mubr.f32.gmra.mrb[0].mxu0 %v2345
    %v2588 = vpop.f32.mrb[0].mxu0
    %v2589 = vadd.f32 %v2375, %v2588
    %v2590 = vpop.f32.mrb[0].mxu0
    %2591 = vmatprep.mubr.f32.mxu0 0.0
    %2592 = vmatmul.mubr.f32.gmra.mrb[0].mxu0 %v2346
    %v2593 = vpop.f32.mrb[0].mxu0
    %v2594 = vadd.f32 %v2375, %v2593
    %v2595 = vpop.f32.mrb[0].mxu0
    %2596 = vmatprep.mubr.f32.mxu0 0.0
    %2597 = vmatmul.mubr.f32.gmra.mrb[0].mxu0 %v2347
    %v2598 = vpop.f32.mrb[0].mxu0
    %v2599 = vadd.f32 %v2375, %v2598
    %v2600 = vpop.f32.mrb[0].mxu0
    %2601 = vmatprep.mubr.f32.mxu0 0.0
    %2602 = vmatmul.mubr.f32.gmra.mrb[0].mxu0 %v2348
    %v2603 = vpop.f32.mrb[0].mxu0
    %v2604 = vadd.f32 %v2375, %v2603
    %v2605 = vpop.f32.mrb[0].mxu0
    %2606 = vmatprep.mubr.f32.mxu0 0.0
    %2607 = vmatmul.mubr.f32.gmra.mrb[0].mxu0 %v2349
    %v2608 = vpop.f32.mrb[0].mxu0
    %v2609 = vadd.f32 %v2375, %v2608
    %v2610 = vpop.f32.mrb[0].mxu0
    %2611 = vmatprep.mubr.f32.mxu0 0.0
    %2612 = vmatmul.mubr.f32.gmra.mrb[0].mxu0 %v2350
    %v2613 = vpop.f32.mrb[0].mxu0
    %v2614 = vadd.f32 %v2375, %v2613
    %v2615 = vpop.f32.mrb[0].mxu0
    %2616 = vmatprep.mubr.f32.mxu0 0.0
    %2617 = vmatmul.mubr.f32.gmra.mrb[0].mxu0 %v2351
    %v2618 = vpop.f32.mrb[0].mxu0
    %v2619 = vadd.f32 %v2375, %v2618
    %v2620 = vpop.f32.mrb[0].mxu0
    %2621 = vmatprep.mubr.f32.mxu0 0.0
    %2622 = vmatmul.mubr.f32.gmra.mrb[0].mxu0 %v2352
    %v2623 = vpop.f32.mrb[0].mxu0
    %v2624 = vadd.f32 %v2375, %v2623
    %v2625 = vpop.f32.mrb[0].mxu0
    %2626 = vmatprep.mubr.f32.mxu0 0.0
    %2627 = vmatmul.mubr.f32.gmra.mrb[0].mxu0 %v2353
    %v2628 = vpop.f32.mrb[0].mxu0
    %v2629 = vadd.f32 %v2375, %v2628
    %v2630 = vpop.f32.mrb[0].mxu0
    %2631 = vdwg.mxu0
    %v2632 = vxor.u32 %v2444, 2147483648
    %v2633 = vxor.u32 %v2449, 2147483648
    %v2634 = vxor.u32 %v2454, 2147483648
    %v2635 = vxor.u32 %v2459, 2147483648
    %v2636 = vxor.u32 %v2464, 2147483648
    %v2637 = vxor.u32 %v2469, 2147483648
    %v2638 = vxor.u32 %v2474, 2147483648
    %v2639 = vxor.u32 %v2479, 2147483648
    %v2640 = vxor.u32 %v2484, 2147483648
    %v2641 = vxor.u32 %v2489, 2147483648
    %v2642 = vxor.u32 %v2494, 2147483648
    %v2643 = vxor.u32 %v2499, 2147483648
    %v2644 = vxor.u32 %v2504, 2147483648
    %v2645 = vxor.u32 %v2509, 2147483648
    %v2646 = vxor.u32 %v2514, 2147483648
    %v2647 = vxor.u32 %v2519, 2147483648
    %v2648 = vxor.u32 %v2524, 2147483648
    %v2649 = vxor.u32 %v2529, 2147483648
    %v2650 = vxor.u32 %v2534, 2147483648
    %v2651 = vxor.u32 %v2539, 2147483648
    %v2652 = vxor.u32 %v2544, 2147483648
    %v2653 = vxor.u32 %v2549, 2147483648
    %v2654 = vxor.u32 %v2554, 2147483648
    %v2655 = vxor.u32 %v2559, 2147483648
    %v2656 = vxor.u32 %v2564, 2147483648
    %v2657 = vxor.u32 %v2569, 2147483648
    %v2658 = vxor.u32 %v2574, 2147483648
    %v2659 = vxor.u32 %v2579, 2147483648
    %v2660 = vxor.u32 %v2584, 2147483648
    %v2661 = vxor.u32 %v2589, 2147483648
    %v2662 = vxor.u32 %v2594, 2147483648
    %v2663 = vxor.u32 %v2599, 2147483648
    %v2664 = vxor.u32 %v2604, 2147483648
    %v2665 = vxor.u32 %v2609, 2147483648
    %v2666 = vxor.u32 %v2614, 2147483648
    %v2667 = vxor.u32 %v2619, 2147483648
    %v2668 = vxor.u32 %v2624, 2147483648
    %v2669 = vxor.u32 %v2629, 2147483648
    %v2670 = vmul.f32 %v2632, 1.442695
    %v2671 = vpow.pop %v2670
    %v2672 = vmul.f32 %v2633, 1.442695
    %v2673 = vpow.pop %v2672
    %v2674 = vmul.f32 %v2634, 1.442695
    %v2675 = vpow.pop %v2674
    %v2676 = vmul.f32 %v2635, 1.442695
    %v2677 = vpow.pop %v2676
    %v2678 = vmul.f32 %v2636, 1.442695
    %v2679 = vpow.pop %v2678
    %v2680 = vmul.f32 %v2637, 1.442695
    %v2681 = vpow.pop %v2680
    %v2682 = vmul.f32 %v2638, 1.442695
    %v2683 = vpow.pop %v2682
    %v2684 = vmul.f32 %v2639, 1.442695
    %v2685 = vpow.pop %v2684
    %v2686 = vmul.f32 %v2640, 1.442695
    %v2687 = vpow.pop %v2686
    %v2688 = vmul.f32 %v2641, 1.442695
    %v2689 = vpow.pop %v2688
    %v2690 = vmul.f32 %v2642, 1.442695
    %v2691 = vpow.pop %v2690
    %v2692 = vmul.f32 %v2643, 1.442695
    %v2693 = vpow.pop %v2692
    %v2694 = vmul.f32 %v2644, 1.442695
    %v2695 = vpow.pop %v2694
    %v2696 = vmul.f32 %v2645, 1.442695
    %v2697 = vpow.pop %v2696
    %v2698 = vmul.f32 %v2646, 1.442695
    %v2699 = vpow.pop %v2698
    %v2700 = vmul.f32 %v2647, 1.442695
    %v2701 = vpow.pop %v2700
    %v2702 = vmul.f32 %v2648, 1.442695
    %v2703 = vpow.pop %v2702
    %v2704 = vmul.f32 %v2649, 1.442695
    %v2705 = vpow.pop %v2704
    %v2706 = vmul.f32 %v2650, 1.442695
    %v2707 = vpow.pop %v2706
    %v2708 = vmul.f32 %v2651, 1.442695
    %v2709 = vpow.pop %v2708
    %v2710 = vmul.f32 %v2652, 1.442695
    %v2711 = vpow.pop %v2710
    %v2712 = vmul.f32 %v2653, 1.442695
    %v2713 = vpow.pop %v2712
    %v2714 = vmul.f32 %v2654, 1.442695
    %v2715 = vpow.pop %v2714
    %v2716 = vmul.f32 %v2655, 1.442695
    %v2717 = vpow.pop %v2716
    %v2718 = vmul.f32 %v2656, 1.442695
    %v2719 = vpow.pop %v2718
    %v2720 = vmul.f32 %v2657, 1.442695
    %v2721 = vpow.pop %v2720
    %v2722 = vmul.f32 %v2658, 1.442695
    %v2723 = vpow.pop %v2722
    %v2724 = vmul.f32 %v2659, 1.442695
    %v2725 = vpow.pop %v2724
    %v2726 = vmul.f32 %v2660, 1.442695
    %v2727 = vpow.pop %v2726
    %v2728 = vmul.f32 %v2661, 1.442695
    %v2729 = vpow.pop %v2728
    %v2730 = vmul.f32 %v2662, 1.442695
    %v2731 = vpow.pop %v2730
    %v2732 = vmul.f32 %v2663, 1.442695
    %v2733 = vpow.pop %v2732
    %v2734 = vmul.f32 %v2664, 1.442695
    %v2735 = vpow.pop %v2734
    %v2736 = vmul.f32 %v2665, 1.442695
    %v2737 = vpow.pop %v2736
    %v2738 = vmul.f32 %v2666, 1.442695
    %v2739 = vpow.pop %v2738
    %v2740 = vmul.f32 %v2667, 1.442695
    %v2741 = vpow.pop %v2740
    %v2742 = vmul.f32 %v2668, 1.442695
    %v2743 = vpow.pop %v2742
    %v2744 = vmul.f32 %v2669, 1.442695
    %v2745 = vpow.pop %v2744
    %v2746 = vadd.f32 %v2671, 1.0
    %v2747 = vadd.f32 %v2673, 1.0
    %v2748 = vadd.f32 %v2675, 1.0
    %v2749 = vadd.f32 %v2677, 1.0
    %v2750 = vadd.f32 %v2679, 1.0
    %v2751 = vadd.f32 %v2681, 1.0
    %v2752 = vadd.f32 %v2683, 1.0
    %v2753 = vadd.f32 %v2685, 1.0
    %v2754 = vadd.f32 %v2687, 1.0
    %v2755 = vadd.f32 %v2689, 1.0
    %v2756 = vadd.f32 %v2691, 1.0
    %v2757 = vadd.f32 %v2693, 1.0
    %v2758 = vadd.f32 %v2695, 1.0
    %v2759 = vadd.f32 %v2697, 1.0
    %v2760 = vadd.f32 %v2699, 1.0
    %v2761 = vadd.f32 %v2701, 1.0
    %v2762 = vadd.f32 %v2703, 1.0
    %v2763 = vadd.f32 %v2705, 1.0
    %v2764 = vadd.f32 %v2707, 1.0
    %v2765 = vadd.f32 %v2709, 1.0
    %v2766 = vadd.f32 %v2711, 1.0
    %v2767 = vadd.f32 %v2713, 1.0
    %v2768 = vadd.f32 %v2715, 1.0
    %v2769 = vadd.f32 %v2717, 1.0
    %v2770 = vadd.f32 %v2719, 1.0
    %v2771 = vadd.f32 %v2721, 1.0
    %v2772 = vadd.f32 %v2723, 1.0
    %v2773 = vadd.f32 %v2725, 1.0
    %v2774 = vadd.f32 %v2727, 1.0
    %v2775 = vadd.f32 %v2729, 1.0
    %v2776 = vadd.f32 %v2731, 1.0
    %v2777 = vadd.f32 %v2733, 1.0
    %v2778 = vadd.f32 %v2735, 1.0
    %v2779 = vadd.f32 %v2737, 1.0
    %v2780 = vadd.f32 %v2739, 1.0
    %v2781 = vadd.f32 %v2741, 1.0
    %v2782 = vadd.f32 %v2743, 1.0
    %v2783 = vadd.f32 %v2745, 1.0
    %v2784 = vrcp.pop %v2746
    %v2785 = vmul.f32 1.0, %v2784
    %v2786 = vrcp.pop %v2747
    %v2787 = vmul.f32 1.0, %v2786
    %v2788 = vrcp.pop %v2748
    %v2789 = vmul.f32 1.0, %v2788
    %v2790 = vrcp.pop %v2749
    %v2791 = vmul.f32 1.0, %v2790
    %v2792 = vrcp.pop %v2750
    %v2793 = vmul.f32 1.0, %v2792
    %v2794 = vrcp.pop %v2751
    %v2795 = vmul.f32 1.0, %v2794
    %v2796 = vrcp.pop %v2752
    %v2797 = vmul.f32 1.0, %v2796
    %v2798 = vrcp.pop %v2753
    %v2799 = vmul.f32 1.0, %v2798
    %v2800 = vrcp.pop %v2754
    %v2801 = vmul.f32 1.0, %v2800
    %v2802 = vrcp.pop %v2755
    %v2803 = vmul.f32 1.0, %v2802
    %v2804 = vrcp.pop %v2756
    %v2805 = vmul.f32 1.0, %v2804
    %v2806 = vrcp.pop %v2757
    %v2807 = vmul.f32 1.0, %v2806
    %v2808 = vrcp.pop %v2758
    %v2809 = vmul.f32 1.0, %v2808
    %v2810 = vrcp.pop %v2759
    %v2811 = vmul.f32 1.0, %v2810
    %v2812 = vrcp.pop %v2760
    %v2813 = vmul.f32 1.0, %v2812
    %v2814 = vrcp.pop %v2761
    %v2815 = vmul.f32 1.0, %v2814
    %v2816 = vrcp.pop %v2762
    %v2817 = vmul.f32 1.0, %v2816
    %v2818 = vrcp.pop %v2763
    %v2819 = vmul.f32 1.0, %v2818
    %v2820 = vrcp.pop %v2764
    %v2821 = vmul.f32 1.0, %v2820
    %v2822 = vrcp.pop %v2765
    %v2823 = vmul.f32 1.0, %v2822
    %v2824 = vrcp.pop %v2766
    %v2825 = vmul.f32 1.0, %v2824
    %v2826 = vrcp.pop %v2767
    %v2827 = vmul.f32 1.0, %v2826
    %v2828 = vrcp.pop %v2768
    %v2829 = vmul.f32 1.0, %v2828
    %v2830 = vrcp.pop %v2769
    %v2831 = vmul.f32 1.0, %v2830
    %v2832 = vrcp.pop %v2770
    %v2833 = vmul.f32 1.0, %v2832
    %v2834 = vrcp.pop %v2771
    %v2835 = vmul.f32 1.0, %v2834
    %v2836 = vrcp.pop %v2772
    %v2837 = vmul.f32 1.0, %v2836
    %v2838 = vrcp.pop %v2773
    %v2839 = vmul.f32 1.0, %v2838
    %v2840 = vrcp.pop %v2774
    %v2841 = vmul.f32 1.0, %v2840
    %v2842 = vrcp.pop %v2775
    %v2843 = vmul.f32 1.0, %v2842
    %v2844 = vrcp.pop %v2776
    %v2845 = vmul.f32 1.0, %v2844
    %v2846 = vrcp.pop %v2777
    %v2847 = vmul.f32 1.0, %v2846
    %v2848 = vrcp.pop %v2778
    %v2849 = vmul.f32 1.0, %v2848
    %v2850 = vrcp.pop %v2779
    %v2851 = vmul.f32 1.0, %v2850
    %v2852 = vrcp.pop %v2780
    %v2853 = vmul.f32 1.0, %v2852
    %v2854 = vrcp.pop %v2781
    %v2855 = vmul.f32 1.0, %v2854
    %v2856 = vrcp.pop %v2782
    %v2857 = vmul.f32 1.0, %v2856
    %v2858 = vrcp.pop %v2783
    %v2859 = vmul.f32 1.0, %v2858
    %v2860 = vmul.f32 %v2444, %v2785
    %v2861 = vmul.f32 %v2449, %v2787
    %v2862 = vmul.f32 %v2454, %v2789
    %v2863 = vmul.f32 %v2459, %v2791
    %v2864 = vmul.f32 %v2464, %v2793
    %v2865 = vmul.f32 %v2469, %v2795
    %v2866 = vmul.f32 %v2474, %v2797
    %v2867 = vmul.f32 %v2479, %v2799
    %v2868 = vmul.f32 %v2484, %v2801
    %v2869 = vmul.f32 %v2489, %v2803
    %v2870 = vmul.f32 %v2494, %v2805
    %v2871 = vmul.f32 %v2499, %v2807
    %v2872 = vmul.f32 %v2504, %v2809
    %v2873 = vmul.f32 %v2509, %v2811
    %v2874 = vmul.f32 %v2514, %v2813
    %v2875 = vmul.f32 %v2519, %v2815
    %v2876 = vmul.f32 %v2524, %v2817
    %v2877 = vmul.f32 %v2529, %v2819
    %v2878 = vmul.f32 %v2534, %v2821
    %v2879 = vmul.f32 %v2539, %v2823
    %v2880 = vmul.f32 %v2544, %v2825
    %v2881 = vmul.f32 %v2549, %v2827
    %v2882 = vmul.f32 %v2554, %v2829
    %v2883 = vmul.f32 %v2559, %v2831
    %v2884 = vmul.f32 %v2564, %v2833
    %v2885 = vmul.f32 %v2569, %v2835
    %v2886 = vmul.f32 %v2574, %v2837
    %v2887 = vmul.f32 %v2579, %v2839
    %v2888 = vmul.f32 %v2584, %v2841
    %v2889 = vmul.f32 %v2589, %v2843
    %v2890 = vmul.f32 %v2594, %v2845
    %v2891 = vmul.f32 %v2599, %v2847
    %v2892 = vmul.f32 %v2604, %v2849
    %v2893 = vmul.f32 %v2609, %v2851
    %v2894 = vmul.f32 %v2614, %v2853
    %v2895 = vmul.f32 %v2619, %v2855
    %v2896 = vmul.f32 %v2624, %v2857
    %v2897 = vmul.f32 %v2629, %v2859
    %v2898 = vld [vmem:[#allocation14] sm:$0xff]
    %v2899 = vld [vmem:[#allocation14 + $0x8] sm:$0xff]
    %v2900 = vld [vmem:[#allocation14 + $0x10] sm:$0xff]
    %v2901 = vld [vmem:[#allocation14 + $0x18] sm:$0xff]
    %v2902 = vld [vmem:[#allocation14 + $0x20] sm:$0xff]
    %v2903 = vld [vmem:[#allocation14 + $0x28] sm:$0xff]
    %v2904 = vld [vmem:[#allocation14 + $0x30] sm:$0xff]
    %v2905 = vld [vmem:[#allocation14 + $0x38] sm:$0xff]
    %v2906 = vld [vmem:[#allocation14 + $0x40] sm:$0xff]
    %v2907 = vld [vmem:[#allocation14 + $0x48] sm:$0xff]
    %v2908 = vld [vmem:[#allocation14 + $0x50] sm:$0xff]
    %v2909 = vld [vmem:[#allocation14 + $0x58] sm:$0xff]
    %v2910 = vld [vmem:[#allocation14 + $0x60] sm:$0xff]
    %v2911 = vld [vmem:[#allocation14 + $0x68] sm:$0xff]
    %v2912 = vld [vmem:[#allocation14 + $0x70] sm:$0xff]
    %v2913 = vld [vmem:[#allocation14 + $0x78] sm:$0xff]
    %v2914 = vld [vmem:[%s10] sm:$0x1]
    %v2916 = vlaneseq
    %v2917 = vshrl.u32 %v2916, 7
    %v2918 = vsub.s32 0, %v2917
    %v2919 = vrot.slane %v2914, %v2918
    %2921 = vmatprep.subr.mxu0 0.0
    %2922 = vmatpush1.msra.mxu0 %v2898
    %2923 = vmatprep.subr.mxu0 0.0
    %2924 = vmatpush1.msra.mxu0 %v2899
    %2925 = vmatprep.subr.mxu0 0.0
    %2926 = vmatpush1.msra.mxu0 %v2900
    %2927 = vmatprep.subr.mxu0 0.0
    %2928 = vmatpush1.msra.mxu0 %v2901
    %2929 = vmatprep.subr.mxu0 0.0
    %2930 = vmatpush1.msra.mxu0 %v2902
    %2931 = vmatprep.subr.mxu0 0.0
    %2932 = vmatpush1.msra.mxu0 %v2903
    %2933 = vmatprep.subr.mxu0 0.0
    %2934 = vmatpush1.msra.mxu0 %v2904
    %2935 = vmatprep.subr.mxu0 0.0
    %2936 = vmatpush1.msra.mxu0 %v2905
    %2937 = vmatprep.subr.mxu0 0.0
    %2938 = vmatpush1.msra.mxu0 %v2906
    %2939 = vmatprep.subr.mxu0 0.0
    %2940 = vmatpush1.msra.mxu0 %v2907
    %2941 = vmatprep.subr.mxu0 0.0
    %2942 = vmatpush1.msra.mxu0 %v2908
    %2943 = vmatprep.subr.mxu0 0.0
    %2944 = vmatpush1.msra.mxu0 %v2909
    %2945 = vmatprep.subr.mxu0 0.0
    %2946 = vmatpush1.msra.mxu0 %v2910
    %2947 = vmatprep.subr.mxu0 0.0
    %2948 = vmatpush1.msra.mxu0 %v2911
    %2949 = vmatprep.subr.mxu0 0.0
    %2950 = vmatpush1.msra.mxu0 %v2912
    %2951 = vmatprep.subr.mxu0 0.0
    %2952 = vmatpush1.msra.mxu0 %v2913
    %2953 = vmatprep.subr.mxu0 0.0
    %2954 = vmatpush1.msra.mxu0 0.0
    %2955 = vmatprep.subr.mxu0 0.0
    %2956 = vmatpush1.msra.mxu0 0.0
    %2957 = vmatprep.subr.mxu0 0.0
    %2958 = vmatpush1.msra.mxu0 0.0
    %2959 = vmatprep.subr.mxu0 0.0
    %2960 = vmatpush1.msra.mxu0 0.0
    %2961 = vmatprep.subr.mxu0 0.0
    %2962 = vmatpush1.msra.mxu0 0.0
    %2963 = vmatprep.subr.mxu0 0.0
    %2964 = vmatpush1.msra.mxu0 0.0
    %2965 = vmatprep.subr.mxu0 0.0
    %2966 = vmatpush1.msra.mxu0 0.0
    %2967 = vmatprep.subr.mxu0 0.0
    %2968 = vmatpush1.msra.mxu0 0.0
    %2969 = vmatprep.subr.mxu0 0.0
    %2970 = vmatpush1.msra.mxu0 0.0
    %2971 = vmatprep.subr.mxu0 0.0
    %2972 = vmatpush1.msra.mxu0 0.0
    %2973 = vmatprep.subr.mxu0 0.0
    %2974 = vmatpush1.msra.mxu0 0.0
    %2975 = vmatprep.subr.mxu0 0.0
    %2976 = vmatpush1.msra.mxu0 0.0
    %2977 = vmatprep.subr.mxu0 0.0
    %2978 = vmatpush1.msra.mxu0 0.0
    %2979 = vmatprep.subr.mxu0 0.0
    %2980 = vmatpush1.msra.mxu0 0.0
    %2981 = vmatprep.subr.mxu0 0.0
    %2982 = vmatpush1.msra.mxu0 0.0
    %2983 = vmatprep.subr.mxu0 0.0
    %2984 = vmatpush1.msra.mxu0 0.0
    %2985 = vmatprep.mubr.f32.mxu0 0.0
    %2986 = vmatmul.mubr.f32.gmra.mrb[0].mxu0 %v2860
    %v2987 = vpop.f32.mrb[0].mxu0
    %v2988 = vadd.f32 %v2919, %v2987
    %v2989 = vpop.f32.mrb[0].mxu0
    %2990 = vmatprep.mubr.f32.mxu0 0.0
    %2991 = vmatmul.mubr.f32.gmra.mrb[0].mxu0 %v2861
    %v2992 = vpop.f32.mrb[0].mxu0
    %v2993 = vadd.f32 %v2919, %v2992
    %v2994 = vpop.f32.mrb[0].mxu0
    %2995 = vmatprep.mubr.f32.mxu0 0.0
    %2996 = vmatmul.mubr.f32.gmra.mrb[0].mxu0 %v2862
    %v2997 = vpop.f32.mrb[0].mxu0
    %v2998 = vadd.f32 %v2919, %v2997
    %v2999 = vpop.f32.mrb[0].mxu0
    %3000 = vmatprep.mubr.f32.mxu0 0.0
    %3001 = vmatmul.mubr.f32.gmra.mrb[0].mxu0 %v2863
    %v3002 = vpop.f32.mrb[0].mxu0
    %v3003 = vadd.f32 %v2919, %v3002
    %v3004 = vpop.f32.mrb[0].mxu0
    %3005 = vmatprep.mubr.f32.mxu0 0.0
    %3006 = vmatmul.mubr.f32.gmra.mrb[0].mxu0 %v2864
    %v3007 = vpop.f32.mrb[0].mxu0
    %v3008 = vadd.f32 %v2919, %v3007
    %v3009 = vpop.f32.mrb[0].mxu0
    %3010 = vmatprep.mubr.f32.mxu0 0.0
    %3011 = vmatmul.mubr.f32.gmra.mrb[0].mxu0 %v2865
    %v3012 = vpop.f32.mrb[0].mxu0
    %v3013 = vadd.f32 %v2919, %v3012
    %v3014 = vpop.f32.mrb[0].mxu0
    %3015 = vmatprep.mubr.f32.mxu0 0.0
    %3016 = vmatmul.mubr.f32.gmra.mrb[0].mxu0 %v2866
    %v3017 = vpop.f32.mrb[0].mxu0
    %v3018 = vadd.f32 %v2919, %v3017
    %v3019 = vpop.f32.mrb[0].mxu0
    %3020 = vmatprep.mubr.f32.mxu0 0.0
    %3021 = vmatmul.mubr.f32.gmra.mrb[0].mxu0 %v2867
    %v3022 = vpop.f32.mrb[0].mxu0
    %v3023 = vadd.f32 %v2919, %v3022
    %v3024 = vpop.f32.mrb[0].mxu0
    %3025 = vmatprep.mubr.f32.mxu0 0.0
    %3026 = vmatmul.mubr.f32.gmra.mrb[0].mxu0 %v2868
    %v3027 = vpop.f32.mrb[0].mxu0
    %v3028 = vadd.f32 %v2919, %v3027
    %v3029 = vpop.f32.mrb[0].mxu0
    %3030 = vmatprep.mubr.f32.mxu0 0.0
    %3031 = vmatmul.mubr.f32.gmra.mrb[0].mxu0 %v2869
    %v3032 = vpop.f32.mrb[0].mxu0
    %v3033 = vadd.f32 %v2919, %v3032
    %v3034 = vpop.f32.mrb[0].mxu0
    %3035 = vmatprep.mubr.f32.mxu0 0.0
    %3036 = vmatmul.mubr.f32.gmra.mrb[0].mxu0 %v2870
    %v3037 = vpop.f32.mrb[0].mxu0
    %v3038 = vadd.f32 %v2919, %v3037
    %v3039 = vpop.f32.mrb[0].mxu0
    %3040 = vmatprep.mubr.f32.mxu0 0.0
    %3041 = vmatmul.mubr.f32.gmra.mrb[0].mxu0 %v2871
    %v3042 = vpop.f32.mrb[0].mxu0
    %v3043 = vadd.f32 %v2919, %v3042
    %v3044 = vpop.f32.mrb[0].mxu0
    %3045 = vmatprep.mubr.f32.mxu0 0.0
    %3046 = vmatmul.mubr.f32.gmra.mrb[0].mxu0 %v2872
    %v3047 = vpop.f32.mrb[0].mxu0
    %v3048 = vadd.f32 %v2919, %v3047
    %v3049 = vpop.f32.mrb[0].mxu0
    %3050 = vmatprep.mubr.f32.mxu0 0.0
    %3051 = vmatmul.mubr.f32.gmra.mrb[0].mxu0 %v2873
    %v3052 = vpop.f32.mrb[0].mxu0
    %v3053 = vadd.f32 %v2919, %v3052
    %v3054 = vpop.f32.mrb[0].mxu0
    %3055 = vmatprep.mubr.f32.mxu0 0.0
    %3056 = vmatmul.mubr.f32.gmra.mrb[0].mxu0 %v2874
    %v3057 = vpop.f32.mrb[0].mxu0
    %v3058 = vadd.f32 %v2919, %v3057
    %v3059 = vpop.f32.mrb[0].mxu0
    %3060 = vmatprep.mubr.f32.mxu0 0.0
    %3061 = vmatmul.mubr.f32.gmra.mrb[0].mxu0 %v2875
    %v3062 = vpop.f32.mrb[0].mxu0
    %v3063 = vadd.f32 %v2919, %v3062
    %v3064 = vpop.f32.mrb[0].mxu0
    %3065 = vmatprep.mubr.f32.mxu0 0.0
    %3066 = vmatmul.mubr.f32.gmra.mrb[0].mxu0 %v2876
    %v3067 = vpop.f32.mrb[0].mxu0
    %v3068 = vadd.f32 %v2919, %v3067
    %v3069 = vpop.f32.mrb[0].mxu0
    %3070 = vmatprep.mubr.f32.mxu0 0.0
    %3071 = vmatmul.mubr.f32.gmra.mrb[0].mxu0 %v2877
    %v3072 = vpop.f32.mrb[0].mxu0
    %v3073 = vadd.f32 %v2919, %v3072
    %v3074 = vpop.f32.mrb[0].mxu0
    %3075 = vmatprep.mubr.f32.mxu0 0.0
    %3076 = vmatmul.mubr.f32.gmra.mrb[0].mxu0 %v2878
    %v3077 = vpop.f32.mrb[0].mxu0
    %v3078 = vadd.f32 %v2919, %v3077
    %v3079 = vpop.f32.mrb[0].mxu0
    %3080 = vmatprep.mubr.f32.mxu0 0.0
    %3081 = vmatmul.mubr.f32.gmra.mrb[0].mxu0 %v2879
    %v3082 = vpop.f32.mrb[0].mxu0
    %v3083 = vadd.f32 %v2919, %v3082
    %v3084 = vpop.f32.mrb[0].mxu0
    %3085 = vmatprep.mubr.f32.mxu0 0.0
    %3086 = vmatmul.mubr.f32.gmra.mrb[0].mxu0 %v2880
    %v3087 = vpop.f32.mrb[0].mxu0
    %v3088 = vadd.f32 %v2919, %v3087
    %v3089 = vpop.f32.mrb[0].mxu0
    %3090 = vmatprep.mubr.f32.mxu0 0.0
    %3091 = vmatmul.mubr.f32.gmra.mrb[0].mxu0 %v2881
    %v3092 = vpop.f32.mrb[0].mxu0
    %v3093 = vadd.f32 %v2919, %v3092
    %v3094 = vpop.f32.mrb[0].mxu0
    %3095 = vmatprep.mubr.f32.mxu0 0.0
    %3096 = vmatmul.mubr.f32.gmra.mrb[0].mxu0 %v2882
    %v3097 = vpop.f32.mrb[0].mxu0
    %v3098 = vadd.f32 %v2919, %v3097
    %v3099 = vpop.f32.mrb[0].mxu0
    %3100 = vmatprep.mubr.f32.mxu0 0.0
    %3101 = vmatmul.mubr.f32.gmra.mrb[0].mxu0 %v2883
    %v3102 = vpop.f32.mrb[0].mxu0
    %v3103 = vadd.f32 %v2919, %v3102
    %v3104 = vpop.f32.mrb[0].mxu0
    %3105 = vmatprep.mubr.f32.mxu0 0.0
    %3106 = vmatmul.mubr.f32.gmra.mrb[0].mxu0 %v2884
    %v3107 = vpop.f32.mrb[0].mxu0
    %v3108 = vadd.f32 %v2919, %v3107
    %v3109 = vpop.f32.mrb[0].mxu0
    %3110 = vmatprep.mubr.f32.mxu0 0.0
    %3111 = vmatmul.mubr.f32.gmra.mrb[0].mxu0 %v2885
    %v3112 = vpop.f32.mrb[0].mxu0
    %v3113 = vadd.f32 %v2919, %v3112
    %v3114 = vpop.f32.mrb[0].mxu0
    %3115 = vmatprep.mubr.f32.mxu0 0.0
    %3116 = vmatmul.mubr.f32.gmra.mrb[0].mxu0 %v2886
    %v3117 = vpop.f32.mrb[0].mxu0
    %v3118 = vadd.f32 %v2919, %v3117
    %v3119 = vpop.f32.mrb[0].mxu0
    %3120 = vmatprep.mubr.f32.mxu0 0.0
    %3121 = vmatmul.mubr.f32.gmra.mrb[0].mxu0 %v2887
    %v3122 = vpop.f32.mrb[0].mxu0
    %v3123 = vadd.f32 %v2919, %v3122
    %v3124 = vpop.f32.mrb[0].mxu0
    %3125 = vmatprep.mubr.f32.mxu0 0.0
    %3126 = vmatmul.mubr.f32.gmra.mrb[0].mxu0 %v2888
    %v3127 = vpop.f32.mrb[0].mxu0
    %v3128 = vadd.f32 %v2919, %v3127
    %v3129 = vpop.f32.mrb[0].mxu0
    %3130 = vmatprep.mubr.f32.mxu0 0.0
    %3131 = vmatmul.mubr.f32.gmra.mrb[0].mxu0 %v2889
    %v3132 = vpop.f32.mrb[0].mxu0
    %v3133 = vadd.f32 %v2919, %v3132
    %v3134 = vpop.f32.mrb[0].mxu0
    %3135 = vmatprep.mubr.f32.mxu0 0.0
    %3136 = vmatmul.mubr.f32.gmra.mrb[0].mxu0 %v2890
    %v3137 = vpop.f32.mrb[0].mxu0
    %v3138 = vadd.f32 %v2919, %v3137
    %v3139 = vpop.f32.mrb[0].mxu0
    %3140 = vmatprep.mubr.f32.mxu0 0.0
    %3141 = vmatmul.mubr.f32.gmra.mrb[0].mxu0 %v2891
    %v3142 = vpop.f32.mrb[0].mxu0
    %v3143 = vadd.f32 %v2919, %v3142
    %v3144 = vpop.f32.mrb[0].mxu0
    %3145 = vmatprep.mubr.f32.mxu0 0.0
    %3146 = vmatmul.mubr.f32.gmra.mrb[0].mxu0 %v2892
    %v3147 = vpop.f32.mrb[0].mxu0
    %v3148 = vadd.f32 %v2919, %v3147
    %v3149 = vpop.f32.mrb[0].mxu0
    %3150 = vmatprep.mubr.f32.mxu0 0.0
    %3151 = vmatmul.mubr.f32.gmra.mrb[0].mxu0 %v2893
    %v3152 = vpop.f32.mrb[0].mxu0
    %v3153 = vadd.f32 %v2919, %v3152
    %v3154 = vpop.f32.mrb[0].mxu0
    %3155 = vmatprep.mubr.f32.mxu0 0.0
    %3156 = vmatmul.mubr.f32.gmra.mrb[0].mxu0 %v2894
    %v3157 = vpop.f32.mrb[0].mxu0
    %v3158 = vadd.f32 %v2919, %v3157
    %v3159 = vpop.f32.mrb[0].mxu0
    %3160 = vmatprep.mubr.f32.mxu0 0.0
    %3161 = vmatmul.mubr.f32.gmra.mrb[0].mxu0 %v2895
    %v3162 = vpop.f32.mrb[0].mxu0
    %v3163 = vadd.f32 %v2919, %v3162
    %v3164 = vpop.f32.mrb[0].mxu0
    %3165 = vmatprep.mubr.f32.mxu0 0.0
    %3166 = vmatmul.mubr.f32.gmra.mrb[0].mxu0 %v2896
    %v3167 = vpop.f32.mrb[0].mxu0
    %v3168 = vadd.f32 %v2919, %v3167
    %v3169 = vpop.f32.mrb[0].mxu0
    %3170 = vmatprep.mubr.f32.mxu0 0.0
    %3171 = vmatmul.mubr.f32.gmra.mrb[0].mxu0 %v2897
    %v3172 = vpop.f32.mrb[0].mxu0
    %v3173 = vadd.f32 %v2919, %v3172
    %v3174 = vpop.f32.mrb[0].mxu0
    %3175 = vdwg.mxu0
    %v3176 = vxor.u32 %v2988, 2147483648
    %v3177 = vxor.u32 %v2993, 2147483648
    %v3178 = vxor.u32 %v2998, 2147483648
    %v3179 = vxor.u32 %v3003, 2147483648
    %v3180 = vxor.u32 %v3008, 2147483648
    %v3181 = vxor.u32 %v3013, 2147483648
    %v3182 = vxor.u32 %v3018, 2147483648
    %v3183 = vxor.u32 %v3023, 2147483648
    %v3184 = vxor.u32 %v3028, 2147483648
    %v3185 = vxor.u32 %v3033, 2147483648
    %v3186 = vxor.u32 %v3038, 2147483648
    %v3187 = vxor.u32 %v3043, 2147483648
    %v3188 = vxor.u32 %v3048, 2147483648
    %v3189 = vxor.u32 %v3053, 2147483648
    %v3190 = vxor.u32 %v3058, 2147483648
    %v3191 = vxor.u32 %v3063, 2147483648
    %v3192 = vxor.u32 %v3068, 2147483648
    %v3193 = vxor.u32 %v3073, 2147483648
    %v3194 = vxor.u32 %v3078, 2147483648
    %v3195 = vxor.u32 %v3083, 2147483648
    %v3196 = vxor.u32 %v3088, 2147483648
    %v3197 = vxor.u32 %v3093, 2147483648
    %v3198 = vxor.u32 %v3098, 2147483648
    %v3199 = vxor.u32 %v3103, 2147483648
    %v3200 = vxor.u32 %v3108, 2147483648
    %v3201 = vxor.u32 %v3113, 2147483648
    %v3202 = vxor.u32 %v3118, 2147483648
    %v3203 = vxor.u32 %v3123, 2147483648
    %v3204 = vxor.u32 %v3128, 2147483648
    %v3205 = vxor.u32 %v3133, 2147483648
    %v3206 = vxor.u32 %v3138, 2147483648
    %v3207 = vxor.u32 %v3143, 2147483648
    %v3208 = vxor.u32 %v3148, 2147483648
    %v3209 = vxor.u32 %v3153, 2147483648
    %v3210 = vxor.u32 %v3158, 2147483648
    %v3211 = vxor.u32 %v3163, 2147483648
    %v3212 = vxor.u32 %v3168, 2147483648
    %v3213 = vxor.u32 %v3173, 2147483648
    %v3214 = vmul.f32 %v3176, 1.442695
    %v3215 = vpow.pop %v3214
    %v3216 = vmul.f32 %v3177, 1.442695
    %v3217 = vpow.pop %v3216
    %v3218 = vmul.f32 %v3178, 1.442695
    %v3219 = vpow.pop %v3218
    %v3220 = vmul.f32 %v3179, 1.442695
    %v3221 = vpow.pop %v3220
    %v3222 = vmul.f32 %v3180, 1.442695
    %v3223 = vpow.pop %v3222
    %v3224 = vmul.f32 %v3181, 1.442695
    %v3225 = vpow.pop %v3224
    %v3226 = vmul.f32 %v3182, 1.442695
    %v3227 = vpow.pop %v3226
    %v3228 = vmul.f32 %v3183, 1.442695
    %v3229 = vpow.pop %v3228
    %v3230 = vmul.f32 %v3184, 1.442695
    %v3231 = vpow.pop %v3230
    %v3232 = vmul.f32 %v3185, 1.442695
    %v3233 = vpow.pop %v3232
    %v3234 = vmul.f32 %v3186, 1.442695
    %v3235 = vpow.pop %v3234
    %v3236 = vmul.f32 %v3187, 1.442695
    %v3237 = vpow.pop %v3236
    %v3238 = vmul.f32 %v3188, 1.442695
    %v3239 = vpow.pop %v3238
    %v3240 = vmul.f32 %v3189, 1.442695
    %v3241 = vpow.pop %v3240
    %v3242 = vmul.f32 %v3190, 1.442695
    %v3243 = vpow.pop %v3242
    %v3244 = vmul.f32 %v3191, 1.442695
    %v3245 = vpow.pop %v3244
    %v3246 = vmul.f32 %v3192, 1.442695
    %v3247 = vpow.pop %v3246
    %v3248 = vmul.f32 %v3193, 1.442695
    %v3249 = vpow.pop %v3248
    %v3250 = vmul.f32 %v3194, 1.442695
    %v3251 = vpow.pop %v3250
    %v3252 = vmul.f32 %v3195, 1.442695
    %v3253 = vpow.pop %v3252
    %v3254 = vmul.f32 %v3196, 1.442695
    %v3255 = vpow.pop %v3254
    %v3256 = vmul.f32 %v3197, 1.442695
    %v3257 = vpow.pop %v3256
    %v3258 = vmul.f32 %v3198, 1.442695
    %v3259 = vpow.pop %v3258
    %v3260 = vmul.f32 %v3199, 1.442695
    %v3261 = vpow.pop %v3260
    %v3262 = vmul.f32 %v3200, 1.442695
    %v3263 = vpow.pop %v3262
    %v3264 = vmul.f32 %v3201, 1.442695
    %v3265 = vpow.pop %v3264
    %v3266 = vmul.f32 %v3202, 1.442695
    %v3267 = vpow.pop %v3266
    %v3268 = vmul.f32 %v3203, 1.442695
    %v3269 = vpow.pop %v3268
    %v3270 = vmul.f32 %v3204, 1.442695
    %v3271 = vpow.pop %v3270
    %v3272 = vmul.f32 %v3205, 1.442695
    %v3273 = vpow.pop %v3272
    %v3274 = vmul.f32 %v3206, 1.442695
    %v3275 = vpow.pop %v3274
    %v3276 = vmul.f32 %v3207, 1.442695
    %v3277 = vpow.pop %v3276
    %v3278 = vmul.f32 %v3208, 1.442695
    %v3279 = vpow.pop %v3278
    %v3280 = vmul.f32 %v3209, 1.442695
    %v3281 = vpow.pop %v3280
    %v3282 = vmul.f32 %v3210, 1.442695
    %v3283 = vpow.pop %v3282
    %v3284 = vmul.f32 %v3211, 1.442695
    %v3285 = vpow.pop %v3284
    %v3286 = vmul.f32 %v3212, 1.442695
    %v3287 = vpow.pop %v3286
    %v3288 = vmul.f32 %v3213, 1.442695
    %v3289 = vpow.pop %v3288
    %v3290 = vadd.f32 %v3215, 1.0
    %v3291 = vadd.f32 %v3217, 1.0
    %v3292 = vadd.f32 %v3219, 1.0
    %v3293 = vadd.f32 %v3221, 1.0
    %v3294 = vadd.f32 %v3223, 1.0
    %v3295 = vadd.f32 %v3225, 1.0
    %v3296 = vadd.f32 %v3227, 1.0
    %v3297 = vadd.f32 %v3229, 1.0
    %v3298 = vadd.f32 %v3231, 1.0
    %v3299 = vadd.f32 %v3233, 1.0
    %v3300 = vadd.f32 %v3235, 1.0
    %v3301 = vadd.f32 %v3237, 1.0
    %v3302 = vadd.f32 %v3239, 1.0
    %v3303 = vadd.f32 %v3241, 1.0
    %v3304 = vadd.f32 %v3243, 1.0
    %v3305 = vadd.f32 %v3245, 1.0
    %v3306 = vadd.f32 %v3247, 1.0
    %v3307 = vadd.f32 %v3249, 1.0
    %v3308 = vadd.f32 %v3251, 1.0
    %v3309 = vadd.f32 %v3253, 1.0
    %v3310 = vadd.f32 %v3255, 1.0
    %v3311 = vadd.f32 %v3257, 1.0
    %v3312 = vadd.f32 %v3259, 1.0
    %v3313 = vadd.f32 %v3261, 1.0
    %v3314 = vadd.f32 %v3263, 1.0
    %v3315 = vadd.f32 %v3265, 1.0
    %v3316 = vadd.f32 %v3267, 1.0
    %v3317 = vadd.f32 %v3269, 1.0
    %v3318 = vadd.f32 %v3271, 1.0
    %v3319 = vadd.f32 %v3273, 1.0
    %v3320 = vadd.f32 %v3275, 1.0
    %v3321 = vadd.f32 %v3277, 1.0
    %v3322 = vadd.f32 %v3279, 1.0
    %v3323 = vadd.f32 %v3281, 1.0
    %v3324 = vadd.f32 %v3283, 1.0
    %v3325 = vadd.f32 %v3285, 1.0
    %v3326 = vadd.f32 %v3287, 1.0
    %v3327 = vadd.f32 %v3289, 1.0
    %v3328 = vrcp.pop %v3290
    %v3329 = vmul.f32 1.0, %v3328
    %v3330 = vrcp.pop %v3291
    %v3331 = vmul.f32 1.0, %v3330
    %v3332 = vrcp.pop %v3292
    %v3333 = vmul.f32 1.0, %v3332
    %v3334 = vrcp.pop %v3293
    %v3335 = vmul.f32 1.0, %v3334
    %v3336 = vrcp.pop %v3294
    %v3337 = vmul.f32 1.0, %v3336
    %v3338 = vrcp.pop %v3295
    %v3339 = vmul.f32 1.0, %v3338
    %v3340 = vrcp.pop %v3296
    %v3341 = vmul.f32 1.0, %v3340
    %v3342 = vrcp.pop %v3297
    %v3343 = vmul.f32 1.0, %v3342
    %v3344 = vrcp.pop %v3298
    %v3345 = vmul.f32 1.0, %v3344
    %v3346 = vrcp.pop %v3299
    %v3347 = vmul.f32 1.0, %v3346
    %v3348 = vrcp.pop %v3300
    %v3349 = vmul.f32 1.0, %v3348
    %v3350 = vrcp.pop %v3301
    %v3351 = vmul.f32 1.0, %v3350
    %v3352 = vrcp.pop %v3302
    %v3353 = vmul.f32 1.0, %v3352
    %v3354 = vrcp.pop %v3303
    %v3355 = vmul.f32 1.0, %v3354
    %v3356 = vrcp.pop %v3304
    %v3357 = vmul.f32 1.0, %v3356
    %v3358 = vrcp.pop %v3305
    %v3359 = vmul.f32 1.0, %v3358
    %v3360 = vrcp.pop %v3306
    %v3361 = vmul.f32 1.0, %v3360
    %v3362 = vrcp.pop %v3307
    %v3363 = vmul.f32 1.0, %v3362
    %v3364 = vrcp.pop %v3308
    %v3365 = vmul.f32 1.0, %v3364
    %v3366 = vrcp.pop %v3309
    %v3367 = vmul.f32 1.0, %v3366
    %v3368 = vrcp.pop %v3310
    %v3369 = vmul.f32 1.0, %v3368
    %v3370 = vrcp.pop %v3311
    %v3371 = vmul.f32 1.0, %v3370
    %v3372 = vrcp.pop %v3312
    %v3373 = vmul.f32 1.0, %v3372
    %v3374 = vrcp.pop %v3313
    %v3375 = vmul.f32 1.0, %v3374
    %v3376 = vrcp.pop %v3314
    %v3377 = vmul.f32 1.0, %v3376
    %v3378 = vrcp.pop %v3315
    %v3379 = vmul.f32 1.0, %v3378
    %v3380 = vrcp.pop %v3316
    %v3381 = vmul.f32 1.0, %v3380
    %v3382 = vrcp.pop %v3317
    %v3383 = vmul.f32 1.0, %v3382
    %v3384 = vrcp.pop %v3318
    %v3385 = vmul.f32 1.0, %v3384
    %v3386 = vrcp.pop %v3319
    %v3387 = vmul.f32 1.0, %v3386
    %v3388 = vrcp.pop %v3320
    %v3389 = vmul.f32 1.0, %v3388
    %v3390 = vrcp.pop %v3321
    %v3391 = vmul.f32 1.0, %v3390
    %v3392 = vrcp.pop %v3322
    %v3393 = vmul.f32 1.0, %v3392
    %v3394 = vrcp.pop %v3323
    %v3395 = vmul.f32 1.0, %v3394
    %v3396 = vrcp.pop %v3324
    %v3397 = vmul.f32 1.0, %v3396
    %v3398 = vrcp.pop %v3325
    %v3399 = vmul.f32 1.0, %v3398
    %v3400 = vrcp.pop %v3326
    %v3401 = vmul.f32 1.0, %v3400
    %v3402 = vrcp.pop %v3327
    %v3403 = vmul.f32 1.0, %v3402
    %v3404 = vmul.f32 %v2988, %v3329
    %v3405 = vmul.f32 %v2993, %v3331
    %v3406 = vmul.f32 %v2998, %v3333
    %v3407 = vmul.f32 %v3003, %v3335
    %v3408 = vmul.f32 %v3008, %v3337
    %v3409 = vmul.f32 %v3013, %v3339
    %v3410 = vmul.f32 %v3018, %v3341
    %v3411 = vmul.f32 %v3023, %v3343
    %v3412 = vmul.f32 %v3028, %v3345
    %v3413 = vmul.f32 %v3033, %v3347
    %v3414 = vmul.f32 %v3038, %v3349
    %v3415 = vmul.f32 %v3043, %v3351
    %v3416 = vmul.f32 %v3048, %v3353
    %v3417 = vmul.f32 %v3053, %v3355
    %v3418 = vmul.f32 %v3058, %v3357
    %v3419 = vmul.f32 %v3063, %v3359
    %v3420 = vmul.f32 %v3068, %v3361
    %v3421 = vmul.f32 %v3073, %v3363
    %v3422 = vmul.f32 %v3078, %v3365
    %v3423 = vmul.f32 %v3083, %v3367
    %v3424 = vmul.f32 %v3088, %v3369
    %v3425 = vmul.f32 %v3093, %v3371
    %v3426 = vmul.f32 %v3098, %v3373
    %v3427 = vmul.f32 %v3103, %v3375
    %v3428 = vmul.f32 %v3108, %v3377
    %v3429 = vmul.f32 %v3113, %v3379
    %v3430 = vmul.f32 %v3118, %v3381
    %v3431 = vmul.f32 %v3123, %v3383
    %v3432 = vmul.f32 %v3128, %v3385
    %v3433 = vmul.f32 %v3133, %v3387
    %v3434 = vmul.f32 %v3138, %v3389
    %v3435 = vmul.f32 %v3143, %v3391
    %v3436 = vmul.f32 %v3148, %v3393
    %v3437 = vmul.f32 %v3153, %v3395
    %v3438 = vmul.f32 %v3158, %v3397
    %v3439 = vmul.f32 %v3163, %v3399
    %v3440 = vmul.f32 %v3168, %v3401
    %v3441 = vmul.f32 %v3173, %v3403
    %v3442 = vadd.f32 %v492, %v3404
    %v3443 = vadd.f32 %v493, %v3405
    %v3444 = vadd.f32 %v494, %v3406
    %v3445 = vadd.f32 %v495, %v3407
    %v3446 = vadd.f32 %v496, %v3408
    %v3447 = vadd.f32 %v497, %v3409
    %v3448 = vadd.f32 %v498, %v3410
    %v3449 = vadd.f32 %v499, %v3411
    %v3450 = vadd.f32 %v500, %v3412
    %v3451 = vadd.f32 %v501, %v3413
    %v3452 = vadd.f32 %v502, %v3414
    %v3453 = vadd.f32 %v503, %v3415
    %v3454 = vadd.f32 %v504, %v3416
    %v3455 = vadd.f32 %v505, %v3417
    %v3456 = vadd.f32 %v506, %v3418
    %v3457 = vadd.f32 %v507, %v3419
    %v3458 = vadd.f32 %v508, %v3420
    %v3459 = vadd.f32 %v509, %v3421
    %v3460 = vadd.f32 %v510, %v3422
    %v3461 = vadd.f32 %v511, %v3423
    %v3462 = vadd.f32 %v512, %v3424
    %v3463 = vadd.f32 %v513, %v3425
    %v3464 = vadd.f32 %v514, %v3426
    %v3465 = vadd.f32 %v515, %v3427
    %v3466 = vadd.f32 %v516, %v3428
    %v3467 = vadd.f32 %v517, %v3429
    %v3468 = vadd.f32 %v518, %v3430
    %v3469 = vadd.f32 %v519, %v3431
    %v3470 = vadd.f32 %v520, %v3432
    %v3471 = vadd.f32 %v521, %v3433
    %v3472 = vadd.f32 %v522, %v3434
    %v3473 = vadd.f32 %v523, %v3435
    %v3474 = vadd.f32 %v524, %v3436
    %v3475 = vadd.f32 %v525, %v3437
    %v3476 = vadd.f32 %v526, %v3438
    %v3477 = vadd.f32 %v527, %v3439
    %v3478 = vadd.f32 %v528, %v3440
    %v3479 = vadd.f32 %v529, %v3441
    %v3480 = vmul.f32 %v3442, 0.70710677
    %v3481 = vmul.f32 %v3443, 0.70710677
    %v3482 = vmul.f32 %v3444, 0.70710677
    %v3483 = vmul.f32 %v3445, 0.70710677
    %v3484 = vmul.f32 %v3446, 0.70710677
    %v3485 = vmul.f32 %v3447, 0.70710677
    %v3486 = vmul.f32 %v3448, 0.70710677
    %v3487 = vmul.f32 %v3449, 0.70710677
    %v3488 = vmul.f32 %v3450, 0.70710677
    %v3489 = vmul.f32 %v3451, 0.70710677
    %v3490 = vmul.f32 %v3452, 0.70710677
    %v3491 = vmul.f32 %v3453, 0.70710677
    %v3492 = vmul.f32 %v3454, 0.70710677
    %v3493 = vmul.f32 %v3455, 0.70710677
    %v3494 = vmul.f32 %v3456, 0.70710677
    %v3495 = vmul.f32 %v3457, 0.70710677
    %v3496 = vmul.f32 %v3458, 0.70710677
    %v3497 = vmul.f32 %v3459, 0.70710677
    %v3498 = vmul.f32 %v3460, 0.70710677
    %v3499 = vmul.f32 %v3461, 0.70710677
    %v3500 = vmul.f32 %v3462, 0.70710677
    %v3501 = vmul.f32 %v3463, 0.70710677
    %v3502 = vmul.f32 %v3464, 0.70710677
    %v3503 = vmul.f32 %v3465, 0.70710677
    %v3504 = vmul.f32 %v3466, 0.70710677
    %v3505 = vmul.f32 %v3467, 0.70710677
    %v3506 = vmul.f32 %v3468, 0.70710677
    %v3507 = vmul.f32 %v3469, 0.70710677
    %v3508 = vmul.f32 %v3470, 0.70710677
    %v3509 = vmul.f32 %v3471, 0.70710677
    %v3510 = vmul.f32 %v3472, 0.70710677
    %v3511 = vmul.f32 %v3473, 0.70710677
    %v3512 = vmul.f32 %v3474, 0.70710677
    %v3513 = vmul.f32 %v3475, 0.70710677
    %v3514 = vmul.f32 %v3476, 0.70710677
    %v3515 = vmul.f32 %v3477, 0.70710677
    %v3516 = vmul.f32 %v3478, 0.70710677
    %v3517 = vmul.f32 %v3479, 0.70710677
    %3518 = vmatprep.subr.mxu0 0.0
    %3519 = vmatpush1.msra.mxu0 %v530
    %3520 = vmatprep.subr.mxu0 0.0
    %3521 = vmatpush1.msra.mxu0 %v531
    %3522 = vmatprep.subr.mxu0 0.0
    %3523 = vmatpush1.msra.mxu0 %v532
    %3524 = vmatprep.subr.mxu0 0.0
    %3525 = vmatpush1.msra.mxu0 %v533
    %3526 = vmatprep.subr.mxu0 0.0
    %3527 = vmatpush1.msra.mxu0 %v534
    %3528 = vmatprep.subr.mxu0 0.0
    %3529 = vmatpush1.msra.mxu0 %v535
    %3530 = vmatprep.subr.mxu0 0.0
    %3531 = vmatpush1.msra.mxu0 %v536
    %3532 = vmatprep.subr.mxu0 0.0
    %3533 = vmatpush1.msra.mxu0 %v537
    %3534 = vmatprep.subr.mxu0 0.0
    %3535 = vmatpush1.msra.mxu0 %v538
    %3536 = vmatprep.subr.mxu0 0.0
    %3537 = vmatpush1.msra.mxu0 %v539
    %3538 = vmatprep.subr.mxu0 0.0
    %3539 = vmatpush1.msra.mxu0 %v540
    %3540 = vmatprep.subr.mxu0 0.0
    %3541 = vmatpush1.msra.mxu0 %v541
    %3542 = vmatprep.subr.mxu0 0.0
    %3543 = vmatpush1.msra.mxu0 %v542
    %3544 = vmatprep.subr.mxu0 0.0
    %3545 = vmatpush1.msra.mxu0 %v543
    %3546 = vmatprep.subr.mxu0 0.0
    %3547 = vmatpush1.msra.mxu0 %v544
    %3548 = vmatprep.subr.mxu0 0.0
    %3549 = vmatpush1.msra.mxu0 %v545
    %3550 = vmatprep.subr.mxu0 0.0
    %3551 = vmatpush1.msra.mxu0 0.0
    %3552 = vmatprep.subr.mxu0 0.0
    %3553 = vmatpush1.msra.mxu0 0.0
    %3554 = vmatprep.subr.mxu0 0.0
    %3555 = vmatpush1.msra.mxu0 0.0
    %3556 = vmatprep.subr.mxu0 0.0
    %3557 = vmatpush1.msra.mxu0 0.0
    %3558 = vmatprep.subr.mxu0 0.0
    %3559 = vmatpush1.msra.mxu0 0.0
    %3560 = vmatprep.subr.mxu0 0.0
    %3561 = vmatpush1.msra.mxu0 0.0
    %3562 = vmatprep.subr.mxu0 0.0
    %3563 = vmatpush1.msra.mxu0 0.0
    %3564 = vmatprep.subr.mxu0 0.0
    %3565 = vmatpush1.msra.mxu0 0.0
    %3566 = vmatprep.subr.mxu0 0.0
    %3567 = vmatpush1.msra.mxu0 0.0
    %3568 = vmatprep.subr.mxu0 0.0
    %3569 = vmatpush1.msra.mxu0 0.0
    %3570 = vmatprep.subr.mxu0 0.0
    %3571 = vmatpush1.msra.mxu0 0.0
    %3572 = vmatprep.subr.mxu0 0.0
    %3573 = vmatpush1.msra.mxu0 0.0
    %3574 = vmatprep.subr.mxu0 0.0
    %3575 = vmatpush1.msra.mxu0 0.0
    %3576 = vmatprep.subr.mxu0 0.0
    %3577 = vmatpush1.msra.mxu0 0.0
    %3578 = vmatprep.subr.mxu0 0.0
    %3579 = vmatpush1.msra.mxu0 0.0
    %3580 = vmatprep.subr.mxu0 0.0
    %3581 = vmatpush1.msra.mxu0 0.0
    %3582 = vmatprep.mubr.f32.mxu0 0.0
    %3583 = vmatmul.mubr.f32.gmra.mrb[0].mxu0 %v3480
    %v3584 = vpop.f32.mrb[0].mxu0
    %v3585 = vadd.f32 0.0, %v3584
    %v3586 = vpop.f32.mrb[0].mxu0
    %3587 = vmatprep.mubr.f32.mxu0 0.0
    %3588 = vmatmul.mubr.f32.gmra.mrb[0].mxu0 %v3481
    %v3589 = vpop.f32.mrb[0].mxu0
    %v3590 = vadd.f32 0.0, %v3589
    %v3591 = vpop.f32.mrb[0].mxu0
    %3592 = vmatprep.mubr.f32.mxu0 0.0
    %3593 = vmatmul.mubr.f32.gmra.mrb[0].mxu0 %v3482
    %v3594 = vpop.f32.mrb[0].mxu0
    %v3595 = vadd.f32 0.0, %v3594
    %v3596 = vpop.f32.mrb[0].mxu0
    %3597 = vmatprep.mubr.f32.mxu0 0.0
    %3598 = vmatmul.mubr.f32.gmra.mrb[0].mxu0 %v3483
    %v3599 = vpop.f32.mrb[0].mxu0
    %v3600 = vadd.f32 0.0, %v3599
    %v3601 = vpop.f32.mrb[0].mxu0
    %3602 = vmatprep.mubr.f32.mxu0 0.0
    %3603 = vmatmul.mubr.f32.gmra.mrb[0].mxu0 %v3484
    %v3604 = vpop.f32.mrb[0].mxu0
    %v3605 = vadd.f32 0.0, %v3604
    %v3606 = vpop.f32.mrb[0].mxu0
    %3607 = vmatprep.mubr.f32.mxu0 0.0
    %3608 = vmatmul.mubr.f32.gmra.mrb[0].mxu0 %v3485
    %v3609 = vpop.f32.mrb[0].mxu0
    %v3610 = vadd.f32 0.0, %v3609
    %v3611 = vpop.f32.mrb[0].mxu0
    %3612 = vmatprep.mubr.f32.mxu0 0.0
    %3613 = vmatmul.mubr.f32.gmra.mrb[0].mxu0 %v3486
    %v3614 = vpop.f32.mrb[0].mxu0
    %v3615 = vadd.f32 0.0, %v3614
    %v3616 = vpop.f32.mrb[0].mxu0
    %3617 = vmatprep.mubr.f32.mxu0 0.0
    %3618 = vmatmul.mubr.f32.gmra.mrb[0].mxu0 %v3487
    %v3619 = vpop.f32.mrb[0].mxu0
    %v3620 = vadd.f32 0.0, %v3619
    %v3621 = vpop.f32.mrb[0].mxu0
    %3622 = vmatprep.mubr.f32.mxu0 0.0
    %3623 = vmatmul.mubr.f32.gmra.mrb[0].mxu0 %v3488
    %v3624 = vpop.f32.mrb[0].mxu0
    %v3625 = vadd.f32 0.0, %v3624
    %v3626 = vpop.f32.mrb[0].mxu0
    %3627 = vmatprep.mubr.f32.mxu0 0.0
    %3628 = vmatmul.mubr.f32.gmra.mrb[0].mxu0 %v3489
    %v3629 = vpop.f32.mrb[0].mxu0
    %v3630 = vadd.f32 0.0, %v3629
    %v3631 = vpop.f32.mrb[0].mxu0
    %3632 = vmatprep.mubr.f32.mxu0 0.0
    %3633 = vmatmul.mubr.f32.gmra.mrb[0].mxu0 %v3490
    %v3634 = vpop.f32.mrb[0].mxu0
    %v3635 = vadd.f32 0.0, %v3634
    %v3636 = vpop.f32.mrb[0].mxu0
    %3637 = vmatprep.mubr.f32.mxu0 0.0
    %3638 = vmatmul.mubr.f32.gmra.mrb[0].mxu0 %v3491
    %v3639 = vpop.f32.mrb[0].mxu0
    %v3640 = vadd.f32 0.0, %v3639
    %v3641 = vpop.f32.mrb[0].mxu0
    %3642 = vmatprep.mubr.f32.mxu0 0.0
    %3643 = vmatmul.mubr.f32.gmra.mrb[0].mxu0 %v3492
    %v3644 = vpop.f32.mrb[0].mxu0
    %v3645 = vadd.f32 0.0, %v3644
    %v3646 = vpop.f32.mrb[0].mxu0
    %3647 = vmatprep.mubr.f32.mxu0 0.0
    %3648 = vmatmul.mubr.f32.gmra.mrb[0].mxu0 %v3493
    %v3649 = vpop.f32.mrb[0].mxu0
    %v3650 = vadd.f32 0.0, %v3649
    %v3651 = vpop.f32.mrb[0].mxu0
    %3652 = vmatprep.mubr.f32.mxu0 0.0
    %3653 = vmatmul.mubr.f32.gmra.mrb[0].mxu0 %v3494
    %v3654 = vpop.f32.mrb[0].mxu0
    %v3655 = vadd.f32 0.0, %v3654
    %v3656 = vpop.f32.mrb[0].mxu0
    %3657 = vmatprep.mubr.f32.mxu0 0.0
    %3658 = vmatmul.mubr.f32.gmra.mrb[0].mxu0 %v3495
    %v3659 = vpop.f32.mrb[0].mxu0
    %v3660 = vadd.f32 0.0, %v3659
    %v3661 = vpop.f32.mrb[0].mxu0
    %3662 = vmatprep.mubr.f32.mxu0 0.0
    %3663 = vmatmul.mubr.f32.gmra.mrb[0].mxu0 %v3496
    %v3664 = vpop.f32.mrb[0].mxu0
    %v3665 = vadd.f32 0.0, %v3664
    %v3666 = vpop.f32.mrb[0].mxu0
    %3667 = vmatprep.mubr.f32.mxu0 0.0
    %3668 = vmatmul.mubr.f32.gmra.mrb[0].mxu0 %v3497
    %v3669 = vpop.f32.mrb[0].mxu0
    %v3670 = vadd.f32 0.0, %v3669
    %v3671 = vpop.f32.mrb[0].mxu0
    %3672 = vmatprep.mubr.f32.mxu0 0.0
    %3673 = vmatmul.mubr.f32.gmra.mrb[0].mxu0 %v3498
    %v3674 = vpop.f32.mrb[0].mxu0
    %v3675 = vadd.f32 0.0, %v3674
    %v3676 = vpop.f32.mrb[0].mxu0
    %3677 = vmatprep.mubr.f32.mxu0 0.0
    %3678 = vmatmul.mubr.f32.gmra.mrb[0].mxu0 %v3499
    %v3679 = vpop.f32.mrb[0].mxu0
    %v3680 = vadd.f32 0.0, %v3679
    %v3681 = vpop.f32.mrb[0].mxu0
    %3682 = vmatprep.mubr.f32.mxu0 0.0
    %3683 = vmatmul.mubr.f32.gmra.mrb[0].mxu0 %v3500
    %v3684 = vpop.f32.mrb[0].mxu0
    %v3685 = vadd.f32 0.0, %v3684
    %v3686 = vpop.f32.mrb[0].mxu0
    %3687 = vmatprep.mubr.f32.mxu0 0.0
    %3688 = vmatmul.mubr.f32.gmra.mrb[0].mxu0 %v3501
    %v3689 = vpop.f32.mrb[0].mxu0
    %v3690 = vadd.f32 0.0, %v3689
    %v3691 = vpop.f32.mrb[0].mxu0
    %3692 = vmatprep.mubr.f32.mxu0 0.0
    %3693 = vmatmul.mubr.f32.gmra.mrb[0].mxu0 %v3502
    %v3694 = vpop.f32.mrb[0].mxu0
    %v3695 = vadd.f32 0.0, %v3694
    %v3696 = vpop.f32.mrb[0].mxu0
    %3697 = vmatprep.mubr.f32.mxu0 0.0
    %3698 = vmatmul.mubr.f32.gmra.mrb[0].mxu0 %v3503
    %v3699 = vpop.f32.mrb[0].mxu0
    %v3700 = vadd.f32 0.0, %v3699
    %v3701 = vpop.f32.mrb[0].mxu0
    %3702 = vmatprep.mubr.f32.mxu0 0.0
    %3703 = vmatmul.mubr.f32.gmra.mrb[0].mxu0 %v3504
    %v3704 = vpop.f32.mrb[0].mxu0
    %v3705 = vadd.f32 0.0, %v3704
    %v3706 = vpop.f32.mrb[0].mxu0
    %3707 = vmatprep.mubr.f32.mxu0 0.0
    %3708 = vmatmul.mubr.f32.gmra.mrb[0].mxu0 %v3505
    %v3709 = vpop.f32.mrb[0].mxu0
    %v3710 = vadd.f32 0.0, %v3709
    %v3711 = vpop.f32.mrb[0].mxu0
    %3712 = vmatprep.mubr.f32.mxu0 0.0
    %3713 = vmatmul.mubr.f32.gmra.mrb[0].mxu0 %v3506
    %v3714 = vpop.f32.mrb[0].mxu0
    %v3715 = vadd.f32 0.0, %v3714
    %v3716 = vpop.f32.mrb[0].mxu0
    %3717 = vmatprep.mubr.f32.mxu0 0.0
    %3718 = vmatmul.mubr.f32.gmra.mrb[0].mxu0 %v3507
    %v3719 = vpop.f32.mrb[0].mxu0
    %v3720 = vadd.f32 0.0, %v3719
    %v3721 = vpop.f32.mrb[0].mxu0
    %3722 = vmatprep.mubr.f32.mxu0 0.0
    %3723 = vmatmul.mubr.f32.gmra.mrb[0].mxu0 %v3508
    %v3724 = vpop.f32.mrb[0].mxu0
    %v3725 = vadd.f32 0.0, %v3724
    %v3726 = vpop.f32.mrb[0].mxu0
    %3727 = vmatprep.mubr.f32.mxu0 0.0
    %3728 = vmatmul.mubr.f32.gmra.mrb[0].mxu0 %v3509
    %v3729 = vpop.f32.mrb[0].mxu0
    %v3730 = vadd.f32 0.0, %v3729
    %v3731 = vpop.f32.mrb[0].mxu0
    %3732 = vmatprep.mubr.f32.mxu0 0.0
    %3733 = vmatmul.mubr.f32.gmra.mrb[0].mxu0 %v3510
    %v3734 = vpop.f32.mrb[0].mxu0
    %v3735 = vadd.f32 0.0, %v3734
    %v3736 = vpop.f32.mrb[0].mxu0
    %3737 = vmatprep.mubr.f32.mxu0 0.0
    %3738 = vmatmul.mubr.f32.gmra.mrb[0].mxu0 %v3511
    %v3739 = vpop.f32.mrb[0].mxu0
    %v3740 = vadd.f32 0.0, %v3739
    %v3741 = vpop.f32.mrb[0].mxu0
    %3742 = vmatprep.mubr.f32.mxu0 0.0
    %3743 = vmatmul.mubr.f32.gmra.mrb[0].mxu0 %v3512
    %v3744 = vpop.f32.mrb[0].mxu0
    %v3745 = vadd.f32 0.0, %v3744
    %v3746 = vpop.f32.mrb[0].mxu0
    %3747 = vmatprep.mubr.f32.mxu0 0.0
    %3748 = vmatmul.mubr.f32.gmra.mrb[0].mxu0 %v3513
    %v3749 = vpop.f32.mrb[0].mxu0
    %v3750 = vadd.f32 0.0, %v3749
    %v3751 = vpop.f32.mrb[0].mxu0
    %3752 = vmatprep.mubr.f32.mxu0 0.0
    %3753 = vmatmul.mubr.f32.gmra.mrb[0].mxu0 %v3514
    %v3754 = vpop.f32.mrb[0].mxu0
    %v3755 = vadd.f32 0.0, %v3754
    %v3756 = vpop.f32.mrb[0].mxu0
    %3757 = vmatprep.mubr.f32.mxu0 0.0
    %3758 = vmatmul.mubr.f32.gmra.mrb[0].mxu0 %v3515
    %v3759 = vpop.f32.mrb[0].mxu0
    %v3760 = vadd.f32 0.0, %v3759
    %v3761 = vpop.f32.mrb[0].mxu0
    %3762 = vmatprep.mubr.f32.mxu0 0.0
    %3763 = vmatmul.mubr.f32.gmra.mrb[0].mxu0 %v3516
    %v3764 = vpop.f32.mrb[0].mxu0
    %v3765 = vadd.f32 0.0, %v3764
    %v3766 = vpop.f32.mrb[0].mxu0
    %3767 = vmatprep.mubr.f32.mxu0 0.0
    %3768 = vmatmul.mubr.f32.gmra.mrb[0].mxu0 %v3517
    %v3769 = vpop.f32.mrb[0].mxu0
    %v3770 = vadd.f32 0.0, %v3769
    %v3771 = vpop.f32.mrb[0].mxu0
    %3772 = vdwg.mxu0
    %3773 = vmatprep.subr.mxu0 0.0
    %3774 = vmatpush1.msra.mxu0 %v546
    %3775 = vmatprep.subr.mxu0 0.0
    %3776 = vmatpush1.msra.mxu0 %v547
    %3777 = vmatprep.subr.mxu0 0.0
    %3778 = vmatpush1.msra.mxu0 %v548
    %3779 = vmatprep.subr.mxu0 0.0
    %3780 = vmatpush1.msra.mxu0 %v549
    %3781 = vmatprep.subr.mxu0 0.0
    %3782 = vmatpush1.msra.mxu0 %v550
    %3783 = vmatprep.subr.mxu0 0.0
    %3784 = vmatpush1.msra.mxu0 %v551
    %3785 = vmatprep.subr.mxu0 0.0
    %3786 = vmatpush1.msra.mxu0 %v552
    %3787 = vmatprep.subr.mxu0 0.0
    %3788 = vmatpush1.msra.mxu0 %v553
    %3789 = vmatprep.subr.mxu0 0.0
    %3790 = vmatpush1.msra.mxu0 %v554
    %3791 = vmatprep.subr.mxu0 0.0
    %3792 = vmatpush1.msra.mxu0 %v555
    %3793 = vmatprep.subr.mxu0 0.0
    %3794 = vmatpush1.msra.mxu0 %v556
    %3795 = vmatprep.subr.mxu0 0.0
    %3796 = vmatpush1.msra.mxu0 %v557
    %3797 = vmatprep.subr.mxu0 0.0
    %3798 = vmatpush1.msra.mxu0 %v558
    %3799 = vmatprep.subr.mxu0 0.0
    %3800 = vmatpush1.msra.mxu0 %v559
    %3801 = vmatprep.subr.mxu0 0.0
    %3802 = vmatpush1.msra.mxu0 %v560
    %3803 = vmatprep.subr.mxu0 0.0
    %3804 = vmatpush1.msra.mxu0 %v561
    %3805 = vmatprep.subr.mxu0 0.0
    %3806 = vmatpush1.msra.mxu0 0.0
    %3807 = vmatprep.subr.mxu0 0.0
    %3808 = vmatpush1.msra.mxu0 0.0
    %3809 = vmatprep.subr.mxu0 0.0
    %3810 = vmatpush1.msra.mxu0 0.0
    %3811 = vmatprep.subr.mxu0 0.0
    %3812 = vmatpush1.msra.mxu0 0.0
    %3813 = vmatprep.subr.mxu0 0.0
    %3814 = vmatpush1.msra.mxu0 0.0
    %3815 = vmatprep.subr.mxu0 0.0
    %3816 = vmatpush1.msra.mxu0 0.0
    %3817 = vmatprep.subr.mxu0 0.0
    %3818 = vmatpush1.msra.mxu0 0.0
    %3819 = vmatprep.subr.mxu0 0.0
    %3820 = vmatpush1.msra.mxu0 0.0
    %3821 = vmatprep.subr.mxu0 0.0
    %3822 = vmatpush1.msra.mxu0 0.0
    %3823 = vmatprep.subr.mxu0 0.0
    %3824 = vmatpush1.msra.mxu0 0.0
    %3825 = vmatprep.subr.mxu0 0.0
    %3826 = vmatpush1.msra.mxu0 0.0
    %3827 = vmatprep.subr.mxu0 0.0
    %3828 = vmatpush1.msra.mxu0 0.0
    %3829 = vmatprep.subr.mxu0 0.0
    %3830 = vmatpush1.msra.mxu0 0.0
    %3831 = vmatprep.subr.mxu0 0.0
    %3832 = vmatpush1.msra.mxu0 0.0
    %3833 = vmatprep.subr.mxu0 0.0
    %3834 = vmatpush1.msra.mxu0 0.0
    %3835 = vmatprep.subr.mxu0 0.0
    %3836 = vmatpush1.msra.mxu0 0.0
    %3837 = vmatprep.mubr.f32.mxu0 0.0
    %3838 = vmatmul.mubr.f32.gmra.mrb[0].mxu0 %v3585
    %v3839 = vpop.f32.mrb[0].mxu0
    %v3840 = vadd.f32 0.0, %v3839
    %v3841 = vpop.f32.mrb[0].mxu0
    %3842 = vmatprep.mubr.f32.mxu0 0.0
    %3843 = vmatmul.mubr.f32.gmra.mrb[0].mxu0 %v3590
    %v3844 = vpop.f32.mrb[0].mxu0
    %v3845 = vadd.f32 0.0, %v3844
    %v3846 = vpop.f32.mrb[0].mxu0
    %3847 = vmatprep.mubr.f32.mxu0 0.0
    %3848 = vmatmul.mubr.f32.gmra.mrb[0].mxu0 %v3595
    %v3849 = vpop.f32.mrb[0].mxu0
    %v3850 = vadd.f32 0.0, %v3849
    %v3851 = vpop.f32.mrb[0].mxu0
    %3852 = vmatprep.mubr.f32.mxu0 0.0
    %3853 = vmatmul.mubr.f32.gmra.mrb[0].mxu0 %v3600
    %v3854 = vpop.f32.mrb[0].mxu0
    %v3855 = vadd.f32 0.0, %v3854
    %v3856 = vpop.f32.mrb[0].mxu0
    %3857 = vmatprep.mubr.f32.mxu0 0.0
    %3858 = vmatmul.mubr.f32.gmra.mrb[0].mxu0 %v3605
    %v3859 = vpop.f32.mrb[0].mxu0
    %v3860 = vadd.f32 0.0, %v3859
    %v3861 = vpop.f32.mrb[0].mxu0
    %3862 = vmatprep.mubr.f32.mxu0 0.0
    %3863 = vmatmul.mubr.f32.gmra.mrb[0].mxu0 %v3610
    %v3864 = vpop.f32.mrb[0].mxu0
    %v3865 = vadd.f32 0.0, %v3864
    %v3866 = vpop.f32.mrb[0].mxu0
    %3867 = vmatprep.mubr.f32.mxu0 0.0
    %3868 = vmatmul.mubr.f32.gmra.mrb[0].mxu0 %v3615
    %v3869 = vpop.f32.mrb[0].mxu0
    %v3870 = vadd.f32 0.0, %v3869
    %v3871 = vpop.f32.mrb[0].mxu0
    %3872 = vmatprep.mubr.f32.mxu0 0.0
    %3873 = vmatmul.mubr.f32.gmra.mrb[0].mxu0 %v3620
    %v3874 = vpop.f32.mrb[0].mxu0
    %v3875 = vadd.f32 0.0, %v3874
    %v3876 = vpop.f32.mrb[0].mxu0
    %3877 = vmatprep.mubr.f32.mxu0 0.0
    %3878 = vmatmul.mubr.f32.gmra.mrb[0].mxu0 %v3625
    %v3879 = vpop.f32.mrb[0].mxu0
    %v3880 = vadd.f32 0.0, %v3879
    %v3881 = vpop.f32.mrb[0].mxu0
    %3882 = vmatprep.mubr.f32.mxu0 0.0
    %3883 = vmatmul.mubr.f32.gmra.mrb[0].mxu0 %v3630
    %v3884 = vpop.f32.mrb[0].mxu0
    %v3885 = vadd.f32 0.0, %v3884
    %v3886 = vpop.f32.mrb[0].mxu0
    %3887 = vmatprep.mubr.f32.mxu0 0.0
    %3888 = vmatmul.mubr.f32.gmra.mrb[0].mxu0 %v3635
    %v3889 = vpop.f32.mrb[0].mxu0
    %v3890 = vadd.f32 0.0, %v3889
    %v3891 = vpop.f32.mrb[0].mxu0
    %3892 = vmatprep.mubr.f32.mxu0 0.0
    %3893 = vmatmul.mubr.f32.gmra.mrb[0].mxu0 %v3640
    %v3894 = vpop.f32.mrb[0].mxu0
    %v3895 = vadd.f32 0.0, %v3894
    %v3896 = vpop.f32.mrb[0].mxu0
    %3897 = vmatprep.mubr.f32.mxu0 0.0
    %3898 = vmatmul.mubr.f32.gmra.mrb[0].mxu0 %v3645
    %v3899 = vpop.f32.mrb[0].mxu0
    %v3900 = vadd.f32 0.0, %v3899
    %v3901 = vpop.f32.mrb[0].mxu0
    %3902 = vmatprep.mubr.f32.mxu0 0.0
    %3903 = vmatmul.mubr.f32.gmra.mrb[0].mxu0 %v3650
    %v3904 = vpop.f32.mrb[0].mxu0
    %v3905 = vadd.f32 0.0, %v3904
    %v3906 = vpop.f32.mrb[0].mxu0
    %3907 = vmatprep.mubr.f32.mxu0 0.0
    %3908 = vmatmul.mubr.f32.gmra.mrb[0].mxu0 %v3655
    %v3909 = vpop.f32.mrb[0].mxu0
    %v3910 = vadd.f32 0.0, %v3909
    %v3911 = vpop.f32.mrb[0].mxu0
    %3912 = vmatprep.mubr.f32.mxu0 0.0
    %3913 = vmatmul.mubr.f32.gmra.mrb[0].mxu0 %v3660
    %v3914 = vpop.f32.mrb[0].mxu0
    %v3915 = vadd.f32 0.0, %v3914
    %v3916 = vpop.f32.mrb[0].mxu0
    %3917 = vmatprep.mubr.f32.mxu0 0.0
    %3918 = vmatmul.mubr.f32.gmra.mrb[0].mxu0 %v3665
    %v3919 = vpop.f32.mrb[0].mxu0
    %v3920 = vadd.f32 0.0, %v3919
    %v3921 = vpop.f32.mrb[0].mxu0
    %3922 = vmatprep.mubr.f32.mxu0 0.0
    %3923 = vmatmul.mubr.f32.gmra.mrb[0].mxu0 %v3670
    %v3924 = vpop.f32.mrb[0].mxu0
    %v3925 = vadd.f32 0.0, %v3924
    %v3926 = vpop.f32.mrb[0].mxu0
    %3927 = vmatprep.mubr.f32.mxu0 0.0
    %3928 = vmatmul.mubr.f32.gmra.mrb[0].mxu0 %v3675
    %v3929 = vpop.f32.mrb[0].mxu0
    %v3930 = vadd.f32 0.0, %v3929
    %v3931 = vpop.f32.mrb[0].mxu0
    %3932 = vmatprep.mubr.f32.mxu0 0.0
    %3933 = vmatmul.mubr.f32.gmra.mrb[0].mxu0 %v3680
    %v3934 = vpop.f32.mrb[0].mxu0
    %v3935 = vadd.f32 0.0, %v3934
    %v3936 = vpop.f32.mrb[0].mxu0
    %3937 = vmatprep.mubr.f32.mxu0 0.0
    %3938 = vmatmul.mubr.f32.gmra.mrb[0].mxu0 %v3685
    %v3939 = vpop.f32.mrb[0].mxu0
    %v3940 = vadd.f32 0.0, %v3939
    %v3941 = vpop.f32.mrb[0].mxu0
    %3942 = vmatprep.mubr.f32.mxu0 0.0
    %3943 = vmatmul.mubr.f32.gmra.mrb[0].mxu0 %v3690
    %v3944 = vpop.f32.mrb[0].mxu0
    %v3945 = vadd.f32 0.0, %v3944
    %v3946 = vpop.f32.mrb[0].mxu0
    %3947 = vmatprep.mubr.f32.mxu0 0.0
    %3948 = vmatmul.mubr.f32.gmra.mrb[0].mxu0 %v3695
    %v3949 = vpop.f32.mrb[0].mxu0
    %v3950 = vadd.f32 0.0, %v3949
    %v3951 = vpop.f32.mrb[0].mxu0
    %3952 = vmatprep.mubr.f32.mxu0 0.0
    %3953 = vmatmul.mubr.f32.gmra.mrb[0].mxu0 %v3700
    %v3954 = vpop.f32.mrb[0].mxu0
    %v3955 = vadd.f32 0.0, %v3954
    %v3956 = vpop.f32.mrb[0].mxu0
    %3957 = vmatprep.mubr.f32.mxu0 0.0
    %3958 = vmatmul.mubr.f32.gmra.mrb[0].mxu0 %v3705
    %v3959 = vpop.f32.mrb[0].mxu0
    %v3960 = vadd.f32 0.0, %v3959
    %v3961 = vpop.f32.mrb[0].mxu0
    %3962 = vmatprep.mubr.f32.mxu0 0.0
    %3963 = vmatmul.mubr.f32.gmra.mrb[0].mxu0 %v3710
    %v3964 = vpop.f32.mrb[0].mxu0
    %v3965 = vadd.f32 0.0, %v3964
    %v3966 = vpop.f32.mrb[0].mxu0
    %3967 = vmatprep.mubr.f32.mxu0 0.0
    %3968 = vmatmul.mubr.f32.gmra.mrb[0].mxu0 %v3715
    %v3969 = vpop.f32.mrb[0].mxu0
    %v3970 = vadd.f32 0.0, %v3969
    %v3971 = vpop.f32.mrb[0].mxu0
    %3972 = vmatprep.mubr.f32.mxu0 0.0
    %3973 = vmatmul.mubr.f32.gmra.mrb[0].mxu0 %v3720
    %v3974 = vpop.f32.mrb[0].mxu0
    %v3975 = vadd.f32 0.0, %v3974
    %v3976 = vpop.f32.mrb[0].mxu0
    %3977 = vmatprep.mubr.f32.mxu0 0.0
    %3978 = vmatmul.mubr.f32.gmra.mrb[0].mxu0 %v3725
    %v3979 = vpop.f32.mrb[0].mxu0
    %v3980 = vadd.f32 0.0, %v3979
    %v3981 = vpop.f32.mrb[0].mxu0
    %3982 = vmatprep.mubr.f32.mxu0 0.0
    %3983 = vmatmul.mubr.f32.gmra.mrb[0].mxu0 %v3730
    %v3984 = vpop.f32.mrb[0].mxu0
    %v3985 = vadd.f32 0.0, %v3984
    %v3986 = vpop.f32.mrb[0].mxu0
    %3987 = vmatprep.mubr.f32.mxu0 0.0
    %3988 = vmatmul.mubr.f32.gmra.mrb[0].mxu0 %v3735
    %v3989 = vpop.f32.mrb[0].mxu0
    %v3990 = vadd.f32 0.0, %v3989
    %v3991 = vpop.f32.mrb[0].mxu0
    %3992 = vmatprep.mubr.f32.mxu0 0.0
    %3993 = vmatmul.mubr.f32.gmra.mrb[0].mxu0 %v3740
    %v3994 = vpop.f32.mrb[0].mxu0
    %v3995 = vadd.f32 0.0, %v3994
    %v3996 = vpop.f32.mrb[0].mxu0
    %3997 = vmatprep.mubr.f32.mxu0 0.0
    %3998 = vmatmul.mubr.f32.gmra.mrb[0].mxu0 %v3745
    %v3999 = vpop.f32.mrb[0].mxu0
    %v4000 = vadd.f32 0.0, %v3999
    %v4001 = vpop.f32.mrb[0].mxu0
    %4002 = vmatprep.mubr.f32.mxu0 0.0
    %4003 = vmatmul.mubr.f32.gmra.mrb[0].mxu0 %v3750
    %v4004 = vpop.f32.mrb[0].mxu0
    %v4005 = vadd.f32 0.0, %v4004
    %v4006 = vpop.f32.mrb[0].mxu0
    %4007 = vmatprep.mubr.f32.mxu0 0.0
    %4008 = vmatmul.mubr.f32.gmra.mrb[0].mxu0 %v3755
    %v4009 = vpop.f32.mrb[0].mxu0
    %v4010 = vadd.f32 0.0, %v4009
    %v4011 = vpop.f32.mrb[0].mxu0
    %4012 = vmatprep.mubr.f32.mxu0 0.0
    %4013 = vmatmul.mubr.f32.gmra.mrb[0].mxu0 %v3760
    %v4014 = vpop.f32.mrb[0].mxu0
    %v4015 = vadd.f32 0.0, %v4014
    %v4016 = vpop.f32.mrb[0].mxu0
    %4017 = vmatprep.mubr.f32.mxu0 0.0
    %4018 = vmatmul.mubr.f32.gmra.mrb[0].mxu0 %v3765
    %v4019 = vpop.f32.mrb[0].mxu0
    %v4020 = vadd.f32 0.0, %v4019
    %v4021 = vpop.f32.mrb[0].mxu0
    %4022 = vmatprep.mubr.f32.mxu0 0.0
    %4023 = vmatmul.mubr.f32.gmra.mrb[0].mxu0 %v3770
    %v4024 = vpop.f32.mrb[0].mxu0
    %v4025 = vadd.f32 0.0, %v4024
    %v4026 = vpop.f32.mrb[0].mxu0
    %4027 = vdwg.mxu0
    %v4028 = vsub.f32 %v3480, %v3840
    %v4029 = vsub.f32 %v3481, %v3845
    %v4030 = vsub.f32 %v3482, %v3850
    %v4031 = vsub.f32 %v3483, %v3855
    %v4032 = vsub.f32 %v3484, %v3860
    %v4033 = vsub.f32 %v3485, %v3865
    %v4034 = vsub.f32 %v3486, %v3870
    %v4035 = vsub.f32 %v3487, %v3875
    %v4036 = vsub.f32 %v3488, %v3880
    %v4037 = vsub.f32 %v3489, %v3885
    %v4038 = vsub.f32 %v3490, %v3890
    %v4039 = vsub.f32 %v3491, %v3895
    %v4040 = vsub.f32 %v3492, %v3900
    %v4041 = vsub.f32 %v3493, %v3905
    %v4042 = vsub.f32 %v3494, %v3910
    %v4043 = vsub.f32 %v3495, %v3915
    %v4044 = vsub.f32 %v3496, %v3920
    %v4045 = vsub.f32 %v3497, %v3925
    %v4046 = vsub.f32 %v3498, %v3930
    %v4047 = vsub.f32 %v3499, %v3935
    %v4048 = vsub.f32 %v3500, %v3940
    %v4049 = vsub.f32 %v3501, %v3945
    %v4050 = vsub.f32 %v3502, %v3950
    %v4051 = vsub.f32 %v3503, %v3955
    %v4052 = vsub.f32 %v3504, %v3960
    %v4053 = vsub.f32 %v3505, %v3965
    %v4054 = vsub.f32 %v3506, %v3970
    %v4055 = vsub.f32 %v3507, %v3975
    %v4056 = vsub.f32 %v3508, %v3980
    %v4057 = vsub.f32 %v3509, %v3985
    %v4058 = vsub.f32 %v3510, %v3990
    %v4059 = vsub.f32 %v3511, %v3995
    %v4060 = vsub.f32 %v3512, %v4000
    %v4061 = vsub.f32 %v3513, %v4005
    %v4062 = vsub.f32 %v3514, %v4010
    %v4063 = vsub.f32 %v3515, %v4015
    %v4064 = vsub.f32 %v3516, %v4020
    %v4065 = vsub.f32 %v3517, %v4025
    %v4066 = vmul.f32 %v4028, %v4028
    %v4067 = vmul.f32 %v4029, %v4029
    %v4068 = vmul.f32 %v4030, %v4030
    %v4069 = vmul.f32 %v4031, %v4031
    %v4070 = vmul.f32 %v4032, %v4032
    %v4071 = vmul.f32 %v4033, %v4033
    %v4072 = vmul.f32 %v4034, %v4034
    %v4073 = vmul.f32 %v4035, %v4035
    %v4074 = vmul.f32 %v4036, %v4036
    %v4075 = vmul.f32 %v4037, %v4037
    %v4076 = vmul.f32 %v4038, %v4038
    %v4077 = vmul.f32 %v4039, %v4039
    %v4078 = vmul.f32 %v4040, %v4040
    %v4079 = vmul.f32 %v4041, %v4041
    %v4080 = vmul.f32 %v4042, %v4042
    %v4081 = vmul.f32 %v4043, %v4043
    %v4082 = vmul.f32 %v4044, %v4044
    %v4083 = vmul.f32 %v4045, %v4045
    %v4084 = vmul.f32 %v4046, %v4046
    %v4085 = vmul.f32 %v4047, %v4047
    %v4086 = vmul.f32 %v4048, %v4048
    %v4087 = vmul.f32 %v4049, %v4049
    %v4088 = vmul.f32 %v4050, %v4050
    %v4089 = vmul.f32 %v4051, %v4051
    %v4090 = vmul.f32 %v4052, %v4052
    %v4091 = vmul.f32 %v4053, %v4053
    %v4092 = vmul.f32 %v4054, %v4054
    %v4093 = vmul.f32 %v4055, %v4055
    %v4094 = vmul.f32 %v4056, %v4056
    %v4095 = vmul.f32 %v4057, %v4057
    %v4096 = vmul.f32 %v4058, %v4058
    %v4097 = vmul.f32 %v4059, %v4059
    %v4098 = vmul.f32 %v4060, %v4060
    %v4099 = vmul.f32 %v4061, %v4061
    %v4100 = vmul.f32 %v4062, %v4062
    %v4101 = vmul.f32 %v4063, %v4063
    %v4102 = vmul.f32 %v4064, %v4064
    %v4103 = vmul.f32 %v4065, %v4065
    %4104 = vmatprep.subr.mxu0 0.0
    %4105 = vmatpush1.msra.mxu0 %v530
    %4106 = vmatprep.subr.mxu0 0.0
    %4107 = vmatpush1.msra.mxu0 %v531
    %4108 = vmatprep.subr.mxu0 0.0
    %4109 = vmatpush1.msra.mxu0 %v532
    %4110 = vmatprep.subr.mxu0 0.0
    %4111 = vmatpush1.msra.mxu0 %v533
    %4112 = vmatprep.subr.mxu0 0.0
    %4113 = vmatpush1.msra.mxu0 %v534
    %4114 = vmatprep.subr.mxu0 0.0
    %4115 = vmatpush1.msra.mxu0 %v535
    %4116 = vmatprep.subr.mxu0 0.0
    %4117 = vmatpush1.msra.mxu0 %v536
    %4118 = vmatprep.subr.mxu0 0.0
    %4119 = vmatpush1.msra.mxu0 %v537
    %4120 = vmatprep.subr.mxu0 0.0
    %4121 = vmatpush1.msra.mxu0 %v538
    %4122 = vmatprep.subr.mxu0 0.0
    %4123 = vmatpush1.msra.mxu0 %v539
    %4124 = vmatprep.subr.mxu0 0.0
    %4125 = vmatpush1.msra.mxu0 %v540
    %4126 = vmatprep.subr.mxu0 0.0
    %4127 = vmatpush1.msra.mxu0 %v541
    %4128 = vmatprep.subr.mxu0 0.0
    %4129 = vmatpush1.msra.mxu0 %v542
    %4130 = vmatprep.subr.mxu0 0.0
    %4131 = vmatpush1.msra.mxu0 %v543
    %4132 = vmatprep.subr.mxu0 0.0
    %4133 = vmatpush1.msra.mxu0 %v544
    %4134 = vmatprep.subr.mxu0 0.0
    %4135 = vmatpush1.msra.mxu0 %v545
    %4136 = vmatprep.subr.mxu0 0.0
    %4137 = vmatpush1.msra.mxu0 0.0
    %4138 = vmatprep.subr.mxu0 0.0
    %4139 = vmatpush1.msra.mxu0 0.0
    %4140 = vmatprep.subr.mxu0 0.0
    %4141 = vmatpush1.msra.mxu0 0.0
    %4142 = vmatprep.subr.mxu0 0.0
    %4143 = vmatpush1.msra.mxu0 0.0
    %4144 = vmatprep.subr.mxu0 0.0
    %4145 = vmatpush1.msra.mxu0 0.0
    %4146 = vmatprep.subr.mxu0 0.0
    %4147 = vmatpush1.msra.mxu0 0.0
    %4148 = vmatprep.subr.mxu0 0.0
    %4149 = vmatpush1.msra.mxu0 0.0
    %4150 = vmatprep.subr.mxu0 0.0
    %4151 = vmatpush1.msra.mxu0 0.0
    %4152 = vmatprep.subr.mxu0 0.0
    %4153 = vmatpush1.msra.mxu0 0.0
    %4154 = vmatprep.subr.mxu0 0.0
    %4155 = vmatpush1.msra.mxu0 0.0
    %4156 = vmatprep.subr.mxu0 0.0
    %4157 = vmatpush1.msra.mxu0 0.0
    %4158 = vmatprep.subr.mxu0 0.0
    %4159 = vmatpush1.msra.mxu0 0.0
    %4160 = vmatprep.subr.mxu0 0.0
    %4161 = vmatpush1.msra.mxu0 0.0
    %4162 = vmatprep.subr.mxu0 0.0
    %4163 = vmatpush1.msra.mxu0 0.0
    %4164 = vmatprep.subr.mxu0 0.0
    %4165 = vmatpush1.msra.mxu0 0.0
    %4166 = vmatprep.subr.mxu0 0.0
    %4167 = vmatpush1.msra.mxu0 0.0
    %4168 = vmatprep.mubr.f32.mxu0 0.0
    %4169 = vmatmul.mubr.f32.gmra.mrb[0].mxu0 %v4066
    %v4170 = vpop.f32.mrb[0].mxu0
    %v4171 = vadd.f32 0.0, %v4170
    %v4172 = vpop.f32.mrb[0].mxu0
    %4173 = vmatprep.mubr.f32.mxu0 0.0
    %4174 = vmatmul.mubr.f32.gmra.mrb[0].mxu0 %v4067
    %v4175 = vpop.f32.mrb[0].mxu0
    %v4176 = vadd.f32 0.0, %v4175
    %v4177 = vpop.f32.mrb[0].mxu0
    %4178 = vmatprep.mubr.f32.mxu0 0.0
    %4179 = vmatmul.mubr.f32.gmra.mrb[0].mxu0 %v4068
    %v4180 = vpop.f32.mrb[0].mxu0
    %v4181 = vadd.f32 0.0, %v4180
    %v4182 = vpop.f32.mrb[0].mxu0
    %4183 = vmatprep.mubr.f32.mxu0 0.0
    %4184 = vmatmul.mubr.f32.gmra.mrb[0].mxu0 %v4069
    %v4185 = vpop.f32.mrb[0].mxu0
    %v4186 = vadd.f32 0.0, %v4185
    %v4187 = vpop.f32.mrb[0].mxu0
    %4188 = vmatprep.mubr.f32.mxu0 0.0
    %4189 = vmatmul.mubr.f32.gmra.mrb[0].mxu0 %v4070
    %v4190 = vpop.f32.mrb[0].mxu0
    %v4191 = vadd.f32 0.0, %v4190
    %v4192 = vpop.f32.mrb[0].mxu0
    %4193 = vmatprep.mubr.f32.mxu0 0.0
    %4194 = vmatmul.mubr.f32.gmra.mrb[0].mxu0 %v4071
    %v4195 = vpop.f32.mrb[0].mxu0
    %v4196 = vadd.f32 0.0, %v4195
    %v4197 = vpop.f32.mrb[0].mxu0
    %4198 = vmatprep.mubr.f32.mxu0 0.0
    %4199 = vmatmul.mubr.f32.gmra.mrb[0].mxu0 %v4072
    %v4200 = vpop.f32.mrb[0].mxu0
    %v4201 = vadd.f32 0.0, %v4200
    %v4202 = vpop.f32.mrb[0].mxu0
    %4203 = vmatprep.mubr.f32.mxu0 0.0
    %4204 = vmatmul.mubr.f32.gmra.mrb[0].mxu0 %v4073
    %v4205 = vpop.f32.mrb[0].mxu0
    %v4206 = vadd.f32 0.0, %v4205
    %v4207 = vpop.f32.mrb[0].mxu0
    %4208 = vmatprep.mubr.f32.mxu0 0.0
    %4209 = vmatmul.mubr.f32.gmra.mrb[0].mxu0 %v4074
    %v4210 = vpop.f32.mrb[0].mxu0
    %v4211 = vadd.f32 0.0, %v4210
    %v4212 = vpop.f32.mrb[0].mxu0
    %4213 = vmatprep.mubr.f32.mxu0 0.0
    %4214 = vmatmul.mubr.f32.gmra.mrb[0].mxu0 %v4075
    %v4215 = vpop.f32.mrb[0].mxu0
    %v4216 = vadd.f32 0.0, %v4215
    %v4217 = vpop.f32.mrb[0].mxu0
    %4218 = vmatprep.mubr.f32.mxu0 0.0
    %4219 = vmatmul.mubr.f32.gmra.mrb[0].mxu0 %v4076
    %v4220 = vpop.f32.mrb[0].mxu0
    %v4221 = vadd.f32 0.0, %v4220
    %v4222 = vpop.f32.mrb[0].mxu0
    %4223 = vmatprep.mubr.f32.mxu0 0.0
    %4224 = vmatmul.mubr.f32.gmra.mrb[0].mxu0 %v4077
    %v4225 = vpop.f32.mrb[0].mxu0
    %v4226 = vadd.f32 0.0, %v4225
    %v4227 = vpop.f32.mrb[0].mxu0
    %4228 = vmatprep.mubr.f32.mxu0 0.0
    %4229 = vmatmul.mubr.f32.gmra.mrb[0].mxu0 %v4078
    %v4230 = vpop.f32.mrb[0].mxu0
    %v4231 = vadd.f32 0.0, %v4230
    %v4232 = vpop.f32.mrb[0].mxu0
    %4233 = vmatprep.mubr.f32.mxu0 0.0
    %4234 = vmatmul.mubr.f32.gmra.mrb[0].mxu0 %v4079
    %v4235 = vpop.f32.mrb[0].mxu0
    %v4236 = vadd.f32 0.0, %v4235
    %v4237 = vpop.f32.mrb[0].mxu0
    %4238 = vmatprep.mubr.f32.mxu0 0.0
    %4239 = vmatmul.mubr.f32.gmra.mrb[0].mxu0 %v4080
    %v4240 = vpop.f32.mrb[0].mxu0
    %v4241 = vadd.f32 0.0, %v4240
    %v4242 = vpop.f32.mrb[0].mxu0
    %4243 = vmatprep.mubr.f32.mxu0 0.0
    %4244 = vmatmul.mubr.f32.gmra.mrb[0].mxu0 %v4081
    %v4245 = vpop.f32.mrb[0].mxu0
    %v4246 = vadd.f32 0.0, %v4245
    %v4247 = vpop.f32.mrb[0].mxu0
    %4248 = vmatprep.mubr.f32.mxu0 0.0
    %4249 = vmatmul.mubr.f32.gmra.mrb[0].mxu0 %v4082
    %v4250 = vpop.f32.mrb[0].mxu0
    %v4251 = vadd.f32 0.0, %v4250
    %v4252 = vpop.f32.mrb[0].mxu0
    %4253 = vmatprep.mubr.f32.mxu0 0.0
    %4254 = vmatmul.mubr.f32.gmra.mrb[0].mxu0 %v4083
    %v4255 = vpop.f32.mrb[0].mxu0
    %v4256 = vadd.f32 0.0, %v4255
    %v4257 = vpop.f32.mrb[0].mxu0
    %4258 = vmatprep.mubr.f32.mxu0 0.0
    %4259 = vmatmul.mubr.f32.gmra.mrb[0].mxu0 %v4084
    %v4260 = vpop.f32.mrb[0].mxu0
    %v4261 = vadd.f32 0.0, %v4260
    %v4262 = vpop.f32.mrb[0].mxu0
    %4263 = vmatprep.mubr.f32.mxu0 0.0
    %4264 = vmatmul.mubr.f32.gmra.mrb[0].mxu0 %v4085
    %v4265 = vpop.f32.mrb[0].mxu0
    %v4266 = vadd.f32 0.0, %v4265
    %v4267 = vpop.f32.mrb[0].mxu0
    %4268 = vmatprep.mubr.f32.mxu0 0.0
    %4269 = vmatmul.mubr.f32.gmra.mrb[0].mxu0 %v4086
    %v4270 = vpop.f32.mrb[0].mxu0
    %v4271 = vadd.f32 0.0, %v4270
    %v4272 = vpop.f32.mrb[0].mxu0
    %4273 = vmatprep.mubr.f32.mxu0 0.0
    %4274 = vmatmul.mubr.f32.gmra.mrb[0].mxu0 %v4087
    %v4275 = vpop.f32.mrb[0].mxu0
    %v4276 = vadd.f32 0.0, %v4275
    %v4277 = vpop.f32.mrb[0].mxu0
    %4278 = vmatprep.mubr.f32.mxu0 0.0
    %4279 = vmatmul.mubr.f32.gmra.mrb[0].mxu0 %v4088
    %v4280 = vpop.f32.mrb[0].mxu0
    %v4281 = vadd.f32 0.0, %v4280
    %v4282 = vpop.f32.mrb[0].mxu0
    %4283 = vmatprep.mubr.f32.mxu0 0.0
    %4284 = vmatmul.mubr.f32.gmra.mrb[0].mxu0 %v4089
    %v4285 = vpop.f32.mrb[0].mxu0
    %v4286 = vadd.f32 0.0, %v4285
    %v4287 = vpop.f32.mrb[0].mxu0
    %4288 = vmatprep.mubr.f32.mxu0 0.0
    %4289 = vmatmul.mubr.f32.gmra.mrb[0].mxu0 %v4090
    %v4290 = vpop.f32.mrb[0].mxu0
    %v4291 = vadd.f32 0.0, %v4290
    %v4292 = vpop.f32.mrb[0].mxu0
    %4293 = vmatprep.mubr.f32.mxu0 0.0
    %4294 = vmatmul.mubr.f32.gmra.mrb[0].mxu0 %v4091
    %v4295 = vpop.f32.mrb[0].mxu0
    %v4296 = vadd.f32 0.0, %v4295
    %v4297 = vpop.f32.mrb[0].mxu0
    %4298 = vmatprep.mubr.f32.mxu0 0.0
    %4299 = vmatmul.mubr.f32.gmra.mrb[0].mxu0 %v4092
    %v4300 = vpop.f32.mrb[0].mxu0
    %v4301 = vadd.f32 0.0, %v4300
    %v4302 = vpop.f32.mrb[0].mxu0
    %4303 = vmatprep.mubr.f32.mxu0 0.0
    %4304 = vmatmul.mubr.f32.gmra.mrb[0].mxu0 %v4093
    %v4305 = vpop.f32.mrb[0].mxu0
    %v4306 = vadd.f32 0.0, %v4305
    %v4307 = vpop.f32.mrb[0].mxu0
    %4308 = vmatprep.mubr.f32.mxu0 0.0
    %4309 = vmatmul.mubr.f32.gmra.mrb[0].mxu0 %v4094
    %v4310 = vpop.f32.mrb[0].mxu0
    %v4311 = vadd.f32 0.0, %v4310
    %v4312 = vpop.f32.mrb[0].mxu0
    %4313 = vmatprep.mubr.f32.mxu0 0.0
    %4314 = vmatmul.mubr.f32.gmra.mrb[0].mxu0 %v4095
    %v4315 = vpop.f32.mrb[0].mxu0
    %v4316 = vadd.f32 0.0, %v4315
    %v4317 = vpop.f32.mrb[0].mxu0
    %4318 = vmatprep.mubr.f32.mxu0 0.0
    %4319 = vmatmul.mubr.f32.gmra.mrb[0].mxu0 %v4096
    %v4320 = vpop.f32.mrb[0].mxu0
    %v4321 = vadd.f32 0.0, %v4320
    %v4322 = vpop.f32.mrb[0].mxu0
    %4323 = vmatprep.mubr.f32.mxu0 0.0
    %4324 = vmatmul.mubr.f32.gmra.mrb[0].mxu0 %v4097
    %v4325 = vpop.f32.mrb[0].mxu0
    %v4326 = vadd.f32 0.0, %v4325
    %v4327 = vpop.f32.mrb[0].mxu0
    %4328 = vmatprep.mubr.f32.mxu0 0.0
    %4329 = vmatmul.mubr.f32.gmra.mrb[0].mxu0 %v4098
    %v4330 = vpop.f32.mrb[0].mxu0
    %v4331 = vadd.f32 0.0, %v4330
    %v4332 = vpop.f32.mrb[0].mxu0
    %4333 = vmatprep.mubr.f32.mxu0 0.0
    %4334 = vmatmul.mubr.f32.gmra.mrb[0].mxu0 %v4099
    %v4335 = vpop.f32.mrb[0].mxu0
    %v4336 = vadd.f32 0.0, %v4335
    %v4337 = vpop.f32.mrb[0].mxu0
    %4338 = vmatprep.mubr.f32.mxu0 0.0
    %4339 = vmatmul.mubr.f32.gmra.mrb[0].mxu0 %v4100
    %v4340 = vpop.f32.mrb[0].mxu0
    %v4341 = vadd.f32 0.0, %v4340
    %v4342 = vpop.f32.mrb[0].mxu0
    %4343 = vmatprep.mubr.f32.mxu0 0.0
    %4344 = vmatmul.mubr.f32.gmra.mrb[0].mxu0 %v4101
    %v4345 = vpop.f32.mrb[0].mxu0
    %v4346 = vadd.f32 0.0, %v4345
    %v4347 = vpop.f32.mrb[0].mxu0
    %4348 = vmatprep.mubr.f32.mxu0 0.0
    %4349 = vmatmul.mubr.f32.gmra.mrb[0].mxu0 %v4102
    %v4350 = vpop.f32.mrb[0].mxu0
    %v4351 = vadd.f32 0.0, %v4350
    %v4352 = vpop.f32.mrb[0].mxu0
    %4353 = vmatprep.mubr.f32.mxu0 0.0
    %4354 = vmatmul.mubr.f32.gmra.mrb[0].mxu0 %v4103
    %v4355 = vpop.f32.mrb[0].mxu0
    %v4356 = vadd.f32 0.0, %v4355
    %v4357 = vpop.f32.mrb[0].mxu0
    %4358 = vdwg.mxu0
    %4359 = vmatprep.subr.mxu0 0.0
    %4360 = vmatpush1.msra.mxu0 %v546
    %4361 = vmatprep.subr.mxu0 0.0
    %4362 = vmatpush1.msra.mxu0 %v547
    %4363 = vmatprep.subr.mxu0 0.0
    %4364 = vmatpush1.msra.mxu0 %v548
    %4365 = vmatprep.subr.mxu0 0.0
    %4366 = vmatpush1.msra.mxu0 %v549
    %4367 = vmatprep.subr.mxu0 0.0
    %4368 = vmatpush1.msra.mxu0 %v550
    %4369 = vmatprep.subr.mxu0 0.0
    %4370 = vmatpush1.msra.mxu0 %v551
    %4371 = vmatprep.subr.mxu0 0.0
    %4372 = vmatpush1.msra.mxu0 %v552
    %4373 = vmatprep.subr.mxu0 0.0
    %4374 = vmatpush1.msra.mxu0 %v553
    %4375 = vmatprep.subr.mxu0 0.0
    %4376 = vmatpush1.msra.mxu0 %v554
    %4377 = vmatprep.subr.mxu0 0.0
    %4378 = vmatpush1.msra.mxu0 %v555
    %4379 = vmatprep.subr.mxu0 0.0
    %4380 = vmatpush1.msra.mxu0 %v556
    %4381 = vmatprep.subr.mxu0 0.0
    %4382 = vmatpush1.msra.mxu0 %v557
    %4383 = vmatprep.subr.mxu0 0.0
    %4384 = vmatpush1.msra.mxu0 %v558
    %4385 = vmatprep.subr.mxu0 0.0
    %4386 = vmatpush1.msra.mxu0 %v559
    %4387 = vmatprep.subr.mxu0 0.0
    %4388 = vmatpush1.msra.mxu0 %v560
    %4389 = vmatprep.subr.mxu0 0.0
    %4390 = vmatpush1.msra.mxu0 %v561
    %4391 = vmatprep.subr.mxu0 0.0
    %4392 = vmatpush1.msra.mxu0 0.0
    %4393 = vmatprep.subr.mxu0 0.0
    %4394 = vmatpush1.msra.mxu0 0.0
    %4395 = vmatprep.subr.mxu0 0.0
    %4396 = vmatpush1.msra.mxu0 0.0
    %4397 = vmatprep.subr.mxu0 0.0
    %4398 = vmatpush1.msra.mxu0 0.0
    %4399 = vmatprep.subr.mxu0 0.0
    %4400 = vmatpush1.msra.mxu0 0.0
    %4401 = vmatprep.subr.mxu0 0.0
    %4402 = vmatpush1.msra.mxu0 0.0
    %4403 = vmatprep.subr.mxu0 0.0
    %4404 = vmatpush1.msra.mxu0 0.0
    %4405 = vmatprep.subr.mxu0 0.0
    %4406 = vmatpush1.msra.mxu0 0.0
    %4407 = vmatprep.subr.mxu0 0.0
    %4408 = vmatpush1.msra.mxu0 0.0
    %4409 = vmatprep.subr.mxu0 0.0
    %4410 = vmatpush1.msra.mxu0 0.0
    %4411 = vmatprep.subr.mxu0 0.0
    %4412 = vmatpush1.msra.mxu0 0.0
    %4413 = vmatprep.subr.mxu0 0.0
    %4414 = vmatpush1.msra.mxu0 0.0
    %4415 = vmatprep.subr.mxu0 0.0
    %4416 = vmatpush1.msra.mxu0 0.0
    %4417 = vmatprep.subr.mxu0 0.0
    %4418 = vmatpush1.msra.mxu0 0.0
    %4419 = vmatprep.subr.mxu0 0.0
    %4420 = vmatpush1.msra.mxu0 0.0
    %4421 = vmatprep.subr.mxu0 0.0
    %4422 = vmatpush1.msra.mxu0 0.0
    %4423 = vmatprep.mubr.f32.mxu0 0.0
    %4424 = vmatmul.mubr.f32.gmra.mrb[0].mxu0 %v4171
    %v4425 = vpop.f32.mrb[0].mxu0
    %v4426 = vadd.f32 0.0, %v4425
    %v4427 = vpop.f32.mrb[0].mxu0
    %4428 = vmatprep.mubr.f32.mxu0 0.0
    %4429 = vmatmul.mubr.f32.gmra.mrb[0].mxu0 %v4176
    %v4430 = vpop.f32.mrb[0].mxu0
    %v4431 = vadd.f32 0.0, %v4430
    %v4432 = vpop.f32.mrb[0].mxu0
    %4433 = vmatprep.mubr.f32.mxu0 0.0
    %4434 = vmatmul.mubr.f32.gmra.mrb[0].mxu0 %v4181
    %v4435 = vpop.f32.mrb[0].mxu0
    %v4436 = vadd.f32 0.0, %v4435
    %v4437 = vpop.f32.mrb[0].mxu0
    %4438 = vmatprep.mubr.f32.mxu0 0.0
    %4439 = vmatmul.mubr.f32.gmra.mrb[0].mxu0 %v4186
    %v4440 = vpop.f32.mrb[0].mxu0
    %v4441 = vadd.f32 0.0, %v4440
    %v4442 = vpop.f32.mrb[0].mxu0
    %4443 = vmatprep.mubr.f32.mxu0 0.0
    %4444 = vmatmul.mubr.f32.gmra.mrb[0].mxu0 %v4191
    %v4445 = vpop.f32.mrb[0].mxu0
    %v4446 = vadd.f32 0.0, %v4445
    %v4447 = vpop.f32.mrb[0].mxu0
    %4448 = vmatprep.mubr.f32.mxu0 0.0
    %4449 = vmatmul.mubr.f32.gmra.mrb[0].mxu0 %v4196
    %v4450 = vpop.f32.mrb[0].mxu0
    %v4451 = vadd.f32 0.0, %v4450
    %v4452 = vpop.f32.mrb[0].mxu0
    %4453 = vmatprep.mubr.f32.mxu0 0.0
    %4454 = vmatmul.mubr.f32.gmra.mrb[0].mxu0 %v4201
    %v4455 = vpop.f32.mrb[0].mxu0
    %v4456 = vadd.f32 0.0, %v4455
    %v4457 = vpop.f32.mrb[0].mxu0
    %4458 = vmatprep.mubr.f32.mxu0 0.0
    %4459 = vmatmul.mubr.f32.gmra.mrb[0].mxu0 %v4206
    %v4460 = vpop.f32.mrb[0].mxu0
    %v4461 = vadd.f32 0.0, %v4460
    %v4462 = vpop.f32.mrb[0].mxu0
    %4463 = vmatprep.mubr.f32.mxu0 0.0
    %4464 = vmatmul.mubr.f32.gmra.mrb[0].mxu0 %v4211
    %v4465 = vpop.f32.mrb[0].mxu0
    %v4466 = vadd.f32 0.0, %v4465
    %v4467 = vpop.f32.mrb[0].mxu0
    %4468 = vmatprep.mubr.f32.mxu0 0.0
    %4469 = vmatmul.mubr.f32.gmra.mrb[0].mxu0 %v4216
    %v4470 = vpop.f32.mrb[0].mxu0
    %v4471 = vadd.f32 0.0, %v4470
    %v4472 = vpop.f32.mrb[0].mxu0
    %4473 = vmatprep.mubr.f32.mxu0 0.0
    %4474 = vmatmul.mubr.f32.gmra.mrb[0].mxu0 %v4221
    %v4475 = vpop.f32.mrb[0].mxu0
    %v4476 = vadd.f32 0.0, %v4475
    %v4477 = vpop.f32.mrb[0].mxu0
    %4478 = vmatprep.mubr.f32.mxu0 0.0
    %4479 = vmatmul.mubr.f32.gmra.mrb[0].mxu0 %v4226
    %v4480 = vpop.f32.mrb[0].mxu0
    %v4481 = vadd.f32 0.0, %v4480
    %v4482 = vpop.f32.mrb[0].mxu0
    %4483 = vmatprep.mubr.f32.mxu0 0.0
    %4484 = vmatmul.mubr.f32.gmra.mrb[0].mxu0 %v4231
    %v4485 = vpop.f32.mrb[0].mxu0
    %v4486 = vadd.f32 0.0, %v4485
    %v4487 = vpop.f32.mrb[0].mxu0
    %4488 = vmatprep.mubr.f32.mxu0 0.0
    %4489 = vmatmul.mubr.f32.gmra.mrb[0].mxu0 %v4236
    %v4490 = vpop.f32.mrb[0].mxu0
    %v4491 = vadd.f32 0.0, %v4490
    %v4492 = vpop.f32.mrb[0].mxu0
    %4493 = vmatprep.mubr.f32.mxu0 0.0
    %4494 = vmatmul.mubr.f32.gmra.mrb[0].mxu0 %v4241
    %v4495 = vpop.f32.mrb[0].mxu0
    %v4496 = vadd.f32 0.0, %v4495
    %v4497 = vpop.f32.mrb[0].mxu0
    %4498 = vmatprep.mubr.f32.mxu0 0.0
    %4499 = vmatmul.mubr.f32.gmra.mrb[0].mxu0 %v4246
    %v4500 = vpop.f32.mrb[0].mxu0
    %v4501 = vadd.f32 0.0, %v4500
    %v4502 = vpop.f32.mrb[0].mxu0
    %4503 = vmatprep.mubr.f32.mxu0 0.0
    %4504 = vmatmul.mubr.f32.gmra.mrb[0].mxu0 %v4251
    %v4505 = vpop.f32.mrb[0].mxu0
    %v4506 = vadd.f32 0.0, %v4505
    %v4507 = vpop.f32.mrb[0].mxu0
    %4508 = vmatprep.mubr.f32.mxu0 0.0
    %4509 = vmatmul.mubr.f32.gmra.mrb[0].mxu0 %v4256
    %v4510 = vpop.f32.mrb[0].mxu0
    %v4511 = vadd.f32 0.0, %v4510
    %v4512 = vpop.f32.mrb[0].mxu0
    %4513 = vmatprep.mubr.f32.mxu0 0.0
    %4514 = vmatmul.mubr.f32.gmra.mrb[0].mxu0 %v4261
    %v4515 = vpop.f32.mrb[0].mxu0
    %v4516 = vadd.f32 0.0, %v4515
    %v4517 = vpop.f32.mrb[0].mxu0
    %4518 = vmatprep.mubr.f32.mxu0 0.0
    %4519 = vmatmul.mubr.f32.gmra.mrb[0].mxu0 %v4266
    %v4520 = vpop.f32.mrb[0].mxu0
    %v4521 = vadd.f32 0.0, %v4520
    %v4522 = vpop.f32.mrb[0].mxu0
    %4523 = vmatprep.mubr.f32.mxu0 0.0
    %4524 = vmatmul.mubr.f32.gmra.mrb[0].mxu0 %v4271
    %v4525 = vpop.f32.mrb[0].mxu0
    %v4526 = vadd.f32 0.0, %v4525
    %v4527 = vpop.f32.mrb[0].mxu0
    %4528 = vmatprep.mubr.f32.mxu0 0.0
    %4529 = vmatmul.mubr.f32.gmra.mrb[0].mxu0 %v4276
    %v4530 = vpop.f32.mrb[0].mxu0
    %v4531 = vadd.f32 0.0, %v4530
    %v4532 = vpop.f32.mrb[0].mxu0
    %4533 = vmatprep.mubr.f32.mxu0 0.0
    %4534 = vmatmul.mubr.f32.gmra.mrb[0].mxu0 %v4281
    %v4535 = vpop.f32.mrb[0].mxu0
    %v4536 = vadd.f32 0.0, %v4535
    %v4537 = vpop.f32.mrb[0].mxu0
    %4538 = vmatprep.mubr.f32.mxu0 0.0
    %4539 = vmatmul.mubr.f32.gmra.mrb[0].mxu0 %v4286
    %v4540 = vpop.f32.mrb[0].mxu0
    %v4541 = vadd.f32 0.0, %v4540
    %v4542 = vpop.f32.mrb[0].mxu0
    %4543 = vmatprep.mubr.f32.mxu0 0.0
    %4544 = vmatmul.mubr.f32.gmra.mrb[0].mxu0 %v4291
    %v4545 = vpop.f32.mrb[0].mxu0
    %v4546 = vadd.f32 0.0, %v4545
    %v4547 = vpop.f32.mrb[0].mxu0
    %4548 = vmatprep.mubr.f32.mxu0 0.0
    %4549 = vmatmul.mubr.f32.gmra.mrb[0].mxu0 %v4296
    %v4550 = vpop.f32.mrb[0].mxu0
    %v4551 = vadd.f32 0.0, %v4550
    %v4552 = vpop.f32.mrb[0].mxu0
    %4553 = vmatprep.mubr.f32.mxu0 0.0
    %4554 = vmatmul.mubr.f32.gmra.mrb[0].mxu0 %v4301
    %v4555 = vpop.f32.mrb[0].mxu0
    %v4556 = vadd.f32 0.0, %v4555
    %v4557 = vpop.f32.mrb[0].mxu0
    %4558 = vmatprep.mubr.f32.mxu0 0.0
    %4559 = vmatmul.mubr.f32.gmra.mrb[0].mxu0 %v4306
    %v4560 = vpop.f32.mrb[0].mxu0
    %v4561 = vadd.f32 0.0, %v4560
    %v4562 = vpop.f32.mrb[0].mxu0
    %4563 = vmatprep.mubr.f32.mxu0 0.0
    %4564 = vmatmul.mubr.f32.gmra.mrb[0].mxu0 %v4311
    %v4565 = vpop.f32.mrb[0].mxu0
    %v4566 = vadd.f32 0.0, %v4565
    %v4567 = vpop.f32.mrb[0].mxu0
    %4568 = vmatprep.mubr.f32.mxu0 0.0
    %4569 = vmatmul.mubr.f32.gmra.mrb[0].mxu0 %v4316
    %v4570 = vpop.f32.mrb[0].mxu0
    %v4571 = vadd.f32 0.0, %v4570
    %v4572 = vpop.f32.mrb[0].mxu0
    %4573 = vmatprep.mubr.f32.mxu0 0.0
    %4574 = vmatmul.mubr.f32.gmra.mrb[0].mxu0 %v4321
    %v4575 = vpop.f32.mrb[0].mxu0
    %v4576 = vadd.f32 0.0, %v4575
    %v4577 = vpop.f32.mrb[0].mxu0
    %4578 = vmatprep.mubr.f32.mxu0 0.0
    %4579 = vmatmul.mubr.f32.gmra.mrb[0].mxu0 %v4326
    %v4580 = vpop.f32.mrb[0].mxu0
    %v4581 = vadd.f32 0.0, %v4580
    %v4582 = vpop.f32.mrb[0].mxu0
    %4583 = vmatprep.mubr.f32.mxu0 0.0
    %4584 = vmatmul.mubr.f32.gmra.mrb[0].mxu0 %v4331
    %v4585 = vpop.f32.mrb[0].mxu0
    %v4586 = vadd.f32 0.0, %v4585
    %v4587 = vpop.f32.mrb[0].mxu0
    %4588 = vmatprep.mubr.f32.mxu0 0.0
    %4589 = vmatmul.mubr.f32.gmra.mrb[0].mxu0 %v4336
    %v4590 = vpop.f32.mrb[0].mxu0
    %v4591 = vadd.f32 0.0, %v4590
    %v4592 = vpop.f32.mrb[0].mxu0
    %4593 = vmatprep.mubr.f32.mxu0 0.0
    %4594 = vmatmul.mubr.f32.gmra.mrb[0].mxu0 %v4341
    %v4595 = vpop.f32.mrb[0].mxu0
    %v4596 = vadd.f32 0.0, %v4595
    %v4597 = vpop.f32.mrb[0].mxu0
    %4598 = vmatprep.mubr.f32.mxu0 0.0
    %4599 = vmatmul.mubr.f32.gmra.mrb[0].mxu0 %v4346
    %v4600 = vpop.f32.mrb[0].mxu0
    %v4601 = vadd.f32 0.0, %v4600
    %v4602 = vpop.f32.mrb[0].mxu0
    %4603 = vmatprep.mubr.f32.mxu0 0.0
    %4604 = vmatmul.mubr.f32.gmra.mrb[0].mxu0 %v4351
    %v4605 = vpop.f32.mrb[0].mxu0
    %v4606 = vadd.f32 0.0, %v4605
    %v4607 = vpop.f32.mrb[0].mxu0
    %4608 = vmatprep.mubr.f32.mxu0 0.0
    %4609 = vmatmul.mubr.f32.gmra.mrb[0].mxu0 %v4356
    %v4610 = vpop.f32.mrb[0].mxu0
    %v4611 = vadd.f32 0.0, %v4610
    %v4612 = vpop.f32.mrb[0].mxu0
    %4613 = vdwg.mxu0
    %v4614 = vmax.f32 %v4426, 0.0
    %v4615 = vmax.f32 %v4431, 0.0
    %v4616 = vmax.f32 %v4436, 0.0
    %v4617 = vmax.f32 %v4441, 0.0
    %v4618 = vmax.f32 %v4446, 0.0
    %v4619 = vmax.f32 %v4451, 0.0
    %v4620 = vmax.f32 %v4456, 0.0
    %v4621 = vmax.f32 %v4461, 0.0
    %v4622 = vmax.f32 %v4466, 0.0
    %v4623 = vmax.f32 %v4471, 0.0
    %v4624 = vmax.f32 %v4476, 0.0
    %v4625 = vmax.f32 %v4481, 0.0
    %v4626 = vmax.f32 %v4486, 0.0
    %v4627 = vmax.f32 %v4491, 0.0
    %v4628 = vmax.f32 %v4496, 0.0
    %v4629 = vmax.f32 %v4501, 0.0
    %v4630 = vmax.f32 %v4506, 0.0
    %v4631 = vmax.f32 %v4511, 0.0
    %v4632 = vmax.f32 %v4516, 0.0
    %v4633 = vmax.f32 %v4521, 0.0
    %v4634 = vmax.f32 %v4526, 0.0
    %v4635 = vmax.f32 %v4531, 0.0
    %v4636 = vmax.f32 %v4536, 0.0
    %v4637 = vmax.f32 %v4541, 0.0
    %v4638 = vmax.f32 %v4546, 0.0
    %v4639 = vmax.f32 %v4551, 0.0
    %v4640 = vmax.f32 %v4556, 0.0
    %v4641 = vmax.f32 %v4561, 0.0
    %v4642 = vmax.f32 %v4566, 0.0
    %v4643 = vmax.f32 %v4571, 0.0
    %v4644 = vmax.f32 %v4576, 0.0
    %v4645 = vmax.f32 %v4581, 0.0
    %v4646 = vmax.f32 %v4586, 0.0
    %v4647 = vmax.f32 %v4591, 0.0
    %v4648 = vmax.f32 %v4596, 0.0
    %v4649 = vmax.f32 %v4601, 0.0
    %v4650 = vmax.f32 %v4606, 0.0
    %v4651 = vmax.f32 %v4611, 0.0
    %v4652 = vadd.f32 %v4614, 1e-05
    %v4653 = vadd.f32 %v4615, 1e-05
    %v4654 = vadd.f32 %v4616, 1e-05
    %v4655 = vadd.f32 %v4617, 1e-05
    %v4656 = vadd.f32 %v4618, 1e-05
    %v4657 = vadd.f32 %v4619, 1e-05
    %v4658 = vadd.f32 %v4620, 1e-05
    %v4659 = vadd.f32 %v4621, 1e-05
    %v4660 = vadd.f32 %v4622, 1e-05
    %v4661 = vadd.f32 %v4623, 1e-05
    %v4662 = vadd.f32 %v4624, 1e-05
    %v4663 = vadd.f32 %v4625, 1e-05
    %v4664 = vadd.f32 %v4626, 1e-05
    %v4665 = vadd.f32 %v4627, 1e-05
    %v4666 = vadd.f32 %v4628, 1e-05
    %v4667 = vadd.f32 %v4629, 1e-05
    %v4668 = vadd.f32 %v4630, 1e-05
    %v4669 = vadd.f32 %v4631, 1e-05
    %v4670 = vadd.f32 %v4632, 1e-05
    %v4671 = vadd.f32 %v4633, 1e-05
    %v4672 = vadd.f32 %v4634, 1e-05
    %v4673 = vadd.f32 %v4635, 1e-05
    %v4674 = vadd.f32 %v4636, 1e-05
    %v4675 = vadd.f32 %v4637, 1e-05
    %v4676 = vadd.f32 %v4638, 1e-05
    %v4677 = vadd.f32 %v4639, 1e-05
    %v4678 = vadd.f32 %v4640, 1e-05
    %v4679 = vadd.f32 %v4641, 1e-05
    %v4680 = vadd.f32 %v4642, 1e-05
    %v4681 = vadd.f32 %v4643, 1e-05
    %v4682 = vadd.f32 %v4644, 1e-05
    %v4683 = vadd.f32 %v4645, 1e-05
    %v4684 = vadd.f32 %v4646, 1e-05
    %v4685 = vadd.f32 %v4647, 1e-05
    %v4686 = vadd.f32 %v4648, 1e-05
    %v4687 = vadd.f32 %v4649, 1e-05
    %v4688 = vadd.f32 %v4650, 1e-05
    %v4689 = vadd.f32 %v4651, 1e-05
    %v4690 = vrsqrt.pop %v4652
    %v4691 = vrsqrt.pop %v4653
    %v4692 = vrsqrt.pop %v4654
    %v4693 = vrsqrt.pop %v4655
    %v4694 = vrsqrt.pop %v4656
    %v4695 = vrsqrt.pop %v4657
    %v4696 = vrsqrt.pop %v4658
    %v4697 = vrsqrt.pop %v4659
    %v4698 = vrsqrt.pop %v4660
    %v4699 = vrsqrt.pop %v4661
    %v4700 = vrsqrt.pop %v4662
    %v4701 = vrsqrt.pop %v4663
    %v4702 = vrsqrt.pop %v4664
    %v4703 = vrsqrt.pop %v4665
    %v4704 = vrsqrt.pop %v4666
    %v4705 = vrsqrt.pop %v4667
    %v4706 = vrsqrt.pop %v4668
    %v4707 = vrsqrt.pop %v4669
    %v4708 = vrsqrt.pop %v4670
    %v4709 = vrsqrt.pop %v4671
    %v4710 = vrsqrt.pop %v4672
    %v4711 = vrsqrt.pop %v4673
    %v4712 = vrsqrt.pop %v4674
    %v4713 = vrsqrt.pop %v4675
    %v4714 = vrsqrt.pop %v4676
    %v4715 = vrsqrt.pop %v4677
    %v4716 = vrsqrt.pop %v4678
    %v4717 = vrsqrt.pop %v4679
    %v4718 = vrsqrt.pop %v4680
    %v4719 = vrsqrt.pop %v4681
    %v4720 = vrsqrt.pop %v4682
    %v4721 = vrsqrt.pop %v4683
    %v4722 = vrsqrt.pop %v4684
    %v4723 = vrsqrt.pop %v4685
    %v4724 = vrsqrt.pop %v4686
    %v4725 = vrsqrt.pop %v4687
    %v4726 = vrsqrt.pop %v4688
    %v4727 = vrsqrt.pop %v4689
    %v4728 = vmul.f32 %v4028, %v4690
    %v4729 = vmul.f32 %v4029, %v4691
    %v4730 = vmul.f32 %v4030, %v4692
    %v4731 = vmul.f32 %v4031, %v4693
    %v4732 = vmul.f32 %v4032, %v4694
    %v4733 = vmul.f32 %v4033, %v4695
    %v4734 = vmul.f32 %v4034, %v4696
    %v4735 = vmul.f32 %v4035, %v4697
    %v4736 = vmul.f32 %v4036, %v4698
    %v4737 = vmul.f32 %v4037, %v4699
    %v4738 = vmul.f32 %v4038, %v4700
    %v4739 = vmul.f32 %v4039, %v4701
    %v4740 = vmul.f32 %v4040, %v4702
    %v4741 = vmul.f32 %v4041, %v4703
    %v4742 = vmul.f32 %v4042, %v4704
    %v4743 = vmul.f32 %v4043, %v4705
    %v4744 = vmul.f32 %v4044, %v4706
    %v4745 = vmul.f32 %v4045, %v4707
    %v4746 = vmul.f32 %v4046, %v4708
    %v4747 = vmul.f32 %v4047, %v4709
    %v4748 = vmul.f32 %v4048, %v4710
    %v4749 = vmul.f32 %v4049, %v4711
    %v4750 = vmul.f32 %v4050, %v4712
    %v4751 = vmul.f32 %v4051, %v4713
    %v4752 = vmul.f32 %v4052, %v4714
    %v4753 = vmul.f32 %v4053, %v4715
    %v4754 = vmul.f32 %v4054, %v4716
    %v4755 = vmul.f32 %v4055, %v4717
    %v4756 = vmul.f32 %v4056, %v4718
    %v4757 = vmul.f32 %v4057, %v4719
    %v4758 = vmul.f32 %v4058, %v4720
    %v4759 = vmul.f32 %v4059, %v4721
    %v4760 = vmul.f32 %v4060, %v4722
    %v4761 = vmul.f32 %v4061, %v4723
    %v4762 = vmul.f32 %v4062, %v4724
    %v4763 = vmul.f32 %v4063, %v4725
    %v4764 = vmul.f32 %v4064, %v4726
    %v4765 = vmul.f32 %v4065, %v4727
    %s4766 = scalar_lea.vmem [#allocation11], 128
    %v4767 = vld [vmem:[%s4766] sm:$0xff]
    %v4768 = vld [vmem:[%s4766 + $0x8] sm:$0xff]
    %v4769 = vld [vmem:[%s4766 + $0x10] sm:$0xff]
    %v4770 = vld [vmem:[%s4766 + $0x18] sm:$0xff]
    %v4771 = vld [vmem:[%s4766 + $0x20] sm:$0xff]
    %v4772 = vld [vmem:[%s4766 + $0x28] sm:$0xff]
    %v4773 = vld [vmem:[%s4766 + $0x30] sm:$0xff]
    %v4774 = vld [vmem:[%s4766 + $0x38] sm:$0xff]
    %v4775 = vld [vmem:[%s4766 + $0x40] sm:$0xff]
    %v4776 = vld [vmem:[%s4766 + $0x48] sm:$0xff]
    %v4777 = vld [vmem:[%s4766 + $0x50] sm:$0xff]
    %v4778 = vld [vmem:[%s4766 + $0x58] sm:$0xff]
    %v4779 = vld [vmem:[%s4766 + $0x60] sm:$0xff]
    %v4780 = vld [vmem:[%s4766 + $0x68] sm:$0xff]
    %v4781 = vld [vmem:[%s4766 + $0x70] sm:$0xff]
    %v4782 = vld [vmem:[%s4766 + $0x78] sm:$0xff]
    %s4783 = scalar_lea.vmem %s6, 1
    %v4784 = vld [vmem:[%s4783] sm:$0x1]
    %v4786 = vlaneseq
    %v4787 = vshrl.u32 %v4786, 7
    %v4788 = vsub.s32 0, %v4787
    %v4789 = vrot.slane %v4784, %v4788
    %4791 = vmatprep.subr.mxu0 0.0
    %4792 = vmatpush1.msra.mxu0 %v4767
    %4793 = vmatprep.subr.mxu0 0.0
    %4794 = vmatpush1.msra.mxu0 %v4768
    %4795 = vmatprep.subr.mxu0 0.0
    %4796 = vmatpush1.msra.mxu0 %v4769
    %4797 = vmatprep.subr.mxu0 0.0
    %4798 = vmatpush1.msra.mxu0 %v4770
    %4799 = vmatprep.subr.mxu0 0.0
    %4800 = vmatpush1.msra.mxu0 %v4771
    %4801 = vmatprep.subr.mxu0 0.0
    %4802 = vmatpush1.msra.mxu0 %v4772
    %4803 = vmatprep.subr.mxu0 0.0
    %4804 = vmatpush1.msra.mxu0 %v4773
    %4805 = vmatprep.subr.mxu0 0.0
    %4806 = vmatpush1.msra.mxu0 %v4774
    %4807 = vmatprep.subr.mxu0 0.0
    %4808 = vmatpush1.msra.mxu0 %v4775
    %4809 = vmatprep.subr.mxu0 0.0
    %4810 = vmatpush1.msra.mxu0 %v4776
    %4811 = vmatprep.subr.mxu0 0.0
    %4812 = vmatpush1.msra.mxu0 %v4777
    %4813 = vmatprep.subr.mxu0 0.0
    %4814 = vmatpush1.msra.mxu0 %v4778
    %4815 = vmatprep.subr.mxu0 0.0
    %4816 = vmatpush1.msra.mxu0 %v4779
    %4817 = vmatprep.subr.mxu0 0.0
    %4818 = vmatpush1.msra.mxu0 %v4780
    %4819 = vmatprep.subr.mxu0 0.0
    %4820 = vmatpush1.msra.mxu0 %v4781
    %4821 = vmatprep.subr.mxu0 0.0
    %4822 = vmatpush1.msra.mxu0 %v4782
    %4823 = vmatprep.subr.mxu0 0.0
    %4824 = vmatpush1.msra.mxu0 0.0
    %4825 = vmatprep.subr.mxu0 0.0
    %4826 = vmatpush1.msra.mxu0 0.0
    %4827 = vmatprep.subr.mxu0 0.0
    %4828 = vmatpush1.msra.mxu0 0.0
    %4829 = vmatprep.subr.mxu0 0.0
    %4830 = vmatpush1.msra.mxu0 0.0
    %4831 = vmatprep.subr.mxu0 0.0
    %4832 = vmatpush1.msra.mxu0 0.0
    %4833 = vmatprep.subr.mxu0 0.0
    %4834 = vmatpush1.msra.mxu0 0.0
    %4835 = vmatprep.subr.mxu0 0.0
    %4836 = vmatpush1.msra.mxu0 0.0
    %4837 = vmatprep.subr.mxu0 0.0
    %4838 = vmatpush1.msra.mxu0 0.0
    %4839 = vmatprep.subr.mxu0 0.0
    %4840 = vmatpush1.msra.mxu0 0.0
    %4841 = vmatprep.subr.mxu0 0.0
    %4842 = vmatpush1.msra.mxu0 0.0
    %4843 = vmatprep.subr.mxu0 0.0
    %4844 = vmatpush1.msra.mxu0 0.0
    %4845 = vmatprep.subr.mxu0 0.0
    %4846 = vmatpush1.msra.mxu0 0.0
    %4847 = vmatprep.subr.mxu0 0.0
    %4848 = vmatpush1.msra.mxu0 0.0
    %4849 = vmatprep.subr.mxu0 0.0
    %4850 = vmatpush1.msra.mxu0 0.0
    %4851 = vmatprep.subr.mxu0 0.0
    %4852 = vmatpush1.msra.mxu0 0.0
    %4853 = vmatprep.subr.mxu0 0.0
    %4854 = vmatpush1.msra.mxu0 0.0
    %4855 = vmatprep.mubr.f32.mxu0 0.0
    %4856 = vmatmul.mubr.f32.gmra.mrb[0].mxu0 %v4728
    %v4857 = vpop.f32.mrb[0].mxu0
    %v4858 = vadd.f32 %v4789, %v4857
    %v4859 = vpop.f32.mrb[0].mxu0
    %4860 = vmatprep.mubr.f32.mxu0 0.0
    %4861 = vmatmul.mubr.f32.gmra.mrb[0].mxu0 %v4729
    %v4862 = vpop.f32.mrb[0].mxu0
    %v4863 = vadd.f32 %v4789, %v4862
    %v4864 = vpop.f32.mrb[0].mxu0
    %4865 = vmatprep.mubr.f32.mxu0 0.0
    %4866 = vmatmul.mubr.f32.gmra.mrb[0].mxu0 %v4730
    %v4867 = vpop.f32.mrb[0].mxu0
    %v4868 = vadd.f32 %v4789, %v4867
    %v4869 = vpop.f32.mrb[0].mxu0
    %4870 = vmatprep.mubr.f32.mxu0 0.0
    %4871 = vmatmul.mubr.f32.gmra.mrb[0].mxu0 %v4731
    %v4872 = vpop.f32.mrb[0].mxu0
    %v4873 = vadd.f32 %v4789, %v4872
    %v4874 = vpop.f32.mrb[0].mxu0
    %4875 = vmatprep.mubr.f32.mxu0 0.0
    %4876 = vmatmul.mubr.f32.gmra.mrb[0].mxu0 %v4732
    %v4877 = vpop.f32.mrb[0].mxu0
    %v4878 = vadd.f32 %v4789, %v4877
    %v4879 = vpop.f32.mrb[0].mxu0
    %4880 = vmatprep.mubr.f32.mxu0 0.0
    %4881 = vmatmul.mubr.f32.gmra.mrb[0].mxu0 %v4733
    %v4882 = vpop.f32.mrb[0].mxu0
    %v4883 = vadd.f32 %v4789, %v4882
    %v4884 = vpop.f32.mrb[0].mxu0
    %4885 = vmatprep.mubr.f32.mxu0 0.0
    %4886 = vmatmul.mubr.f32.gmra.mrb[0].mxu0 %v4734
    %v4887 = vpop.f32.mrb[0].mxu0
    %v4888 = vadd.f32 %v4789, %v4887
    %v4889 = vpop.f32.mrb[0].mxu0
    %4890 = vmatprep.mubr.f32.mxu0 0.0
    %4891 = vmatmul.mubr.f32.gmra.mrb[0].mxu0 %v4735
    %v4892 = vpop.f32.mrb[0].mxu0
    %v4893 = vadd.f32 %v4789, %v4892
    %v4894 = vpop.f32.mrb[0].mxu0
    %4895 = vmatprep.mubr.f32.mxu0 0.0
    %4896 = vmatmul.mubr.f32.gmra.mrb[0].mxu0 %v4736
    %v4897 = vpop.f32.mrb[0].mxu0
    %v4898 = vadd.f32 %v4789, %v4897
    %v4899 = vpop.f32.mrb[0].mxu0
    %4900 = vmatprep.mubr.f32.mxu0 0.0
    %4901 = vmatmul.mubr.f32.gmra.mrb[0].mxu0 %v4737
    %v4902 = vpop.f32.mrb[0].mxu0
    %v4903 = vadd.f32 %v4789, %v4902
    %v4904 = vpop.f32.mrb[0].mxu0
    %4905 = vmatprep.mubr.f32.mxu0 0.0
    %4906 = vmatmul.mubr.f32.gmra.mrb[0].mxu0 %v4738
    %v4907 = vpop.f32.mrb[0].mxu0
    %v4908 = vadd.f32 %v4789, %v4907
    %v4909 = vpop.f32.mrb[0].mxu0
    %4910 = vmatprep.mubr.f32.mxu0 0.0
    %4911 = vmatmul.mubr.f32.gmra.mrb[0].mxu0 %v4739
    %v4912 = vpop.f32.mrb[0].mxu0
    %v4913 = vadd.f32 %v4789, %v4912
    %v4914 = vpop.f32.mrb[0].mxu0
    %4915 = vmatprep.mubr.f32.mxu0 0.0
    %4916 = vmatmul.mubr.f32.gmra.mrb[0].mxu0 %v4740
    %v4917 = vpop.f32.mrb[0].mxu0
    %v4918 = vadd.f32 %v4789, %v4917
    %v4919 = vpop.f32.mrb[0].mxu0
    %4920 = vmatprep.mubr.f32.mxu0 0.0
    %4921 = vmatmul.mubr.f32.gmra.mrb[0].mxu0 %v4741
    %v4922 = vpop.f32.mrb[0].mxu0
    %v4923 = vadd.f32 %v4789, %v4922
    %v4924 = vpop.f32.mrb[0].mxu0
    %4925 = vmatprep.mubr.f32.mxu0 0.0
    %4926 = vmatmul.mubr.f32.gmra.mrb[0].mxu0 %v4742
    %v4927 = vpop.f32.mrb[0].mxu0
    %v4928 = vadd.f32 %v4789, %v4927
    %v4929 = vpop.f32.mrb[0].mxu0
    %4930 = vmatprep.mubr.f32.mxu0 0.0
    %4931 = vmatmul.mubr.f32.gmra.mrb[0].mxu0 %v4743
    %v4932 = vpop.f32.mrb[0].mxu0
    %v4933 = vadd.f32 %v4789, %v4932
    %v4934 = vpop.f32.mrb[0].mxu0
    %4935 = vmatprep.mubr.f32.mxu0 0.0
    %4936 = vmatmul.mubr.f32.gmra.mrb[0].mxu0 %v4744
    %v4937 = vpop.f32.mrb[0].mxu0
    %v4938 = vadd.f32 %v4789, %v4937
    %v4939 = vpop.f32.mrb[0].mxu0
    %4940 = vmatprep.mubr.f32.mxu0 0.0
    %4941 = vmatmul.mubr.f32.gmra.mrb[0].mxu0 %v4745
    %v4942 = vpop.f32.mrb[0].mxu0
    %v4943 = vadd.f32 %v4789, %v4942
    %v4944 = vpop.f32.mrb[0].mxu0
    %4945 = vmatprep.mubr.f32.mxu0 0.0
    %4946 = vmatmul.mubr.f32.gmra.mrb[0].mxu0 %v4746
    %v4947 = vpop.f32.mrb[0].mxu0
    %v4948 = vadd.f32 %v4789, %v4947
    %v4949 = vpop.f32.mrb[0].mxu0
    %4950 = vmatprep.mubr.f32.mxu0 0.0
    %4951 = vmatmul.mubr.f32.gmra.mrb[0].mxu0 %v4747
    %v4952 = vpop.f32.mrb[0].mxu0
    %v4953 = vadd.f32 %v4789, %v4952
    %v4954 = vpop.f32.mrb[0].mxu0
    %4955 = vmatprep.mubr.f32.mxu0 0.0
    %4956 = vmatmul.mubr.f32.gmra.mrb[0].mxu0 %v4748
    %v4957 = vpop.f32.mrb[0].mxu0
    %v4958 = vadd.f32 %v4789, %v4957
    %v4959 = vpop.f32.mrb[0].mxu0
    %4960 = vmatprep.mubr.f32.mxu0 0.0
    %4961 = vmatmul.mubr.f32.gmra.mrb[0].mxu0 %v4749
    %v4962 = vpop.f32.mrb[0].mxu0
    %v4963 = vadd.f32 %v4789, %v4962
    %v4964 = vpop.f32.mrb[0].mxu0
    %4965 = vmatprep.mubr.f32.mxu0 0.0
    %4966 = vmatmul.mubr.f32.gmra.mrb[0].mxu0 %v4750
    %v4967 = vpop.f32.mrb[0].mxu0
    %v4968 = vadd.f32 %v4789, %v4967
    %v4969 = vpop.f32.mrb[0].mxu0
    %4970 = vmatprep.mubr.f32.mxu0 0.0
    %4971 = vmatmul.mubr.f32.gmra.mrb[0].mxu0 %v4751
    %v4972 = vpop.f32.mrb[0].mxu0
    %v4973 = vadd.f32 %v4789, %v4972
    %v4974 = vpop.f32.mrb[0].mxu0
    %4975 = vmatprep.mubr.f32.mxu0 0.0
    %4976 = vmatmul.mubr.f32.gmra.mrb[0].mxu0 %v4752
    %v4977 = vpop.f32.mrb[0].mxu0
    %v4978 = vadd.f32 %v4789, %v4977
    %v4979 = vpop.f32.mrb[0].mxu0
    %4980 = vmatprep.mubr.f32.mxu0 0.0
    %4981 = vmatmul.mubr.f32.gmra.mrb[0].mxu0 %v4753
    %v4982 = vpop.f32.mrb[0].mxu0
    %v4983 = vadd.f32 %v4789, %v4982
    %v4984 = vpop.f32.mrb[0].mxu0
    %4985 = vmatprep.mubr.f32.mxu0 0.0
    %4986 = vmatmul.mubr.f32.gmra.mrb[0].mxu0 %v4754
    %v4987 = vpop.f32.mrb[0].mxu0
    %v4988 = vadd.f32 %v4789, %v4987
    %v4989 = vpop.f32.mrb[0].mxu0
    %4990 = vmatprep.mubr.f32.mxu0 0.0
    %4991 = vmatmul.mubr.f32.gmra.mrb[0].mxu0 %v4755
    %v4992 = vpop.f32.mrb[0].mxu0
    %v4993 = vadd.f32 %v4789, %v4992
    %v4994 = vpop.f32.mrb[0].mxu0
    %4995 = vmatprep.mubr.f32.mxu0 0.0
    %4996 = vmatmul.mubr.f32.gmra.mrb[0].mxu0 %v4756
    %v4997 = vpop.f32.mrb[0].mxu0
    %v4998 = vadd.f32 %v4789, %v4997
    %v4999 = vpop.f32.mrb[0].mxu0
    %5000 = vmatprep.mubr.f32.mxu0 0.0
    %5001 = vmatmul.mubr.f32.gmra.mrb[0].mxu0 %v4757
    %v5002 = vpop.f32.mrb[0].mxu0
    %v5003 = vadd.f32 %v4789, %v5002
    %v5004 = vpop.f32.mrb[0].mxu0
    %5005 = vmatprep.mubr.f32.mxu0 0.0
    %5006 = vmatmul.mubr.f32.gmra.mrb[0].mxu0 %v4758
    %v5007 = vpop.f32.mrb[0].mxu0
    %v5008 = vadd.f32 %v4789, %v5007
    %v5009 = vpop.f32.mrb[0].mxu0
    %5010 = vmatprep.mubr.f32.mxu0 0.0
    %5011 = vmatmul.mubr.f32.gmra.mrb[0].mxu0 %v4759
    %v5012 = vpop.f32.mrb[0].mxu0
    %v5013 = vadd.f32 %v4789, %v5012
    %v5014 = vpop.f32.mrb[0].mxu0
    %5015 = vmatprep.mubr.f32.mxu0 0.0
    %5016 = vmatmul.mubr.f32.gmra.mrb[0].mxu0 %v4760
    %v5017 = vpop.f32.mrb[0].mxu0
    %v5018 = vadd.f32 %v4789, %v5017
    %v5019 = vpop.f32.mrb[0].mxu0
    %5020 = vmatprep.mubr.f32.mxu0 0.0
    %5021 = vmatmul.mubr.f32.gmra.mrb[0].mxu0 %v4761
    %v5022 = vpop.f32.mrb[0].mxu0
    %v5023 = vadd.f32 %v4789, %v5022
    %v5024 = vpop.f32.mrb[0].mxu0
    %5025 = vmatprep.mubr.f32.mxu0 0.0
    %5026 = vmatmul.mubr.f32.gmra.mrb[0].mxu0 %v4762
    %v5027 = vpop.f32.mrb[0].mxu0
    %v5028 = vadd.f32 %v4789, %v5027
    %v5029 = vpop.f32.mrb[0].mxu0
    %5030 = vmatprep.mubr.f32.mxu0 0.0
    %5031 = vmatmul.mubr.f32.gmra.mrb[0].mxu0 %v4763
    %v5032 = vpop.f32.mrb[0].mxu0
    %v5033 = vadd.f32 %v4789, %v5032
    %v5034 = vpop.f32.mrb[0].mxu0
    %5035 = vmatprep.mubr.f32.mxu0 0.0
    %5036 = vmatmul.mubr.f32.gmra.mrb[0].mxu0 %v4764
    %v5037 = vpop.f32.mrb[0].mxu0
    %v5038 = vadd.f32 %v4789, %v5037
    %v5039 = vpop.f32.mrb[0].mxu0
    %5040 = vmatprep.mubr.f32.mxu0 0.0
    %5041 = vmatmul.mubr.f32.gmra.mrb[0].mxu0 %v4765
    %v5042 = vpop.f32.mrb[0].mxu0
    %v5043 = vadd.f32 %v4789, %v5042
    %v5044 = vpop.f32.mrb[0].mxu0
    %5045 = vdwg.mxu0
    %v5046 = vxor.u32 %v4858, 2147483648
    %v5047 = vxor.u32 %v4863, 2147483648
    %v5048 = vxor.u32 %v4868, 2147483648
    %v5049 = vxor.u32 %v4873, 2147483648
    %v5050 = vxor.u32 %v4878, 2147483648
    %v5051 = vxor.u32 %v4883, 2147483648
    %v5052 = vxor.u32 %v4888, 2147483648
    %v5053 = vxor.u32 %v4893, 2147483648
    %v5054 = vxor.u32 %v4898, 2147483648
    %v5055 = vxor.u32 %v4903, 2147483648
    %v5056 = vxor.u32 %v4908, 2147483648
    %v5057 = vxor.u32 %v4913, 2147483648
    %v5058 = vxor.u32 %v4918, 2147483648
    %v5059 = vxor.u32 %v4923, 2147483648
    %v5060 = vxor.u32 %v4928, 2147483648
    %v5061 = vxor.u32 %v4933, 2147483648
    %v5062 = vxor.u32 %v4938, 2147483648
    %v5063 = vxor.u32 %v4943, 2147483648
    %v5064 = vxor.u32 %v4948, 2147483648
    %v5065 = vxor.u32 %v4953, 2147483648
    %v5066 = vxor.u32 %v4958, 2147483648
    %v5067 = vxor.u32 %v4963, 2147483648
    %v5068 = vxor.u32 %v4968, 2147483648
    %v5069 = vxor.u32 %v4973, 2147483648
    %v5070 = vxor.u32 %v4978, 2147483648
    %v5071 = vxor.u32 %v4983, 2147483648
    %v5072 = vxor.u32 %v4988, 2147483648
    %v5073 = vxor.u32 %v4993, 2147483648
    %v5074 = vxor.u32 %v4998, 2147483648
    %v5075 = vxor.u32 %v5003, 2147483648
    %v5076 = vxor.u32 %v5008, 2147483648
    %v5077 = vxor.u32 %v5013, 2147483648
    %v5078 = vxor.u32 %v5018, 2147483648
    %v5079 = vxor.u32 %v5023, 2147483648
    %v5080 = vxor.u32 %v5028, 2147483648
    %v5081 = vxor.u32 %v5033, 2147483648
    %v5082 = vxor.u32 %v5038, 2147483648
    %v5083 = vxor.u32 %v5043, 2147483648
    %v5084 = vmul.f32 %v5046, 1.442695
    %v5085 = vpow.pop %v5084
    %v5086 = vmul.f32 %v5047, 1.442695
    %v5087 = vpow.pop %v5086
    %v5088 = vmul.f32 %v5048, 1.442695
    %v5089 = vpow.pop %v5088
    %v5090 = vmul.f32 %v5049, 1.442695
    %v5091 = vpow.pop %v5090
    %v5092 = vmul.f32 %v5050, 1.442695
    %v5093 = vpow.pop %v5092
    %v5094 = vmul.f32 %v5051, 1.442695
    %v5095 = vpow.pop %v5094
    %v5096 = vmul.f32 %v5052, 1.442695
    %v5097 = vpow.pop %v5096
    %v5098 = vmul.f32 %v5053, 1.442695
    %v5099 = vpow.pop %v5098
    %v5100 = vmul.f32 %v5054, 1.442695
    %v5101 = vpow.pop %v5100
    %v5102 = vmul.f32 %v5055, 1.442695
    %v5103 = vpow.pop %v5102
    %v5104 = vmul.f32 %v5056, 1.442695
    %v5105 = vpow.pop %v5104
    %v5106 = vmul.f32 %v5057, 1.442695
    %v5107 = vpow.pop %v5106
    %v5108 = vmul.f32 %v5058, 1.442695
    %v5109 = vpow.pop %v5108
    %v5110 = vmul.f32 %v5059, 1.442695
    %v5111 = vpow.pop %v5110
    %v5112 = vmul.f32 %v5060, 1.442695
    %v5113 = vpow.pop %v5112
    %v5114 = vmul.f32 %v5061, 1.442695
    %v5115 = vpow.pop %v5114
    %v5116 = vmul.f32 %v5062, 1.442695
    %v5117 = vpow.pop %v5116
    %v5118 = vmul.f32 %v5063, 1.442695
    %v5119 = vpow.pop %v5118
    %v5120 = vmul.f32 %v5064, 1.442695
    %v5121 = vpow.pop %v5120
    %v5122 = vmul.f32 %v5065, 1.442695
    %v5123 = vpow.pop %v5122
    %v5124 = vmul.f32 %v5066, 1.442695
    %v5125 = vpow.pop %v5124
    %v5126 = vmul.f32 %v5067, 1.442695
    %v5127 = vpow.pop %v5126
    %v5128 = vmul.f32 %v5068, 1.442695
    %v5129 = vpow.pop %v5128
    %v5130 = vmul.f32 %v5069, 1.442695
    %v5131 = vpow.pop %v5130
    %v5132 = vmul.f32 %v5070, 1.442695
    %v5133 = vpow.pop %v5132
    %v5134 = vmul.f32 %v5071, 1.442695
    %v5135 = vpow.pop %v5134
    %v5136 = vmul.f32 %v5072, 1.442695
    %v5137 = vpow.pop %v5136
    %v5138 = vmul.f32 %v5073, 1.442695
    %v5139 = vpow.pop %v5138
    %v5140 = vmul.f32 %v5074, 1.442695
    %v5141 = vpow.pop %v5140
    %v5142 = vmul.f32 %v5075, 1.442695
    %v5143 = vpow.pop %v5142
    %v5144 = vmul.f32 %v5076, 1.442695
    %v5145 = vpow.pop %v5144
    %v5146 = vmul.f32 %v5077, 1.442695
    %v5147 = vpow.pop %v5146
    %v5148 = vmul.f32 %v5078, 1.442695
    %v5149 = vpow.pop %v5148
    %v5150 = vmul.f32 %v5079, 1.442695
    %v5151 = vpow.pop %v5150
    %v5152 = vmul.f32 %v5080, 1.442695
    %v5153 = vpow.pop %v5152
    %v5154 = vmul.f32 %v5081, 1.442695
    %v5155 = vpow.pop %v5154
    %v5156 = vmul.f32 %v5082, 1.442695
    %v5157 = vpow.pop %v5156
    %v5158 = vmul.f32 %v5083, 1.442695
    %v5159 = vpow.pop %v5158
    %v5160 = vadd.f32 %v5085, 1.0
    %v5161 = vadd.f32 %v5087, 1.0
    %v5162 = vadd.f32 %v5089, 1.0
    %v5163 = vadd.f32 %v5091, 1.0
    %v5164 = vadd.f32 %v5093, 1.0
    %v5165 = vadd.f32 %v5095, 1.0
    %v5166 = vadd.f32 %v5097, 1.0
    %v5167 = vadd.f32 %v5099, 1.0
    %v5168 = vadd.f32 %v5101, 1.0
    %v5169 = vadd.f32 %v5103, 1.0
    %v5170 = vadd.f32 %v5105, 1.0
    %v5171 = vadd.f32 %v5107, 1.0
    %v5172 = vadd.f32 %v5109, 1.0
    %v5173 = vadd.f32 %v5111, 1.0
    %v5174 = vadd.f32 %v5113, 1.0
    %v5175 = vadd.f32 %v5115, 1.0
    %v5176 = vadd.f32 %v5117, 1.0
    %v5177 = vadd.f32 %v5119, 1.0
    %v5178 = vadd.f32 %v5121, 1.0
    %v5179 = vadd.f32 %v5123, 1.0
    %v5180 = vadd.f32 %v5125, 1.0
    %v5181 = vadd.f32 %v5127, 1.0
    %v5182 = vadd.f32 %v5129, 1.0
    %v5183 = vadd.f32 %v5131, 1.0
    %v5184 = vadd.f32 %v5133, 1.0
    %v5185 = vadd.f32 %v5135, 1.0
    %v5186 = vadd.f32 %v5137, 1.0
    %v5187 = vadd.f32 %v5139, 1.0
    %v5188 = vadd.f32 %v5141, 1.0
    %v5189 = vadd.f32 %v5143, 1.0
    %v5190 = vadd.f32 %v5145, 1.0
    %v5191 = vadd.f32 %v5147, 1.0
    %v5192 = vadd.f32 %v5149, 1.0
    %v5193 = vadd.f32 %v5151, 1.0
    %v5194 = vadd.f32 %v5153, 1.0
    %v5195 = vadd.f32 %v5155, 1.0
    %v5196 = vadd.f32 %v5157, 1.0
    %v5197 = vadd.f32 %v5159, 1.0
    %v5198 = vrcp.pop %v5160
    %v5199 = vmul.f32 1.0, %v5198
    %v5200 = vrcp.pop %v5161
    %v5201 = vmul.f32 1.0, %v5200
    %v5202 = vrcp.pop %v5162
    %v5203 = vmul.f32 1.0, %v5202
    %v5204 = vrcp.pop %v5163
    %v5205 = vmul.f32 1.0, %v5204
    %v5206 = vrcp.pop %v5164
    %v5207 = vmul.f32 1.0, %v5206
    %v5208 = vrcp.pop %v5165
    %v5209 = vmul.f32 1.0, %v5208
    %v5210 = vrcp.pop %v5166
    %v5211 = vmul.f32 1.0, %v5210
    %v5212 = vrcp.pop %v5167
    %v5213 = vmul.f32 1.0, %v5212
    %v5214 = vrcp.pop %v5168
    %v5215 = vmul.f32 1.0, %v5214
    %v5216 = vrcp.pop %v5169
    %v5217 = vmul.f32 1.0, %v5216
    %v5218 = vrcp.pop %v5170
    %v5219 = vmul.f32 1.0, %v5218
    %v5220 = vrcp.pop %v5171
    %v5221 = vmul.f32 1.0, %v5220
    %v5222 = vrcp.pop %v5172
    %v5223 = vmul.f32 1.0, %v5222
    %v5224 = vrcp.pop %v5173
    %v5225 = vmul.f32 1.0, %v5224
    %v5226 = vrcp.pop %v5174
    %v5227 = vmul.f32 1.0, %v5226
    %v5228 = vrcp.pop %v5175
    %v5229 = vmul.f32 1.0, %v5228
    %v5230 = vrcp.pop %v5176
    %v5231 = vmul.f32 1.0, %v5230
    %v5232 = vrcp.pop %v5177
    %v5233 = vmul.f32 1.0, %v5232
    %v5234 = vrcp.pop %v5178
    %v5235 = vmul.f32 1.0, %v5234
    %v5236 = vrcp.pop %v5179
    %v5237 = vmul.f32 1.0, %v5236
    %v5238 = vrcp.pop %v5180
    %v5239 = vmul.f32 1.0, %v5238
    %v5240 = vrcp.pop %v5181
    %v5241 = vmul.f32 1.0, %v5240
    %v5242 = vrcp.pop %v5182
    %v5243 = vmul.f32 1.0, %v5242
    %v5244 = vrcp.pop %v5183
    %v5245 = vmul.f32 1.0, %v5244
    %v5246 = vrcp.pop %v5184
    %v5247 = vmul.f32 1.0, %v5246
    %v5248 = vrcp.pop %v5185
    %v5249 = vmul.f32 1.0, %v5248
    %v5250 = vrcp.pop %v5186
    %v5251 = vmul.f32 1.0, %v5250
    %v5252 = vrcp.pop %v5187
    %v5253 = vmul.f32 1.0, %v5252
    %v5254 = vrcp.pop %v5188
    %v5255 = vmul.f32 1.0, %v5254
    %v5256 = vrcp.pop %v5189
    %v5257 = vmul.f32 1.0, %v5256
    %v5258 = vrcp.pop %v5190
    %v5259 = vmul.f32 1.0, %v5258
    %v5260 = vrcp.pop %v5191
    %v5261 = vmul.f32 1.0, %v5260
    %v5262 = vrcp.pop %v5192
    %v5263 = vmul.f32 1.0, %v5262
    %v5264 = vrcp.pop %v5193
    %v5265 = vmul.f32 1.0, %v5264
    %v5266 = vrcp.pop %v5194
    %v5267 = vmul.f32 1.0, %v5266
    %v5268 = vrcp.pop %v5195
    %v5269 = vmul.f32 1.0, %v5268
    %v5270 = vrcp.pop %v5196
    %v5271 = vmul.f32 1.0, %v5270
    %v5272 = vrcp.pop %v5197
    %v5273 = vmul.f32 1.0, %v5272
    %v5274 = vmul.f32 %v4858, %v5199
    %v5275 = vmul.f32 %v4863, %v5201
    %v5276 = vmul.f32 %v4868, %v5203
    %v5277 = vmul.f32 %v4873, %v5205
    %v5278 = vmul.f32 %v4878, %v5207
    %v5279 = vmul.f32 %v4883, %v5209
    %v5280 = vmul.f32 %v4888, %v5211
    %v5281 = vmul.f32 %v4893, %v5213
    %v5282 = vmul.f32 %v4898, %v5215
    %v5283 = vmul.f32 %v4903, %v5217
    %v5284 = vmul.f32 %v4908, %v5219
    %v5285 = vmul.f32 %v4913, %v5221
    %v5286 = vmul.f32 %v4918, %v5223
    %v5287 = vmul.f32 %v4923, %v5225
    %v5288 = vmul.f32 %v4928, %v5227
    %v5289 = vmul.f32 %v4933, %v5229
    %v5290 = vmul.f32 %v4938, %v5231
    %v5291 = vmul.f32 %v4943, %v5233
    %v5292 = vmul.f32 %v4948, %v5235
    %v5293 = vmul.f32 %v4953, %v5237
    %v5294 = vmul.f32 %v4958, %v5239
    %v5295 = vmul.f32 %v4963, %v5241
    %v5296 = vmul.f32 %v4968, %v5243
    %v5297 = vmul.f32 %v4973, %v5245
    %v5298 = vmul.f32 %v4978, %v5247
    %v5299 = vmul.f32 %v4983, %v5249
    %v5300 = vmul.f32 %v4988, %v5251
    %v5301 = vmul.f32 %v4993, %v5253
    %v5302 = vmul.f32 %v4998, %v5255
    %v5303 = vmul.f32 %v5003, %v5257
    %v5304 = vmul.f32 %v5008, %v5259
    %v5305 = vmul.f32 %v5013, %v5261
    %v5306 = vmul.f32 %v5018, %v5263
    %v5307 = vmul.f32 %v5023, %v5265
    %v5308 = vmul.f32 %v5028, %v5267
    %v5309 = vmul.f32 %v5033, %v5269
    %v5310 = vmul.f32 %v5038, %v5271
    %v5311 = vmul.f32 %v5043, %v5273
    %s5312 = scalar_lea.vmem [#allocation12], 128
    %v5313 = vld [vmem:[%s5312] sm:$0xff]
    %v5314 = vld [vmem:[%s5312 + $0x8] sm:$0xff]
    %v5315 = vld [vmem:[%s5312 + $0x10] sm:$0xff]
    %v5316 = vld [vmem:[%s5312 + $0x18] sm:$0xff]
    %v5317 = vld [vmem:[%s5312 + $0x20] sm:$0xff]
    %v5318 = vld [vmem:[%s5312 + $0x28] sm:$0xff]
    %v5319 = vld [vmem:[%s5312 + $0x30] sm:$0xff]
    %v5320 = vld [vmem:[%s5312 + $0x38] sm:$0xff]
    %v5321 = vld [vmem:[%s5312 + $0x40] sm:$0xff]
    %v5322 = vld [vmem:[%s5312 + $0x48] sm:$0xff]
    %v5323 = vld [vmem:[%s5312 + $0x50] sm:$0xff]
    %v5324 = vld [vmem:[%s5312 + $0x58] sm:$0xff]
    %v5325 = vld [vmem:[%s5312 + $0x60] sm:$0xff]
    %v5326 = vld [vmem:[%s5312 + $0x68] sm:$0xff]
    %v5327 = vld [vmem:[%s5312 + $0x70] sm:$0xff]
    %v5328 = vld [vmem:[%s5312 + $0x78] sm:$0xff]
    %s5329 = scalar_lea.vmem %s8, 1
    %v5330 = vld [vmem:[%s5329] sm:$0x1]
    %v5332 = vlaneseq
    %v5333 = vshrl.u32 %v5332, 7
    %v5334 = vsub.s32 0, %v5333
    %v5335 = vrot.slane %v5330, %v5334
    %5337 = vmatprep.subr.mxu0 0.0
    %5338 = vmatpush1.msra.mxu0 %v5313
    %5339 = vmatprep.subr.mxu0 0.0
    %5340 = vmatpush1.msra.mxu0 %v5314
    %5341 = vmatprep.subr.mxu0 0.0
    %5342 = vmatpush1.msra.mxu0 %v5315
    %5343 = vmatprep.subr.mxu0 0.0
    %5344 = vmatpush1.msra.mxu0 %v5316
    %5345 = vmatprep.subr.mxu0 0.0
    %5346 = vmatpush1.msra.mxu0 %v5317
    %5347 = vmatprep.subr.mxu0 0.0
    %5348 = vmatpush1.msra.mxu0 %v5318
    %5349 = vmatprep.subr.mxu0 0.0
    %5350 = vmatpush1.msra.mxu0 %v5319
    %5351 = vmatprep.subr.mxu0 0.0
    %5352 = vmatpush1.msra.mxu0 %v5320
    %5353 = vmatprep.subr.mxu0 0.0
    %5354 = vmatpush1.msra.mxu0 %v5321
    %5355 = vmatprep.subr.mxu0 0.0
    %5356 = vmatpush1.msra.mxu0 %v5322
    %5357 = vmatprep.subr.mxu0 0.0
    %5358 = vmatpush1.msra.mxu0 %v5323
    %5359 = vmatprep.subr.mxu0 0.0
    %5360 = vmatpush1.msra.mxu0 %v5324
    %5361 = vmatprep.subr.mxu0 0.0
    %5362 = vmatpush1.msra.mxu0 %v5325
    %5363 = vmatprep.subr.mxu0 0.0
    %5364 = vmatpush1.msra.mxu0 %v5326
    %5365 = vmatprep.subr.mxu0 0.0
    %5366 = vmatpush1.msra.mxu0 %v5327
    %5367 = vmatprep.subr.mxu0 0.0
    %5368 = vmatpush1.msra.mxu0 %v5328
    %5369 = vmatprep.subr.mxu0 0.0
    %5370 = vmatpush1.msra.mxu0 0.0
    %5371 = vmatprep.subr.mxu0 0.0
    %5372 = vmatpush1.msra.mxu0 0.0
    %5373 = vmatprep.subr.mxu0 0.0
    %5374 = vmatpush1.msra.mxu0 0.0
    %5375 = vmatprep.subr.mxu0 0.0
    %5376 = vmatpush1.msra.mxu0 0.0
    %5377 = vmatprep.subr.mxu0 0.0
    %5378 = vmatpush1.msra.mxu0 0.0
    %5379 = vmatprep.subr.mxu0 0.0
    %5380 = vmatpush1.msra.mxu0 0.0
    %5381 = vmatprep.subr.mxu0 0.0
    %5382 = vmatpush1.msra.mxu0 0.0
    %5383 = vmatprep.subr.mxu0 0.0
    %5384 = vmatpush1.msra.mxu0 0.0
    %5385 = vmatprep.subr.mxu0 0.0
    %5386 = vmatpush1.msra.mxu0 0.0
    %5387 = vmatprep.subr.mxu0 0.0
    %5388 = vmatpush1.msra.mxu0 0.0
    %5389 = vmatprep.subr.mxu0 0.0
    %5390 = vmatpush1.msra.mxu0 0.0
    %5391 = vmatprep.subr.mxu0 0.0
    %5392 = vmatpush1.msra.mxu0 0.0
    %5393 = vmatprep.subr.mxu0 0.0
    %5394 = vmatpush1.msra.mxu0 0.0
    %5395 = vmatprep.subr.mxu0 0.0
    %5396 = vmatpush1.msra.mxu0 0.0
    %5397 = vmatprep.subr.mxu0 0.0
    %5398 = vmatpush1.msra.mxu0 0.0
    %5399 = vmatprep.subr.mxu0 0.0
    %5400 = vmatpush1.msra.mxu0 0.0
    %5401 = vmatprep.mubr.f32.mxu0 0.0
    %5402 = vmatmul.mubr.f32.gmra.mrb[0].mxu0 %v5274
    %v5403 = vpop.f32.mrb[0].mxu0
    %v5404 = vadd.f32 %v5335, %v5403
    %v5405 = vpop.f32.mrb[0].mxu0
    %5406 = vmatprep.mubr.f32.mxu0 0.0
    %5407 = vmatmul.mubr.f32.gmra.mrb[0].mxu0 %v5275
    %v5408 = vpop.f32.mrb[0].mxu0
    %v5409 = vadd.f32 %v5335, %v5408
    %v5410 = vpop.f32.mrb[0].mxu0
    %5411 = vmatprep.mubr.f32.mxu0 0.0
    %5412 = vmatmul.mubr.f32.gmra.mrb[0].mxu0 %v5276
    %v5413 = vpop.f32.mrb[0].mxu0
    %v5414 = vadd.f32 %v5335, %v5413
    %v5415 = vpop.f32.mrb[0].mxu0
    %5416 = vmatprep.mubr.f32.mxu0 0.0
    %5417 = vmatmul.mubr.f32.gmra.mrb[0].mxu0 %v5277
    %v5418 = vpop.f32.mrb[0].mxu0
    %v5419 = vadd.f32 %v5335, %v5418
    %v5420 = vpop.f32.mrb[0].mxu0
    %5421 = vmatprep.mubr.f32.mxu0 0.0
    %5422 = vmatmul.mubr.f32.gmra.mrb[0].mxu0 %v5278
    %v5423 = vpop.f32.mrb[0].mxu0
    %v5424 = vadd.f32 %v5335, %v5423
    %v5425 = vpop.f32.mrb[0].mxu0
    %5426 = vmatprep.mubr.f32.mxu0 0.0
    %5427 = vmatmul.mubr.f32.gmra.mrb[0].mxu0 %v5279
    %v5428 = vpop.f32.mrb[0].mxu0
    %v5429 = vadd.f32 %v5335, %v5428
    %v5430 = vpop.f32.mrb[0].mxu0
    %5431 = vmatprep.mubr.f32.mxu0 0.0
    %5432 = vmatmul.mubr.f32.gmra.mrb[0].mxu0 %v5280
    %v5433 = vpop.f32.mrb[0].mxu0
    %v5434 = vadd.f32 %v5335, %v5433
    %v5435 = vpop.f32.mrb[0].mxu0
    %5436 = vmatprep.mubr.f32.mxu0 0.0
    %5437 = vmatmul.mubr.f32.gmra.mrb[0].mxu0 %v5281
    %v5438 = vpop.f32.mrb[0].mxu0
    %v5439 = vadd.f32 %v5335, %v5438
    %v5440 = vpop.f32.mrb[0].mxu0
    %5441 = vmatprep.mubr.f32.mxu0 0.0
    %5442 = vmatmul.mubr.f32.gmra.mrb[0].mxu0 %v5282
    %v5443 = vpop.f32.mrb[0].mxu0
    %v5444 = vadd.f32 %v5335, %v5443
    %v5445 = vpop.f32.mrb[0].mxu0
    %5446 = vmatprep.mubr.f32.mxu0 0.0
    %5447 = vmatmul.mubr.f32.gmra.mrb[0].mxu0 %v5283
    %v5448 = vpop.f32.mrb[0].mxu0
    %v5449 = vadd.f32 %v5335, %v5448
    %v5450 = vpop.f32.mrb[0].mxu0
    %5451 = vmatprep.mubr.f32.mxu0 0.0
    %5452 = vmatmul.mubr.f32.gmra.mrb[0].mxu0 %v5284
    %v5453 = vpop.f32.mrb[0].mxu0
    %v5454 = vadd.f32 %v5335, %v5453
    %v5455 = vpop.f32.mrb[0].mxu0
    %5456 = vmatprep.mubr.f32.mxu0 0.0
    %5457 = vmatmul.mubr.f32.gmra.mrb[0].mxu0 %v5285
    %v5458 = vpop.f32.mrb[0].mxu0
    %v5459 = vadd.f32 %v5335, %v5458
    %v5460 = vpop.f32.mrb[0].mxu0
    %5461 = vmatprep.mubr.f32.mxu0 0.0
    %5462 = vmatmul.mubr.f32.gmra.mrb[0].mxu0 %v5286
    %v5463 = vpop.f32.mrb[0].mxu0
    %v5464 = vadd.f32 %v5335, %v5463
    %v5465 = vpop.f32.mrb[0].mxu0
    %5466 = vmatprep.mubr.f32.mxu0 0.0
    %5467 = vmatmul.mubr.f32.gmra.mrb[0].mxu0 %v5287
    %v5468 = vpop.f32.mrb[0].mxu0
    %v5469 = vadd.f32 %v5335, %v5468
    %v5470 = vpop.f32.mrb[0].mxu0
    %5471 = vmatprep.mubr.f32.mxu0 0.0
    %5472 = vmatmul.mubr.f32.gmra.mrb[0].mxu0 %v5288
    %v5473 = vpop.f32.mrb[0].mxu0
    %v5474 = vadd.f32 %v5335, %v5473
    %v5475 = vpop.f32.mrb[0].mxu0
    %5476 = vmatprep.mubr.f32.mxu0 0.0
    %5477 = vmatmul.mubr.f32.gmra.mrb[0].mxu0 %v5289
    %v5478 = vpop.f32.mrb[0].mxu0
    %v5479 = vadd.f32 %v5335, %v5478
    %v5480 = vpop.f32.mrb[0].mxu0
    %5481 = vmatprep.mubr.f32.mxu0 0.0
    %5482 = vmatmul.mubr.f32.gmra.mrb[0].mxu0 %v5290
    %v5483 = vpop.f32.mrb[0].mxu0
    %v5484 = vadd.f32 %v5335, %v5483
    %v5485 = vpop.f32.mrb[0].mxu0
    %5486 = vmatprep.mubr.f32.mxu0 0.0
    %5487 = vmatmul.mubr.f32.gmra.mrb[0].mxu0 %v5291
    %v5488 = vpop.f32.mrb[0].mxu0
    %v5489 = vadd.f32 %v5335, %v5488
    %v5490 = vpop.f32.mrb[0].mxu0
    %5491 = vmatprep.mubr.f32.mxu0 0.0
    %5492 = vmatmul.mubr.f32.gmra.mrb[0].mxu0 %v5292
    %v5493 = vpop.f32.mrb[0].mxu0
    %v5494 = vadd.f32 %v5335, %v5493
    %v5495 = vpop.f32.mrb[0].mxu0
    %5496 = vmatprep.mubr.f32.mxu0 0.0
    %5497 = vmatmul.mubr.f32.gmra.mrb[0].mxu0 %v5293
    %v5498 = vpop.f32.mrb[0].mxu0
    %v5499 = vadd.f32 %v5335, %v5498
    %v5500 = vpop.f32.mrb[0].mxu0
    %5501 = vmatprep.mubr.f32.mxu0 0.0
    %5502 = vmatmul.mubr.f32.gmra.mrb[0].mxu0 %v5294
    %v5503 = vpop.f32.mrb[0].mxu0
    %v5504 = vadd.f32 %v5335, %v5503
    %v5505 = vpop.f32.mrb[0].mxu0
    %5506 = vmatprep.mubr.f32.mxu0 0.0
    %5507 = vmatmul.mubr.f32.gmra.mrb[0].mxu0 %v5295
    %v5508 = vpop.f32.mrb[0].mxu0
    %v5509 = vadd.f32 %v5335, %v5508
    %v5510 = vpop.f32.mrb[0].mxu0
    %5511 = vmatprep.mubr.f32.mxu0 0.0
    %5512 = vmatmul.mubr.f32.gmra.mrb[0].mxu0 %v5296
    %v5513 = vpop.f32.mrb[0].mxu0
    %v5514 = vadd.f32 %v5335, %v5513
    %v5515 = vpop.f32.mrb[0].mxu0
    %5516 = vmatprep.mubr.f32.mxu0 0.0
    %5517 = vmatmul.mubr.f32.gmra.mrb[0].mxu0 %v5297
    %v5518 = vpop.f32.mrb[0].mxu0
    %v5519 = vadd.f32 %v5335, %v5518
    %v5520 = vpop.f32.mrb[0].mxu0
    %5521 = vmatprep.mubr.f32.mxu0 0.0
    %5522 = vmatmul.mubr.f32.gmra.mrb[0].mxu0 %v5298
    %v5523 = vpop.f32.mrb[0].mxu0
    %v5524 = vadd.f32 %v5335, %v5523
    %v5525 = vpop.f32.mrb[0].mxu0
    %5526 = vmatprep.mubr.f32.mxu0 0.0
    %5527 = vmatmul.mubr.f32.gmra.mrb[0].mxu0 %v5299
    %v5528 = vpop.f32.mrb[0].mxu0
    %v5529 = vadd.f32 %v5335, %v5528
    %v5530 = vpop.f32.mrb[0].mxu0
    %5531 = vmatprep.mubr.f32.mxu0 0.0
    %5532 = vmatmul.mubr.f32.gmra.mrb[0].mxu0 %v5300
    %v5533 = vpop.f32.mrb[0].mxu0
    %v5534 = vadd.f32 %v5335, %v5533
    %v5535 = vpop.f32.mrb[0].mxu0
    %5536 = vmatprep.mubr.f32.mxu0 0.0
    %5537 = vmatmul.mubr.f32.gmra.mrb[0].mxu0 %v5301
    %v5538 = vpop.f32.mrb[0].mxu0
    %v5539 = vadd.f32 %v5335, %v5538
    %v5540 = vpop.f32.mrb[0].mxu0
    %5541 = vmatprep.mubr.f32.mxu0 0.0
    %5542 = vmatmul.mubr.f32.gmra.mrb[0].mxu0 %v5302
    %v5543 = vpop.f32.mrb[0].mxu0
    %v5544 = vadd.f32 %v5335, %v5543
    %v5545 = vpop.f32.mrb[0].mxu0
    %5546 = vmatprep.mubr.f32.mxu0 0.0
    %5547 = vmatmul.mubr.f32.gmra.mrb[0].mxu0 %v5303
    %v5548 = vpop.f32.mrb[0].mxu0
    %v5549 = vadd.f32 %v5335, %v5548
    %v5550 = vpop.f32.mrb[0].mxu0
    %5551 = vmatprep.mubr.f32.mxu0 0.0
    %5552 = vmatmul.mubr.f32.gmra.mrb[0].mxu0 %v5304
    %v5553 = vpop.f32.mrb[0].mxu0
    %v5554 = vadd.f32 %v5335, %v5553
    %v5555 = vpop.f32.mrb[0].mxu0
    %5556 = vmatprep.mubr.f32.mxu0 0.0
    %5557 = vmatmul.mubr.f32.gmra.mrb[0].mxu0 %v5305
    %v5558 = vpop.f32.mrb[0].mxu0
    %v5559 = vadd.f32 %v5335, %v5558
    %v5560 = vpop.f32.mrb[0].mxu0
    %5561 = vmatprep.mubr.f32.mxu0 0.0
    %5562 = vmatmul.mubr.f32.gmra.mrb[0].mxu0 %v5306
    %v5563 = vpop.f32.mrb[0].mxu0
    %v5564 = vadd.f32 %v5335, %v5563
    %v5565 = vpop.f32.mrb[0].mxu0
    %5566 = vmatprep.mubr.f32.mxu0 0.0
    %5567 = vmatmul.mubr.f32.gmra.mrb[0].mxu0 %v5307
    %v5568 = vpop.f32.mrb[0].mxu0
    %v5569 = vadd.f32 %v5335, %v5568
    %v5570 = vpop.f32.mrb[0].mxu0
    %5571 = vmatprep.mubr.f32.mxu0 0.0
    %5572 = vmatmul.mubr.f32.gmra.mrb[0].mxu0 %v5308
    %v5573 = vpop.f32.mrb[0].mxu0
    %v5574 = vadd.f32 %v5335, %v5573
    %v5575 = vpop.f32.mrb[0].mxu0
    %5576 = vmatprep.mubr.f32.mxu0 0.0
    %5577 = vmatmul.mubr.f32.gmra.mrb[0].mxu0 %v5309
    %v5578 = vpop.f32.mrb[0].mxu0
    %v5579 = vadd.f32 %v5335, %v5578
    %v5580 = vpop.f32.mrb[0].mxu0
    %5581 = vmatprep.mubr.f32.mxu0 0.0
    %5582 = vmatmul.mubr.f32.gmra.mrb[0].mxu0 %v5310
    %v5583 = vpop.f32.mrb[0].mxu0
    %v5584 = vadd.f32 %v5335, %v5583
    %v5585 = vpop.f32.mrb[0].mxu0
    %5586 = vmatprep.mubr.f32.mxu0 0.0
    %5587 = vmatmul.mubr.f32.gmra.mrb[0].mxu0 %v5311
    %v5588 = vpop.f32.mrb[0].mxu0
    %v5589 = vadd.f32 %v5335, %v5588
    %v5590 = vpop.f32.mrb[0].mxu0
    %5591 = vdwg.mxu0
    %v5592 = vxor.u32 %v5404, 2147483648
    %v5593 = vxor.u32 %v5409, 2147483648
    %v5594 = vxor.u32 %v5414, 2147483648
    %v5595 = vxor.u32 %v5419, 2147483648
    %v5596 = vxor.u32 %v5424, 2147483648
    %v5597 = vxor.u32 %v5429, 2147483648
    %v5598 = vxor.u32 %v5434, 2147483648
    %v5599 = vxor.u32 %v5439, 2147483648
    %v5600 = vxor.u32 %v5444, 2147483648
    %v5601 = vxor.u32 %v5449, 2147483648
    %v5602 = vxor.u32 %v5454, 2147483648
    %v5603 = vxor.u32 %v5459, 2147483648
    %v5604 = vxor.u32 %v5464, 2147483648
    %v5605 = vxor.u32 %v5469, 2147483648
    %v5606 = vxor.u32 %v5474, 2147483648
    %v5607 = vxor.u32 %v5479, 2147483648
    %v5608 = vxor.u32 %v5484, 2147483648
    %v5609 = vxor.u32 %v5489, 2147483648
    %v5610 = vxor.u32 %v5494, 2147483648
    %v5611 = vxor.u32 %v5499, 2147483648
    %v5612 = vxor.u32 %v5504, 2147483648
    %v5613 = vxor.u32 %v5509, 2147483648
    %v5614 = vxor.u32 %v5514, 2147483648
    %v5615 = vxor.u32 %v5519, 2147483648
    %v5616 = vxor.u32 %v5524, 2147483648
    %v5617 = vxor.u32 %v5529, 2147483648
    %v5618 = vxor.u32 %v5534, 2147483648
    %v5619 = vxor.u32 %v5539, 2147483648
    %v5620 = vxor.u32 %v5544, 2147483648
    %v5621 = vxor.u32 %v5549, 2147483648
    %v5622 = vxor.u32 %v5554, 2147483648
    %v5623 = vxor.u32 %v5559, 2147483648
    %v5624 = vxor.u32 %v5564, 2147483648
    %v5625 = vxor.u32 %v5569, 2147483648
    %v5626 = vxor.u32 %v5574, 2147483648
    %v5627 = vxor.u32 %v5579, 2147483648
    %v5628 = vxor.u32 %v5584, 2147483648
    %v5629 = vxor.u32 %v5589, 2147483648
    %v5630 = vmul.f32 %v5592, 1.442695
    %v5631 = vpow.pop %v5630
    %v5632 = vmul.f32 %v5593, 1.442695
    %v5633 = vpow.pop %v5632
    %v5634 = vmul.f32 %v5594, 1.442695
    %v5635 = vpow.pop %v5634
    %v5636 = vmul.f32 %v5595, 1.442695
    %v5637 = vpow.pop %v5636
    %v5638 = vmul.f32 %v5596, 1.442695
    %v5639 = vpow.pop %v5638
    %v5640 = vmul.f32 %v5597, 1.442695
    %v5641 = vpow.pop %v5640
    %v5642 = vmul.f32 %v5598, 1.442695
    %v5643 = vpow.pop %v5642
    %v5644 = vmul.f32 %v5599, 1.442695
    %v5645 = vpow.pop %v5644
    %v5646 = vmul.f32 %v5600, 1.442695
    %v5647 = vpow.pop %v5646
    %v5648 = vmul.f32 %v5601, 1.442695
    %v5649 = vpow.pop %v5648
    %v5650 = vmul.f32 %v5602, 1.442695
    %v5651 = vpow.pop %v5650
    %v5652 = vmul.f32 %v5603, 1.442695
    %v5653 = vpow.pop %v5652
    %v5654 = vmul.f32 %v5604, 1.442695
    %v5655 = vpow.pop %v5654
    %v5656 = vmul.f32 %v5605, 1.442695
    %v5657 = vpow.pop %v5656
    %v5658 = vmul.f32 %v5606, 1.442695
    %v5659 = vpow.pop %v5658
    %v5660 = vmul.f32 %v5607, 1.442695
    %v5661 = vpow.pop %v5660
    %v5662 = vmul.f32 %v5608, 1.442695
    %v5663 = vpow.pop %v5662
    %v5664 = vmul.f32 %v5609, 1.442695
    %v5665 = vpow.pop %v5664
    %v5666 = vmul.f32 %v5610, 1.442695
    %v5667 = vpow.pop %v5666
    %v5668 = vmul.f32 %v5611, 1.442695
    %v5669 = vpow.pop %v5668
    %v5670 = vmul.f32 %v5612, 1.442695
    %v5671 = vpow.pop %v5670
    %v5672 = vmul.f32 %v5613, 1.442695
    %v5673 = vpow.pop %v5672
    %v5674 = vmul.f32 %v5614, 1.442695
    %v5675 = vpow.pop %v5674
    %v5676 = vmul.f32 %v5615, 1.442695
    %v5677 = vpow.pop %v5676
    %v5678 = vmul.f32 %v5616, 1.442695
    %v5679 = vpow.pop %v5678
    %v5680 = vmul.f32 %v5617, 1.442695
    %v5681 = vpow.pop %v5680
    %v5682 = vmul.f32 %v5618, 1.442695
    %v5683 = vpow.pop %v5682
    %v5684 = vmul.f32 %v5619, 1.442695
    %v5685 = vpow.pop %v5684
    %v5686 = vmul.f32 %v5620, 1.442695
    %v5687 = vpow.pop %v5686
    %v5688 = vmul.f32 %v5621, 1.442695
    %v5689 = vpow.pop %v5688
    %v5690 = vmul.f32 %v5622, 1.442695
    %v5691 = vpow.pop %v5690
    %v5692 = vmul.f32 %v5623, 1.442695
    %v5693 = vpow.pop %v5692
    %v5694 = vmul.f32 %v5624, 1.442695
    %v5695 = vpow.pop %v5694
    %v5696 = vmul.f32 %v5625, 1.442695
    %v5697 = vpow.pop %v5696
    %v5698 = vmul.f32 %v5626, 1.442695
    %v5699 = vpow.pop %v5698
    %v5700 = vmul.f32 %v5627, 1.442695
    %v5701 = vpow.pop %v5700
    %v5702 = vmul.f32 %v5628, 1.442695
    %v5703 = vpow.pop %v5702
    %v5704 = vmul.f32 %v5629, 1.442695
    %v5705 = vpow.pop %v5704
    %v5706 = vadd.f32 %v5631, 1.0
    %v5707 = vadd.f32 %v5633, 1.0
    %v5708 = vadd.f32 %v5635, 1.0
    %v5709 = vadd.f32 %v5637, 1.0
    %v5710 = vadd.f32 %v5639, 1.0
    %v5711 = vadd.f32 %v5641, 1.0
    %v5712 = vadd.f32 %v5643, 1.0
    %v5713 = vadd.f32 %v5645, 1.0
    %v5714 = vadd.f32 %v5647, 1.0
    %v5715 = vadd.f32 %v5649, 1.0
    %v5716 = vadd.f32 %v5651, 1.0
    %v5717 = vadd.f32 %v5653, 1.0
    %v5718 = vadd.f32 %v5655, 1.0
    %v5719 = vadd.f32 %v5657, 1.0
    %v5720 = vadd.f32 %v5659, 1.0
    %v5721 = vadd.f32 %v5661, 1.0
    %v5722 = vadd.f32 %v5663, 1.0
    %v5723 = vadd.f32 %v5665, 1.0
    %v5724 = vadd.f32 %v5667, 1.0
    %v5725 = vadd.f32 %v5669, 1.0
    %v5726 = vadd.f32 %v5671, 1.0
    %v5727 = vadd.f32 %v5673, 1.0
    %v5728 = vadd.f32 %v5675, 1.0
    %v5729 = vadd.f32 %v5677, 1.0
    %v5730 = vadd.f32 %v5679, 1.0
    %v5731 = vadd.f32 %v5681, 1.0
    %v5732 = vadd.f32 %v5683, 1.0
    %v5733 = vadd.f32 %v5685, 1.0
    %v5734 = vadd.f32 %v5687, 1.0
    %v5735 = vadd.f32 %v5689, 1.0
    %v5736 = vadd.f32 %v5691, 1.0
    %v5737 = vadd.f32 %v5693, 1.0
    %v5738 = vadd.f32 %v5695, 1.0
    %v5739 = vadd.f32 %v5697, 1.0
    %v5740 = vadd.f32 %v5699, 1.0
    %v5741 = vadd.f32 %v5701, 1.0
    %v5742 = vadd.f32 %v5703, 1.0
    %v5743 = vadd.f32 %v5705, 1.0
    %v5744 = vrcp.pop %v5706
    %v5745 = vmul.f32 1.0, %v5744
    %v5746 = vrcp.pop %v5707
    %v5747 = vmul.f32 1.0, %v5746
    %v5748 = vrcp.pop %v5708
    %v5749 = vmul.f32 1.0, %v5748
    %v5750 = vrcp.pop %v5709
    %v5751 = vmul.f32 1.0, %v5750
    %v5752 = vrcp.pop %v5710
    %v5753 = vmul.f32 1.0, %v5752
    %v5754 = vrcp.pop %v5711
    %v5755 = vmul.f32 1.0, %v5754
    %v5756 = vrcp.pop %v5712
    %v5757 = vmul.f32 1.0, %v5756
    %v5758 = vrcp.pop %v5713
    %v5759 = vmul.f32 1.0, %v5758
    %v5760 = vrcp.pop %v5714
    %v5761 = vmul.f32 1.0, %v5760
    %v5762 = vrcp.pop %v5715
    %v5763 = vmul.f32 1.0, %v5762
    %v5764 = vrcp.pop %v5716
    %v5765 = vmul.f32 1.0, %v5764
    %v5766 = vrcp.pop %v5717
    %v5767 = vmul.f32 1.0, %v5766
    %v5768 = vrcp.pop %v5718
    %v5769 = vmul.f32 1.0, %v5768
    %v5770 = vrcp.pop %v5719
    %v5771 = vmul.f32 1.0, %v5770
    %v5772 = vrcp.pop %v5720
    %v5773 = vmul.f32 1.0, %v5772
    %v5774 = vrcp.pop %v5721
    %v5775 = vmul.f32 1.0, %v5774
    %v5776 = vrcp.pop %v5722
    %v5777 = vmul.f32 1.0, %v5776
    %v5778 = vrcp.pop %v5723
    %v5779 = vmul.f32 1.0, %v5778
    %v5780 = vrcp.pop %v5724
    %v5781 = vmul.f32 1.0, %v5780
    %v5782 = vrcp.pop %v5725
    %v5783 = vmul.f32 1.0, %v5782
    %v5784 = vrcp.pop %v5726
    %v5785 = vmul.f32 1.0, %v5784
    %v5786 = vrcp.pop %v5727
    %v5787 = vmul.f32 1.0, %v5786
    %v5788 = vrcp.pop %v5728
    %v5789 = vmul.f32 1.0, %v5788
    %v5790 = vrcp.pop %v5729
    %v5791 = vmul.f32 1.0, %v5790
    %v5792 = vrcp.pop %v5730
    %v5793 = vmul.f32 1.0, %v5792
    %v5794 = vrcp.pop %v5731
    %v5795 = vmul.f32 1.0, %v5794
    %v5796 = vrcp.pop %v5732
    %v5797 = vmul.f32 1.0, %v5796
    %v5798 = vrcp.pop %v5733
    %v5799 = vmul.f32 1.0, %v5798
    %v5800 = vrcp.pop %v5734
    %v5801 = vmul.f32 1.0, %v5800
    %v5802 = vrcp.pop %v5735
    %v5803 = vmul.f32 1.0, %v5802
    %v5804 = vrcp.pop %v5736
    %v5805 = vmul.f32 1.0, %v5804
    %v5806 = vrcp.pop %v5737
    %v5807 = vmul.f32 1.0, %v5806
    %v5808 = vrcp.pop %v5738
    %v5809 = vmul.f32 1.0, %v5808
    %v5810 = vrcp.pop %v5739
    %v5811 = vmul.f32 1.0, %v5810
    %v5812 = vrcp.pop %v5740
    %v5813 = vmul.f32 1.0, %v5812
    %v5814 = vrcp.pop %v5741
    %v5815 = vmul.f32 1.0, %v5814
    %v5816 = vrcp.pop %v5742
    %v5817 = vmul.f32 1.0, %v5816
    %v5818 = vrcp.pop %v5743
    %v5819 = vmul.f32 1.0, %v5818
    %v5820 = vmul.f32 %v5404, %v5745
    %v5821 = vmul.f32 %v5409, %v5747
    %v5822 = vmul.f32 %v5414, %v5749
    %v5823 = vmul.f32 %v5419, %v5751
    %v5824 = vmul.f32 %v5424, %v5753
    %v5825 = vmul.f32 %v5429, %v5755
    %v5826 = vmul.f32 %v5434, %v5757
    %v5827 = vmul.f32 %v5439, %v5759
    %v5828 = vmul.f32 %v5444, %v5761
    %v5829 = vmul.f32 %v5449, %v5763
    %v5830 = vmul.f32 %v5454, %v5765
    %v5831 = vmul.f32 %v5459, %v5767
    %v5832 = vmul.f32 %v5464, %v5769
    %v5833 = vmul.f32 %v5469, %v5771
    %v5834 = vmul.f32 %v5474, %v5773
    %v5835 = vmul.f32 %v5479, %v5775
    %v5836 = vmul.f32 %v5484, %v5777
    %v5837 = vmul.f32 %v5489, %v5779
    %v5838 = vmul.f32 %v5494, %v5781
    %v5839 = vmul.f32 %v5499, %v5783
    %v5840 = vmul.f32 %v5504, %v5785
    %v5841 = vmul.f32 %v5509, %v5787
    %v5842 = vmul.f32 %v5514, %v5789
    %v5843 = vmul.f32 %v5519, %v5791
    %v5844 = vmul.f32 %v5524, %v5793
    %v5845 = vmul.f32 %v5529, %v5795
    %v5846 = vmul.f32 %v5534, %v5797
    %v5847 = vmul.f32 %v5539, %v5799
    %v5848 = vmul.f32 %v5544, %v5801
    %v5849 = vmul.f32 %v5549, %v5803
    %v5850 = vmul.f32 %v5554, %v5805
    %v5851 = vmul.f32 %v5559, %v5807
    %v5852 = vmul.f32 %v5564, %v5809
    %v5853 = vmul.f32 %v5569, %v5811
    %v5854 = vmul.f32 %v5574, %v5813
    %v5855 = vmul.f32 %v5579, %v5815
    %v5856 = vmul.f32 %v5584, %v5817
    %v5857 = vmul.f32 %v5589, %v5819
    %s5858 = scalar_lea.vmem [#allocation14], 128
    %v5859 = vld [vmem:[%s5858] sm:$0xff]
    %v5860 = vld [vmem:[%s5858 + $0x8] sm:$0xff]
    %v5861 = vld [vmem:[%s5858 + $0x10] sm:$0xff]
    %v5862 = vld [vmem:[%s5858 + $0x18] sm:$0xff]
    %v5863 = vld [vmem:[%s5858 + $0x20] sm:$0xff]
    %v5864 = vld [vmem:[%s5858 + $0x28] sm:$0xff]
    %v5865 = vld [vmem:[%s5858 + $0x30] sm:$0xff]
    %v5866 = vld [vmem:[%s5858 + $0x38] sm:$0xff]
    %v5867 = vld [vmem:[%s5858 + $0x40] sm:$0xff]
    %v5868 = vld [vmem:[%s5858 + $0x48] sm:$0xff]
    %v5869 = vld [vmem:[%s5858 + $0x50] sm:$0xff]
    %v5870 = vld [vmem:[%s5858 + $0x58] sm:$0xff]
    %v5871 = vld [vmem:[%s5858 + $0x60] sm:$0xff]
    %v5872 = vld [vmem:[%s5858 + $0x68] sm:$0xff]
    %v5873 = vld [vmem:[%s5858 + $0x70] sm:$0xff]
    %v5874 = vld [vmem:[%s5858 + $0x78] sm:$0xff]
    %s5875 = scalar_lea.vmem %s10, 1
    %v5876 = vld [vmem:[%s5875] sm:$0x1]
    %v5878 = vlaneseq
    %v5879 = vshrl.u32 %v5878, 7
    %v5880 = vsub.s32 0, %v5879
    %v5881 = vrot.slane %v5876, %v5880
    %5883 = vmatprep.subr.mxu0 0.0
    %5884 = vmatpush1.msra.mxu0 %v5859
    %5885 = vmatprep.subr.mxu0 0.0
    %5886 = vmatpush1.msra.mxu0 %v5860
    %5887 = vmatprep.subr.mxu0 0.0
    %5888 = vmatpush1.msra.mxu0 %v5861
    %5889 = vmatprep.subr.mxu0 0.0
    %5890 = vmatpush1.msra.mxu0 %v5862
    %5891 = vmatprep.subr.mxu0 0.0
    %5892 = vmatpush1.msra.mxu0 %v5863
    %5893 = vmatprep.subr.mxu0 0.0
    %5894 = vmatpush1.msra.mxu0 %v5864
    %5895 = vmatprep.subr.mxu0 0.0
    %5896 = vmatpush1.msra.mxu0 %v5865
    %5897 = vmatprep.subr.mxu0 0.0
    %5898 = vmatpush1.msra.mxu0 %v5866
    %5899 = vmatprep.subr.mxu0 0.0
    %5900 = vmatpush1.msra.mxu0 %v5867
    %5901 = vmatprep.subr.mxu0 0.0
    %5902 = vmatpush1.msra.mxu0 %v5868
    %5903 = vmatprep.subr.mxu0 0.0
    %5904 = vmatpush1.msra.mxu0 %v5869
    %5905 = vmatprep.subr.mxu0 0.0
    %5906 = vmatpush1.msra.mxu0 %v5870
    %5907 = vmatprep.subr.mxu0 0.0
    %5908 = vmatpush1.msra.mxu0 %v5871
    %5909 = vmatprep.subr.mxu0 0.0
    %5910 = vmatpush1.msra.mxu0 %v5872
    %5911 = vmatprep.subr.mxu0 0.0
    %5912 = vmatpush1.msra.mxu0 %v5873
    %5913 = vmatprep.subr.mxu0 0.0
    %5914 = vmatpush1.msra.mxu0 %v5874
    %5915 = vmatprep.subr.mxu0 0.0
    %5916 = vmatpush1.msra.mxu0 0.0
    %5917 = vmatprep.subr.mxu0 0.0
    %5918 = vmatpush1.msra.mxu0 0.0
    %5919 = vmatprep.subr.mxu0 0.0
    %5920 = vmatpush1.msra.mxu0 0.0
    %5921 = vmatprep.subr.mxu0 0.0
    %5922 = vmatpush1.msra.mxu0 0.0
    %5923 = vmatprep.subr.mxu0 0.0
    %5924 = vmatpush1.msra.mxu0 0.0
    %5925 = vmatprep.subr.mxu0 0.0
    %5926 = vmatpush1.msra.mxu0 0.0
    %5927 = vmatprep.subr.mxu0 0.0
    %5928 = vmatpush1.msra.mxu0 0.0
    %5929 = vmatprep.subr.mxu0 0.0
    %5930 = vmatpush1.msra.mxu0 0.0
    %5931 = vmatprep.subr.mxu0 0.0
    %5932 = vmatpush1.msra.mxu0 0.0
    %5933 = vmatprep.subr.mxu0 0.0
    %5934 = vmatpush1.msra.mxu0 0.0
    %5935 = vmatprep.subr.mxu0 0.0
    %5936 = vmatpush1.msra.mxu0 0.0
    %5937 = vmatprep.subr.mxu0 0.0
    %5938 = vmatpush1.msra.mxu0 0.0
    %5939 = vmatprep.subr.mxu0 0.0
    %5940 = vmatpush1.msra.mxu0 0.0
    %5941 = vmatprep.subr.mxu0 0.0
    %5942 = vmatpush1.msra.mxu0 0.0
    %5943 = vmatprep.subr.mxu0 0.0
    %5944 = vmatpush1.msra.mxu0 0.0
    %5945 = vmatprep.subr.mxu0 0.0
    %5946 = vmatpush1.msra.mxu0 0.0
    %5947 = vmatprep.mubr.f32.mxu0 0.0
    %5948 = vmatmul.mubr.f32.gmra.mrb[0].mxu0 %v5820
    %v5949 = vpop.f32.mrb[0].mxu0
    %v5950 = vadd.f32 %v5881, %v5949
    %v5951 = vpop.f32.mrb[0].mxu0
    %5952 = vmatprep.mubr.f32.mxu0 0.0
    %5953 = vmatmul.mubr.f32.gmra.mrb[0].mxu0 %v5821
    %v5954 = vpop.f32.mrb[0].mxu0
    %v5955 = vadd.f32 %v5881, %v5954
    %v5956 = vpop.f32.mrb[0].mxu0
    %5957 = vmatprep.mubr.f32.mxu0 0.0
    %5958 = vmatmul.mubr.f32.gmra.mrb[0].mxu0 %v5822
    %v5959 = vpop.f32.mrb[0].mxu0
    %v5960 = vadd.f32 %v5881, %v5959
    %v5961 = vpop.f32.mrb[0].mxu0
    %5962 = vmatprep.mubr.f32.mxu0 0.0
    %5963 = vmatmul.mubr.f32.gmra.mrb[0].mxu0 %v5823
    %v5964 = vpop.f32.mrb[0].mxu0
    %v5965 = vadd.f32 %v5881, %v5964
    %v5966 = vpop.f32.mrb[0].mxu0
    %5967 = vmatprep.mubr.f32.mxu0 0.0
    %5968 = vmatmul.mubr.f32.gmra.mrb[0].mxu0 %v5824
    %v5969 = vpop.f32.mrb[0].mxu0
    %v5970 = vadd.f32 %v5881, %v5969
    %v5971 = vpop.f32.mrb[0].mxu0
    %5972 = vmatprep.mubr.f32.mxu0 0.0
    %5973 = vmatmul.mubr.f32.gmra.mrb[0].mxu0 %v5825
    %v5974 = vpop.f32.mrb[0].mxu0
    %v5975 = vadd.f32 %v5881, %v5974
    %v5976 = vpop.f32.mrb[0].mxu0
    %5977 = vmatprep.mubr.f32.mxu0 0.0
    %5978 = vmatmul.mubr.f32.gmra.mrb[0].mxu0 %v5826
    %v5979 = vpop.f32.mrb[0].mxu0
    %v5980 = vadd.f32 %v5881, %v5979
    %v5981 = vpop.f32.mrb[0].mxu0
    %5982 = vmatprep.mubr.f32.mxu0 0.0
    %5983 = vmatmul.mubr.f32.gmra.mrb[0].mxu0 %v5827
    %v5984 = vpop.f32.mrb[0].mxu0
    %v5985 = vadd.f32 %v5881, %v5984
    %v5986 = vpop.f32.mrb[0].mxu0
    %5987 = vmatprep.mubr.f32.mxu0 0.0
    %5988 = vmatmul.mubr.f32.gmra.mrb[0].mxu0 %v5828
    %v5989 = vpop.f32.mrb[0].mxu0
    %v5990 = vadd.f32 %v5881, %v5989
    %v5991 = vpop.f32.mrb[0].mxu0
    %5992 = vmatprep.mubr.f32.mxu0 0.0
    %5993 = vmatmul.mubr.f32.gmra.mrb[0].mxu0 %v5829
    %v5994 = vpop.f32.mrb[0].mxu0
    %v5995 = vadd.f32 %v5881, %v5994
    %v5996 = vpop.f32.mrb[0].mxu0
    %5997 = vmatprep.mubr.f32.mxu0 0.0
    %5998 = vmatmul.mubr.f32.gmra.mrb[0].mxu0 %v5830
    %v5999 = vpop.f32.mrb[0].mxu0
    %v6000 = vadd.f32 %v5881, %v5999
    %v6001 = vpop.f32.mrb[0].mxu0
    %6002 = vmatprep.mubr.f32.mxu0 0.0
    %6003 = vmatmul.mubr.f32.gmra.mrb[0].mxu0 %v5831
    %v6004 = vpop.f32.mrb[0].mxu0
    %v6005 = vadd.f32 %v5881, %v6004
    %v6006 = vpop.f32.mrb[0].mxu0
    %6007 = vmatprep.mubr.f32.mxu0 0.0
    %6008 = vmatmul.mubr.f32.gmra.mrb[0].mxu0 %v5832
    %v6009 = vpop.f32.mrb[0].mxu0
    %v6010 = vadd.f32 %v5881, %v6009
    %v6011 = vpop.f32.mrb[0].mxu0
    %6012 = vmatprep.mubr.f32.mxu0 0.0
    %6013 = vmatmul.mubr.f32.gmra.mrb[0].mxu0 %v5833
    %v6014 = vpop.f32.mrb[0].mxu0
    %v6015 = vadd.f32 %v5881, %v6014
    %v6016 = vpop.f32.mrb[0].mxu0
    %6017 = vmatprep.mubr.f32.mxu0 0.0
    %6018 = vmatmul.mubr.f32.gmra.mrb[0].mxu0 %v5834
    %v6019 = vpop.f32.mrb[0].mxu0
    %v6020 = vadd.f32 %v5881, %v6019
    %v6021 = vpop.f32.mrb[0].mxu0
    %6022 = vmatprep.mubr.f32.mxu0 0.0
    %6023 = vmatmul.mubr.f32.gmra.mrb[0].mxu0 %v5835
    %v6024 = vpop.f32.mrb[0].mxu0
    %v6025 = vadd.f32 %v5881, %v6024
    %v6026 = vpop.f32.mrb[0].mxu0
    %6027 = vmatprep.mubr.f32.mxu0 0.0
    %6028 = vmatmul.mubr.f32.gmra.mrb[0].mxu0 %v5836
    %v6029 = vpop.f32.mrb[0].mxu0
    %v6030 = vadd.f32 %v5881, %v6029
    %v6031 = vpop.f32.mrb[0].mxu0
    %6032 = vmatprep.mubr.f32.mxu0 0.0
    %6033 = vmatmul.mubr.f32.gmra.mrb[0].mxu0 %v5837
    %v6034 = vpop.f32.mrb[0].mxu0
    %v6035 = vadd.f32 %v5881, %v6034
    %v6036 = vpop.f32.mrb[0].mxu0
    %6037 = vmatprep.mubr.f32.mxu0 0.0
    %6038 = vmatmul.mubr.f32.gmra.mrb[0].mxu0 %v5838
    %v6039 = vpop.f32.mrb[0].mxu0
    %v6040 = vadd.f32 %v5881, %v6039
    %v6041 = vpop.f32.mrb[0].mxu0
    %6042 = vmatprep.mubr.f32.mxu0 0.0
    %6043 = vmatmul.mubr.f32.gmra.mrb[0].mxu0 %v5839
    %v6044 = vpop.f32.mrb[0].mxu0
    %v6045 = vadd.f32 %v5881, %v6044
    %v6046 = vpop.f32.mrb[0].mxu0
    %6047 = vmatprep.mubr.f32.mxu0 0.0
    %6048 = vmatmul.mubr.f32.gmra.mrb[0].mxu0 %v5840
    %v6049 = vpop.f32.mrb[0].mxu0
    %v6050 = vadd.f32 %v5881, %v6049
    %v6051 = vpop.f32.mrb[0].mxu0
    %6052 = vmatprep.mubr.f32.mxu0 0.0
    %6053 = vmatmul.mubr.f32.gmra.mrb[0].mxu0 %v5841
    %v6054 = vpop.f32.mrb[0].mxu0
    %v6055 = vadd.f32 %v5881, %v6054
    %v6056 = vpop.f32.mrb[0].mxu0
    %6057 = vmatprep.mubr.f32.mxu0 0.0
    %6058 = vmatmul.mubr.f32.gmra.mrb[0].mxu0 %v5842
    %v6059 = vpop.f32.mrb[0].mxu0
    %v6060 = vadd.f32 %v5881, %v6059
    %v6061 = vpop.f32.mrb[0].mxu0
    %6062 = vmatprep.mubr.f32.mxu0 0.0
    %6063 = vmatmul.mubr.f32.gmra.mrb[0].mxu0 %v5843
    %v6064 = vpop.f32.mrb[0].mxu0
    %v6065 = vadd.f32 %v5881, %v6064
    %v6066 = vpop.f32.mrb[0].mxu0
    %6067 = vmatprep.mubr.f32.mxu0 0.0
    %6068 = vmatmul.mubr.f32.gmra.mrb[0].mxu0 %v5844
    %v6069 = vpop.f32.mrb[0].mxu0
    %v6070 = vadd.f32 %v5881, %v6069
    %v6071 = vpop.f32.mrb[0].mxu0
    %6072 = vmatprep.mubr.f32.mxu0 0.0
    %6073 = vmatmul.mubr.f32.gmra.mrb[0].mxu0 %v5845
    %v6074 = vpop.f32.mrb[0].mxu0
    %v6075 = vadd.f32 %v5881, %v6074
    %v6076 = vpop.f32.mrb[0].mxu0
    %6077 = vmatprep.mubr.f32.mxu0 0.0
    %6078 = vmatmul.mubr.f32.gmra.mrb[0].mxu0 %v5846
    %v6079 = vpop.f32.mrb[0].mxu0
    %v6080 = vadd.f32 %v5881, %v6079
    %v6081 = vpop.f32.mrb[0].mxu0
    %6082 = vmatprep.mubr.f32.mxu0 0.0
    %6083 = vmatmul.mubr.f32.gmra.mrb[0].mxu0 %v5847
    %v6084 = vpop.f32.mrb[0].mxu0
    %v6085 = vadd.f32 %v5881, %v6084
    %v6086 = vpop.f32.mrb[0].mxu0
    %6087 = vmatprep.mubr.f32.mxu0 0.0
    %6088 = vmatmul.mubr.f32.gmra.mrb[0].mxu0 %v5848
    %v6089 = vpop.f32.mrb[0].mxu0
    %v6090 = vadd.f32 %v5881, %v6089
    %v6091 = vpop.f32.mrb[0].mxu0
    %6092 = vmatprep.mubr.f32.mxu0 0.0
    %6093 = vmatmul.mubr.f32.gmra.mrb[0].mxu0 %v5849
    %v6094 = vpop.f32.mrb[0].mxu0
    %v6095 = vadd.f32 %v5881, %v6094
    %v6096 = vpop.f32.mrb[0].mxu0
    %6097 = vmatprep.mubr.f32.mxu0 0.0
    %6098 = vmatmul.mubr.f32.gmra.mrb[0].mxu0 %v5850
    %v6099 = vpop.f32.mrb[0].mxu0
    %v6100 = vadd.f32 %v5881, %v6099
    %v6101 = vpop.f32.mrb[0].mxu0
    %6102 = vmatprep.mubr.f32.mxu0 0.0
    %6103 = vmatmul.mubr.f32.gmra.mrb[0].mxu0 %v5851
    %v6104 = vpop.f32.mrb[0].mxu0
    %v6105 = vadd.f32 %v5881, %v6104
    %v6106 = vpop.f32.mrb[0].mxu0
    %6107 = vmatprep.mubr.f32.mxu0 0.0
    %6108 = vmatmul.mubr.f32.gmra.mrb[0].mxu0 %v5852
    %v6109 = vpop.f32.mrb[0].mxu0
    %v6110 = vadd.f32 %v5881, %v6109
    %v6111 = vpop.f32.mrb[0].mxu0
    %6112 = vmatprep.mubr.f32.mxu0 0.0
    %6113 = vmatmul.mubr.f32.gmra.mrb[0].mxu0 %v5853
    %v6114 = vpop.f32.mrb[0].mxu0
    %v6115 = vadd.f32 %v5881, %v6114
    %v6116 = vpop.f32.mrb[0].mxu0
    %6117 = vmatprep.mubr.f32.mxu0 0.0
    %6118 = vmatmul.mubr.f32.gmra.mrb[0].mxu0 %v5854
    %v6119 = vpop.f32.mrb[0].mxu0
    %v6120 = vadd.f32 %v5881, %v6119
    %v6121 = vpop.f32.mrb[0].mxu0
    %6122 = vmatprep.mubr.f32.mxu0 0.0
    %6123 = vmatmul.mubr.f32.gmra.mrb[0].mxu0 %v5855
    %v6124 = vpop.f32.mrb[0].mxu0
    %v6125 = vadd.f32 %v5881, %v6124
    %v6126 = vpop.f32.mrb[0].mxu0
    %6127 = vmatprep.mubr.f32.mxu0 0.0
    %6128 = vmatmul.mubr.f32.gmra.mrb[0].mxu0 %v5856
    %v6129 = vpop.f32.mrb[0].mxu0
    %v6130 = vadd.f32 %v5881, %v6129
    %v6131 = vpop.f32.mrb[0].mxu0
    %6132 = vmatprep.mubr.f32.mxu0 0.0
    %6133 = vmatmul.mubr.f32.gmra.mrb[0].mxu0 %v5857
    %v6134 = vpop.f32.mrb[0].mxu0
    %v6135 = vadd.f32 %v5881, %v6134
    %v6136 = vpop.f32.mrb[0].mxu0
    %6137 = vdwg.mxu0
    %v6138 = vxor.u32 %v5950, 2147483648
    %v6139 = vxor.u32 %v5955, 2147483648
    %v6140 = vxor.u32 %v5960, 2147483648
    %v6141 = vxor.u32 %v5965, 2147483648
    %v6142 = vxor.u32 %v5970, 2147483648
    %v6143 = vxor.u32 %v5975, 2147483648
    %v6144 = vxor.u32 %v5980, 2147483648
    %v6145 = vxor.u32 %v5985, 2147483648
    %v6146 = vxor.u32 %v5990, 2147483648
    %v6147 = vxor.u32 %v5995, 2147483648
    %v6148 = vxor.u32 %v6000, 2147483648
    %v6149 = vxor.u32 %v6005, 2147483648
    %v6150 = vxor.u32 %v6010, 2147483648
    %v6151 = vxor.u32 %v6015, 2147483648
    %v6152 = vxor.u32 %v6020, 2147483648
    %v6153 = vxor.u32 %v6025, 2147483648
    %v6154 = vxor.u32 %v6030, 2147483648
    %v6155 = vxor.u32 %v6035, 2147483648
    %v6156 = vxor.u32 %v6040, 2147483648
    %v6157 = vxor.u32 %v6045, 2147483648
    %v6158 = vxor.u32 %v6050, 2147483648
    %v6159 = vxor.u32 %v6055, 2147483648
    %v6160 = vxor.u32 %v6060, 2147483648
    %v6161 = vxor.u32 %v6065, 2147483648
    %v6162 = vxor.u32 %v6070, 2147483648
    %v6163 = vxor.u32 %v6075, 2147483648
    %v6164 = vxor.u32 %v6080, 2147483648
    %v6165 = vxor.u32 %v6085, 2147483648
    %v6166 = vxor.u32 %v6090, 2147483648
    %v6167 = vxor.u32 %v6095, 2147483648
    %v6168 = vxor.u32 %v6100, 2147483648
    %v6169 = vxor.u32 %v6105, 2147483648
    %v6170 = vxor.u32 %v6110, 2147483648
    %v6171 = vxor.u32 %v6115, 2147483648
    %v6172 = vxor.u32 %v6120, 2147483648
    %v6173 = vxor.u32 %v6125, 2147483648
    %v6174 = vxor.u32 %v6130, 2147483648
    %v6175 = vxor.u32 %v6135, 2147483648
    %v6176 = vmul.f32 %v6138, 1.442695
    %v6177 = vpow.pop %v6176
    %v6178 = vmul.f32 %v6139, 1.442695
    %v6179 = vpow.pop %v6178
    %v6180 = vmul.f32 %v6140, 1.442695
    %v6181 = vpow.pop %v6180
    %v6182 = vmul.f32 %v6141, 1.442695
    %v6183 = vpow.pop %v6182
    %v6184 = vmul.f32 %v6142, 1.442695
    %v6185 = vpow.pop %v6184
    %v6186 = vmul.f32 %v6143, 1.442695
    %v6187 = vpow.pop %v6186
    %v6188 = vmul.f32 %v6144, 1.442695
    %v6189 = vpow.pop %v6188
    %v6190 = vmul.f32 %v6145, 1.442695
    %v6191 = vpow.pop %v6190
    %v6192 = vmul.f32 %v6146, 1.442695
    %v6193 = vpow.pop %v6192
    %v6194 = vmul.f32 %v6147, 1.442695
    %v6195 = vpow.pop %v6194
    %v6196 = vmul.f32 %v6148, 1.442695
    %v6197 = vpow.pop %v6196
    %v6198 = vmul.f32 %v6149, 1.442695
    %v6199 = vpow.pop %v6198
    %v6200 = vmul.f32 %v6150, 1.442695
    %v6201 = vpow.pop %v6200
    %v6202 = vmul.f32 %v6151, 1.442695
    %v6203 = vpow.pop %v6202
    %v6204 = vmul.f32 %v6152, 1.442695
    %v6205 = vpow.pop %v6204
    %v6206 = vmul.f32 %v6153, 1.442695
    %v6207 = vpow.pop %v6206
    %v6208 = vmul.f32 %v6154, 1.442695
    %v6209 = vpow.pop %v6208
    %v6210 = vmul.f32 %v6155, 1.442695
    %v6211 = vpow.pop %v6210
    %v6212 = vmul.f32 %v6156, 1.442695
    %v6213 = vpow.pop %v6212
    %v6214 = vmul.f32 %v6157, 1.442695
    %v6215 = vpow.pop %v6214
    %v6216 = vmul.f32 %v6158, 1.442695
    %v6217 = vpow.pop %v6216
    %v6218 = vmul.f32 %v6159, 1.442695
    %v6219 = vpow.pop %v6218
    %v6220 = vmul.f32 %v6160, 1.442695
    %v6221 = vpow.pop %v6220
    %v6222 = vmul.f32 %v6161, 1.442695
    %v6223 = vpow.pop %v6222
    %v6224 = vmul.f32 %v6162, 1.442695
    %v6225 = vpow.pop %v6224
    %v6226 = vmul.f32 %v6163, 1.442695
    %v6227 = vpow.pop %v6226
    %v6228 = vmul.f32 %v6164, 1.442695
    %v6229 = vpow.pop %v6228
    %v6230 = vmul.f32 %v6165, 1.442695
    %v6231 = vpow.pop %v6230
    %v6232 = vmul.f32 %v6166, 1.442695
    %v6233 = vpow.pop %v6232
    %v6234 = vmul.f32 %v6167, 1.442695
    %v6235 = vpow.pop %v6234
    %v6236 = vmul.f32 %v6168, 1.442695
    %v6237 = vpow.pop %v6236
    %v6238 = vmul.f32 %v6169, 1.442695
    %v6239 = vpow.pop %v6238
    %v6240 = vmul.f32 %v6170, 1.442695
    %v6241 = vpow.pop %v6240
    %v6242 = vmul.f32 %v6171, 1.442695
    %v6243 = vpow.pop %v6242
    %v6244 = vmul.f32 %v6172, 1.442695
    %v6245 = vpow.pop %v6244
    %v6246 = vmul.f32 %v6173, 1.442695
    %v6247 = vpow.pop %v6246
    %v6248 = vmul.f32 %v6174, 1.442695
    %v6249 = vpow.pop %v6248
    %v6250 = vmul.f32 %v6175, 1.442695
    %v6251 = vpow.pop %v6250
    %v6252 = vadd.f32 %v6177, 1.0
    %v6253 = vadd.f32 %v6179, 1.0
    %v6254 = vadd.f32 %v6181, 1.0
    %v6255 = vadd.f32 %v6183, 1.0
    %v6256 = vadd.f32 %v6185, 1.0
    %v6257 = vadd.f32 %v6187, 1.0
    %v6258 = vadd.f32 %v6189, 1.0
    %v6259 = vadd.f32 %v6191, 1.0
    %v6260 = vadd.f32 %v6193, 1.0
    %v6261 = vadd.f32 %v6195, 1.0
    %v6262 = vadd.f32 %v6197, 1.0
    %v6263 = vadd.f32 %v6199, 1.0
    %v6264 = vadd.f32 %v6201, 1.0
    %v6265 = vadd.f32 %v6203, 1.0
    %v6266 = vadd.f32 %v6205, 1.0
    %v6267 = vadd.f32 %v6207, 1.0
    %v6268 = vadd.f32 %v6209, 1.0
    %v6269 = vadd.f32 %v6211, 1.0
    %v6270 = vadd.f32 %v6213, 1.0
    %v6271 = vadd.f32 %v6215, 1.0
    %v6272 = vadd.f32 %v6217, 1.0
    %v6273 = vadd.f32 %v6219, 1.0
    %v6274 = vadd.f32 %v6221, 1.0
    %v6275 = vadd.f32 %v6223, 1.0
    %v6276 = vadd.f32 %v6225, 1.0
    %v6277 = vadd.f32 %v6227, 1.0
    %v6278 = vadd.f32 %v6229, 1.0
    %v6279 = vadd.f32 %v6231, 1.0
    %v6280 = vadd.f32 %v6233, 1.0
    %v6281 = vadd.f32 %v6235, 1.0
    %v6282 = vadd.f32 %v6237, 1.0
    %v6283 = vadd.f32 %v6239, 1.0
    %v6284 = vadd.f32 %v6241, 1.0
    %v6285 = vadd.f32 %v6243, 1.0
    %v6286 = vadd.f32 %v6245, 1.0
    %v6287 = vadd.f32 %v6247, 1.0
    %v6288 = vadd.f32 %v6249, 1.0
    %v6289 = vadd.f32 %v6251, 1.0
    %v6290 = vrcp.pop %v6252
    %v6291 = vmul.f32 1.0, %v6290
    %v6292 = vrcp.pop %v6253
    %v6293 = vmul.f32 1.0, %v6292
    %v6294 = vrcp.pop %v6254
    %v6295 = vmul.f32 1.0, %v6294
    %v6296 = vrcp.pop %v6255
    %v6297 = vmul.f32 1.0, %v6296
    %v6298 = vrcp.pop %v6256
    %v6299 = vmul.f32 1.0, %v6298
    %v6300 = vrcp.pop %v6257
    %v6301 = vmul.f32 1.0, %v6300
    %v6302 = vrcp.pop %v6258
    %v6303 = vmul.f32 1.0, %v6302
    %v6304 = vrcp.pop %v6259
    %v6305 = vmul.f32 1.0, %v6304
    %v6306 = vrcp.pop %v6260
    %v6307 = vmul.f32 1.0, %v6306
    %v6308 = vrcp.pop %v6261
    %v6309 = vmul.f32 1.0, %v6308
    %v6310 = vrcp.pop %v6262
    %v6311 = vmul.f32 1.0, %v6310
    %v6312 = vrcp.pop %v6263
    %v6313 = vmul.f32 1.0, %v6312
    %v6314 = vrcp.pop %v6264
    %v6315 = vmul.f32 1.0, %v6314
    %v6316 = vrcp.pop %v6265
    %v6317 = vmul.f32 1.0, %v6316
    %v6318 = vrcp.pop %v6266
    %v6319 = vmul.f32 1.0, %v6318
    %v6320 = vrcp.pop %v6267
    %v6321 = vmul.f32 1.0, %v6320
    %v6322 = vrcp.pop %v6268
    %v6323 = vmul.f32 1.0, %v6322
    %v6324 = vrcp.pop %v6269
    %v6325 = vmul.f32 1.0, %v6324
    %v6326 = vrcp.pop %v6270
    %v6327 = vmul.f32 1.0, %v6326
    %v6328 = vrcp.pop %v6271
    %v6329 = vmul.f32 1.0, %v6328
    %v6330 = vrcp.pop %v6272
    %v6331 = vmul.f32 1.0, %v6330
    %v6332 = vrcp.pop %v6273
    %v6333 = vmul.f32 1.0, %v6332
    %v6334 = vrcp.pop %v6274
    %v6335 = vmul.f32 1.0, %v6334
    %v6336 = vrcp.pop %v6275
    %v6337 = vmul.f32 1.0, %v6336
    %v6338 = vrcp.pop %v6276
    %v6339 = vmul.f32 1.0, %v6338
    %v6340 = vrcp.pop %v6277
    %v6341 = vmul.f32 1.0, %v6340
    %v6342 = vrcp.pop %v6278
    %v6343 = vmul.f32 1.0, %v6342
    %v6344 = vrcp.pop %v6279
    %v6345 = vmul.f32 1.0, %v6344
    %v6346 = vrcp.pop %v6280
    %v6347 = vmul.f32 1.0, %v6346
    %v6348 = vrcp.pop %v6281
    %v6349 = vmul.f32 1.0, %v6348
    %v6350 = vrcp.pop %v6282
    %v6351 = vmul.f32 1.0, %v6350
    %v6352 = vrcp.pop %v6283
    %v6353 = vmul.f32 1.0, %v6352
    %v6354 = vrcp.pop %v6284
    %v6355 = vmul.f32 1.0, %v6354
    %v6356 = vrcp.pop %v6285
    %v6357 = vmul.f32 1.0, %v6356
    %v6358 = vrcp.pop %v6286
    %v6359 = vmul.f32 1.0, %v6358
    %v6360 = vrcp.pop %v6287
    %v6361 = vmul.f32 1.0, %v6360
    %v6362 = vrcp.pop %v6288
    %v6363 = vmul.f32 1.0, %v6362
    %v6364 = vrcp.pop %v6289
    %v6365 = vmul.f32 1.0, %v6364
    %v6366 = vmul.f32 %v5950, %v6291
    %v6367 = vmul.f32 %v5955, %v6293
    %v6368 = vmul.f32 %v5960, %v6295
    %v6369 = vmul.f32 %v5965, %v6297
    %v6370 = vmul.f32 %v5970, %v6299
    %v6371 = vmul.f32 %v5975, %v6301
    %v6372 = vmul.f32 %v5980, %v6303
    %v6373 = vmul.f32 %v5985, %v6305
    %v6374 = vmul.f32 %v5990, %v6307
    %v6375 = vmul.f32 %v5995, %v6309
    %v6376 = vmul.f32 %v6000, %v6311
    %v6377 = vmul.f32 %v6005, %v6313
    %v6378 = vmul.f32 %v6010, %v6315
    %v6379 = vmul.f32 %v6015, %v6317
    %v6380 = vmul.f32 %v6020, %v6319
    %v6381 = vmul.f32 %v6025, %v6321
    %v6382 = vmul.f32 %v6030, %v6323
    %v6383 = vmul.f32 %v6035, %v6325
    %v6384 = vmul.f32 %v6040, %v6327
    %v6385 = vmul.f32 %v6045, %v6329
    %v6386 = vmul.f32 %v6050, %v6331
    %v6387 = vmul.f32 %v6055, %v6333
    %v6388 = vmul.f32 %v6060, %v6335
    %v6389 = vmul.f32 %v6065, %v6337
    %v6390 = vmul.f32 %v6070, %v6339
    %v6391 = vmul.f32 %v6075, %v6341
    %v6392 = vmul.f32 %v6080, %v6343
    %v6393 = vmul.f32 %v6085, %v6345
    %v6394 = vmul.f32 %v6090, %v6347
    %v6395 = vmul.f32 %v6095, %v6349
    %v6396 = vmul.f32 %v6100, %v6351
    %v6397 = vmul.f32 %v6105, %v6353
    %v6398 = vmul.f32 %v6110, %v6355
    %v6399 = vmul.f32 %v6115, %v6357
    %v6400 = vmul.f32 %v6120, %v6359
    %v6401 = vmul.f32 %v6125, %v6361
    %v6402 = vmul.f32 %v6130, %v6363
    %v6403 = vmul.f32 %v6135, %v6365
    %v6404 = vadd.f32 %v3480, %v6366
    %v6405 = vadd.f32 %v3481, %v6367
    %v6406 = vadd.f32 %v3482, %v6368
    %v6407 = vadd.f32 %v3483, %v6369
    %v6408 = vadd.f32 %v3484, %v6370
    %v6409 = vadd.f32 %v3485, %v6371
    %v6410 = vadd.f32 %v3486, %v6372
    %v6411 = vadd.f32 %v3487, %v6373
    %v6412 = vadd.f32 %v3488, %v6374
    %v6413 = vadd.f32 %v3489, %v6375
    %v6414 = vadd.f32 %v3490, %v6376
    %v6415 = vadd.f32 %v3491, %v6377
    %v6416 = vadd.f32 %v3492, %v6378
    %v6417 = vadd.f32 %v3493, %v6379
    %v6418 = vadd.f32 %v3494, %v6380
    %v6419 = vadd.f32 %v3495, %v6381
    %v6420 = vadd.f32 %v3496, %v6382
    %v6421 = vadd.f32 %v3497, %v6383
    %v6422 = vadd.f32 %v3498, %v6384
    %v6423 = vadd.f32 %v3499, %v6385
    %v6424 = vadd.f32 %v3500, %v6386
    %v6425 = vadd.f32 %v3501, %v6387
    %v6426 = vadd.f32 %v3502, %v6388
    %v6427 = vadd.f32 %v3503, %v6389
    %v6428 = vadd.f32 %v3504, %v6390
    %v6429 = vadd.f32 %v3505, %v6391
    %v6430 = vadd.f32 %v3506, %v6392
    %v6431 = vadd.f32 %v3507, %v6393
    %v6432 = vadd.f32 %v3508, %v6394
    %v6433 = vadd.f32 %v3509, %v6395
    %v6434 = vadd.f32 %v3510, %v6396
    %v6435 = vadd.f32 %v3511, %v6397
    %v6436 = vadd.f32 %v3512, %v6398
    %v6437 = vadd.f32 %v3513, %v6399
    %v6438 = vadd.f32 %v3514, %v6400
    %v6439 = vadd.f32 %v3515, %v6401
    %v6440 = vadd.f32 %v3516, %v6402
    %v6441 = vadd.f32 %v3517, %v6403
    %v6442 = vmul.f32 %v6404, 0.70710677
    %v6443 = vmul.f32 %v6405, 0.70710677
    %v6444 = vmul.f32 %v6406, 0.70710677
    %v6445 = vmul.f32 %v6407, 0.70710677
    %v6446 = vmul.f32 %v6408, 0.70710677
    %v6447 = vmul.f32 %v6409, 0.70710677
    %v6448 = vmul.f32 %v6410, 0.70710677
    %v6449 = vmul.f32 %v6411, 0.70710677
    %v6450 = vmul.f32 %v6412, 0.70710677
    %v6451 = vmul.f32 %v6413, 0.70710677
    %v6452 = vmul.f32 %v6414, 0.70710677
    %v6453 = vmul.f32 %v6415, 0.70710677
    %v6454 = vmul.f32 %v6416, 0.70710677
    %v6455 = vmul.f32 %v6417, 0.70710677
    %v6456 = vmul.f32 %v6418, 0.70710677
    %v6457 = vmul.f32 %v6419, 0.70710677
    %v6458 = vmul.f32 %v6420, 0.70710677
    %v6459 = vmul.f32 %v6421, 0.70710677
    %v6460 = vmul.f32 %v6422, 0.70710677
    %v6461 = vmul.f32 %v6423, 0.70710677
    %v6462 = vmul.f32 %v6424, 0.70710677
    %v6463 = vmul.f32 %v6425, 0.70710677
    %v6464 = vmul.f32 %v6426, 0.70710677
    %v6465 = vmul.f32 %v6427, 0.70710677
    %v6466 = vmul.f32 %v6428, 0.70710677
    %v6467 = vmul.f32 %v6429, 0.70710677
    %v6468 = vmul.f32 %v6430, 0.70710677
    %v6469 = vmul.f32 %v6431, 0.70710677
    %v6470 = vmul.f32 %v6432, 0.70710677
    %v6471 = vmul.f32 %v6433, 0.70710677
    %v6472 = vmul.f32 %v6434, 0.70710677
    %v6473 = vmul.f32 %v6435, 0.70710677
    %v6474 = vmul.f32 %v6436, 0.70710677
    %v6475 = vmul.f32 %v6437, 0.70710677
    %v6476 = vmul.f32 %v6438, 0.70710677
    %v6477 = vmul.f32 %v6439, 0.70710677
    %v6478 = vmul.f32 %v6440, 0.70710677
    %v6479 = vmul.f32 %v6441, 0.70710677
    %6480 = vst [vmem:[#allocation2] sm:$0xff] %v6442
    %6481 = vst [vmem:[#allocation2 + $0x8] sm:$0xff] %v6443
    %6482 = vst [vmem:[#allocation2 + $0x10] sm:$0xff] %v6444
    %6483 = vst [vmem:[#allocation2 + $0x18] sm:$0xff] %v6445
    %6484 = vst [vmem:[#allocation2 + $0x20] sm:$0xff] %v6446
    %6485 = vst [vmem:[#allocation2 + $0x28] sm:$0xff] %v6447
    %6486 = vst [vmem:[#allocation2 + $0x30] sm:$0xff] %v6448
    %6487 = vst [vmem:[#allocation2 + $0x38] sm:$0xff] %v6449
    %6488 = vst [vmem:[#allocation2 + $0x40] sm:$0xff] %v6450
    %6489 = vst [vmem:[#allocation2 + $0x48] sm:$0xff] %v6451
    %6490 = vst [vmem:[#allocation2 + $0x50] sm:$0xff] %v6452
    %6491 = vst [vmem:[#allocation2 + $0x58] sm:$0xff] %v6453
    %6492 = vst [vmem:[#allocation2 + $0x60] sm:$0xff] %v6454
    %6493 = vst [vmem:[#allocation2 + $0x68] sm:$0xff] %v6455
    %6494 = vst [vmem:[#allocation2 + $0x70] sm:$0xff] %v6456
    %6495 = vst [vmem:[#allocation2 + $0x78] sm:$0xff] %v6457
    %6496 = vst [vmem:[#allocation2 + $0x80] sm:$0xff] %v6458
    %6497 = vst [vmem:[#allocation2 + $0x88] sm:$0xff] %v6459
    %6498 = vst [vmem:[#allocation2 + $0x90] sm:$0xff] %v6460
    %6499 = vst [vmem:[#allocation2 + $0x98] sm:$0xff] %v6461
    %6500 = vst [vmem:[#allocation2 + $0xa0] sm:$0xff] %v6462
    %6501 = vst [vmem:[#allocation2 + $0xa8] sm:$0xff] %v6463
    %6502 = vst [vmem:[#allocation2 + $0xb0] sm:$0xff] %v6464
    %6503 = vst [vmem:[#allocation2 + $0xb8] sm:$0xff] %v6465
    %6504 = vst [vmem:[#allocation2 + $0xc0] sm:$0xff] %v6466
    %6505 = vst [vmem:[#allocation2 + $0xc8] sm:$0xff] %v6467
    %6506 = vst [vmem:[#allocation2 + $0xd0] sm:$0xff] %v6468
    %6507 = vst [vmem:[#allocation2 + $0xd8] sm:$0xff] %v6469
    %6508 = vst [vmem:[#allocation2 + $0xe0] sm:$0xff] %v6470
    %6509 = vst [vmem:[#allocation2 + $0xe8] sm:$0xff] %v6471
    %6510 = vst [vmem:[#allocation2 + $0xf0] sm:$0xff] %v6472
    %6511 = vst [vmem:[#allocation2 + $0xf8] sm:$0xff] %v6473
    %6512 = vst [vmem:[#allocation2 + $0x100] sm:$0xff] %v6474
    %6513 = vst [vmem:[#allocation2 + $0x108] sm:$0xff] %v6475
    %6514 = vst [vmem:[#allocation2 + $0x110] sm:$0xff] %v6476
    %6515 = vst [vmem:[#allocation2 + $0x118] sm:$0xff] %v6477
    %6516 = vst [vmem:[#allocation2 + $0x120] sm:$0xff] %v6478
    %6517 = vst [vmem:[#allocation2 + $0x128] sm:$0xff] %v6479
    // Predicated region
    $region78: #{tpu_custom_call.1} parent=1 // pred_check
      %p6518 = pneg %p134
    $region79: #{tpu_custom_call.1} parent=1 // pred_check_branch
      %6520 = sbr.rel (%p6518) target = $region81
    $region80: #{tpu_custom_call.1} parent=1 // pred_region
      %v6521 = vld [vmem:[#allocation2] sm:$0xff]
      %v6522 = vld [vmem:[#allocation2 + $0x8] sm:$0xff]
      %v6523 = vld [vmem:[#allocation2 + $0x10] sm:$0xff]
      %v6524 = vld [vmem:[#allocation2 + $0x18] sm:$0xff]
      %v6525 = vld [vmem:[#allocation2 + $0x20] sm:$0xff]
      %v6526 = vld [vmem:[#allocation2 + $0x28] sm:$0xff]
      %v6527 = vld [vmem:[#allocation2 + $0x30] sm:$0xff]
      %v6528 = vld [vmem:[#allocation2 + $0x38] sm:$0xff]
      %v6529 = vld [vmem:[#allocation2 + $0x40] sm:$0xff]
      %v6530 = vld [vmem:[#allocation2 + $0x48] sm:$0xff]
      %v6531 = vld [vmem:[#allocation2 + $0x50] sm:$0xff]
      %v6532 = vld [vmem:[#allocation2 + $0x58] sm:$0xff]
      %v6533 = vld [vmem:[#allocation2 + $0x60] sm:$0xff]
      %v6534 = vld [vmem:[#allocation2 + $0x68] sm:$0xff]
      %v6535 = vld [vmem:[#allocation2 + $0x70] sm:$0xff]
      %v6536 = vld [vmem:[#allocation2 + $0x78] sm:$0xff]
      %v6537 = vld [vmem:[#allocation2 + $0x80] sm:$0xff]
      %v6538 = vld [vmem:[#allocation2 + $0x88] sm:$0xff]
      %v6539 = vld [vmem:[#allocation2 + $0x90] sm:$0xff]
      %v6540 = vld [vmem:[#allocation2 + $0x98] sm:$0xff]
      %v6541 = vld [vmem:[#allocation2 + $0xa0] sm:$0xff]
      %v6542 = vld [vmem:[#allocation2 + $0xa8] sm:$0xff]
      %v6543 = vld [vmem:[#allocation2 + $0xb0] sm:$0xff]
      %v6544 = vld [vmem:[#allocation2 + $0xb8] sm:$0xff]
      %v6545 = vld [vmem:[#allocation2 + $0xc0] sm:$0xff]
      %v6546 = vld [vmem:[#allocation2 + $0xc8] sm:$0xff]
      %v6547 = vld [vmem:[#allocation2 + $0xd0] sm:$0xff]
      %v6548 = vld [vmem:[#allocation2 + $0xd8] sm:$0xff]
      %v6549 = vld [vmem:[#allocation2 + $0xe0] sm:$0xff]
      %v6550 = vld [vmem:[#allocation2 + $0xe8] sm:$0xff]
      %v6551 = vld [vmem:[#allocation2 + $0xf0] sm:$0xff]
      %v6552 = vld [vmem:[#allocation2 + $0xf8] sm:$0xff]
      %v6553 = vld [vmem:[#allocation2 + $0x100] sm:$0xff]
      %v6554 = vld [vmem:[#allocation2 + $0x108] sm:$0xff]
      %v6555 = vld [vmem:[#allocation2 + $0x110] sm:$0xff]
      %v6556 = vld [vmem:[#allocation2 + $0x118] sm:$0xff]
      %v6557 = vld [vmem:[#allocation2 + $0x120] sm:$0xff]
      %v6558 = vld [vmem:[#allocation2 + $0x128] sm:$0xff]
      %6559 = vst [vmem:[#allocation15] sm:$0xff] %v6521
      %6560 = vst [vmem:[#allocation15 + $0x8] sm:$0xff] %v6522
      %6561 = vst [vmem:[#allocation15 + $0x10] sm:$0xff] %v6523
      %6562 = vst [vmem:[#allocation15 + $0x18] sm:$0xff] %v6524
      %6563 = vst [vmem:[#allocation15 + $0x20] sm:$0xff] %v6525
      %6564 = vst [vmem:[#allocation15 + $0x28] sm:$0xff] %v6526
      %6565 = vst [vmem:[#allocation15 + $0x30] sm:$0xff] %v6527
      %6566 = vst [vmem:[#allocation15 + $0x38] sm:$0xff] %v6528
      %6567 = vst [vmem:[#allocation15 + $0x40] sm:$0xff] %v6529
      %6568 = vst [vmem:[#allocation15 + $0x48] sm:$0xff] %v6530
      %6569 = vst [vmem:[#allocation15 + $0x50] sm:$0xff] %v6531
      %6570 = vst [vmem:[#allocation15 + $0x58] sm:$0xff] %v6532
      %6571 = vst [vmem:[#allocation15 + $0x60] sm:$0xff] %v6533
      %6572 = vst [vmem:[#allocation15 + $0x68] sm:$0xff] %v6534
      %6573 = vst [vmem:[#allocation15 + $0x70] sm:$0xff] %v6535
      %6574 = vst [vmem:[#allocation15 + $0x78] sm:$0xff] %v6536
      %6575 = vst [vmem:[#allocation15 + $0x80] sm:$0xff] %v6537
      %6576 = vst [vmem:[#allocation15 + $0x88] sm:$0xff] %v6538
      %6577 = vst [vmem:[#allocation15 + $0x90] sm:$0xff] %v6539
      %6578 = vst [vmem:[#allocation15 + $0x98] sm:$0xff] %v6540
      %6579 = vst [vmem:[#allocation15 + $0xa0] sm:$0xff] %v6541
      %6580 = vst [vmem:[#allocation15 + $0xa8] sm:$0xff] %v6542
      %6581 = vst [vmem:[#allocation15 + $0xb0] sm:$0xff] %v6543
      %6582 = vst [vmem:[#allocation15 + $0xb8] sm:$0xff] %v6544
      %6583 = vst [vmem:[#allocation15 + $0xc0] sm:$0xff] %v6545
      %6584 = vst [vmem:[#allocation15 + $0xc8] sm:$0xff] %v6546
      %6585 = vst [vmem:[#allocation15 + $0xd0] sm:$0xff] %v6547
      %6586 = vst [vmem:[#allocation15 + $0xd8] sm:$0xff] %v6548
      %6587 = vst [vmem:[#allocation15 + $0xe0] sm:$0xff] %v6549
      %6588 = vst [vmem:[#allocation15 + $0xe8] sm:$0xff] %v6550
      %6589 = vst [vmem:[#allocation15 + $0xf0] sm:$0xff] %v6551
      %6590 = vst [vmem:[#allocation15 + $0xf8] sm:$0xff] %v6552
      %6591 = vst [vmem:[#allocation15 + $0x100] sm:$0xff] %v6553
      %6592 = vst [vmem:[#allocation15 + $0x108] sm:$0xff] %v6554
      %6593 = vst [vmem:[#allocation15 + $0x110] sm:$0xff] %v6555
      %6594 = vst [vmem:[#allocation15 + $0x118] sm:$0xff] %v6556
      %6595 = vst [vmem:[#allocation15 + $0x120] sm:$0xff] %v6557
      %6596 = vst [vmem:[#allocation15 + $0x128] sm:$0xff] %v6558
    $region81: #{tpu_custom_call.1} parent=1 // pred_fallthru
      _
    // Predicated region
    $region82: #{tpu_custom_call.1} parent=1 // pred_check
      _
    $region83: #{tpu_custom_call.1} parent=1 // pred_check_branch
      %6598 = sbr.rel (0) target = $region85
    $region84: #{tpu_custom_call.1} parent=1 // pred_region
      %s6600 = ssub.s32 4864, 4864
      %6601 = vsyncadd [#allocation5], %s6600
      %s6602 = sshll.u32 [#allocation15], 4
      %s6603 = int_to_ptr.vmem [resolvable:$true] %s6602
      %6608 = dma.vmem_to_hbm [thread:$0]  %s6603, 4864, %s11, [#allocation5], 128, 128, 8
    $region85: #{tpu_custom_call.1} parent=1 // pred_fallthru
      _
    // Predicated region
    $region86: #{tpu_custom_call.1} parent=1 // pred_check
      _
    $region87: #{tpu_custom_call.1} parent=1 // pred_check_branch
      %6610 = sbr.rel (0) target = $region89
    $region88: #{tpu_custom_call.1} parent=1 // pred_region
      %6611 = dma.done [#allocation5], 4864
    $region89: #{tpu_custom_call.1} parent=1 // pred_fallthru
      _
    %6612 = vsyncpa [#allocation4], 1
    %6613 = vsyncpa [#allocation7], 1
    %6614 = vsyncpa [#allocation10], 1
    %6615 = vsyncpa [#allocation13], 1
    %6616 = vsyncpa [#allocation5], 1

</llo_original>
